<compile_context>
chip_gen: v5e
topology: v5e:2x2
jax: 0.10.0
libtpu: 0.0.40
codegen_flags: <defaults>
</compile_context>

<pallas_src>
import functools

import jax
import jax.numpy as jnp
from jax.experimental import pallas as pl
from jax.experimental.pallas import tpu as pltpu

EPS = 1e-5


def _round_up(n, m):
    return (n + m - 1) // m * m


def _kernel(
    x_ref,                      # (TB, 1664) bf16
    w1_ref, b1_ref, g1_ref, be1_ref,
    w2_ref, b2_ref, g2_ref, be2_ref,
    w3_ref, b3_ref,
    out_ref,                    # (TB, 128) f32  (result broadcast across lanes)
    h1_s, h2_s,                 # (nbt, TB, 512) / (nbt, TB, 128) f32 staging
    s1, ss1, s2, ss2,           # (1, 512)/(1, 512)/(1, 128)/(1, 128) f32 stat accumulators
    *, b_true,
):
    ph = pl.program_id(0)       # phase: 0 = fc1, 1 = bn1+fc2, 2 = bn2+fc3
    bt = pl.program_id(1)       # batch tile
    tb = x_ref.shape[0]
    inv_b = 1.0 / b_true

    # mask for padded batch rows (they must not contribute to BN statistics)
    rows = jax.lax.broadcasted_iota(jnp.int32, (tb, 1), 0) + bt * tb
    rmask = (rows < b_true).astype(jnp.float32)

    @pl.when(jnp.logical_and(ph == 0, bt == 0))
    def _():
        s1[...] = jnp.zeros_like(s1)
        ss1[...] = jnp.zeros_like(ss1)
        s2[...] = jnp.zeros_like(s2)
        ss2[...] = jnp.zeros_like(ss2)

    @pl.when(ph == 0)
    def _():
        h1 = jnp.dot(x_ref[...], w1_ref[...],
                     preferred_element_type=jnp.float32) + b1_ref[...]      # (TB, 512) f32
        h1_s[bt] = h1
        hm = h1 * rmask
        s1[...] += jnp.sum(hm, axis=0, keepdims=True)
        ss1[...] += jnp.sum(hm * h1, axis=0, keepdims=True)

    @pl.when(ph == 1)
    def _():
        mean = s1[...] * inv_b
        var = ss1[...] * inv_b - mean * mean
        scale = g1_ref[...] * jax.lax.rsqrt(var + EPS)
        shift = be1_ref[...] - scale * mean
        a1 = jnp.maximum(h1_s[bt] * scale + shift, 0.0)                     # (TB, 512) f32
        h2 = jnp.dot(a1.astype(jnp.bfloat16), w2_ref[...],
                     preferred_element_type=jnp.float32) + b2_ref[...]      # (TB, 128) f32
        h2_s[bt] = h2
        hm = h2 * rmask
        s2[...] += jnp.sum(hm, axis=0, keepdims=True)
        ss2[...] += jnp.sum(hm * h2, axis=0, keepdims=True)

    @pl.when(ph == 2)
    def _():
        mean = s2[...] * inv_b
        var = ss2[...] * inv_b - mean * mean
        scale = g2_ref[...] * jax.lax.rsqrt(var + EPS)
        shift = be2_ref[...] - scale * mean
        a2 = jnp.maximum(h2_s[bt] * scale + shift, 0.0)                     # (TB, 128) f32
        # fc3: N=1 -> VPU multiply + lane reduction instead of MXU matmul
        r = jnp.sum(a2 * w3_ref[...], axis=-1, keepdims=True) + b3_ref[...]  # (TB, 1)
        out_ref[...] = jnp.broadcast_to(r, out_ref.shape).astype(out_ref.dtype)


def exception_detector(x, params):
    """x: (B, 1568) float32.  Returns (B, 1) float32."""
    B, F = x.shape
    F_pad = _round_up(F, 128)                 # 1568 -> 1664
    TB = min(128, _round_up(B, 8))            # batch tile
    B_pad = _round_up(B, TB)
    nbt = B_pad // TB

    # pad + cast (zero padding has no numerical effect; padded rows are masked for BN)
    xp = jnp.pad(x, ((0, B_pad - B), (0, F_pad - F))).astype(jnp.bfloat16)
    w1 = jnp.pad(params["w1"], ((0, F_pad - F), (0, 0))).astype(jnp.bfloat16)
    w2 = params["w2"].astype(jnp.bfloat16)
    w3 = params["w3"].T.astype(jnp.float32)   # (1, 128) row for the VPU reduce
    b3 = params["b3"].astype(jnp.float32)     # (1, 1)

    args = (
        xp,
        w1, params["b1"], params["g1"], params["be1"],
        w2, params["b2"], params["g2"], params["be2"],
        w3, b3,
    )

    const = lambda ph, bt: (0, 0)             # weights stay VMEM-resident across the grid
    in_specs = [
        # x only needed in phase 0; pin to block 0 otherwise so it is not re-streamed
        pl.BlockSpec((TB, F_pad), lambda ph, bt: (jnp.where(ph == 0, bt, 0), 0)),
        pl.BlockSpec((F_pad, 512), const),
        pl.BlockSpec((1, 512), const),
        pl.BlockSpec((1, 512), const),
        pl.BlockSpec((1, 512), const),
        pl.BlockSpec((512, 128), const),
        pl.BlockSpec((1, 128), const),
        pl.BlockSpec((1, 128), const),
        pl.BlockSpec((1, 128), const),
        pl.BlockSpec((1, 128), const),
        pl.BlockSpec((1, 1), const),
    ]
    # lane-dense output slab; only written (and written back) during phase 2
    out_specs = pl.BlockSpec((TB, 128), lambda ph, bt: (jnp.where(ph == 2, bt, 0), 0))

    kernel = functools.partial(_kernel, b_true=B)

    out_pad = pl.pallas_call(
        kernel,
        out_shape=jax.ShapeDtypeStruct((B_pad, 128), jnp.float32),
        grid_spec=pltpu.PrefetchScalarGridSpec(
            num_scalar_prefetch=0,
            grid=(3, nbt),
            in_specs=in_specs,
            out_specs=out_specs,
            scratch_shapes=[
                pltpu.VMEM((nbt, TB, 512), jnp.float32),   # staged fc1 pre-activations
                pltpu.VMEM((nbt, TB, 128), jnp.float32),   # staged fc2 pre-activations
                pltpu.VMEM((1, 512), jnp.float32),         # sum(h1)
                pltpu.VMEM((1, 512), jnp.float32),         # sum(h1^2)
                pltpu.VMEM((1, 128), jnp.float32),         # sum(h2)
                pltpu.VMEM((1, 128), jnp.float32),         # sum(h2^2)
            ],
        ),
        compiler_params=pltpu.CompilerParams(
            dimension_semantics=("arbitrary", "arbitrary")),
    )(*args)
    return out_pad[:B, :1]


def init_params(key):
    """Synthetic parameters matching the nn.Module shapes.

    nn.Linear(in, out) weight is (out, in) in torch; stored transposed (in, out) so the
    kernel does x @ W.  BN gamma=1, beta=0 (PyTorch defaults).  1-D params kept 2-D (1, C).
    """
    k1, k2, k3 = jax.random.split(key, 3)

    def linear(k, fan_in, fan_out):
        bound = 1.0 / jnp.sqrt(fan_in)
        kw, kb = jax.random.split(k)
        w = jax.random.uniform(kw, (fan_in, fan_out), jnp.float32, -bound, bound)
        b = jax.random.uniform(kb, (1, fan_out), jnp.float32, -bound, bound)
        return w, b

    w1, b1 = linear(k1, 1568, 512)
    w2, b2 = linear(k2, 512, 128)
    w3, b3 = linear(k3, 128, 1)
    return dict(
        w1=w1, b1=b1, g1=jnp.ones((1, 512), jnp.float32), be1=jnp.zeros((1, 512), jnp.float32),
        w2=w2, b2=b2, g2=jnp.ones((1, 128), jnp.float32), be2=jnp.zeros((1, 128), jnp.float32),
        w3=w3, b3=b3,
    )


def reference(x, p):
    """Pure-JAX reference with the same numerics as the kernel:
    bf16 matmul operands + f32 accumulation, training-mode BN (biased var, one-pass form)."""
    bf = jnp.bfloat16

    def bn_relu(h, g, be):
        m = jnp.mean(h, axis=0, keepdims=True)
        v = jnp.mean(h * h, axis=0, keepdims=True) - m * m
        return jnp.maximum(g * (h - m) * jax.lax.rsqrt(v + EPS) + be, 0.0)

    h1 = jnp.dot(x.astype(bf), p["w1"].astype(bf),
                 preferred_element_type=jnp.float32) + p["b1"]
    a1 = bn_relu(h1, p["g1"], p["be1"])
    h2 = jnp.dot(a1.astype(bf), p["w2"].astype(bf),
                 preferred_element_type=jnp.float32) + p["b2"]
    a2 = bn_relu(h2, p["g2"], p["be2"])
    return jnp.sum(a2 * p["w3"].T, axis=-1, keepdims=True) + p["b3"]


if __name__ == "__main__":
    key = jax.random.PRNGKey(0)
    kx, kp = jax.random.split(key)

    B = 200  # non-multiple of the 128-row tile -> exercises padding/masking and the 2-tile grid
    x = jax.random.normal(kx, (B, 1568), jnp.float32)
    params = init_params(kp)

    out = jax.block_until_ready(exception_detector(x, params))
    ref = reference(x, params)

    assert out.shape == (B, 1), out.shape
    err = jnp.max(jnp.abs(out - ref))
    assert jnp.allclose(out, ref, atol=2e-2, rtol=2e-2), f"max abs err {err}"
    print("KERNEL_OK")
</pallas_src>

<mosaic_0001>
module attributes {stable_mosaic.version = 11 : i64} {
  func.func @_kernel(%arg0: i32, %arg1: i32, %arg2: memref<128x1664xbf16, #tpu.memory_space<vmem>>, %arg3: memref<1664x512xbf16, #tpu.memory_space<vmem>>, %arg4: memref<1x512xf32, #tpu.memory_space<vmem>>, %arg5: memref<1x512xf32, #tpu.memory_space<vmem>>, %arg6: memref<1x512xf32, #tpu.memory_space<vmem>>, %arg7: memref<512x128xbf16, #tpu.memory_space<vmem>>, %arg8: memref<1x128xf32, #tpu.memory_space<vmem>>, %arg9: memref<1x128xf32, #tpu.memory_space<vmem>>, %arg10: memref<1x128xf32, #tpu.memory_space<vmem>>, %arg11: memref<1x128xf32, #tpu.memory_space<vmem>>, %arg12: memref<1x1xf32, #tpu.memory_space<vmem>>, %arg13: memref<128x128xf32, #tpu.memory_space<vmem>>, %arg14: memref<2x128x512xf32, #tpu.memory_space<vmem>>, %arg15: memref<2x128x128xf32, #tpu.memory_space<vmem>>, %arg16: memref<1x512xf32, #tpu.memory_space<vmem>>, %arg17: memref<1x512xf32, #tpu.memory_space<vmem>>, %arg18: memref<1x128xf32, #tpu.memory_space<vmem>>, %arg19: memref<1x128xf32, #tpu.memory_space<vmem>>) attributes {dimension_semantics = [#tpu.dimension_semantics<arbitrary>, #tpu.dimension_semantics<arbitrary>], iteration_bounds = array<i64: 3, 2>, scalar_prefetch = 0 : i64, scratch_operands = 6 : i64, tpu.core_type = #tpu.core_type<tc>, window_params = [{transform_indices = @transform_0, window_bounds = array<i64: 128, 1664>}, {pipeline_mode = #tpu.pipeline_mode<synchronous>, transform_indices = @transform_1, window_bounds = array<i64: 1664, 512>}, {pipeline_mode = #tpu.pipeline_mode<synchronous>, transform_indices = @transform_2, window_bounds = array<i64: 1, 512>}, {pipeline_mode = #tpu.pipeline_mode<synchronous>, transform_indices = @transform_3, window_bounds = array<i64: 1, 512>}, {pipeline_mode = #tpu.pipeline_mode<synchronous>, transform_indices = @transform_4, window_bounds = array<i64: 1, 512>}, {pipeline_mode = #tpu.pipeline_mode<synchronous>, transform_indices = @transform_5, window_bounds = array<i64: 512, 128>}, {pipeline_mode = #tpu.pipeline_mode<synchronous>, transform_indices = @transform_6, window_bounds = array<i64: 1, 128>}, {pipeline_mode = #tpu.pipeline_mode<synchronous>, transform_indices = @transform_7, window_bounds = array<i64: 1, 128>}, {pipeline_mode = #tpu.pipeline_mode<synchronous>, transform_indices = @transform_8, window_bounds = array<i64: 1, 128>}, {pipeline_mode = #tpu.pipeline_mode<synchronous>, transform_indices = @transform_9, window_bounds = array<i64: 1, 128>}, {pipeline_mode = #tpu.pipeline_mode<synchronous>, transform_indices = @transform_10, window_bounds = array<i64: 1, 1>}, {transform_indices = @transform_11, window_bounds = array<i64: 128, 128>}]} {
    %0 = tpu.iota {dimensions = array<i32: 0>} : vector<128x1xi32>
    %c128_i32 = arith.constant 128 : i32
    %1 = arith.muli %arg1, %c128_i32 : i32
    %2 = vector.broadcast %1 : i32 to vector<128x1xi32>
    %3 = arith.addi %0, %2 : vector<128x1xi32>
    %c200_i32 = arith.constant 200 : i32
    %4 = vector.broadcast %c200_i32 : i32 to vector<128x1xi32>
    %5 = arith.cmpi slt, %3, %4 : vector<128x1xi32>
    %6 = arith.extui %5 : vector<128x1xi1> to vector<128x1xi32>
    %7 = arith.sitofp %6 : vector<128x1xi32> to vector<128x1xf32>
    %c0_i32 = arith.constant 0 : i32
    %8 = arith.cmpi eq, %arg0, %c0_i32 : i32
    %c0_i32_0 = arith.constant 0 : i32
    %9 = arith.cmpi eq, %arg1, %c0_i32_0 : i32
    %10 = arith.andi %8, %9 : i1
    %11 = arith.extui %10 : i1 to i32
    %c0_i32_1 = arith.constant 0 : i32
    %12 = arith.cmpi ne, %11, %c0_i32_1 : i32
    scf.if %12 {
      %cst = arith.constant 0.000000e+00 : f32
      %22 = vector.broadcast %cst : f32 to vector<1x512xf32>
      %c0 = arith.constant 0 : index
      %c0_6 = arith.constant 0 : index
      %23 = vector.load %arg16[%c0, %c0_6] : memref<1x512xf32, #tpu.memory_space<vmem>>, vector<1x512xf32>
      tpu.vector_store %arg16[%c0, %c0_6], %22 {strides = array<i32>} : memref<1x512xf32, #tpu.memory_space<vmem>>, vector<1x512xf32>,
      %cst_7 = arith.constant 0.000000e+00 : f32
      %24 = vector.broadcast %cst_7 : f32 to vector<1x512xf32>
      %c0_8 = arith.constant 0 : index
      %c0_9 = arith.constant 0 : index
      %25 = vector.load %arg17[%c0_8, %c0_9] : memref<1x512xf32, #tpu.memory_space<vmem>>, vector<1x512xf32>
      tpu.vector_store %arg17[%c0_8, %c0_9], %24 {strides = array<i32>} : memref<1x512xf32, #tpu.memory_space<vmem>>, vector<1x512xf32>,
      %cst_10 = arith.constant 0.000000e+00 : f32
      %26 = vector.broadcast %cst_10 : f32 to vector<1x128xf32>
      %c0_11 = arith.constant 0 : index
      %c0_12 = arith.constant 0 : index
      %27 = vector.load %arg18[%c0_11, %c0_12] : memref<1x128xf32, #tpu.memory_space<vmem>>, vector<1x128xf32>
      tpu.vector_store %arg18[%c0_11, %c0_12], %26 {strides = array<i32>} : memref<1x128xf32, #tpu.memory_space<vmem>>, vector<1x128xf32>,
      %cst_13 = arith.constant 0.000000e+00 : f32
      %28 = vector.broadcast %cst_13 : f32 to vector<1x128xf32>
      %c0_14 = arith.constant 0 : index
      %c0_15 = arith.constant 0 : index
      %29 = vector.load %arg19[%c0_14, %c0_15] : memref<1x128xf32, #tpu.memory_space<vmem>>, vector<1x128xf32>
      tpu.vector_store %arg19[%c0_14, %c0_15], %28 {strides = array<i32>} : memref<1x128xf32, #tpu.memory_space<vmem>>, vector<1x128xf32>,
    } else {
    }
    %c0_i32_2 = arith.constant 0 : i32
    %13 = arith.cmpi eq, %arg0, %c0_i32_2 : i32
    %14 = arith.extui %13 : i1 to i32
    %c0_i32_3 = arith.constant 0 : i32
    %15 = arith.cmpi ne, %14, %c0_i32_3 : i32
    scf.if %15 {
      %c0 = arith.constant 0 : index
      %c0_6 = arith.constant 0 : index
      %22 = vector.load %arg2[%c0, %c0_6] : memref<128x1664xbf16, #tpu.memory_space<vmem>>, vector<128x1664xbf16>
      %c0_7 = arith.constant 0 : index
      %c0_8 = arith.constant 0 : index
      %23 = vector.load %arg3[%c0_7, %c0_8] : memref<1664x512xbf16, #tpu.memory_space<vmem>>, vector<1664x512xbf16>
      %cst = arith.constant dense<0.000000e+00> : vector<128x512xf32>
      %24 = tpu.matmul %22, %23, %cst {dimension_numbers = #tpu.dot_dimension_numbers<[1], [0], [0], [1], [0, 0, 1, 1], [], []>} : vector<128x1664xbf16>, vector<1664x512xbf16>, vector<128x512xf32> -> vector<128x512xf32>
      %c0_9 = arith.constant 0 : index
      %c0_10 = arith.constant 0 : index
      %25 = vector.load %arg4[%c0_9, %c0_10] : memref<1x512xf32, #tpu.memory_space<vmem>>, vector<1x512xf32>
      %26 = vector.broadcast %25 : vector<1x512xf32> to vector<128x512xf32>
      %27 = arith.addf %24, %26 : vector<128x512xf32>
      %28 = arith.index_cast %arg1 : i32 to index
      %c0_11 = arith.constant 0 : index
      %c0_12 = arith.constant 0 : index
      %29 = vector.load %arg14[%28, %c0_11, %c0_12] : memref<2x128x512xf32, #tpu.memory_space<vmem>>, vector<1x128x512xf32>
      %30 = vector.shape_cast %29 : vector<1x128x512xf32> to vector<128x512xf32>
      %31 = vector.shape_cast %27 : vector<128x512xf32> to vector<1x128x512xf32>
      tpu.vector_store %arg14[%28, %c0_11, %c0_12], %31 {strides = array<i32>} : memref<2x128x512xf32, #tpu.memory_space<vmem>>, vector<1x128x512xf32>,
      %32 = vector.broadcast %7 : vector<128x1xf32> to vector<128x512xf32>
      %33 = arith.mulf %27, %32 : vector<128x512xf32>
      %c0_13 = arith.constant 0 : index
      %c0_14 = arith.constant 0 : index
      %34 = vector.load %arg16[%c0_13, %c0_14] : memref<1x512xf32, #tpu.memory_space<vmem>>, vector<1x512xf32>
      %cst_15 = arith.constant dense<0.000000e+00> : vector<512xf32>
      %35 = vector.multi_reduction <add>, %33, %cst_15 [0] : vector<128x512xf32> to vector<512xf32>
      %36 = vector.shape_cast %35 : vector<512xf32> to vector<1x512xf32>
      %37 = arith.addf %34, %36 : vector<1x512xf32>
      %c0_16 = arith.constant 0 : index
      %c0_17 = arith.constant 0 : index
      %38 = vector.load %arg16[%c0_16, %c0_17] : memref<1x512xf32, #tpu.memory_space<vmem>>, vector<1x512xf32>
      tpu.vector_store %arg16[%c0_16, %c0_17], %37 {strides = array<i32>} : memref<1x512xf32, #tpu.memory_space<vmem>>, vector<1x512xf32>,
      %c0_18 = arith.constant 0 : index
      %c0_19 = arith.constant 0 : index
      %39 = vector.load %arg17[%c0_18, %c0_19] : memref<1x512xf32, #tpu.memory_space<vmem>>, vector<1x512xf32>
      %40 = arith.mulf %33, %27 : vector<128x512xf32>
      %cst_20 = arith.constant dense<0.000000e+00> : vector<512xf32>
      %41 = vector.multi_reduction <add>, %40, %cst_20 [0] : vector<128x512xf32> to vector<512xf32>
      %42 = vector.shape_cast %41 : vector<512xf32> to vector<1x512xf32>
      %43 = arith.addf %39, %42 : vector<1x512xf32>
      %c0_21 = arith.constant 0 : index
      %c0_22 = arith.constant 0 : index
      %44 = vector.load %arg17[%c0_21, %c0_22] : memref<1x512xf32, #tpu.memory_space<vmem>>, vector<1x512xf32>
      tpu.vector_store %arg17[%c0_21, %c0_22], %43 {strides = array<i32>} : memref<1x512xf32, #tpu.memory_space<vmem>>, vector<1x512xf32>,
    } else {
    }
    %c1_i32 = arith.constant 1 : i32
    %16 = arith.cmpi eq, %arg0, %c1_i32 : i32
    %17 = arith.extui %16 : i1 to i32
    %c0_i32_4 = arith.constant 0 : i32
    %18 = arith.cmpi ne, %17, %c0_i32_4 : i32
    scf.if %18 {
      %c0 = arith.constant 0 : index
      %c0_6 = arith.constant 0 : index
      %22 = vector.load %arg16[%c0, %c0_6] : memref<1x512xf32, #tpu.memory_space<vmem>>, vector<1x512xf32>
      %cst = arith.constant 5.000000e-03 : f32
      %23 = vector.broadcast %cst : f32 to vector<1x512xf32>
      %24 = arith.mulf %22, %23 : vector<1x512xf32>
      %c0_7 = arith.constant 0 : index
      %c0_8 = arith.constant 0 : index
      %25 = vector.load %arg17[%c0_7, %c0_8] : memref<1x512xf32, #tpu.memory_space<vmem>>, vector<1x512xf32>
      %cst_9 = arith.constant 5.000000e-03 : f32
      %26 = vector.broadcast %cst_9 : f32 to vector<1x512xf32>
      %27 = arith.mulf %25, %26 : vector<1x512xf32>
      %28 = arith.mulf %24, %24 : vector<1x512xf32>
      %29 = arith.subf %27, %28 : vector<1x512xf32>
      %c0_10 = arith.constant 0 : index
      %c0_11 = arith.constant 0 : index
      %30 = vector.load %arg5[%c0_10, %c0_11] : memref<1x512xf32, #tpu.memory_space<vmem>>, vector<1x512xf32>
      %cst_12 = arith.constant 9.99999974E-6 : f32
      %31 = vector.broadcast %cst_12 : f32 to vector<1x512xf32>
      %32 = arith.addf %29, %31 : vector<1x512xf32>
      %33 = math.rsqrt %32 : vector<1x512xf32>
      %34 = arith.mulf %30, %33 : vector<1x512xf32>
      %c0_13 = arith.constant 0 : index
      %c0_14 = arith.constant 0 : index
      %35 = vector.load %arg6[%c0_13, %c0_14] : memref<1x512xf32, #tpu.memory_space<vmem>>, vector<1x512xf32>
      %36 = arith.mulf %34, %24 : vector<1x512xf32>
      %37 = arith.subf %35, %36 : vector<1x512xf32>
      %38 = arith.index_cast %arg1 : i32 to index
      %c0_15 = arith.constant 0 : index
      %c0_16 = arith.constant 0 : index
      %39 = vector.load %arg14[%38, %c0_15, %c0_16] : memref<2x128x512xf32, #tpu.memory_space<vmem>>, vector<1x128x512xf32>
      %40 = vector.shape_cast %39 : vector<1x128x512xf32> to vector<128x512xf32>
      %41 = vector.broadcast %34 : vector<1x512xf32> to vector<128x512xf32>
      %42 = arith.mulf %40, %41 : vector<128x512xf32>
      %43 = vector.broadcast %37 : vector<1x512xf32> to vector<128x512xf32>
      %44 = arith.addf %42, %43 : vector<128x512xf32>
      %cst_17 = arith.constant 0.000000e+00 : f32
      %45 = vector.broadcast %cst_17 : f32 to vector<128x512xf32>
      %46 = arith.maximumf %44, %45 : vector<128x512xf32>
      %47 = arith.truncf %46 : vector<128x512xf32> to vector<128x512xbf16>
      %c0_18 = arith.constant 0 : index
      %c0_19 = arith.constant 0 : index
      %48 = vector.load %arg7[%c0_18, %c0_19] : memref<512x128xbf16, #tpu.memory_space<vmem>>, vector<512x128xbf16>
      %cst_20 = arith.constant dense<0.000000e+00> : vector<128x128xf32>
      %49 = tpu.matmul %47, %48, %cst_20 {dimension_numbers = #tpu.dot_dimension_numbers<[1], [0], [0], [1], [0, 0, 1, 1], [], []>} : vector<128x512xbf16>, vector<512x128xbf16>, vector<128x128xf32> -> vector<128x128xf32>
      %c0_21 = arith.constant 0 : index
      %c0_22 = arith.constant 0 : index
      %50 = vector.load %arg8[%c0_21, %c0_22] : memref<1x128xf32, #tpu.memory_space<vmem>>, vector<1x128xf32>
      %51 = vector.broadcast %50 : vector<1x128xf32> to vector<128x128xf32>
      %52 = arith.addf %49, %51 : vector<128x128xf32>
      %53 = arith.index_cast %arg1 : i32 to index
      %c0_23 = arith.constant 0 : index
      %c0_24 = arith.constant 0 : index
      %54 = vector.load %arg15[%53, %c0_23, %c0_24] : memref<2x128x128xf32, #tpu.memory_space<vmem>>, vector<1x128x128xf32>
      %55 = vector.shape_cast %54 : vector<1x128x128xf32> to vector<128x128xf32>
      %56 = vector.shape_cast %52 : vector<128x128xf32> to vector<1x128x128xf32>
      tpu.vector_store %arg15[%53, %c0_23, %c0_24], %56 {strides = array<i32>} : memref<2x128x128xf32, #tpu.memory_space<vmem>>, vector<1x128x128xf32>,
      %57 = vector.broadcast %7 : vector<128x1xf32> to vector<128x128xf32>
      %58 = arith.mulf %52, %57 : vector<128x128xf32>
      %c0_25 = arith.constant 0 : index
      %c0_26 = arith.constant 0 : index
      %59 = vector.load %arg18[%c0_25, %c0_26] : memref<1x128xf32, #tpu.memory_space<vmem>>, vector<1x128xf32>
      %cst_27 = arith.constant dense<0.000000e+00> : vector<128xf32>
      %60 = vector.multi_reduction <add>, %58, %cst_27 [0] : vector<128x128xf32> to vector<128xf32>
      %61 = vector.shape_cast %60 : vector<128xf32> to vector<1x128xf32>
      %62 = arith.addf %59, %61 : vector<1x128xf32>
      %c0_28 = arith.constant 0 : index
      %c0_29 = arith.constant 0 : index
      %63 = vector.load %arg18[%c0_28, %c0_29] : memref<1x128xf32, #tpu.memory_space<vmem>>, vector<1x128xf32>
      tpu.vector_store %arg18[%c0_28, %c0_29], %62 {strides = array<i32>} : memref<1x128xf32, #tpu.memory_space<vmem>>, vector<1x128xf32>,
      %c0_30 = arith.constant 0 : index
      %c0_31 = arith.constant 0 : index
      %64 = vector.load %arg19[%c0_30, %c0_31] : memref<1x128xf32, #tpu.memory_space<vmem>>, vector<1x128xf32>
      %65 = arith.mulf %58, %52 : vector<128x128xf32>
      %cst_32 = arith.constant dense<0.000000e+00> : vector<128xf32>
      %66 = vector.multi_reduction <add>, %65, %cst_32 [0] : vector<128x128xf32> to vector<128xf32>
      %67 = vector.shape_cast %66 : vector<128xf32> to vector<1x128xf32>
      %68 = arith.addf %64, %67 : vector<1x128xf32>
      %c0_33 = arith.constant 0 : index
      %c0_34 = arith.constant 0 : index
      %69 = vector.load %arg19[%c0_33, %c0_34] : memref<1x128xf32, #tpu.memory_space<vmem>>, vector<1x128xf32>
      tpu.vector_store %arg19[%c0_33, %c0_34], %68 {strides = array<i32>} : memref<1x128xf32, #tpu.memory_space<vmem>>, vector<1x128xf32>,
    } else {
    }
    %c2_i32 = arith.constant 2 : i32
    %19 = arith.cmpi eq, %arg0, %c2_i32 : i32
    %20 = arith.extui %19 : i1 to i32
    %c0_i32_5 = arith.constant 0 : i32
    %21 = arith.cmpi ne, %20, %c0_i32_5 : i32
    scf.if %21 {
      %c0 = arith.constant 0 : index
      %c0_6 = arith.constant 0 : index
      %22 = vector.load %arg18[%c0, %c0_6] : memref<1x128xf32, #tpu.memory_space<vmem>>, vector<1x128xf32>
      %cst = arith.constant 5.000000e-03 : f32
      %23 = vector.broadcast %cst : f32 to vector<1x128xf32>
      %24 = arith.mulf %22, %23 : vector<1x128xf32>
      %c0_7 = arith.constant 0 : index
      %c0_8 = arith.constant 0 : index
      %25 = vector.load %arg19[%c0_7, %c0_8] : memref<1x128xf32, #tpu.memory_space<vmem>>, vector<1x128xf32>
      %cst_9 = arith.constant 5.000000e-03 : f32
      %26 = vector.broadcast %cst_9 : f32 to vector<1x128xf32>
      %27 = arith.mulf %25, %26 : vector<1x128xf32>
      %28 = arith.mulf %24, %24 : vector<1x128xf32>
      %29 = arith.subf %27, %28 : vector<1x128xf32>
      %c0_10 = arith.constant 0 : index
      %c0_11 = arith.constant 0 : index
      %30 = vector.load %arg9[%c0_10, %c0_11] : memref<1x128xf32, #tpu.memory_space<vmem>>, vector<1x128xf32>
      %cst_12 = arith.constant 9.99999974E-6 : f32
      %31 = vector.broadcast %cst_12 : f32 to vector<1x128xf32>
      %32 = arith.addf %29, %31 : vector<1x128xf32>
      %33 = math.rsqrt %32 : vector<1x128xf32>
      %34 = arith.mulf %30, %33 : vector<1x128xf32>
      %c0_13 = arith.constant 0 : index
      %c0_14 = arith.constant 0 : index
      %35 = vector.load %arg10[%c0_13, %c0_14] : memref<1x128xf32, #tpu.memory_space<vmem>>, vector<1x128xf32>
      %36 = arith.mulf %34, %24 : vector<1x128xf32>
      %37 = arith.subf %35, %36 : vector<1x128xf32>
      %38 = arith.index_cast %arg1 : i32 to index
      %c0_15 = arith.constant 0 : index
      %c0_16 = arith.constant 0 : index
      %39 = vector.load %arg15[%38, %c0_15, %c0_16] : memref<2x128x128xf32, #tpu.memory_space<vmem>>, vector<1x128x128xf32>
      %40 = vector.shape_cast %39 : vector<1x128x128xf32> to vector<128x128xf32>
      %41 = vector.broadcast %34 : vector<1x128xf32> to vector<128x128xf32>
      %42 = arith.mulf %40, %41 : vector<128x128xf32>
      %43 = vector.broadcast %37 : vector<1x128xf32> to vector<128x128xf32>
      %44 = arith.addf %42, %43 : vector<128x128xf32>
      %cst_17 = arith.constant 0.000000e+00 : f32
      %45 = vector.broadcast %cst_17 : f32 to vector<128x128xf32>
      %46 = arith.maximumf %44, %45 : vector<128x128xf32>
      %c0_18 = arith.constant 0 : index
      %c0_19 = arith.constant 0 : index
      %47 = vector.load %arg11[%c0_18, %c0_19] : memref<1x128xf32, #tpu.memory_space<vmem>>, vector<1x128xf32>
      %48 = vector.broadcast %47 : vector<1x128xf32> to vector<128x128xf32>
      %49 = arith.mulf %46, %48 : vector<128x128xf32>
      %cst_20 = arith.constant dense<0.000000e+00> : vector<128xf32>
      %50 = vector.multi_reduction <add>, %49, %cst_20 [1] : vector<128x128xf32> to vector<128xf32>
      %51 = vector.shape_cast %50 : vector<128xf32> to vector<128x1xf32>
      %c0_21 = arith.constant 0 : index
      %c0_22 = arith.constant 0 : index
      %52 = vector.load %arg12[%c0_21, %c0_22] : memref<1x1xf32, #tpu.memory_space<vmem>>, vector<1x1xf32>
      %53 = vector.broadcast %52 : vector<1x1xf32> to vector<128x1xf32>
      %54 = arith.addf %51, %53 : vector<128x1xf32>
      %55 = vector.shape_cast %54 : vector<128x1xf32> to vector<128x1xf32>
      %56 = vector.broadcast %55 : vector<128x1xf32> to vector<128x128xf32>
      %c0_23 = arith.constant 0 : index
      %c0_24 = arith.constant 0 : index
      %57 = vector.load %arg13[%c0_23, %c0_24] : memref<128x128xf32, #tpu.memory_space<vmem>>, vector<128x128xf32>
      tpu.vector_store %arg13[%c0_23, %c0_24], %56 {strides = array<i32>} : memref<128x128xf32, #tpu.memory_space<vmem>>, vector<128x128xf32>,
    } else {
    }
    return
  }
  func.func @transform_0(%arg0: i32, %arg1: i32) -> (i32, i32) {
    %c0_i32 = arith.constant 0 : i32
    %0 = arith.cmpi eq, %arg0, %c0_i32 : i32
    %c0_i32_0 = arith.constant 0 : i32
    %1 = arith.select %0, %arg1, %c0_i32_0 : i32
    %c0_i32_1 = arith.constant 0 : i32
    %c0_i32_2 = arith.constant 0 : i32
    return %1, %c0_i32_1 : i32, i32
  }
  func.func @transform_1(%arg0: i32, %arg1: i32) -> (i32, i32) {
    %c0_i32 = arith.constant 0 : i32
    %c0_i32_0 = arith.constant 0 : i32
    %c0_i32_1 = arith.constant 0 : i32
    return %c0_i32, %c0_i32_0 : i32, i32
  }
  func.func @transform_2(%arg0: i32, %arg1: i32) -> (i32, i32) {
    %c0_i32 = arith.constant 0 : i32
    %c0_i32_0 = arith.constant 0 : i32
    %c0_i32_1 = arith.constant 0 : i32
    return %c0_i32, %c0_i32_0 : i32, i32
  }
  func.func @transform_3(%arg0: i32, %arg1: i32) -> (i32, i32) {
    %c0_i32 = arith.constant 0 : i32
    %c0_i32_0 = arith.constant 0 : i32
    %c0_i32_1 = arith.constant 0 : i32
    return %c0_i32, %c0_i32_0 : i32, i32
  }
  func.func @transform_4(%arg0: i32, %arg1: i32) -> (i32, i32) {
    %c0_i32 = arith.constant 0 : i32
    %c0_i32_0 = arith.constant 0 : i32
    %c0_i32_1 = arith.constant 0 : i32
    return %c0_i32, %c0_i32_0 : i32, i32
  }
  func.func @transform_5(%arg0: i32, %arg1: i32) -> (i32, i32) {
    %c0_i32 = arith.constant 0 : i32
    %c0_i32_0 = arith.constant 0 : i32
    %c0_i32_1 = arith.constant 0 : i32
    return %c0_i32, %c0_i32_0 : i32, i32
  }
  func.func @transform_6(%arg0: i32, %arg1: i32) -> (i32, i32) {
    %c0_i32 = arith.constant 0 : i32
    %c0_i32_0 = arith.constant 0 : i32
    %c0_i32_1 = arith.constant 0 : i32
    return %c0_i32, %c0_i32_0 : i32, i32
  }
  func.func @transform_7(%arg0: i32, %arg1: i32) -> (i32, i32) {
    %c0_i32 = arith.constant 0 : i32
    %c0_i32_0 = arith.constant 0 : i32
    %c0_i32_1 = arith.constant 0 : i32
    return %c0_i32, %c0_i32_0 : i32, i32
  }
  func.func @transform_8(%arg0: i32, %arg1: i32) -> (i32, i32) {
    %c0_i32 = arith.constant 0 : i32
    %c0_i32_0 = arith.constant 0 : i32
    %c0_i32_1 = arith.constant 0 : i32
    return %c0_i32, %c0_i32_0 : i32, i32
  }
  func.func @transform_9(%arg0: i32, %arg1: i32) -> (i32, i32) {
    %c0_i32 = arith.constant 0 : i32
    %c0_i32_0 = arith.constant 0 : i32
    %c0_i32_1 = arith.constant 0 : i32
    return %c0_i32, %c0_i32_0 : i32, i32
  }
  func.func @transform_10(%arg0: i32, %arg1: i32) -> (i32, i32) {
    %c0_i32 = arith.constant 0 : i32
    %c0_i32_0 = arith.constant 0 : i32
    %c0_i32_1 = arith.constant 0 : i32
    return %c0_i32, %c0_i32_0 : i32, i32
  }
  func.func @transform_11(%arg0: i32, %arg1: i32) -> (i32, i32) {
    %c2_i32 = arith.constant 2 : i32
    %0 = arith.cmpi eq, %arg0, %c2_i32 : i32
    %c0_i32 = arith.constant 0 : i32
    %1 = arith.select %0, %arg1, %c0_i32 : i32
    %c0_i32_0 = arith.constant 0 : i32
    %c0_i32_1 = arith.constant 0 : i32
    return %1, %c0_i32_0 : i32, i32
  }
}

</mosaic_0001>

<llo_original>
// kernel: tpu_custom_call.1
$region0: #{tpu_custom_call.1}
  #allocation0 [shape = 'u32[]', space=smem, size = 0x4, offset = 0x4, fixed_abs, tag = 'smem constant byte address 0x4 - core index']
  #allocation1 [shape = 'u32[72,128]{1,0:T(1,128)}', space=vmem, size = 0x9000, scoped, tag = 'internal scratch']
  #allocation2 [shape = 'f32[2,128,512]{2,1,0:T(8,128)}', space=vmem, size = 0x80000, scoped, tag = 'scratch operand']
  #allocation3 [shape = 'f32[2,128,128]{2,1,0:T(8,128)}', space=vmem, size = 0x20000, scoped, tag = 'scratch operand']
  #allocation4 [shape = 'f32[1,512]{1,0:T(1,128)}', space=vmem, size = 0x800, scoped, tag = 'scratch operand']
  #allocation5 [shape = 'f32[1,512]{1,0:T(1,128)}', space=vmem, size = 0x800, scoped, tag = 'scratch operand']
  #allocation6 [shape = 'f32[1,128]{1,0:T(1,128)}', space=vmem, size = 0x200, scoped, tag = 'scratch operand']
  #allocation7 [shape = 'f32[1,128]{1,0:T(1,128)}', space=vmem, size = 0x200, scoped, tag = 'scratch operand']
  #allocation8 [shape = 'f32[1,1]{1,0:T(1,128)S(1)}', space=vmem, size = 0x200, scoped, tag = 'scoped memory for tpu_custom_call.1']
  %s0 = inlined_call_operand.hbm [shape: bf16[256,1664], index: 0, kind: input, shape index: {}]
  %s1 = inlined_call_operand.hbm [shape: bf16[1664,512], index: 1, kind: input, shape index: {}]
  %s2 = inlined_call_operand.hbm [shape: f32[1,512], index: 2, kind: input, shape index: {}]
  %s3 = inlined_call_operand.hbm [shape: f32[1,512], index: 3, kind: input, shape index: {}]
  %s4 = inlined_call_operand.hbm [shape: f32[1,512], index: 4, kind: input, shape index: {}]
  %s5 = inlined_call_operand.hbm [shape: bf16[512,128], index: 5, kind: input, shape index: {}]
  %s6 = inlined_call_operand.hbm [shape: f32[1,128], index: 6, kind: input, shape index: {}]
  %s7 = inlined_call_operand.hbm [shape: f32[1,128], index: 7, kind: input, shape index: {}]
  %s8 = inlined_call_operand.hbm [shape: f32[1,128], index: 8, kind: input, shape index: {}]
  %s9 = inlined_call_operand.hbm [shape: f32[1,128], index: 9, kind: input, shape index: {}]
  %s10 = inlined_call_operand.<no memory space> [shape: f32[1,1], index: 10, kind: input, shape index: {}]
  %s11 = inlined_call_operand.hbm [shape: f32[256,128], index: 11, kind: output, shape index: {}]
  %s12 = sld [smem:[#allocation0]]
  $region133: #{tpu_custom_call.1} parent=0
    _
  %s14 = ssub.s32 1, %s12
  %s15 = scalar_select 0, %s14, %s12
  %v16 = vstv %s10
  %17 = vst [vmem:[#allocation8] sm:$0x1] %v16
  $region1: #{tpu_custom_call.1} parent=0
    #allocation9 [shape = 'u8[851968]{0}', space=vmem, size = 0xd0000, scoped, tag = 'input window, operand 0']
    #allocation10 [shape = 's32[2]{0}', space=sflag, size = 0x8, scoped, tag = 'scoped memory for tpu_custom_call.1']
    #allocation11 [shape = 's32[2]{0}', space=sflag, size = 0x8, scoped, tag = 'scoped memory for tpu_custom_call.1']
    #allocation12 [shape = 'u8[1703936]{0}', space=vmem, size = 0x1a0000, scoped, tag = 'input window, operand 1, single buffered']
    #allocation13 [shape = 's32[1]{0}', space=sflag, size = 0x4, scoped, tag = 'scoped memory for tpu_custom_call.1']
    #allocation14 [shape = 'u8[2048]{0}', space=vmem, size = 0x800, scoped, tag = 'input window, operand 2, single buffered']
    #allocation15 [shape = 'u8[2048]{0}', space=vmem, size = 0x800, scoped, tag = 'input window, operand 3, single buffered']
    #allocation16 [shape = 's32[1]{0}', space=sflag, size = 0x4, scoped, tag = 'scoped memory for tpu_custom_call.1']
    #allocation17 [shape = 'u8[2048]{0}', space=vmem, size = 0x800, scoped, tag = 'input window, operand 4, single buffered']
    #allocation18 [shape = 'u8[131072]{0}', space=vmem, size = 0x20000, scoped, tag = 'input window, operand 5, single buffered']
    #allocation19 [shape = 's32[1]{0}', space=sflag, size = 0x4, scoped, tag = 'scoped memory for tpu_custom_call.1']
    #allocation20 [shape = 'u8[512]{0}', space=vmem, size = 0x400, scoped, tag = 'input window, operand 6, single buffered']
    #allocation21 [shape = 'u8[512]{0}', space=vmem, size = 0x400, scoped, tag = 'input window, operand 7, single buffered']
    #allocation22 [shape = 's32[1]{0}', space=sflag, size = 0x4, scoped, tag = 'scoped memory for tpu_custom_call.1']
    #allocation23 [shape = 'u8[512]{0}', space=vmem, size = 0x400, scoped, tag = 'input window, operand 8, single buffered']
    #allocation24 [shape = 'u8[512]{0}', space=vmem, size = 0x400, scoped, tag = 'input window, operand 9, single buffered']
    #allocation25 [shape = 's32[1]{0}', space=sflag, size = 0x4, scoped, tag = 'scoped memory for tpu_custom_call.1']
    #allocation26 [shape = 'u8[131072]{0}', space=vmem, size = 0x20000, scoped, tag = 'output window, operand 0']
    %18 = vsyncpa [#allocation10], 0
    %s19 = scalar_lea.sflag [#allocation10], 1
    %20 = vsyncpa %s19, 0
    %21 = vsyncpa [#allocation13], 0
    %22 = vsyncpa [#allocation16], 0
    %23 = vsyncpa [#allocation19], 0
    %24 = vsyncpa [#allocation22], 0
    %25 = vsyncpa [#allocation25], 0
    %26 = vsyncpa [#allocation11], 0
    %s27 = scalar_lea.sflag [#allocation11], 1
    %28 = vsyncpa %s27, 0
    loop: start=0, step=1, limit=8
    $region2: #{tpu_custom_call.1} parent=1 // loop_pre_header
      _
    $region3: #{tpu_custom_call.1} parent=1 // loop_header
      %s30 = sphi 0, %s34
      %p31 = scmp.ge.s32.totalorder %s30, 8
      %s37 = sphi 0, %s49
      %s38 = sphi 0, %s45
      %s39 = sphi 0, %s37
      %s40 = sphi 0, %s38
      %s41 = sphi 0, %s39
      %s42 = sphi 0, %s40
      %s56 = sphi 0, %s58
      %s59 = sphi 0, %s56
      %s60 = sphi 0, %s59
      %s76 = sphi 0, %s60
      %s80 = sphi 0, %s80
      %s82 = sphi 0, %s80
      %s83 = sphi 0, %s82
      %s97 = sphi 0, %s83
      %s101 = sphi 0, %s101
      %s103 = sphi 0, %s101
      %s104 = sphi 0, %s103
      %s118 = sphi 0, %s104
      %s122 = sphi 0, %s122
      %s124 = sphi 0, %s122
      %s125 = sphi 0, %s124
      %s139 = sphi 0, %s125
      %s143 = sphi 0, %s143
      %s145 = sphi 0, %s143
      %s146 = sphi 0, %s145
      %s160 = sphi 0, %s146
      %s164 = sphi 0, %s164
      %s166 = sphi 0, %s164
      %s167 = sphi 0, %s166
      %s181 = sphi 0, %s167
      %s185 = sphi 0, %s185
      %s187 = sphi 0, %s185
      %s188 = sphi 0, %s187
      %s202 = sphi 0, %s188
      %s206 = sphi 0, %s206
      %s208 = sphi 0, %s206
      %s209 = sphi 0, %s208
      %s223 = sphi 0, %s209
      %s227 = sphi 0, %s227
      %s229 = sphi 0, %s227
      %s230 = sphi 0, %s229
      %s244 = sphi 0, %s230
      %s248 = sphi 0, %s248
      %s250 = sphi 0, %s248
      %s251 = sphi 0, %s250
      %s265 = sphi 0, %s251
      %s269 = sphi 0, %s269
      %s271 = sphi 0, %s269
      %s272 = sphi 0, %s271
      %s286 = sphi 0, %s272
      %s296 = sphi 0, %s298
      %s299 = sphi 0, %s296
      %s300 = sphi 0, %s299
      %s316 = sphi 0, %s300
    $region4: #{tpu_custom_call.1} parent=1 // loop_header_branch
      %33 = sbr.rel (%p31) target = $region8
    $region5: #{tpu_custom_call.1} parent=1 // loop_body
      %s35 = ssub.s32 %s30, 1
      %s36 = ssub.s32 %s30, 2
      %s43 = sadd.s32 1, %s38
      %p44 = scmp.ge.s32.totalorder %s43, 2
      %s45 = scalar_select %p44, 0, %s43
      %s46 = sadd.s32 1, %s37
      %s47 = scalar_select %p44, %s46, %s37
      %p48 = scmp.ge.s32.totalorder %s47, 3
      %s49 = scalar_select %p48, 0, %s47
      %p50 = scmp.eq.s32.totalorder %s37, 0
      %s51 = scalar_select %p50, %s38, 0
      %p52 = scmp.eq.s32.totalorder %s49, 0
      %s53 = scalar_select %p52, %s45, 0
      %s54 = ssub.s32 %s51, %s53
      %p55 = scmp.eq.s32.totalorder %s54, 0
      %s57 = sadd.s32 %s56, 1
      %s58 = scalar_select %p55, %s56, %s57
      %p61 = pneg %p55
      %p62 = scmp.eq.s32.totalorder %s30, 5
      %p63 = por %p61, %p62
      %p64 = scmp.ne.s32.totalorder %s56, %s59
      %p65 = scmp.eq.s32.totalorder %s30, 0
      %p66 = por %p64, %p65
      %p67 = scmp.ne.s32.totalorder %s56, %s59
      %p68 = scmp.eq.s32.totalorder %s35, 5
      %p69 = por %p67, %p68
      %p70 = scmp.ne.s32.totalorder %s59, %s60
      %p71 = scmp.eq.s32.totalorder %s35, 0
      %p72 = por %p70, %p71
      %p73 = scmp.ne.s32.totalorder %s59, %s60
      %p74 = scmp.eq.s32.totalorder %s36, 5
      %p75 = por %p73, %p74
      %p77 = scmp.ne.s32.totalorder %s60, %s76
      %p78 = scmp.eq.s32.totalorder %s36, 0
      %p79 = por %p77, %p78
      %s81 = sadd.s32 %s80, 1
      %p84 = scmp.eq.s32.totalorder %s30, 5
      %p85 = scmp.ne.s32.totalorder %s80, %s82
      %p86 = scmp.eq.s32.totalorder %s30, 0
      %p87 = por %p85, %p86
      %p88 = scmp.ne.s32.totalorder %s80, %s82
      %p89 = scmp.eq.s32.totalorder %s35, 5
      %p90 = por %p88, %p89
      %p91 = scmp.ne.s32.totalorder %s82, %s83
      %p92 = scmp.eq.s32.totalorder %s35, 0
      %p93 = por %p91, %p92
      %p94 = scmp.ne.s32.totalorder %s82, %s83
      %p95 = scmp.eq.s32.totalorder %s36, 5
      %p96 = por %p94, %p95
      %p98 = scmp.ne.s32.totalorder %s83, %s97
      %p99 = scmp.eq.s32.totalorder %s36, 0
      %p100 = por %p98, %p99
      %s102 = sadd.s32 %s101, 1
      %p105 = scmp.eq.s32.totalorder %s30, 5
      %p106 = scmp.ne.s32.totalorder %s101, %s103
      %p107 = scmp.eq.s32.totalorder %s30, 0
      %p108 = por %p106, %p107
      %p109 = scmp.ne.s32.totalorder %s101, %s103
      %p110 = scmp.eq.s32.totalorder %s35, 5
      %p111 = por %p109, %p110
      %p112 = scmp.ne.s32.totalorder %s103, %s104
      %p113 = scmp.eq.s32.totalorder %s35, 0
      %p114 = por %p112, %p113
      %p115 = scmp.ne.s32.totalorder %s103, %s104
      %p116 = scmp.eq.s32.totalorder %s36, 5
      %p117 = por %p115, %p116
      %p119 = scmp.ne.s32.totalorder %s104, %s118
      %p120 = scmp.eq.s32.totalorder %s36, 0
      %p121 = por %p119, %p120
      %s123 = sadd.s32 %s122, 1
      %p126 = scmp.eq.s32.totalorder %s30, 5
      %p127 = scmp.ne.s32.totalorder %s122, %s124
      %p128 = scmp.eq.s32.totalorder %s30, 0
      %p129 = por %p127, %p128
      %p130 = scmp.ne.s32.totalorder %s122, %s124
      %p131 = scmp.eq.s32.totalorder %s35, 5
      %p132 = por %p130, %p131
      %p133 = scmp.ne.s32.totalorder %s124, %s125
      %p134 = scmp.eq.s32.totalorder %s35, 0
      %p135 = por %p133, %p134
      %p136 = scmp.ne.s32.totalorder %s124, %s125
      %p137 = scmp.eq.s32.totalorder %s36, 5
      %p138 = por %p136, %p137
      %p140 = scmp.ne.s32.totalorder %s125, %s139
      %p141 = scmp.eq.s32.totalorder %s36, 0
      %p142 = por %p140, %p141
      %s144 = sadd.s32 %s143, 1
      %p147 = scmp.eq.s32.totalorder %s30, 5
      %p148 = scmp.ne.s32.totalorder %s143, %s145
      %p149 = scmp.eq.s32.totalorder %s30, 0
      %p150 = por %p148, %p149
      %p151 = scmp.ne.s32.totalorder %s143, %s145
      %p152 = scmp.eq.s32.totalorder %s35, 5
      %p153 = por %p151, %p152
      %p154 = scmp.ne.s32.totalorder %s145, %s146
      %p155 = scmp.eq.s32.totalorder %s35, 0
      %p156 = por %p154, %p155
      %p157 = scmp.ne.s32.totalorder %s145, %s146
      %p158 = scmp.eq.s32.totalorder %s36, 5
      %p159 = por %p157, %p158
      %p161 = scmp.ne.s32.totalorder %s146, %s160
      %p162 = scmp.eq.s32.totalorder %s36, 0
      %p163 = por %p161, %p162
      %s165 = sadd.s32 %s164, 1
      %p168 = scmp.eq.s32.totalorder %s30, 5
      %p169 = scmp.ne.s32.totalorder %s164, %s166
      %p170 = scmp.eq.s32.totalorder %s30, 0
      %p171 = por %p169, %p170
      %p172 = scmp.ne.s32.totalorder %s164, %s166
      %p173 = scmp.eq.s32.totalorder %s35, 5
      %p174 = por %p172, %p173
      %p175 = scmp.ne.s32.totalorder %s166, %s167
      %p176 = scmp.eq.s32.totalorder %s35, 0
      %p177 = por %p175, %p176
      %p178 = scmp.ne.s32.totalorder %s166, %s167
      %p179 = scmp.eq.s32.totalorder %s36, 5
      %p180 = por %p178, %p179
      %p182 = scmp.ne.s32.totalorder %s167, %s181
      %p183 = scmp.eq.s32.totalorder %s36, 0
      %p184 = por %p182, %p183
      %s186 = sadd.s32 %s185, 1
      %p189 = scmp.eq.s32.totalorder %s30, 5
      %p190 = scmp.ne.s32.totalorder %s185, %s187
      %p191 = scmp.eq.s32.totalorder %s30, 0
      %p192 = por %p190, %p191
      %p193 = scmp.ne.s32.totalorder %s185, %s187
      %p194 = scmp.eq.s32.totalorder %s35, 5
      %p195 = por %p193, %p194
      %p196 = scmp.ne.s32.totalorder %s187, %s188
      %p197 = scmp.eq.s32.totalorder %s35, 0
      %p198 = por %p196, %p197
      %p199 = scmp.ne.s32.totalorder %s187, %s188
      %p200 = scmp.eq.s32.totalorder %s36, 5
      %p201 = por %p199, %p200
      %p203 = scmp.ne.s32.totalorder %s188, %s202
      %p204 = scmp.eq.s32.totalorder %s36, 0
      %p205 = por %p203, %p204
      %s207 = sadd.s32 %s206, 1
      %p210 = scmp.eq.s32.totalorder %s30, 5
      %p211 = scmp.ne.s32.totalorder %s206, %s208
      %p212 = scmp.eq.s32.totalorder %s30, 0
      %p213 = por %p211, %p212
      %p214 = scmp.ne.s32.totalorder %s206, %s208
      %p215 = scmp.eq.s32.totalorder %s35, 5
      %p216 = por %p214, %p215
      %p217 = scmp.ne.s32.totalorder %s208, %s209
      %p218 = scmp.eq.s32.totalorder %s35, 0
      %p219 = por %p217, %p218
      %p220 = scmp.ne.s32.totalorder %s208, %s209
      %p221 = scmp.eq.s32.totalorder %s36, 5
      %p222 = por %p220, %p221
      %p224 = scmp.ne.s32.totalorder %s209, %s223
      %p225 = scmp.eq.s32.totalorder %s36, 0
      %p226 = por %p224, %p225
      %s228 = sadd.s32 %s227, 1
      %p231 = scmp.eq.s32.totalorder %s30, 5
      %p232 = scmp.ne.s32.totalorder %s227, %s229
      %p233 = scmp.eq.s32.totalorder %s30, 0
      %p234 = por %p232, %p233
      %p235 = scmp.ne.s32.totalorder %s227, %s229
      %p236 = scmp.eq.s32.totalorder %s35, 5
      %p237 = por %p235, %p236
      %p238 = scmp.ne.s32.totalorder %s229, %s230
      %p239 = scmp.eq.s32.totalorder %s35, 0
      %p240 = por %p238, %p239
      %p241 = scmp.ne.s32.totalorder %s229, %s230
      %p242 = scmp.eq.s32.totalorder %s36, 5
      %p243 = por %p241, %p242
      %p245 = scmp.ne.s32.totalorder %s230, %s244
      %p246 = scmp.eq.s32.totalorder %s36, 0
      %p247 = por %p245, %p246
      %s249 = sadd.s32 %s248, 1
      %p252 = scmp.eq.s32.totalorder %s30, 5
      %p253 = scmp.ne.s32.totalorder %s248, %s250
      %p254 = scmp.eq.s32.totalorder %s30, 0
      %p255 = por %p253, %p254
      %p256 = scmp.ne.s32.totalorder %s248, %s250
      %p257 = scmp.eq.s32.totalorder %s35, 5
      %p258 = por %p256, %p257
      %p259 = scmp.ne.s32.totalorder %s250, %s251
      %p260 = scmp.eq.s32.totalorder %s35, 0
      %p261 = por %p259, %p260
      %p262 = scmp.ne.s32.totalorder %s250, %s251
      %p263 = scmp.eq.s32.totalorder %s36, 5
      %p264 = por %p262, %p263
      %p266 = scmp.ne.s32.totalorder %s251, %s265
      %p267 = scmp.eq.s32.totalorder %s36, 0
      %p268 = por %p266, %p267
      %s270 = sadd.s32 %s269, 1
      %p273 = scmp.eq.s32.totalorder %s30, 5
      %p274 = scmp.ne.s32.totalorder %s269, %s271
      %p275 = scmp.eq.s32.totalorder %s30, 0
      %p276 = por %p274, %p275
      %p277 = scmp.ne.s32.totalorder %s269, %s271
      %p278 = scmp.eq.s32.totalorder %s35, 5
      %p279 = por %p277, %p278
      %p280 = scmp.ne.s32.totalorder %s271, %s272
      %p281 = scmp.eq.s32.totalorder %s35, 0
      %p282 = por %p280, %p281
      %p283 = scmp.ne.s32.totalorder %s271, %s272
      %p284 = scmp.eq.s32.totalorder %s36, 5
      %p285 = por %p283, %p284
      %p287 = scmp.ne.s32.totalorder %s272, %s286
      %p288 = scmp.eq.s32.totalorder %s36, 0
      %p289 = por %p287, %p288
      %p290 = scmp.eq.s32.totalorder %s37, 2
      %s291 = scalar_select %p290, %s38, 0
      %p292 = scmp.eq.s32.totalorder %s49, 2
      %s293 = scalar_select %p292, %s45, 0
      %s294 = ssub.s32 %s291, %s293
      %p295 = scmp.eq.s32.totalorder %s294, 0
      %s297 = sadd.s32 %s296, 1
      %s298 = scalar_select %p295, %s296, %s297
      %p301 = pneg %p295
      %p302 = scmp.eq.s32.totalorder %s30, 5
      %p303 = por %p301, %p302
      %p304 = scmp.ne.s32.totalorder %s296, %s299
      %p305 = scmp.eq.s32.totalorder %s30, 0
      %p306 = por %p304, %p305
      %p307 = scmp.ne.s32.totalorder %s296, %s299
      %p308 = scmp.eq.s32.totalorder %s35, 5
      %p309 = por %p307, %p308
      %p310 = scmp.ne.s32.totalorder %s299, %s300
      %p311 = scmp.eq.s32.totalorder %s35, 0
      %p312 = por %p310, %p311
      %p313 = scmp.ne.s32.totalorder %s299, %s300
      %p314 = scmp.eq.s32.totalorder %s36, 5
      %p315 = por %p313, %p314
      %p317 = scmp.ne.s32.totalorder %s300, %s316
      %p318 = scmp.eq.s32.totalorder %s36, 0
      %p319 = por %p317, %p318
      %p320 = scmp.le.s32.totalorder 1, %s30
      %p321 = scmp.lt.s32.totalorder %s30, 7
      %p322 = pnand %p320, %p321
      %p323 = pneg %p322
      // Predicated region
      $region9: #{tpu_custom_call.1} parent=5 // pred_check
        _
      $region10: #{tpu_custom_call.1} parent=5 // pred_check_branch
        %325 = sbr.rel (%p322) target = $region12
      $region11: #{tpu_custom_call.1} parent=5 // pred_region
        %s326 = ssub.s32 %s30, 1
        // Predicated region
        $region13: #{tpu_custom_call.1} parent=11 // pred_check
          %p327 = pneg %p93
        $region14: #{tpu_custom_call.1} parent=11 // pred_check_branch
          %329 = sbr.rel (%p327) target = $region16
        $region15: #{tpu_custom_call.1} parent=11 // pred_region
          %331 = vsyncadd [#allocation13], 0
          %s332 = sshll.u32 %s1, 4
          %s333 = int_to_ptr.hbm [resolvable:$true] %s332
          %s334 = sshll.u32 [#allocation12], 4
          %s335 = int_to_ptr.vmem [resolvable:$true] %s334
          %340 = dma.hbm_to_vmem [thread:$0]  %s333, 53248, %s335, [#allocation13], 256, 256, 16
        $region16: #{tpu_custom_call.1} parent=11 // pred_fallthru
          _
        // Predicated region
        $region17: #{tpu_custom_call.1} parent=11 // pred_check
          %p341 = pneg %p114
        $region18: #{tpu_custom_call.1} parent=11 // pred_check_branch
          %343 = sbr.rel (%p341) target = $region20
        $region19: #{tpu_custom_call.1} parent=11 // pred_region
          %345 = vsyncadd [#allocation13], 0
          %s347 = sshll.u32 %s2, 4
          %s348 = int_to_ptr.hbm [resolvable:$true] %s347
          %s349 = sshll.u32 [#allocation14], 4
          %s350 = int_to_ptr.vmem [resolvable:$true] %s349
          %352 = dma.hbm_to_vmem [thread:$0]  %s348, 64, %s350, [#allocation13]
        $region20: #{tpu_custom_call.1} parent=11 // pred_fallthru
          _
        // Predicated region
        $region21: #{tpu_custom_call.1} parent=11 // pred_check
          %p353 = pneg %p135
        $region22: #{tpu_custom_call.1} parent=11 // pred_check_branch
          %355 = sbr.rel (%p353) target = $region24
        $region23: #{tpu_custom_call.1} parent=11 // pred_region
          %357 = vsyncadd [#allocation16], 0
          %s359 = sshll.u32 %s3, 4
          %s360 = int_to_ptr.hbm [resolvable:$true] %s359
          %s361 = sshll.u32 [#allocation15], 4
          %s362 = int_to_ptr.vmem [resolvable:$true] %s361
          %364 = dma.hbm_to_vmem [thread:$0]  %s360, 64, %s362, [#allocation16]
        $region24: #{tpu_custom_call.1} parent=11 // pred_fallthru
          _
        // Predicated region
        $region25: #{tpu_custom_call.1} parent=11 // pred_check
          %p365 = pneg %p156
        $region26: #{tpu_custom_call.1} parent=11 // pred_check_branch
          %367 = sbr.rel (%p365) target = $region28
        $region27: #{tpu_custom_call.1} parent=11 // pred_region
          %369 = vsyncadd [#allocation16], 0
          %s371 = sshll.u32 %s4, 4
          %s372 = int_to_ptr.hbm [resolvable:$true] %s371
          %s373 = sshll.u32 [#allocation17], 4
          %s374 = int_to_ptr.vmem [resolvable:$true] %s373
          %376 = dma.hbm_to_vmem [thread:$0]  %s372, 64, %s374, [#allocation16]
        $region28: #{tpu_custom_call.1} parent=11 // pred_fallthru
          _
        // Predicated region
        $region29: #{tpu_custom_call.1} parent=11 // pred_check
          %p377 = pneg %p177
        $region30: #{tpu_custom_call.1} parent=11 // pred_check_branch
          %379 = sbr.rel (%p377) target = $region32
        $region31: #{tpu_custom_call.1} parent=11 // pred_region
          %381 = vsyncadd [#allocation19], 0
          %s382 = sshll.u32 %s5, 4
          %s383 = int_to_ptr.hbm [resolvable:$true] %s382
          %s384 = sshll.u32 [#allocation18], 4
          %s385 = int_to_ptr.vmem [resolvable:$true] %s384
          %390 = dma.hbm_to_vmem [thread:$0]  %s383, 4096, %s385, [#allocation19], 64, 64, 4
        $region32: #{tpu_custom_call.1} parent=11 // pred_fallthru
          _
        // Predicated region
        $region33: #{tpu_custom_call.1} parent=11 // pred_check
          %p391 = pneg %p198
        $region34: #{tpu_custom_call.1} parent=11 // pred_check_branch
          %393 = sbr.rel (%p391) target = $region36
        $region35: #{tpu_custom_call.1} parent=11 // pred_region
          %395 = vsyncadd [#allocation19], 0
          %s397 = sshll.u32 %s6, 4
          %s398 = int_to_ptr.hbm [resolvable:$true] %s397
          %s399 = sshll.u32 [#allocation20], 4
          %s400 = int_to_ptr.vmem [resolvable:$true] %s399
          %402 = dma.hbm_to_vmem [thread:$0]  %s398, 16, %s400, [#allocation19]
        $region36: #{tpu_custom_call.1} parent=11 // pred_fallthru
          _
        // Predicated region
        $region37: #{tpu_custom_call.1} parent=11 // pred_check
          %p403 = pneg %p219
        $region38: #{tpu_custom_call.1} parent=11 // pred_check_branch
          %405 = sbr.rel (%p403) target = $region40
        $region39: #{tpu_custom_call.1} parent=11 // pred_region
          %407 = vsyncadd [#allocation22], 0
          %s409 = sshll.u32 %s7, 4
          %s410 = int_to_ptr.hbm [resolvable:$true] %s409
          %s411 = sshll.u32 [#allocation21], 4
          %s412 = int_to_ptr.vmem [resolvable:$true] %s411
          %414 = dma.hbm_to_vmem [thread:$0]  %s410, 16, %s412, [#allocation22]
        $region40: #{tpu_custom_call.1} parent=11 // pred_fallthru
          _
        // Predicated region
        $region41: #{tpu_custom_call.1} parent=11 // pred_check
          %p415 = pneg %p240
        $region42: #{tpu_custom_call.1} parent=11 // pred_check_branch
          %417 = sbr.rel (%p415) target = $region44
        $region43: #{tpu_custom_call.1} parent=11 // pred_region
          %419 = vsyncadd [#allocation22], 0
          %s421 = sshll.u32 %s8, 4
          %s422 = int_to_ptr.hbm [resolvable:$true] %s421
          %s423 = sshll.u32 [#allocation23], 4
          %s424 = int_to_ptr.vmem [resolvable:$true] %s423
          %426 = dma.hbm_to_vmem [thread:$0]  %s422, 16, %s424, [#allocation22]
        $region44: #{tpu_custom_call.1} parent=11 // pred_fallthru
          _
        // Predicated region
        $region45: #{tpu_custom_call.1} parent=11 // pred_check
          %p427 = pneg %p261
        $region46: #{tpu_custom_call.1} parent=11 // pred_check_branch
          %429 = sbr.rel (%p427) target = $region48
        $region47: #{tpu_custom_call.1} parent=11 // pred_region
          %431 = vsyncadd [#allocation25], 0
          %s433 = sshll.u32 %s9, 4
          %s434 = int_to_ptr.hbm [resolvable:$true] %s433
          %s435 = sshll.u32 [#allocation24], 4
          %s436 = int_to_ptr.vmem [resolvable:$true] %s435
          %438 = dma.hbm_to_vmem [thread:$0]  %s434, 16, %s436, [#allocation25]
        $region48: #{tpu_custom_call.1} parent=11 // pred_fallthru
          _
        // Predicated region
        $region49: #{tpu_custom_call.1} parent=11 // pred_check
          %p439 = pneg %p282
        $region50: #{tpu_custom_call.1} parent=11 // pred_check_branch
          %441 = sbr.rel (%p439) target = $region52
        $region51: #{tpu_custom_call.1} parent=11 // pred_region
          _
        $region52: #{tpu_custom_call.1} parent=11 // pred_fallthru
          _
      $region12: #{tpu_custom_call.1} parent=5 // pred_fallthru
        _
      %p442 = scmp.lt.s32.totalorder %s30, 6
      // Predicated region
      $region53: #{tpu_custom_call.1} parent=5 // pred_check
        %p443 = pneg %p442
      $region54: #{tpu_custom_call.1} parent=5 // pred_check_branch
        %445 = sbr.rel (%p443) target = $region56
      $region55: #{tpu_custom_call.1} parent=5 // pred_region
        // Predicated region
        $region57: #{tpu_custom_call.1} parent=55 // pred_check
          %p446 = pneg %p66
        $region58: #{tpu_custom_call.1} parent=55 // pred_check_branch
          %448 = sbr.rel (%p446) target = $region60
        $region59: #{tpu_custom_call.1} parent=55 // pred_region
          %s449 = sand.u32 %s56, 1
          %s450 = scalar_lea.sflag [#allocation10], %s449
          %s451 = sand.u32 %s56, 1
          %s452 = smul.addr %s451, 832
          %s453 = scalar_lea.vmem [#allocation9], %s452
          %p454 = scmp.eq.s32.totalorder %s37, 0
          %s455 = scalar_select %p454, %s38, 0
          %s456 = smul.u32 16, %s455
          %458 = vsyncadd %s450, 0
          %s459 = smul.addr %s456, 13
          %s460 = smul.addr %s459, 4
          %s461 = scalar_lea.hbm %s0, %s460
          %s462 = sshll.u32 %s461, 4
          %s463 = int_to_ptr.hbm [resolvable:$true] %s462
          %s464 = sshll.u32 %s453, 4
          %s465 = int_to_ptr.vmem [resolvable:$true] %s464
          %470 = dma.hbm_to_vmem [thread:$0]  %s463, 13312, %s465, %s450, 832, 832, 52
        $region60: #{tpu_custom_call.1} parent=55 // pred_fallthru
          _
      $region56: #{tpu_custom_call.1} parent=5 // pred_fallthru
        _
      %p471 = scmp.le.s32.totalorder 1, %s30
      %p472 = scmp.lt.s32.totalorder %s30, 7
      %p473 = pnand %p471, %p472
      %p474 = pneg %p473
      // Predicated region
      $region61: #{tpu_custom_call.1} parent=5 // pred_check
        _
      $region62: #{tpu_custom_call.1} parent=5 // pred_check_branch
        %476 = sbr.rel (%p473) target = $region64
      $region63: #{tpu_custom_call.1} parent=5 // pred_region
        %s477 = ssub.s32 %s30, 1
        %s478 = sand.u32 %s59, 1
        %s479 = scalar_lea.sflag [#allocation10], %s478
        %s480 = sand.u32 %s59, 1
        %s481 = smul.addr %s480, 832
        %s482 = scalar_lea.vmem [#allocation9], %s481
        // Predicated region
        $region65: #{tpu_custom_call.1} parent=63 // pred_check
          %p483 = pneg %p72
        $region66: #{tpu_custom_call.1} parent=63 // pred_check_branch
          %485 = sbr.rel (%p483) target = $region68
        $region67: #{tpu_custom_call.1} parent=63 // pred_region
          %487 = dma.done %s479, 13312
        $region68: #{tpu_custom_call.1} parent=63 // pred_fallthru
          _
        // Predicated region
        $region69: #{tpu_custom_call.1} parent=63 // pred_check
          %p488 = pneg %p93
        $region70: #{tpu_custom_call.1} parent=63 // pred_check_branch
          %490 = sbr.rel (%p488) target = $region72
        $region71: #{tpu_custom_call.1} parent=63 // pred_region
          %492 = dma.done [#allocation13], 53248
        $region72: #{tpu_custom_call.1} parent=63 // pred_fallthru
          _
        // Predicated region
        $region73: #{tpu_custom_call.1} parent=63 // pred_check
          %p493 = pneg %p114
        $region74: #{tpu_custom_call.1} parent=63 // pred_check_branch
          %495 = sbr.rel (%p493) target = $region76
        $region75: #{tpu_custom_call.1} parent=63 // pred_region
          %497 = dma.done [#allocation13], 64
        $region76: #{tpu_custom_call.1} parent=63 // pred_fallthru
          _
        // Predicated region
        $region77: #{tpu_custom_call.1} parent=63 // pred_check
          %p498 = pneg %p135
        $region78: #{tpu_custom_call.1} parent=63 // pred_check_branch
          %500 = sbr.rel (%p498) target = $region80
        $region79: #{tpu_custom_call.1} parent=63 // pred_region
          %502 = dma.done [#allocation16], 64
        $region80: #{tpu_custom_call.1} parent=63 // pred_fallthru
          _
        // Predicated region
        $region81: #{tpu_custom_call.1} parent=63 // pred_check
          %p503 = pneg %p156
        $region82: #{tpu_custom_call.1} parent=63 // pred_check_branch
          %505 = sbr.rel (%p503) target = $region84
        $region83: #{tpu_custom_call.1} parent=63 // pred_region
          %507 = dma.done [#allocation16], 64
        $region84: #{tpu_custom_call.1} parent=63 // pred_fallthru
          _
        // Predicated region
        $region85: #{tpu_custom_call.1} parent=63 // pred_check
          %p508 = pneg %p177
        $region86: #{tpu_custom_call.1} parent=63 // pred_check_branch
          %510 = sbr.rel (%p508) target = $region88
        $region87: #{tpu_custom_call.1} parent=63 // pred_region
          %512 = dma.done [#allocation19], 4096
        $region88: #{tpu_custom_call.1} parent=63 // pred_fallthru
          _
        // Predicated region
        $region89: #{tpu_custom_call.1} parent=63 // pred_check
          %p513 = pneg %p198
        $region90: #{tpu_custom_call.1} parent=63 // pred_check_branch
          %515 = sbr.rel (%p513) target = $region92
        $region91: #{tpu_custom_call.1} parent=63 // pred_region
          %517 = dma.done [#allocation19], 16
        $region92: #{tpu_custom_call.1} parent=63 // pred_fallthru
          _
        // Predicated region
        $region93: #{tpu_custom_call.1} parent=63 // pred_check
          %p518 = pneg %p219
        $region94: #{tpu_custom_call.1} parent=63 // pred_check_branch
          %520 = sbr.rel (%p518) target = $region96
        $region95: #{tpu_custom_call.1} parent=63 // pred_region
          %522 = dma.done [#allocation22], 16
        $region96: #{tpu_custom_call.1} parent=63 // pred_fallthru
          _
        // Predicated region
        $region97: #{tpu_custom_call.1} parent=63 // pred_check
          %p523 = pneg %p240
        $region98: #{tpu_custom_call.1} parent=63 // pred_check_branch
          %525 = sbr.rel (%p523) target = $region100
        $region99: #{tpu_custom_call.1} parent=63 // pred_region
          %527 = dma.done [#allocation22], 16
        $region100: #{tpu_custom_call.1} parent=63 // pred_fallthru
          _
        // Predicated region
        $region101: #{tpu_custom_call.1} parent=63 // pred_check
          %p528 = pneg %p261
        $region102: #{tpu_custom_call.1} parent=63 // pred_check_branch
          %530 = sbr.rel (%p528) target = $region104
        $region103: #{tpu_custom_call.1} parent=63 // pred_region
          %532 = dma.done [#allocation25], 16
        $region104: #{tpu_custom_call.1} parent=63 // pred_fallthru
          _
        %s533 = sand.u32 %s59, 1
        %s534 = scalar_lea.sflag [#allocation10], %s533
        %s535 = sand.u32 %s59, 1
        %s536 = smul.addr %s535, 832
        %s537 = scalar_lea.vmem [#allocation9], %s536
        %p538 = pneg %p72
        %p539 = pneg %p69
        %p540 = pneg %p93
        %p541 = pneg %p90
        %p542 = pneg %p114
        %p543 = pneg %p111
        %p544 = pneg %p135
        %p545 = pneg %p132
        %p546 = pneg %p156
        %p547 = pneg %p153
        %p548 = pneg %p177
        %p549 = pneg %p174
        %p550 = pneg %p198
        %p551 = pneg %p195
        %p552 = pneg %p219
        %p553 = pneg %p216
        %p554 = pneg %p240
        %p555 = pneg %p237
        %p556 = pneg %p261
        %p557 = pneg %p258
        %p558 = pneg %p282
        %p559 = pneg %p279
        %p560 = pneg %p312
        %p561 = pneg %p309
        %s562 = sand.u32 %s299, 1
        %s563 = scalar_lea.sflag [#allocation11], %s562
        %s564 = sand.u32 %s299, 1
        %s565 = smul.addr %s564, 128
        %s566 = scalar_lea.vmem [#allocation26], %s565
        %p567 = scmp.eq.s32.totalorder %s39, 0
        %s568 = scalar_select %p567, %s40, 0
        %s569 = smul.u32 16, %s568
        %p570 = scmp.eq.s32.totalorder %s39, 2
        %s571 = scalar_select %p570, %s40, 0
        %s572 = smul.u32 16, %s571
        %v573 = vlaneseq
        %v574 = vshrl.u32 %v573, 7
        %v575 = vadd.s32 %v574, 8
        %v576 = vadd.s32 %v574, 16
        %v577 = vadd.s32 %v574, 24
        %v578 = vadd.s32 %v574, 32
        %v579 = vadd.s32 %v574, 40
        %v580 = vadd.s32 %v574, 48
        %v581 = vadd.s32 %v574, 56
        %v582 = vadd.s32 %v574, 64
        %v583 = vadd.s32 %v574, 72
        %v584 = vadd.s32 %v574, 80
        %v585 = vadd.s32 %v574, 88
        %v586 = vadd.s32 %v574, 96
        %v587 = vadd.s32 %v574, 104
        %v588 = vadd.s32 %v574, 112
        %v589 = vadd.s32 %v574, 120
        %s590 = smul.u32 %s40, 128
        %v591 = vstv %s590
        %v592 = vadd.s32 %v574, %v591
        %v593 = vadd.s32 %v575, %v591
        %v594 = vadd.s32 %v576, %v591
        %v595 = vadd.s32 %v577, %v591
        %v596 = vadd.s32 %v578, %v591
        %v597 = vadd.s32 %v579, %v591
        %v598 = vadd.s32 %v580, %v591
        %v599 = vadd.s32 %v581, %v591
        %v600 = vadd.s32 %v582, %v591
        %v601 = vadd.s32 %v583, %v591
        %v602 = vadd.s32 %v584, %v591
        %v603 = vadd.s32 %v585, %v591
        %v604 = vadd.s32 %v586, %v591
        %v605 = vadd.s32 %v587, %v591
        %v606 = vadd.s32 %v588, %v591
        %v607 = vadd.s32 %v589, %v591
        %vm608 = vcmp.lt.s32.totalorder %v592, 200
        %vm609 = vcmp.lt.s32.totalorder %v593, 200
        %vm610 = vcmp.lt.s32.totalorder %v594, 200
        %vm611 = vcmp.lt.s32.totalorder %v595, 200
        %vm612 = vcmp.lt.s32.totalorder %v596, 200
        %vm613 = vcmp.lt.s32.totalorder %v597, 200
        %vm614 = vcmp.lt.s32.totalorder %v598, 200
        %vm615 = vcmp.lt.s32.totalorder %v599, 200
        %vm616 = vcmp.lt.s32.totalorder %v600, 200
        %vm617 = vcmp.lt.s32.totalorder %v601, 200
        %vm618 = vcmp.lt.s32.totalorder %v602, 200
        %vm619 = vcmp.lt.s32.totalorder %v603, 200
        %vm620 = vcmp.lt.s32.totalorder %v604, 200
        %vm621 = vcmp.lt.s32.totalorder %v605, 200
        %vm622 = vcmp.lt.s32.totalorder %v606, 200
        %vm623 = vcmp.lt.s32.totalorder %v607, 200
        %v624 = vsel %vm608, 1, 0
        %v625 = vsel %vm609, 1, 0
        %v626 = vsel %vm610, 1, 0
        %v627 = vsel %vm611, 1, 0
        %v628 = vsel %vm612, 1, 0
        %v629 = vsel %vm613, 1, 0
        %v630 = vsel %vm614, 1, 0
        %v631 = vsel %vm615, 1, 0
        %v632 = vsel %vm616, 1, 0
        %v633 = vsel %vm617, 1, 0
        %v634 = vsel %vm618, 1, 0
        %v635 = vsel %vm619, 1, 0
        %v636 = vsel %vm620, 1, 0
        %v637 = vsel %vm621, 1, 0
        %v638 = vsel %vm622, 1, 0
        %v639 = vsel %vm623, 1, 0
        %v640 = vcvt.s32.f32 %v624
        %v641 = vcvt.s32.f32 %v625
        %v642 = vcvt.s32.f32 %v626
        %v643 = vcvt.s32.f32 %v627
        %v644 = vcvt.s32.f32 %v628
        %v645 = vcvt.s32.f32 %v629
        %v646 = vcvt.s32.f32 %v630
        %v647 = vcvt.s32.f32 %v631
        %v648 = vcvt.s32.f32 %v632
        %v649 = vcvt.s32.f32 %v633
        %v650 = vcvt.s32.f32 %v634
        %v651 = vcvt.s32.f32 %v635
        %v652 = vcvt.s32.f32 %v636
        %v653 = vcvt.s32.f32 %v637
        %v654 = vcvt.s32.f32 %v638
        %v655 = vcvt.s32.f32 %v639
        %p656 = scmp.eq.s32.totalorder %s39, 0
        %p657 = scmp.eq.s32.totalorder %s40, 0
        %p658 = pnand %p656, %p657
        %p659 = pneg %p658
        // Predicated region
        $region105: #{tpu_custom_call.1} parent=63 // pred_check
          _
        $region106: #{tpu_custom_call.1} parent=63 // pred_check_branch
          %661 = sbr.rel (%p658) target = $region108
        $region107: #{tpu_custom_call.1} parent=63 // pred_region
          %v662 = vlaneseq
          %vm663 = vcmp.ge.s32.totalorder %v662, 0
          %vm664 = vcmp.lt.s32.totalorder %v662, 512
          %vm665 = vmand %vm663, %vm664
          %666 = vst.msk [vmem:[#allocation4] sm:$0xf] %vm665, 0.0
          %667 = vst.msk [vmem:[#allocation5] sm:$0xf] %vm665, 0.0
          %668 = vst [vmem:[#allocation6] sm:$0x1] 0.0
          %669 = vst [vmem:[#allocation7] sm:$0x1] 0.0
        $region108: #{tpu_custom_call.1} parent=63 // pred_fallthru
          _
        // Predicated region
        $region109: #{tpu_custom_call.1} parent=63 // pred_check
          %p670 = pneg %p656
        $region110: #{tpu_custom_call.1} parent=63 // pred_check_branch
          %672 = sbr.rel (%p670) target = $region112
        $region111: #{tpu_custom_call.1} parent=63 // pred_region
          %v673 = vld [vmem:[%s482] sm:$0xff]
          %v674 = vld [vmem:[%s482 + $0x8] sm:$0xff]
          %v675 = vld [vmem:[%s482 + $0x10] sm:$0xff]
          %v676 = vld [vmem:[%s482 + $0x18] sm:$0xff]
          %v677 = vld [vmem:[%s482 + $0x20] sm:$0xff]
          %v678 = vld [vmem:[%s482 + $0x28] sm:$0xff]
          %v679 = vld [vmem:[%s482 + $0x30] sm:$0xf]
          %v680 = vld [vmem:[%s482 + $0x34] sm:$0xff]
          %v681 = vld [vmem:[%s482 + $0x3c] sm:$0xff]
          %v682 = vld [vmem:[%s482 + $0x44] sm:$0xff]
          %v683 = vld [vmem:[%s482 + $0x4c] sm:$0xff]
          %v684 = vld [vmem:[%s482 + $0x54] sm:$0xff]
          %v685 = vld [vmem:[%s482 + $0x5c] sm:$0xff]
          %v686 = vld [vmem:[%s482 + $0x64] sm:$0xf]
          %v687 = vld [vmem:[%s482 + $0x68] sm:$0xff]
          %v688 = vld [vmem:[%s482 + $0x70] sm:$0xff]
          %v689 = vld [vmem:[%s482 + $0x78] sm:$0xff]
          %v690 = vld [vmem:[%s482 + $0x80] sm:$0xff]
          %v691 = vld [vmem:[%s482 + $0x88] sm:$0xff]
          %v692 = vld [vmem:[%s482 + $0x90] sm:$0xff]
          %v693 = vld [vmem:[%s482 + $0x98] sm:$0xf]
          %v694 = vld [vmem:[%s482 + $0x9c] sm:$0xff]
          %v695 = vld [vmem:[%s482 + $0xa4] sm:$0xff]
          %v696 = vld [vmem:[%s482 + $0xac] sm:$0xff]
          %v697 = vld [vmem:[%s482 + $0xb4] sm:$0xff]
          %v698 = vld [vmem:[%s482 + $0xbc] sm:$0xff]
          %v699 = vld [vmem:[%s482 + $0xc4] sm:$0xff]
          %v700 = vld [vmem:[%s482 + $0xcc] sm:$0xf]
          %v701 = vld [vmem:[%s482 + $0xd0] sm:$0xff]
          %v702 = vld [vmem:[%s482 + $0xd8] sm:$0xff]
          %v703 = vld [vmem:[%s482 + $0xe0] sm:$0xff]
          %v704 = vld [vmem:[%s482 + $0xe8] sm:$0xff]
          %v705 = vld [vmem:[%s482 + $0xf0] sm:$0xff]
          %v706 = vld [vmem:[%s482 + $0xf8] sm:$0xff]
          %v707 = vld [vmem:[%s482 + $0x100] sm:$0xf]
          %v708 = vld [vmem:[%s482 + $0x104] sm:$0xff]
          %v709 = vld [vmem:[%s482 + $0x10c] sm:$0xff]
          %v710 = vld [vmem:[%s482 + $0x114] sm:$0xff]
          %v711 = vld [vmem:[%s482 + $0x11c] sm:$0xff]
          %v712 = vld [vmem:[%s482 + $0x124] sm:$0xff]
          %v713 = vld [vmem:[%s482 + $0x12c] sm:$0xff]
          %v714 = vld [vmem:[%s482 + $0x134] sm:$0xf]
          %v715 = vld [vmem:[%s482 + $0x138] sm:$0xff]
          %v716 = vld [vmem:[%s482 + $0x140] sm:$0xff]
          %v717 = vld [vmem:[%s482 + $0x148] sm:$0xff]
          %v718 = vld [vmem:[%s482 + $0x150] sm:$0xff]
          %v719 = vld [vmem:[%s482 + $0x158] sm:$0xff]
          %v720 = vld [vmem:[%s482 + $0x160] sm:$0xff]
          %v721 = vld [vmem:[%s482 + $0x168] sm:$0xf]
          %v722 = vld [vmem:[%s482 + $0x16c] sm:$0xff]
          %v723 = vld [vmem:[%s482 + $0x174] sm:$0xff]
          %v724 = vld [vmem:[%s482 + $0x17c] sm:$0xff]
          %v725 = vld [vmem:[%s482 + $0x184] sm:$0xff]
          %v726 = vld [vmem:[%s482 + $0x18c] sm:$0xff]
          %v727 = vld [vmem:[%s482 + $0x194] sm:$0xff]
          %v728 = vld [vmem:[%s482 + $0x19c] sm:$0xf]
          %v729 = vld [vmem:[%s482 + $0x1a0] sm:$0xff]
          %v730 = vld [vmem:[%s482 + $0x1a8] sm:$0xff]
          %v731 = vld [vmem:[%s482 + $0x1b0] sm:$0xff]
          %v732 = vld [vmem:[%s482 + $0x1b8] sm:$0xff]
          %v733 = vld [vmem:[%s482 + $0x1c0] sm:$0xff]
          %v734 = vld [vmem:[%s482 + $0x1c8] sm:$0xff]
          %v735 = vld [vmem:[%s482 + $0x1d0] sm:$0xf]
          %v736 = vld [vmem:[%s482 + $0x1d4] sm:$0xff]
          %v737 = vld [vmem:[%s482 + $0x1dc] sm:$0xff]
          %v738 = vld [vmem:[%s482 + $0x1e4] sm:$0xff]
          %v739 = vld [vmem:[%s482 + $0x1ec] sm:$0xff]
          %v740 = vld [vmem:[%s482 + $0x1f4] sm:$0xff]
          %v741 = vld [vmem:[%s482 + $0x1fc] sm:$0xff]
          %v742 = vld [vmem:[%s482 + $0x204] sm:$0xf]
          %v743 = vld [vmem:[%s482 + $0x208] sm:$0xff]
          %v744 = vld [vmem:[%s482 + $0x210] sm:$0xff]
          %v745 = vld [vmem:[%s482 + $0x218] sm:$0xff]
          %v746 = vld [vmem:[%s482 + $0x220] sm:$0xff]
          %v747 = vld [vmem:[%s482 + $0x228] sm:$0xff]
          %v748 = vld [vmem:[%s482 + $0x230] sm:$0xff]
          %v749 = vld [vmem:[%s482 + $0x238] sm:$0xf]
          %v750 = vld [vmem:[%s482 + $0x23c] sm:$0xff]
          %v751 = vld [vmem:[%s482 + $0x244] sm:$0xff]
          %v752 = vld [vmem:[%s482 + $0x24c] sm:$0xff]
          %v753 = vld [vmem:[%s482 + $0x254] sm:$0xff]
          %v754 = vld [vmem:[%s482 + $0x25c] sm:$0xff]
          %v755 = vld [vmem:[%s482 + $0x264] sm:$0xff]
          %v756 = vld [vmem:[%s482 + $0x26c] sm:$0xf]
          %v757 = vld [vmem:[%s482 + $0x270] sm:$0xff]
          %v758 = vld [vmem:[%s482 + $0x278] sm:$0xff]
          %v759 = vld [vmem:[%s482 + $0x280] sm:$0xff]
          %v760 = vld [vmem:[%s482 + $0x288] sm:$0xff]
          %v761 = vld [vmem:[%s482 + $0x290] sm:$0xff]
          %v762 = vld [vmem:[%s482 + $0x298] sm:$0xff]
          %v763 = vld [vmem:[%s482 + $0x2a0] sm:$0xf]
          %v764 = vld [vmem:[%s482 + $0x2a4] sm:$0xff]
          %v765 = vld [vmem:[%s482 + $0x2ac] sm:$0xff]
          %v766 = vld [vmem:[%s482 + $0x2b4] sm:$0xff]
          %v767 = vld [vmem:[%s482 + $0x2bc] sm:$0xff]
          %v768 = vld [vmem:[%s482 + $0x2c4] sm:$0xff]
          %v769 = vld [vmem:[%s482 + $0x2cc] sm:$0xff]
          %v770 = vld [vmem:[%s482 + $0x2d4] sm:$0xf]
          %v771 = vld [vmem:[%s482 + $0x2d8] sm:$0xff]
          %v772 = vld [vmem:[%s482 + $0x2e0] sm:$0xff]
          %v773 = vld [vmem:[%s482 + $0x2e8] sm:$0xff]
          %v774 = vld [vmem:[%s482 + $0x2f0] sm:$0xff]
          %v775 = vld [vmem:[%s482 + $0x2f8] sm:$0xff]
          %v776 = vld [vmem:[%s482 + $0x300] sm:$0xff]
          %v777 = vld [vmem:[%s482 + $0x308] sm:$0xf]
          %v778 = vld [vmem:[%s482 + $0x30c] sm:$0xff]
          %v779 = vld [vmem:[%s482 + $0x314] sm:$0xff]
          %v780 = vld [vmem:[%s482 + $0x31c] sm:$0xff]
          %v781 = vld [vmem:[%s482 + $0x324] sm:$0xff]
          %v782 = vld [vmem:[%s482 + $0x32c] sm:$0xff]
          %v783 = vld [vmem:[%s482 + $0x334] sm:$0xff]
          %v784 = vld [vmem:[%s482 + $0x33c] sm:$0xf]
          %v785 = vld [vmem:[#allocation12] sm:$0xff]
          %v786 = vld [vmem:[#allocation12 + $0x8] sm:$0xff]
          %v787 = vld [vmem:[#allocation12 + $0x10] sm:$0xff]
          %v788 = vld [vmem:[#allocation12 + $0x18] sm:$0xff]
          %v789 = vld [vmem:[#allocation12 + $0x20] sm:$0xff]
          %v790 = vld [vmem:[#allocation12 + $0x28] sm:$0xff]
          %v791 = vld [vmem:[#allocation12 + $0x30] sm:$0xff]
          %v792 = vld [vmem:[#allocation12 + $0x38] sm:$0xff]
          %v793 = vld [vmem:[#allocation12 + $0x40] sm:$0xff]
          %v794 = vld [vmem:[#allocation12 + $0x48] sm:$0xff]
          %v795 = vld [vmem:[#allocation12 + $0x50] sm:$0xff]
          %v796 = vld [vmem:[#allocation12 + $0x58] sm:$0xff]
          %v797 = vld [vmem:[#allocation12 + $0x60] sm:$0xff]
          %v798 = vld [vmem:[#allocation12 + $0x68] sm:$0xff]
          %v799 = vld [vmem:[#allocation12 + $0x70] sm:$0xff]
          %v800 = vld [vmem:[#allocation12 + $0x78] sm:$0xff]
          %v801 = vld [vmem:[#allocation12 + $0x80] sm:$0xff]
          %v802 = vld [vmem:[#allocation12 + $0x88] sm:$0xff]
          %v803 = vld [vmem:[#allocation12 + $0x90] sm:$0xff]
          %v804 = vld [vmem:[#allocation12 + $0x98] sm:$0xff]
          %v805 = vld [vmem:[#allocation12 + $0xa0] sm:$0xff]
          %v806 = vld [vmem:[#allocation12 + $0xa8] sm:$0xff]
          %v807 = vld [vmem:[#allocation12 + $0xb0] sm:$0xff]
          %v808 = vld [vmem:[#allocation12 + $0xb8] sm:$0xff]
          %v809 = vld [vmem:[#allocation12 + $0xc0] sm:$0xff]
          %v810 = vld [vmem:[#allocation12 + $0xc8] sm:$0xff]
          %v811 = vld [vmem:[#allocation12 + $0xd0] sm:$0xff]
          %v812 = vld [vmem:[#allocation12 + $0xd8] sm:$0xff]
          %v813 = vld [vmem:[#allocation12 + $0xe0] sm:$0xff]
          %v814 = vld [vmem:[#allocation12 + $0xe8] sm:$0xff]
          %v815 = vld [vmem:[#allocation12 + $0xf0] sm:$0xff]
          %v816 = vld [vmem:[#allocation12 + $0xf8] sm:$0xff]
          %v817 = vld [vmem:[#allocation12 + $0x100] sm:$0xff]
          %v818 = vld [vmem:[#allocation12 + $0x108] sm:$0xff]
          %v819 = vld [vmem:[#allocation12 + $0x110] sm:$0xff]
          %v820 = vld [vmem:[#allocation12 + $0x118] sm:$0xff]
          %v821 = vld [vmem:[#allocation12 + $0x120] sm:$0xff]
          %v822 = vld [vmem:[#allocation12 + $0x128] sm:$0xff]
          %v823 = vld [vmem:[#allocation12 + $0x130] sm:$0xff]
          %v824 = vld [vmem:[#allocation12 + $0x138] sm:$0xff]
          %v825 = vld [vmem:[#allocation12 + $0x140] sm:$0xff]
          %v826 = vld [vmem:[#allocation12 + $0x148] sm:$0xff]
          %v827 = vld [vmem:[#allocation12 + $0x150] sm:$0xff]
          %v828 = vld [vmem:[#allocation12 + $0x158] sm:$0xff]
          %v829 = vld [vmem:[#allocation12 + $0x160] sm:$0xff]
          %v830 = vld [vmem:[#allocation12 + $0x168] sm:$0xff]
          %v831 = vld [vmem:[#allocation12 + $0x170] sm:$0xff]
          %v832 = vld [vmem:[#allocation12 + $0x178] sm:$0xff]
          %v833 = vld [vmem:[#allocation12 + $0x180] sm:$0xff]
          %v834 = vld [vmem:[#allocation12 + $0x188] sm:$0xff]
          %v835 = vld [vmem:[#allocation12 + $0x190] sm:$0xff]
          %v836 = vld [vmem:[#allocation12 + $0x198] sm:$0xff]
          %v837 = vld [vmem:[#allocation12 + $0x1a0] sm:$0xff]
          %v838 = vld [vmem:[#allocation12 + $0x1a8] sm:$0xff]
          %v839 = vld [vmem:[#allocation12 + $0x1b0] sm:$0xff]
          %v840 = vld [vmem:[#allocation12 + $0x1b8] sm:$0xff]
          %v841 = vld [vmem:[#allocation12 + $0x1c0] sm:$0xff]
          %v842 = vld [vmem:[#allocation12 + $0x1c8] sm:$0xff]
          %v843 = vld [vmem:[#allocation12 + $0x1d0] sm:$0xff]
          %v844 = vld [vmem:[#allocation12 + $0x1d8] sm:$0xff]
          %v845 = vld [vmem:[#allocation12 + $0x1e0] sm:$0xff]
          %v846 = vld [vmem:[#allocation12 + $0x1e8] sm:$0xff]
          %v847 = vld [vmem:[#allocation12 + $0x1f0] sm:$0xff]
          %v848 = vld [vmem:[#allocation12 + $0x1f8] sm:$0xff]
          %v849 = vld [vmem:[#allocation12 + $0x200] sm:$0xff]
          %v850 = vld [vmem:[#allocation12 + $0x208] sm:$0xff]
          %v851 = vld [vmem:[#allocation12 + $0x210] sm:$0xff]
          %v852 = vld [vmem:[#allocation12 + $0x218] sm:$0xff]
          %v853 = vld [vmem:[#allocation12 + $0x220] sm:$0xff]
          %v854 = vld [vmem:[#allocation12 + $0x228] sm:$0xff]
          %v855 = vld [vmem:[#allocation12 + $0x230] sm:$0xff]
          %v856 = vld [vmem:[#allocation12 + $0x238] sm:$0xff]
          %v857 = vld [vmem:[#allocation12 + $0x240] sm:$0xff]
          %v858 = vld [vmem:[#allocation12 + $0x248] sm:$0xff]
          %v859 = vld [vmem:[#allocation12 + $0x250] sm:$0xff]
          %v860 = vld [vmem:[#allocation12 + $0x258] sm:$0xff]
          %v861 = vld [vmem:[#allocation12 + $0x260] sm:$0xff]
          %v862 = vld [vmem:[#allocation12 + $0x268] sm:$0xff]
          %v863 = vld [vmem:[#allocation12 + $0x270] sm:$0xff]
          %v864 = vld [vmem:[#allocation12 + $0x278] sm:$0xff]
          %v865 = vld [vmem:[#allocation12 + $0x280] sm:$0xff]
          %v866 = vld [vmem:[#allocation12 + $0x288] sm:$0xff]
          %v867 = vld [vmem:[#allocation12 + $0x290] sm:$0xff]
          %v868 = vld [vmem:[#allocation12 + $0x298] sm:$0xff]
          %v869 = vld [vmem:[#allocation12 + $0x2a0] sm:$0xff]
          %v870 = vld [vmem:[#allocation12 + $0x2a8] sm:$0xff]
          %v871 = vld [vmem:[#allocation12 + $0x2b0] sm:$0xff]
          %v872 = vld [vmem:[#allocation12 + $0x2b8] sm:$0xff]
          %v873 = vld [vmem:[#allocation12 + $0x2c0] sm:$0xff]
          %v874 = vld [vmem:[#allocation12 + $0x2c8] sm:$0xff]
          %v875 = vld [vmem:[#allocation12 + $0x2d0] sm:$0xff]
          %v876 = vld [vmem:[#allocation12 + $0x2d8] sm:$0xff]
          %v877 = vld [vmem:[#allocation12 + $0x2e0] sm:$0xff]
          %v878 = vld [vmem:[#allocation12 + $0x2e8] sm:$0xff]
          %v879 = vld [vmem:[#allocation12 + $0x2f0] sm:$0xff]
          %v880 = vld [vmem:[#allocation12 + $0x2f8] sm:$0xff]
          %v881 = vld [vmem:[#allocation12 + $0x300] sm:$0xff]
          %v882 = vld [vmem:[#allocation12 + $0x308] sm:$0xff]
          %v883 = vld [vmem:[#allocation12 + $0x310] sm:$0xff]
          %v884 = vld [vmem:[#allocation12 + $0x318] sm:$0xff]
          %v885 = vld [vmem:[#allocation12 + $0x320] sm:$0xff]
          %v886 = vld [vmem:[#allocation12 + $0x328] sm:$0xff]
          %v887 = vld [vmem:[#allocation12 + $0x330] sm:$0xff]
          %v888 = vld [vmem:[#allocation12 + $0x338] sm:$0xff]
          %v889 = vld [vmem:[#allocation12 + $0x340] sm:$0xff]
          %v890 = vld [vmem:[#allocation12 + $0x348] sm:$0xff]
          %v891 = vld [vmem:[#allocation12 + $0x350] sm:$0xff]
          %v892 = vld [vmem:[#allocation12 + $0x358] sm:$0xff]
          %v893 = vld [vmem:[#allocation12 + $0x360] sm:$0xff]
          %v894 = vld [vmem:[#allocation12 + $0x368] sm:$0xff]
          %v895 = vld [vmem:[#allocation12 + $0x370] sm:$0xff]
          %v896 = vld [vmem:[#allocation12 + $0x378] sm:$0xff]
          %v897 = vld [vmem:[#allocation12 + $0x380] sm:$0xff]
          %v898 = vld [vmem:[#allocation12 + $0x388] sm:$0xff]
          %v899 = vld [vmem:[#allocation12 + $0x390] sm:$0xff]
          %v900 = vld [vmem:[#allocation12 + $0x398] sm:$0xff]
          %v901 = vld [vmem:[#allocation12 + $0x3a0] sm:$0xff]
          %v902 = vld [vmem:[#allocation12 + $0x3a8] sm:$0xff]
          %v903 = vld [vmem:[#allocation12 + $0x3b0] sm:$0xff]
          %v904 = vld [vmem:[#allocation12 + $0x3b8] sm:$0xff]
          %v905 = vld [vmem:[#allocation12 + $0x3c0] sm:$0xff]
          %v906 = vld [vmem:[#allocation12 + $0x3c8] sm:$0xff]
          %v907 = vld [vmem:[#allocation12 + $0x3d0] sm:$0xff]
          %v908 = vld [vmem:[#allocation12 + $0x3d8] sm:$0xff]
          %v909 = vld [vmem:[#allocation12 + $0x3e0] sm:$0xff]
          %v910 = vld [vmem:[#allocation12 + $0x3e8] sm:$0xff]
          %v911 = vld [vmem:[#allocation12 + $0x3f0] sm:$0xff]
          %v912 = vld [vmem:[#allocation12 + $0x3f8] sm:$0xff]
          %v913 = vld [vmem:[#allocation12 + $0x400] sm:$0xff]
          %v914 = vld [vmem:[#allocation12 + $0x408] sm:$0xff]
          %v915 = vld [vmem:[#allocation12 + $0x410] sm:$0xff]
          %v916 = vld [vmem:[#allocation12 + $0x418] sm:$0xff]
          %v917 = vld [vmem:[#allocation12 + $0x420] sm:$0xff]
          %v918 = vld [vmem:[#allocation12 + $0x428] sm:$0xff]
          %v919 = vld [vmem:[#allocation12 + $0x430] sm:$0xff]
          %v920 = vld [vmem:[#allocation12 + $0x438] sm:$0xff]
          %v921 = vld [vmem:[#allocation12 + $0x440] sm:$0xff]
          %v922 = vld [vmem:[#allocation12 + $0x448] sm:$0xff]
          %v923 = vld [vmem:[#allocation12 + $0x450] sm:$0xff]
          %v924 = vld [vmem:[#allocation12 + $0x458] sm:$0xff]
          %v925 = vld [vmem:[#allocation12 + $0x460] sm:$0xff]
          %v926 = vld [vmem:[#allocation12 + $0x468] sm:$0xff]
          %v927 = vld [vmem:[#allocation12 + $0x470] sm:$0xff]
          %v928 = vld [vmem:[#allocation12 + $0x478] sm:$0xff]
          %v929 = vld [vmem:[#allocation12 + $0x480] sm:$0xff]
          %v930 = vld [vmem:[#allocation12 + $0x488] sm:$0xff]
          %v931 = vld [vmem:[#allocation12 + $0x490] sm:$0xff]
          %v932 = vld [vmem:[#allocation12 + $0x498] sm:$0xff]
          %v933 = vld [vmem:[#allocation12 + $0x4a0] sm:$0xff]
          %v934 = vld [vmem:[#allocation12 + $0x4a8] sm:$0xff]
          %v935 = vld [vmem:[#allocation12 + $0x4b0] sm:$0xff]
          %v936 = vld [vmem:[#allocation12 + $0x4b8] sm:$0xff]
          %v937 = vld [vmem:[#allocation12 + $0x4c0] sm:$0xff]
          %v938 = vld [vmem:[#allocation12 + $0x4c8] sm:$0xff]
          %v939 = vld [vmem:[#allocation12 + $0x4d0] sm:$0xff]
          %v940 = vld [vmem:[#allocation12 + $0x4d8] sm:$0xff]
          %v941 = vld [vmem:[#allocation12 + $0x4e0] sm:$0xff]
          %v942 = vld [vmem:[#allocation12 + $0x4e8] sm:$0xff]
          %v943 = vld [vmem:[#allocation12 + $0x4f0] sm:$0xff]
          %v944 = vld [vmem:[#allocation12 + $0x4f8] sm:$0xff]
          %v945 = vld [vmem:[#allocation12 + $0x500] sm:$0xff]
          %v946 = vld [vmem:[#allocation12 + $0x508] sm:$0xff]
          %v947 = vld [vmem:[#allocation12 + $0x510] sm:$0xff]
          %v948 = vld [vmem:[#allocation12 + $0x518] sm:$0xff]
          %v949 = vld [vmem:[#allocation12 + $0x520] sm:$0xff]
          %v950 = vld [vmem:[#allocation12 + $0x528] sm:$0xff]
          %v951 = vld [vmem:[#allocation12 + $0x530] sm:$0xff]
          %v952 = vld [vmem:[#allocation12 + $0x538] sm:$0xff]
          %v953 = vld [vmem:[#allocation12 + $0x540] sm:$0xff]
          %v954 = vld [vmem:[#allocation12 + $0x548] sm:$0xff]
          %v955 = vld [vmem:[#allocation12 + $0x550] sm:$0xff]
          %v956 = vld [vmem:[#allocation12 + $0x558] sm:$0xff]
          %v957 = vld [vmem:[#allocation12 + $0x560] sm:$0xff]
          %v958 = vld [vmem:[#allocation12 + $0x568] sm:$0xff]
          %v959 = vld [vmem:[#allocation12 + $0x570] sm:$0xff]
          %v960 = vld [vmem:[#allocation12 + $0x578] sm:$0xff]
          %v961 = vld [vmem:[#allocation12 + $0x580] sm:$0xff]
          %v962 = vld [vmem:[#allocation12 + $0x588] sm:$0xff]
          %v963 = vld [vmem:[#allocation12 + $0x590] sm:$0xff]
          %v964 = vld [vmem:[#allocation12 + $0x598] sm:$0xff]
          %v965 = vld [vmem:[#allocation12 + $0x5a0] sm:$0xff]
          %v966 = vld [vmem:[#allocation12 + $0x5a8] sm:$0xff]
          %v967 = vld [vmem:[#allocation12 + $0x5b0] sm:$0xff]
          %v968 = vld [vmem:[#allocation12 + $0x5b8] sm:$0xff]
          %v969 = vld [vmem:[#allocation12 + $0x5c0] sm:$0xff]
          %v970 = vld [vmem:[#allocation12 + $0x5c8] sm:$0xff]
          %v971 = vld [vmem:[#allocation12 + $0x5d0] sm:$0xff]
          %v972 = vld [vmem:[#allocation12 + $0x5d8] sm:$0xff]
          %v973 = vld [vmem:[#allocation12 + $0x5e0] sm:$0xff]
          %v974 = vld [vmem:[#allocation12 + $0x5e8] sm:$0xff]
          %v975 = vld [vmem:[#allocation12 + $0x5f0] sm:$0xff]
          %v976 = vld [vmem:[#allocation12 + $0x5f8] sm:$0xff]
          %v977 = vld [vmem:[#allocation12 + $0x600] sm:$0xff]
          %v978 = vld [vmem:[#allocation12 + $0x608] sm:$0xff]
          %v979 = vld [vmem:[#allocation12 + $0x610] sm:$0xff]
          %v980 = vld [vmem:[#allocation12 + $0x618] sm:$0xff]
          %v981 = vld [vmem:[#allocation12 + $0x620] sm:$0xff]
          %v982 = vld [vmem:[#allocation12 + $0x628] sm:$0xff]
          %v983 = vld [vmem:[#allocation12 + $0x630] sm:$0xff]
          %v984 = vld [vmem:[#allocation12 + $0x638] sm:$0xff]
          %v985 = vld [vmem:[#allocation12 + $0x640] sm:$0xff]
          %v986 = vld [vmem:[#allocation12 + $0x648] sm:$0xff]
          %v987 = vld [vmem:[#allocation12 + $0x650] sm:$0xff]
          %v988 = vld [vmem:[#allocation12 + $0x658] sm:$0xff]
          %v989 = vld [vmem:[#allocation12 + $0x660] sm:$0xff]
          %v990 = vld [vmem:[#allocation12 + $0x668] sm:$0xff]
          %v991 = vld [vmem:[#allocation12 + $0x670] sm:$0xff]
          %v992 = vld [vmem:[#allocation12 + $0x678] sm:$0xff]
          %v993 = vld [vmem:[#allocation12 + $0x680] sm:$0xff]
          %v994 = vld [vmem:[#allocation12 + $0x688] sm:$0xff]
          %v995 = vld [vmem:[#allocation12 + $0x690] sm:$0xff]
          %v996 = vld [vmem:[#allocation12 + $0x698] sm:$0xff]
          %v997 = vld [vmem:[#allocation12 + $0x6a0] sm:$0xff]
          %v998 = vld [vmem:[#allocation12 + $0x6a8] sm:$0xff]
          %v999 = vld [vmem:[#allocation12 + $0x6b0] sm:$0xff]
          %v1000 = vld [vmem:[#allocation12 + $0x6b8] sm:$0xff]
          %v1001 = vld [vmem:[#allocation12 + $0x6c0] sm:$0xff]
          %v1002 = vld [vmem:[#allocation12 + $0x6c8] sm:$0xff]
          %v1003 = vld [vmem:[#allocation12 + $0x6d0] sm:$0xff]
          %v1004 = vld [vmem:[#allocation12 + $0x6d8] sm:$0xff]
          %v1005 = vld [vmem:[#allocation12 + $0x6e0] sm:$0xff]
          %v1006 = vld [vmem:[#allocation12 + $0x6e8] sm:$0xff]
          %v1007 = vld [vmem:[#allocation12 + $0x6f0] sm:$0xff]
          %v1008 = vld [vmem:[#allocation12 + $0x6f8] sm:$0xff]
          %v1009 = vld [vmem:[#allocation12 + $0x700] sm:$0xff]
          %v1010 = vld [vmem:[#allocation12 + $0x708] sm:$0xff]
          %v1011 = vld [vmem:[#allocation12 + $0x710] sm:$0xff]
          %v1012 = vld [vmem:[#allocation12 + $0x718] sm:$0xff]
          %v1013 = vld [vmem:[#allocation12 + $0x720] sm:$0xff]
          %v1014 = vld [vmem:[#allocation12 + $0x728] sm:$0xff]
          %v1015 = vld [vmem:[#allocation12 + $0x730] sm:$0xff]
          %v1016 = vld [vmem:[#allocation12 + $0x738] sm:$0xff]
          %v1017 = vld [vmem:[#allocation12 + $0x740] sm:$0xff]
          %v1018 = vld [vmem:[#allocation12 + $0x748] sm:$0xff]
          %v1019 = vld [vmem:[#allocation12 + $0x750] sm:$0xff]
          %v1020 = vld [vmem:[#allocation12 + $0x758] sm:$0xff]
          %v1021 = vld [vmem:[#allocation12 + $0x760] sm:$0xff]
          %v1022 = vld [vmem:[#allocation12 + $0x768] sm:$0xff]
          %v1023 = vld [vmem:[#allocation12 + $0x770] sm:$0xff]
          %v1024 = vld [vmem:[#allocation12 + $0x778] sm:$0xff]
          %v1025 = vld [vmem:[#allocation12 + $0x780] sm:$0xff]
          %v1026 = vld [vmem:[#allocation12 + $0x788] sm:$0xff]
          %v1027 = vld [vmem:[#allocation12 + $0x790] sm:$0xff]
          %v1028 = vld [vmem:[#allocation12 + $0x798] sm:$0xff]
          %v1029 = vld [vmem:[#allocation12 + $0x7a0] sm:$0xff]
          %v1030 = vld [vmem:[#allocation12 + $0x7a8] sm:$0xff]
          %v1031 = vld [vmem:[#allocation12 + $0x7b0] sm:$0xff]
          %v1032 = vld [vmem:[#allocation12 + $0x7b8] sm:$0xff]
          %v1033 = vld [vmem:[#allocation12 + $0x7c0] sm:$0xff]
          %v1034 = vld [vmem:[#allocation12 + $0x7c8] sm:$0xff]
          %v1035 = vld [vmem:[#allocation12 + $0x7d0] sm:$0xff]
          %v1036 = vld [vmem:[#allocation12 + $0x7d8] sm:$0xff]
          %v1037 = vld [vmem:[#allocation12 + $0x7e0] sm:$0xff]
          %v1038 = vld [vmem:[#allocation12 + $0x7e8] sm:$0xff]
          %v1039 = vld [vmem:[#allocation12 + $0x7f0] sm:$0xff]
          %v1040 = vld [vmem:[#allocation12 + $0x7f8] sm:$0xff]
          %v1041 = vld [vmem:[#allocation12 + $0x800] sm:$0xff]
          %v1042 = vld [vmem:[#allocation12 + $0x808] sm:$0xff]
          %v1043 = vld [vmem:[#allocation12 + $0x810] sm:$0xff]
          %v1044 = vld [vmem:[#allocation12 + $0x818] sm:$0xff]
          %v1045 = vld [vmem:[#allocation12 + $0x820] sm:$0xff]
          %v1046 = vld [vmem:[#allocation12 + $0x828] sm:$0xff]
          %v1047 = vld [vmem:[#allocation12 + $0x830] sm:$0xff]
          %v1048 = vld [vmem:[#allocation12 + $0x838] sm:$0xff]
          %v1049 = vld [vmem:[#allocation12 + $0x840] sm:$0xff]
          %v1050 = vld [vmem:[#allocation12 + $0x848] sm:$0xff]
          %v1051 = vld [vmem:[#allocation12 + $0x850] sm:$0xff]
          %v1052 = vld [vmem:[#allocation12 + $0x858] sm:$0xff]
          %v1053 = vld [vmem:[#allocation12 + $0x860] sm:$0xff]
          %v1054 = vld [vmem:[#allocation12 + $0x868] sm:$0xff]
          %v1055 = vld [vmem:[#allocation12 + $0x870] sm:$0xff]
          %v1056 = vld [vmem:[#allocation12 + $0x878] sm:$0xff]
          %v1057 = vld [vmem:[#allocation12 + $0x880] sm:$0xff]
          %v1058 = vld [vmem:[#allocation12 + $0x888] sm:$0xff]
          %v1059 = vld [vmem:[#allocation12 + $0x890] sm:$0xff]
          %v1060 = vld [vmem:[#allocation12 + $0x898] sm:$0xff]
          %v1061 = vld [vmem:[#allocation12 + $0x8a0] sm:$0xff]
          %v1062 = vld [vmem:[#allocation12 + $0x8a8] sm:$0xff]
          %v1063 = vld [vmem:[#allocation12 + $0x8b0] sm:$0xff]
          %v1064 = vld [vmem:[#allocation12 + $0x8b8] sm:$0xff]
          %v1065 = vld [vmem:[#allocation12 + $0x8c0] sm:$0xff]
          %v1066 = vld [vmem:[#allocation12 + $0x8c8] sm:$0xff]
          %v1067 = vld [vmem:[#allocation12 + $0x8d0] sm:$0xff]
          %v1068 = vld [vmem:[#allocation12 + $0x8d8] sm:$0xff]
          %v1069 = vld [vmem:[#allocation12 + $0x8e0] sm:$0xff]
          %v1070 = vld [vmem:[#allocation12 + $0x8e8] sm:$0xff]
          %v1071 = vld [vmem:[#allocation12 + $0x8f0] sm:$0xff]
          %v1072 = vld [vmem:[#allocation12 + $0x8f8] sm:$0xff]
          %v1073 = vld [vmem:[#allocation12 + $0x900] sm:$0xff]
          %v1074 = vld [vmem:[#allocation12 + $0x908] sm:$0xff]
          %v1075 = vld [vmem:[#allocation12 + $0x910] sm:$0xff]
          %v1076 = vld [vmem:[#allocation12 + $0x918] sm:$0xff]
          %v1077 = vld [vmem:[#allocation12 + $0x920] sm:$0xff]
          %v1078 = vld [vmem:[#allocation12 + $0x928] sm:$0xff]
          %v1079 = vld [vmem:[#allocation12 + $0x930] sm:$0xff]
          %v1080 = vld [vmem:[#allocation12 + $0x938] sm:$0xff]
          %v1081 = vld [vmem:[#allocation12 + $0x940] sm:$0xff]
          %v1082 = vld [vmem:[#allocation12 + $0x948] sm:$0xff]
          %v1083 = vld [vmem:[#allocation12 + $0x950] sm:$0xff]
          %v1084 = vld [vmem:[#allocation12 + $0x958] sm:$0xff]
          %v1085 = vld [vmem:[#allocation12 + $0x960] sm:$0xff]
          %v1086 = vld [vmem:[#allocation12 + $0x968] sm:$0xff]
          %v1087 = vld [vmem:[#allocation12 + $0x970] sm:$0xff]
          %v1088 = vld [vmem:[#allocation12 + $0x978] sm:$0xff]
          %v1089 = vld [vmem:[#allocation12 + $0x980] sm:$0xff]
          %v1090 = vld [vmem:[#allocation12 + $0x988] sm:$0xff]
          %v1091 = vld [vmem:[#allocation12 + $0x990] sm:$0xff]
          %v1092 = vld [vmem:[#allocation12 + $0x998] sm:$0xff]
          %v1093 = vld [vmem:[#allocation12 + $0x9a0] sm:$0xff]
          %v1094 = vld [vmem:[#allocation12 + $0x9a8] sm:$0xff]
          %v1095 = vld [vmem:[#allocation12 + $0x9b0] sm:$0xff]
          %v1096 = vld [vmem:[#allocation12 + $0x9b8] sm:$0xff]
          %v1097 = vld [vmem:[#allocation12 + $0x9c0] sm:$0xff]
          %v1098 = vld [vmem:[#allocation12 + $0x9c8] sm:$0xff]
          %v1099 = vld [vmem:[#allocation12 + $0x9d0] sm:$0xff]
          %v1100 = vld [vmem:[#allocation12 + $0x9d8] sm:$0xff]
          %v1101 = vld [vmem:[#allocation12 + $0x9e0] sm:$0xff]
          %v1102 = vld [vmem:[#allocation12 + $0x9e8] sm:$0xff]
          %v1103 = vld [vmem:[#allocation12 + $0x9f0] sm:$0xff]
          %v1104 = vld [vmem:[#allocation12 + $0x9f8] sm:$0xff]
          %v1105 = vld [vmem:[#allocation12 + $0xa00] sm:$0xff]
          %v1106 = vld [vmem:[#allocation12 + $0xa08] sm:$0xff]
          %v1107 = vld [vmem:[#allocation12 + $0xa10] sm:$0xff]
          %v1108 = vld [vmem:[#allocation12 + $0xa18] sm:$0xff]
          %v1109 = vld [vmem:[#allocation12 + $0xa20] sm:$0xff]
          %v1110 = vld [vmem:[#allocation12 + $0xa28] sm:$0xff]
          %v1111 = vld [vmem:[#allocation12 + $0xa30] sm:$0xff]
          %v1112 = vld [vmem:[#allocation12 + $0xa38] sm:$0xff]
          %v1113 = vld [vmem:[#allocation12 + $0xa40] sm:$0xff]
          %v1114 = vld [vmem:[#allocation12 + $0xa48] sm:$0xff]
          %v1115 = vld [vmem:[#allocation12 + $0xa50] sm:$0xff]
          %v1116 = vld [vmem:[#allocation12 + $0xa58] sm:$0xff]
          %v1117 = vld [vmem:[#allocation12 + $0xa60] sm:$0xff]
          %v1118 = vld [vmem:[#allocation12 + $0xa68] sm:$0xff]
          %v1119 = vld [vmem:[#allocation12 + $0xa70] sm:$0xff]
          %v1120 = vld [vmem:[#allocation12 + $0xa78] sm:$0xff]
          %v1121 = vld [vmem:[#allocation12 + $0xa80] sm:$0xff]
          %v1122 = vld [vmem:[#allocation12 + $0xa88] sm:$0xff]
          %v1123 = vld [vmem:[#allocation12 + $0xa90] sm:$0xff]
          %v1124 = vld [vmem:[#allocation12 + $0xa98] sm:$0xff]
          %v1125 = vld [vmem:[#allocation12 + $0xaa0] sm:$0xff]
          %v1126 = vld [vmem:[#allocation12 + $0xaa8] sm:$0xff]
          %v1127 = vld [vmem:[#allocation12 + $0xab0] sm:$0xff]
          %v1128 = vld [vmem:[#allocation12 + $0xab8] sm:$0xff]
          %v1129 = vld [vmem:[#allocation12 + $0xac0] sm:$0xff]
          %v1130 = vld [vmem:[#allocation12 + $0xac8] sm:$0xff]
          %v1131 = vld [vmem:[#allocation12 + $0xad0] sm:$0xff]
          %v1132 = vld [vmem:[#allocation12 + $0xad8] sm:$0xff]
          %v1133 = vld [vmem:[#allocation12 + $0xae0] sm:$0xff]
          %v1134 = vld [vmem:[#allocation12 + $0xae8] sm:$0xff]
          %v1135 = vld [vmem:[#allocation12 + $0xaf0] sm:$0xff]
          %v1136 = vld [vmem:[#allocation12 + $0xaf8] sm:$0xff]
          %v1137 = vld [vmem:[#allocation12 + $0xb00] sm:$0xff]
          %v1138 = vld [vmem:[#allocation12 + $0xb08] sm:$0xff]
          %v1139 = vld [vmem:[#allocation12 + $0xb10] sm:$0xff]
          %v1140 = vld [vmem:[#allocation12 + $0xb18] sm:$0xff]
          %v1141 = vld [vmem:[#allocation12 + $0xb20] sm:$0xff]
          %v1142 = vld [vmem:[#allocation12 + $0xb28] sm:$0xff]
          %v1143 = vld [vmem:[#allocation12 + $0xb30] sm:$0xff]
          %v1144 = vld [vmem:[#allocation12 + $0xb38] sm:$0xff]
          %v1145 = vld [vmem:[#allocation12 + $0xb40] sm:$0xff]
          %v1146 = vld [vmem:[#allocation12 + $0xb48] sm:$0xff]
          %v1147 = vld [vmem:[#allocation12 + $0xb50] sm:$0xff]
          %v1148 = vld [vmem:[#allocation12 + $0xb58] sm:$0xff]
          %v1149 = vld [vmem:[#allocation12 + $0xb60] sm:$0xff]
          %v1150 = vld [vmem:[#allocation12 + $0xb68] sm:$0xff]
          %v1151 = vld [vmem:[#allocation12 + $0xb70] sm:$0xff]
          %v1152 = vld [vmem:[#allocation12 + $0xb78] sm:$0xff]
          %v1153 = vld [vmem:[#allocation12 + $0xb80] sm:$0xff]
          %v1154 = vld [vmem:[#allocation12 + $0xb88] sm:$0xff]
          %v1155 = vld [vmem:[#allocation12 + $0xb90] sm:$0xff]
          %v1156 = vld [vmem:[#allocation12 + $0xb98] sm:$0xff]
          %v1157 = vld [vmem:[#allocation12 + $0xba0] sm:$0xff]
          %v1158 = vld [vmem:[#allocation12 + $0xba8] sm:$0xff]
          %v1159 = vld [vmem:[#allocation12 + $0xbb0] sm:$0xff]
          %v1160 = vld [vmem:[#allocation12 + $0xbb8] sm:$0xff]
          %v1161 = vld [vmem:[#allocation12 + $0xbc0] sm:$0xff]
          %v1162 = vld [vmem:[#allocation12 + $0xbc8] sm:$0xff]
          %v1163 = vld [vmem:[#allocation12 + $0xbd0] sm:$0xff]
          %v1164 = vld [vmem:[#allocation12 + $0xbd8] sm:$0xff]
          %v1165 = vld [vmem:[#allocation12 + $0xbe0] sm:$0xff]
          %v1166 = vld [vmem:[#allocation12 + $0xbe8] sm:$0xff]
          %v1167 = vld [vmem:[#allocation12 + $0xbf0] sm:$0xff]
          %v1168 = vld [vmem:[#allocation12 + $0xbf8] sm:$0xff]
          %v1169 = vld [vmem:[#allocation12 + $0xc00] sm:$0xff]
          %v1170 = vld [vmem:[#allocation12 + $0xc08] sm:$0xff]
          %v1171 = vld [vmem:[#allocation12 + $0xc10] sm:$0xff]
          %v1172 = vld [vmem:[#allocation12 + $0xc18] sm:$0xff]
          %v1173 = vld [vmem:[#allocation12 + $0xc20] sm:$0xff]
          %v1174 = vld [vmem:[#allocation12 + $0xc28] sm:$0xff]
          %v1175 = vld [vmem:[#allocation12 + $0xc30] sm:$0xff]
          %v1176 = vld [vmem:[#allocation12 + $0xc38] sm:$0xff]
          %v1177 = vld [vmem:[#allocation12 + $0xc40] sm:$0xff]
          %v1178 = vld [vmem:[#allocation12 + $0xc48] sm:$0xff]
          %v1179 = vld [vmem:[#allocation12 + $0xc50] sm:$0xff]
          %v1180 = vld [vmem:[#allocation12 + $0xc58] sm:$0xff]
          %v1181 = vld [vmem:[#allocation12 + $0xc60] sm:$0xff]
          %v1182 = vld [vmem:[#allocation12 + $0xc68] sm:$0xff]
          %v1183 = vld [vmem:[#allocation12 + $0xc70] sm:$0xff]
          %v1184 = vld [vmem:[#allocation12 + $0xc78] sm:$0xff]
          %v1185 = vld [vmem:[#allocation12 + $0xc80] sm:$0xff]
          %v1186 = vld [vmem:[#allocation12 + $0xc88] sm:$0xff]
          %v1187 = vld [vmem:[#allocation12 + $0xc90] sm:$0xff]
          %v1188 = vld [vmem:[#allocation12 + $0xc98] sm:$0xff]
          %v1189 = vld [vmem:[#allocation12 + $0xca0] sm:$0xff]
          %v1190 = vld [vmem:[#allocation12 + $0xca8] sm:$0xff]
          %v1191 = vld [vmem:[#allocation12 + $0xcb0] sm:$0xff]
          %v1192 = vld [vmem:[#allocation12 + $0xcb8] sm:$0xff]
          %v1193 = vld [vmem:[#allocation12 + $0xcc0] sm:$0xff]
          %v1194 = vld [vmem:[#allocation12 + $0xcc8] sm:$0xff]
          %v1195 = vld [vmem:[#allocation12 + $0xcd0] sm:$0xff]
          %v1196 = vld [vmem:[#allocation12 + $0xcd8] sm:$0xff]
          %v1197 = vld [vmem:[#allocation12 + $0xce0] sm:$0xff]
          %v1198 = vld [vmem:[#allocation12 + $0xce8] sm:$0xff]
          %v1199 = vld [vmem:[#allocation12 + $0xcf0] sm:$0xff]
          %v1200 = vld [vmem:[#allocation12 + $0xcf8] sm:$0xff]
          %v1201 = vld [vmem:[#allocation14] sm:$0xf]
          %v1203 = vperm.slane %v1201, 0
          %v1204 = vperm.slane %v1201, 1
          %v1205 = vperm.slane %v1201, 2
          %v1206 = vperm.slane %v1201, 3
          %v1323 = vunpack.c.l.b16 %v673
          %v1324 = vunpack.c.h.b16 %v673
          %v1325 = vunpack.c.l.b16 %v674
          %v1326 = vunpack.c.h.b16 %v674
          %v1327 = vunpack.c.l.b16 %v675
          %v1328 = vunpack.c.h.b16 %v675
          %v1329 = vunpack.c.l.b16 %v676
          %v1330 = vunpack.c.h.b16 %v676
          %v1331 = vunpack.c.l.b16 %v677
          %v1332 = vunpack.c.h.b16 %v677
          %v1333 = vunpack.c.l.b16 %v678
          %v1334 = vunpack.c.h.b16 %v678
          %v1335 = vunpack.c.l.b16 %v679
          %v1336 = vunpack.c.l.b16 %v680
          %v1337 = vunpack.c.h.b16 %v680
          %v1338 = vunpack.c.l.b16 %v681
          %v1339 = vunpack.c.h.b16 %v681
          %v1340 = vunpack.c.l.b16 %v682
          %v1341 = vunpack.c.h.b16 %v682
          %v1342 = vunpack.c.l.b16 %v683
          %v1343 = vunpack.c.h.b16 %v683
          %v1344 = vunpack.c.l.b16 %v684
          %v1345 = vunpack.c.h.b16 %v684
          %v1346 = vunpack.c.l.b16 %v685
          %v1347 = vunpack.c.h.b16 %v685
          %v1348 = vunpack.c.l.b16 %v686
          %v1349 = vunpack.c.l.b16 %v687
          %v1350 = vunpack.c.h.b16 %v687
          %v1351 = vunpack.c.l.b16 %v688
          %v1352 = vunpack.c.h.b16 %v688
          %v1353 = vunpack.c.l.b16 %v689
          %v1354 = vunpack.c.h.b16 %v689
          %v1355 = vunpack.c.l.b16 %v690
          %v1356 = vunpack.c.h.b16 %v690
          %v1357 = vunpack.c.l.b16 %v691
          %v1358 = vunpack.c.h.b16 %v691
          %v1359 = vunpack.c.l.b16 %v692
          %v1360 = vunpack.c.h.b16 %v692
          %v1361 = vunpack.c.l.b16 %v693
          %v1362 = vunpack.c.l.b16 %v694
          %v1363 = vunpack.c.h.b16 %v694
          %v1364 = vunpack.c.l.b16 %v695
          %v1365 = vunpack.c.h.b16 %v695
          %v1366 = vunpack.c.l.b16 %v696
          %v1367 = vunpack.c.h.b16 %v696
          %v1368 = vunpack.c.l.b16 %v697
          %v1369 = vunpack.c.h.b16 %v697
          %v1370 = vunpack.c.l.b16 %v698
          %v1371 = vunpack.c.h.b16 %v698
          %v1372 = vunpack.c.l.b16 %v699
          %v1373 = vunpack.c.h.b16 %v699
          %v1374 = vunpack.c.l.b16 %v700
          %v1375 = vunpack.c.l.b16 %v701
          %v1376 = vunpack.c.h.b16 %v701
          %v1377 = vunpack.c.l.b16 %v702
          %v1378 = vunpack.c.h.b16 %v702
          %v1379 = vunpack.c.l.b16 %v703
          %v1380 = vunpack.c.h.b16 %v703
          %v1381 = vunpack.c.l.b16 %v704
          %v1382 = vunpack.c.h.b16 %v704
          %v1383 = vunpack.c.l.b16 %v705
          %v1384 = vunpack.c.h.b16 %v705
          %v1385 = vunpack.c.l.b16 %v706
          %v1386 = vunpack.c.h.b16 %v706
          %v1387 = vunpack.c.l.b16 %v707
          %v1388 = vunpack.c.l.b16 %v708
          %v1389 = vunpack.c.h.b16 %v708
          %v1390 = vunpack.c.l.b16 %v709
          %v1391 = vunpack.c.h.b16 %v709
          %v1392 = vunpack.c.l.b16 %v710
          %v1393 = vunpack.c.h.b16 %v710
          %v1394 = vunpack.c.l.b16 %v711
          %v1395 = vunpack.c.h.b16 %v711
          %v1396 = vunpack.c.l.b16 %v712
          %v1397 = vunpack.c.h.b16 %v712
          %v1398 = vunpack.c.l.b16 %v713
          %v1399 = vunpack.c.h.b16 %v713
          %v1400 = vunpack.c.l.b16 %v714
          %v1401 = vunpack.c.l.b16 %v715
          %v1402 = vunpack.c.h.b16 %v715
          %v1403 = vunpack.c.l.b16 %v716
          %v1404 = vunpack.c.h.b16 %v716
          %v1405 = vunpack.c.l.b16 %v717
          %v1406 = vunpack.c.h.b16 %v717
          %v1407 = vunpack.c.l.b16 %v718
          %v1408 = vunpack.c.h.b16 %v718
          %v1409 = vunpack.c.l.b16 %v719
          %v1410 = vunpack.c.h.b16 %v719
          %v1411 = vunpack.c.l.b16 %v720
          %v1412 = vunpack.c.h.b16 %v720
          %v1413 = vunpack.c.l.b16 %v721
          %v1414 = vunpack.c.l.b16 %v722
          %v1415 = vunpack.c.h.b16 %v722
          %v1416 = vunpack.c.l.b16 %v723
          %v1417 = vunpack.c.h.b16 %v723
          %v1418 = vunpack.c.l.b16 %v724
          %v1419 = vunpack.c.h.b16 %v724
          %v1420 = vunpack.c.l.b16 %v725
          %v1421 = vunpack.c.h.b16 %v725
          %v1422 = vunpack.c.l.b16 %v726
          %v1423 = vunpack.c.h.b16 %v726
          %v1424 = vunpack.c.l.b16 %v727
          %v1425 = vunpack.c.h.b16 %v727
          %v1426 = vunpack.c.l.b16 %v728
          %v1427 = vunpack.c.l.b16 %v729
          %v1428 = vunpack.c.h.b16 %v729
          %v1429 = vunpack.c.l.b16 %v730
          %v1430 = vunpack.c.h.b16 %v730
          %v1431 = vunpack.c.l.b16 %v731
          %v1432 = vunpack.c.h.b16 %v731
          %v1433 = vunpack.c.l.b16 %v732
          %v1434 = vunpack.c.h.b16 %v732
          %v1435 = vunpack.c.l.b16 %v733
          %v1436 = vunpack.c.h.b16 %v733
          %v1437 = vunpack.c.l.b16 %v734
          %v1438 = vunpack.c.h.b16 %v734
          %v1439 = vunpack.c.l.b16 %v735
          %v1440 = vunpack.c.l.b16 %v736
          %v1441 = vunpack.c.h.b16 %v736
          %v1442 = vunpack.c.l.b16 %v737
          %v1443 = vunpack.c.h.b16 %v737
          %v1444 = vunpack.c.l.b16 %v738
          %v1445 = vunpack.c.h.b16 %v738
          %v1446 = vunpack.c.l.b16 %v739
          %v1447 = vunpack.c.h.b16 %v739
          %v1448 = vunpack.c.l.b16 %v740
          %v1449 = vunpack.c.h.b16 %v740
          %v1450 = vunpack.c.l.b16 %v741
          %v1451 = vunpack.c.h.b16 %v741
          %v1452 = vunpack.c.l.b16 %v742
          %v1453 = vunpack.c.l.b16 %v743
          %v1454 = vunpack.c.h.b16 %v743
          %v1455 = vunpack.c.l.b16 %v744
          %v1456 = vunpack.c.h.b16 %v744
          %v1457 = vunpack.c.l.b16 %v745
          %v1458 = vunpack.c.h.b16 %v745
          %v1459 = vunpack.c.l.b16 %v746
          %v1460 = vunpack.c.h.b16 %v746
          %v1461 = vunpack.c.l.b16 %v747
          %v1462 = vunpack.c.h.b16 %v747
          %v1463 = vunpack.c.l.b16 %v748
          %v1464 = vunpack.c.h.b16 %v748
          %v1465 = vunpack.c.l.b16 %v749
          %v1466 = vunpack.c.l.b16 %v750
          %v1467 = vunpack.c.h.b16 %v750
          %v1468 = vunpack.c.l.b16 %v751
          %v1469 = vunpack.c.h.b16 %v751
          %v1470 = vunpack.c.l.b16 %v752
          %v1471 = vunpack.c.h.b16 %v752
          %v1472 = vunpack.c.l.b16 %v753
          %v1473 = vunpack.c.h.b16 %v753
          %v1474 = vunpack.c.l.b16 %v754
          %v1475 = vunpack.c.h.b16 %v754
          %v1476 = vunpack.c.l.b16 %v755
          %v1477 = vunpack.c.h.b16 %v755
          %v1478 = vunpack.c.l.b16 %v756
          %v1479 = vunpack.c.l.b16 %v757
          %v1480 = vunpack.c.h.b16 %v757
          %v1481 = vunpack.c.l.b16 %v758
          %v1482 = vunpack.c.h.b16 %v758
          %v1483 = vunpack.c.l.b16 %v759
          %v1484 = vunpack.c.h.b16 %v759
          %v1485 = vunpack.c.l.b16 %v760
          %v1486 = vunpack.c.h.b16 %v760
          %v1487 = vunpack.c.l.b16 %v761
          %v1488 = vunpack.c.h.b16 %v761
          %v1489 = vunpack.c.l.b16 %v762
          %v1490 = vunpack.c.h.b16 %v762
          %v1491 = vunpack.c.l.b16 %v763
          %v1492 = vunpack.c.l.b16 %v764
          %v1493 = vunpack.c.h.b16 %v764
          %v1494 = vunpack.c.l.b16 %v765
          %v1495 = vunpack.c.h.b16 %v765
          %v1496 = vunpack.c.l.b16 %v766
          %v1497 = vunpack.c.h.b16 %v766
          %v1498 = vunpack.c.l.b16 %v767
          %v1499 = vunpack.c.h.b16 %v767
          %v1500 = vunpack.c.l.b16 %v768
          %v1501 = vunpack.c.h.b16 %v768
          %v1502 = vunpack.c.l.b16 %v769
          %v1503 = vunpack.c.h.b16 %v769
          %v1504 = vunpack.c.l.b16 %v770
          %v1505 = vunpack.c.l.b16 %v771
          %v1506 = vunpack.c.h.b16 %v771
          %v1507 = vunpack.c.l.b16 %v772
          %v1508 = vunpack.c.h.b16 %v772
          %v1509 = vunpack.c.l.b16 %v773
          %v1510 = vunpack.c.h.b16 %v773
          %v1511 = vunpack.c.l.b16 %v774
          %v1512 = vunpack.c.h.b16 %v774
          %v1513 = vunpack.c.l.b16 %v775
          %v1514 = vunpack.c.h.b16 %v775
          %v1515 = vunpack.c.l.b16 %v776
          %v1516 = vunpack.c.h.b16 %v776
          %v1517 = vunpack.c.l.b16 %v777
          %v1518 = vunpack.c.l.b16 %v778
          %v1519 = vunpack.c.h.b16 %v778
          %v1520 = vunpack.c.l.b16 %v779
          %v1521 = vunpack.c.h.b16 %v779
          %v1522 = vunpack.c.l.b16 %v780
          %v1523 = vunpack.c.h.b16 %v780
          %v1524 = vunpack.c.l.b16 %v781
          %v1525 = vunpack.c.h.b16 %v781
          %v1526 = vunpack.c.l.b16 %v782
          %v1527 = vunpack.c.h.b16 %v782
          %v1528 = vunpack.c.l.b16 %v783
          %v1529 = vunpack.c.h.b16 %v783
          %v1530 = vunpack.c.l.b16 %v784
          %v1531 = vpack.c.b16 %v1336, %v1323
          %v1532 = vpack.c.b16 %v1337, %v1324
          %v1533 = vpack.c.b16 %v1338, %v1325
          %v1534 = vpack.c.b16 %v1339, %v1326
          %v1535 = vpack.c.b16 %v1340, %v1327
          %v1536 = vpack.c.b16 %v1341, %v1328
          %v1537 = vpack.c.b16 %v1342, %v1329
          %v1538 = vpack.c.b16 %v1343, %v1330
          %v1539 = vpack.c.b16 %v1344, %v1331
          %v1540 = vpack.c.b16 %v1345, %v1332
          %v1541 = vpack.c.b16 %v1346, %v1333
          %v1542 = vpack.c.b16 %v1347, %v1334
          %v1543 = vpack.c.b16 %v1348, %v1335
          %v1544 = vpack.c.b16 %v1362, %v1349
          %v1545 = vpack.c.b16 %v1363, %v1350
          %v1546 = vpack.c.b16 %v1364, %v1351
          %v1547 = vpack.c.b16 %v1365, %v1352
          %v1548 = vpack.c.b16 %v1366, %v1353
          %v1549 = vpack.c.b16 %v1367, %v1354
          %v1550 = vpack.c.b16 %v1368, %v1355
          %v1551 = vpack.c.b16 %v1369, %v1356
          %v1552 = vpack.c.b16 %v1370, %v1357
          %v1553 = vpack.c.b16 %v1371, %v1358
          %v1554 = vpack.c.b16 %v1372, %v1359
          %v1555 = vpack.c.b16 %v1373, %v1360
          %v1556 = vpack.c.b16 %v1374, %v1361
          %v1557 = vpack.c.b16 %v1388, %v1375
          %v1558 = vpack.c.b16 %v1389, %v1376
          %v1559 = vpack.c.b16 %v1390, %v1377
          %v1560 = vpack.c.b16 %v1391, %v1378
          %v1561 = vpack.c.b16 %v1392, %v1379
          %v1562 = vpack.c.b16 %v1393, %v1380
          %v1563 = vpack.c.b16 %v1394, %v1381
          %v1564 = vpack.c.b16 %v1395, %v1382
          %v1565 = vpack.c.b16 %v1396, %v1383
          %v1566 = vpack.c.b16 %v1397, %v1384
          %v1567 = vpack.c.b16 %v1398, %v1385
          %v1568 = vpack.c.b16 %v1399, %v1386
          %v1569 = vpack.c.b16 %v1400, %v1387
          %v1570 = vpack.c.b16 %v1414, %v1401
          %v1571 = vpack.c.b16 %v1415, %v1402
          %v1572 = vpack.c.b16 %v1416, %v1403
          %v1573 = vpack.c.b16 %v1417, %v1404
          %v1574 = vpack.c.b16 %v1418, %v1405
          %v1575 = vpack.c.b16 %v1419, %v1406
          %v1576 = vpack.c.b16 %v1420, %v1407
          %v1577 = vpack.c.b16 %v1421, %v1408
          %v1578 = vpack.c.b16 %v1422, %v1409
          %v1579 = vpack.c.b16 %v1423, %v1410
          %v1580 = vpack.c.b16 %v1424, %v1411
          %v1581 = vpack.c.b16 %v1425, %v1412
          %v1582 = vpack.c.b16 %v1426, %v1413
          %v1583 = vpack.c.b16 %v1440, %v1427
          %v1584 = vpack.c.b16 %v1441, %v1428
          %v1585 = vpack.c.b16 %v1442, %v1429
          %v1586 = vpack.c.b16 %v1443, %v1430
          %v1587 = vpack.c.b16 %v1444, %v1431
          %v1588 = vpack.c.b16 %v1445, %v1432
          %v1589 = vpack.c.b16 %v1446, %v1433
          %v1590 = vpack.c.b16 %v1447, %v1434
          %v1591 = vpack.c.b16 %v1448, %v1435
          %v1592 = vpack.c.b16 %v1449, %v1436
          %v1593 = vpack.c.b16 %v1450, %v1437
          %v1594 = vpack.c.b16 %v1451, %v1438
          %v1595 = vpack.c.b16 %v1452, %v1439
          %v1596 = vpack.c.b16 %v1466, %v1453
          %v1597 = vpack.c.b16 %v1467, %v1454
          %v1598 = vpack.c.b16 %v1468, %v1455
          %v1599 = vpack.c.b16 %v1469, %v1456
          %v1600 = vpack.c.b16 %v1470, %v1457
          %v1601 = vpack.c.b16 %v1471, %v1458
          %v1602 = vpack.c.b16 %v1472, %v1459
          %v1603 = vpack.c.b16 %v1473, %v1460
          %v1604 = vpack.c.b16 %v1474, %v1461
          %v1605 = vpack.c.b16 %v1475, %v1462
          %v1606 = vpack.c.b16 %v1476, %v1463
          %v1607 = vpack.c.b16 %v1477, %v1464
          %v1608 = vpack.c.b16 %v1478, %v1465
          %v1609 = vpack.c.b16 %v1492, %v1479
          %v1610 = vpack.c.b16 %v1493, %v1480
          %v1611 = vpack.c.b16 %v1494, %v1481
          %v1612 = vpack.c.b16 %v1495, %v1482
          %v1613 = vpack.c.b16 %v1496, %v1483
          %v1614 = vpack.c.b16 %v1497, %v1484
          %v1615 = vpack.c.b16 %v1498, %v1485
          %v1616 = vpack.c.b16 %v1499, %v1486
          %v1617 = vpack.c.b16 %v1500, %v1487
          %v1618 = vpack.c.b16 %v1501, %v1488
          %v1619 = vpack.c.b16 %v1502, %v1489
          %v1620 = vpack.c.b16 %v1503, %v1490
          %v1621 = vpack.c.b16 %v1504, %v1491
          %v1622 = vpack.c.b16 %v1518, %v1505
          %v1623 = vpack.c.b16 %v1519, %v1506
          %v1624 = vpack.c.b16 %v1520, %v1507
          %v1625 = vpack.c.b16 %v1521, %v1508
          %v1626 = vpack.c.b16 %v1522, %v1509
          %v1627 = vpack.c.b16 %v1523, %v1510
          %v1628 = vpack.c.b16 %v1524, %v1511
          %v1629 = vpack.c.b16 %v1525, %v1512
          %v1630 = vpack.c.b16 %v1526, %v1513
          %v1631 = vpack.c.b16 %v1527, %v1514
          %v1632 = vpack.c.b16 %v1528, %v1515
          %v1633 = vpack.c.b16 %v1529, %v1516
          %v1634 = vpack.c.b16 %v1530, %v1517
          %v2155 = vunpack.c.l.b16 %v785
          %v2156 = vunpack.c.h.b16 %v785
          %v2157 = vunpack.c.l.b16 %v786
          %v2158 = vunpack.c.h.b16 %v786
          %v2159 = vunpack.c.l.b16 %v787
          %v2160 = vunpack.c.h.b16 %v787
          %v2161 = vunpack.c.l.b16 %v788
          %v2162 = vunpack.c.h.b16 %v788
          %v2163 = vunpack.c.l.b16 %v789
          %v2164 = vunpack.c.h.b16 %v789
          %v2165 = vunpack.c.l.b16 %v790
          %v2166 = vunpack.c.h.b16 %v790
          %v2167 = vunpack.c.l.b16 %v791
          %v2168 = vunpack.c.h.b16 %v791
          %v2169 = vunpack.c.l.b16 %v792
          %v2170 = vunpack.c.h.b16 %v792
          %v2171 = vunpack.c.l.b16 %v793
          %v2172 = vunpack.c.h.b16 %v793
          %v2173 = vunpack.c.l.b16 %v794
          %v2174 = vunpack.c.h.b16 %v794
          %v2175 = vunpack.c.l.b16 %v795
          %v2176 = vunpack.c.h.b16 %v795
          %v2177 = vunpack.c.l.b16 %v796
          %v2178 = vunpack.c.h.b16 %v796
          %v2179 = vunpack.c.l.b16 %v797
          %v2180 = vunpack.c.h.b16 %v797
          %v2181 = vunpack.c.l.b16 %v798
          %v2182 = vunpack.c.h.b16 %v798
          %v2183 = vunpack.c.l.b16 %v799
          %v2184 = vunpack.c.h.b16 %v799
          %v2185 = vunpack.c.l.b16 %v800
          %v2186 = vunpack.c.h.b16 %v800
          %v2187 = vunpack.c.l.b16 %v801
          %v2188 = vunpack.c.h.b16 %v801
          %v2189 = vunpack.c.l.b16 %v802
          %v2190 = vunpack.c.h.b16 %v802
          %v2191 = vunpack.c.l.b16 %v803
          %v2192 = vunpack.c.h.b16 %v803
          %v2193 = vunpack.c.l.b16 %v804
          %v2194 = vunpack.c.h.b16 %v804
          %v2195 = vunpack.c.l.b16 %v805
          %v2196 = vunpack.c.h.b16 %v805
          %v2197 = vunpack.c.l.b16 %v806
          %v2198 = vunpack.c.h.b16 %v806
          %v2199 = vunpack.c.l.b16 %v807
          %v2200 = vunpack.c.h.b16 %v807
          %v2201 = vunpack.c.l.b16 %v808
          %v2202 = vunpack.c.h.b16 %v808
          %v2203 = vunpack.c.l.b16 %v809
          %v2204 = vunpack.c.h.b16 %v809
          %v2205 = vunpack.c.l.b16 %v810
          %v2206 = vunpack.c.h.b16 %v810
          %v2207 = vunpack.c.l.b16 %v811
          %v2208 = vunpack.c.h.b16 %v811
          %v2209 = vunpack.c.l.b16 %v812
          %v2210 = vunpack.c.h.b16 %v812
          %v2211 = vunpack.c.l.b16 %v813
          %v2212 = vunpack.c.h.b16 %v813
          %v2213 = vunpack.c.l.b16 %v814
          %v2214 = vunpack.c.h.b16 %v814
          %v2215 = vunpack.c.l.b16 %v815
          %v2216 = vunpack.c.h.b16 %v815
          %v2217 = vunpack.c.l.b16 %v816
          %v2218 = vunpack.c.h.b16 %v816
          %v2219 = vunpack.c.l.b16 %v817
          %v2220 = vunpack.c.h.b16 %v817
          %v2221 = vunpack.c.l.b16 %v818
          %v2222 = vunpack.c.h.b16 %v818
          %v2223 = vunpack.c.l.b16 %v819
          %v2224 = vunpack.c.h.b16 %v819
          %v2225 = vunpack.c.l.b16 %v820
          %v2226 = vunpack.c.h.b16 %v820
          %v2227 = vunpack.c.l.b16 %v821
          %v2228 = vunpack.c.h.b16 %v821
          %v2229 = vunpack.c.l.b16 %v822
          %v2230 = vunpack.c.h.b16 %v822
          %v2231 = vunpack.c.l.b16 %v823
          %v2232 = vunpack.c.h.b16 %v823
          %v2233 = vunpack.c.l.b16 %v824
          %v2234 = vunpack.c.h.b16 %v824
          %v2235 = vunpack.c.l.b16 %v825
          %v2236 = vunpack.c.h.b16 %v825
          %v2237 = vunpack.c.l.b16 %v826
          %v2238 = vunpack.c.h.b16 %v826
          %v2239 = vunpack.c.l.b16 %v827
          %v2240 = vunpack.c.h.b16 %v827
          %v2241 = vunpack.c.l.b16 %v828
          %v2242 = vunpack.c.h.b16 %v828
          %v2243 = vunpack.c.l.b16 %v829
          %v2244 = vunpack.c.h.b16 %v829
          %v2245 = vunpack.c.l.b16 %v830
          %v2246 = vunpack.c.h.b16 %v830
          %v2247 = vunpack.c.l.b16 %v831
          %v2248 = vunpack.c.h.b16 %v831
          %v2249 = vunpack.c.l.b16 %v832
          %v2250 = vunpack.c.h.b16 %v832
          %v2251 = vunpack.c.l.b16 %v833
          %v2252 = vunpack.c.h.b16 %v833
          %v2253 = vunpack.c.l.b16 %v834
          %v2254 = vunpack.c.h.b16 %v834
          %v2255 = vunpack.c.l.b16 %v835
          %v2256 = vunpack.c.h.b16 %v835
          %v2257 = vunpack.c.l.b16 %v836
          %v2258 = vunpack.c.h.b16 %v836
          %v2259 = vunpack.c.l.b16 %v837
          %v2260 = vunpack.c.h.b16 %v837
          %v2261 = vunpack.c.l.b16 %v838
          %v2262 = vunpack.c.h.b16 %v838
          %v2263 = vunpack.c.l.b16 %v839
          %v2264 = vunpack.c.h.b16 %v839
          %v2265 = vunpack.c.l.b16 %v840
          %v2266 = vunpack.c.h.b16 %v840
          %v2267 = vunpack.c.l.b16 %v841
          %v2268 = vunpack.c.h.b16 %v841
          %v2269 = vunpack.c.l.b16 %v842
          %v2270 = vunpack.c.h.b16 %v842
          %v2271 = vunpack.c.l.b16 %v843
          %v2272 = vunpack.c.h.b16 %v843
          %v2273 = vunpack.c.l.b16 %v844
          %v2274 = vunpack.c.h.b16 %v844
          %v2275 = vunpack.c.l.b16 %v845
          %v2276 = vunpack.c.h.b16 %v845
          %v2277 = vunpack.c.l.b16 %v846
          %v2278 = vunpack.c.h.b16 %v846
          %v2279 = vunpack.c.l.b16 %v847
          %v2280 = vunpack.c.h.b16 %v847
          %v2281 = vunpack.c.l.b16 %v848
          %v2282 = vunpack.c.h.b16 %v848
          %v2283 = vunpack.c.l.b16 %v849
          %v2284 = vunpack.c.h.b16 %v849
          %v2285 = vunpack.c.l.b16 %v850
          %v2286 = vunpack.c.h.b16 %v850
          %v2287 = vunpack.c.l.b16 %v851
          %v2288 = vunpack.c.h.b16 %v851
          %v2289 = vunpack.c.l.b16 %v852
          %v2290 = vunpack.c.h.b16 %v852
          %v2291 = vunpack.c.l.b16 %v853
          %v2292 = vunpack.c.h.b16 %v853
          %v2293 = vunpack.c.l.b16 %v854
          %v2294 = vunpack.c.h.b16 %v854
          %v2295 = vunpack.c.l.b16 %v855
          %v2296 = vunpack.c.h.b16 %v855
          %v2297 = vunpack.c.l.b16 %v856
          %v2298 = vunpack.c.h.b16 %v856
          %v2299 = vunpack.c.l.b16 %v857
          %v2300 = vunpack.c.h.b16 %v857
          %v2301 = vunpack.c.l.b16 %v858
          %v2302 = vunpack.c.h.b16 %v858
          %v2303 = vunpack.c.l.b16 %v859
          %v2304 = vunpack.c.h.b16 %v859
          %v2305 = vunpack.c.l.b16 %v860
          %v2306 = vunpack.c.h.b16 %v860
          %v2307 = vunpack.c.l.b16 %v861
          %v2308 = vunpack.c.h.b16 %v861
          %v2309 = vunpack.c.l.b16 %v862
          %v2310 = vunpack.c.h.b16 %v862
          %v2311 = vunpack.c.l.b16 %v863
          %v2312 = vunpack.c.h.b16 %v863
          %v2313 = vunpack.c.l.b16 %v864
          %v2314 = vunpack.c.h.b16 %v864
          %v2315 = vunpack.c.l.b16 %v865
          %v2316 = vunpack.c.h.b16 %v865
          %v2317 = vunpack.c.l.b16 %v866
          %v2318 = vunpack.c.h.b16 %v866
          %v2319 = vunpack.c.l.b16 %v867
          %v2320 = vunpack.c.h.b16 %v867
          %v2321 = vunpack.c.l.b16 %v868
          %v2322 = vunpack.c.h.b16 %v868
          %v2323 = vunpack.c.l.b16 %v869
          %v2324 = vunpack.c.h.b16 %v869
          %v2325 = vunpack.c.l.b16 %v870
          %v2326 = vunpack.c.h.b16 %v870
          %v2327 = vunpack.c.l.b16 %v871
          %v2328 = vunpack.c.h.b16 %v871
          %v2329 = vunpack.c.l.b16 %v872
          %v2330 = vunpack.c.h.b16 %v872
          %v2331 = vunpack.c.l.b16 %v873
          %v2332 = vunpack.c.h.b16 %v873
          %v2333 = vunpack.c.l.b16 %v874
          %v2334 = vunpack.c.h.b16 %v874
          %v2335 = vunpack.c.l.b16 %v875
          %v2336 = vunpack.c.h.b16 %v875
          %v2337 = vunpack.c.l.b16 %v876
          %v2338 = vunpack.c.h.b16 %v876
          %v2339 = vunpack.c.l.b16 %v877
          %v2340 = vunpack.c.h.b16 %v877
          %v2341 = vunpack.c.l.b16 %v878
          %v2342 = vunpack.c.h.b16 %v878
          %v2343 = vunpack.c.l.b16 %v879
          %v2344 = vunpack.c.h.b16 %v879
          %v2345 = vunpack.c.l.b16 %v880
          %v2346 = vunpack.c.h.b16 %v880
          %v2347 = vunpack.c.l.b16 %v881
          %v2348 = vunpack.c.h.b16 %v881
          %v2349 = vunpack.c.l.b16 %v882
          %v2350 = vunpack.c.h.b16 %v882
          %v2351 = vunpack.c.l.b16 %v883
          %v2352 = vunpack.c.h.b16 %v883
          %v2353 = vunpack.c.l.b16 %v884
          %v2354 = vunpack.c.h.b16 %v884
          %v2355 = vunpack.c.l.b16 %v885
          %v2356 = vunpack.c.h.b16 %v885
          %v2357 = vunpack.c.l.b16 %v886
          %v2358 = vunpack.c.h.b16 %v886
          %v2359 = vunpack.c.l.b16 %v887
          %v2360 = vunpack.c.h.b16 %v887
          %v2361 = vunpack.c.l.b16 %v888
          %v2362 = vunpack.c.h.b16 %v888
          %v2363 = vunpack.c.l.b16 %v889
          %v2364 = vunpack.c.h.b16 %v889
          %v2365 = vunpack.c.l.b16 %v890
          %v2366 = vunpack.c.h.b16 %v890
          %v2367 = vunpack.c.l.b16 %v891
          %v2368 = vunpack.c.h.b16 %v891
          %v2369 = vunpack.c.l.b16 %v892
          %v2370 = vunpack.c.h.b16 %v892
          %v2371 = vunpack.c.l.b16 %v893
          %v2372 = vunpack.c.h.b16 %v893
          %v2373 = vunpack.c.l.b16 %v894
          %v2374 = vunpack.c.h.b16 %v894
          %v2375 = vunpack.c.l.b16 %v895
          %v2376 = vunpack.c.h.b16 %v895
          %v2377 = vunpack.c.l.b16 %v896
          %v2378 = vunpack.c.h.b16 %v896
          %v2379 = vunpack.c.l.b16 %v897
          %v2380 = vunpack.c.h.b16 %v897
          %v2381 = vunpack.c.l.b16 %v898
          %v2382 = vunpack.c.h.b16 %v898
          %v2383 = vunpack.c.l.b16 %v899
          %v2384 = vunpack.c.h.b16 %v899
          %v2385 = vunpack.c.l.b16 %v900
          %v2386 = vunpack.c.h.b16 %v900
          %v2387 = vunpack.c.l.b16 %v901
          %v2388 = vunpack.c.h.b16 %v901
          %v2389 = vunpack.c.l.b16 %v902
          %v2390 = vunpack.c.h.b16 %v902
          %v2391 = vunpack.c.l.b16 %v903
          %v2392 = vunpack.c.h.b16 %v903
          %v2393 = vunpack.c.l.b16 %v904
          %v2394 = vunpack.c.h.b16 %v904
          %v2395 = vunpack.c.l.b16 %v905
          %v2396 = vunpack.c.h.b16 %v905
          %v2397 = vunpack.c.l.b16 %v906
          %v2398 = vunpack.c.h.b16 %v906
          %v2399 = vunpack.c.l.b16 %v907
          %v2400 = vunpack.c.h.b16 %v907
          %v2401 = vunpack.c.l.b16 %v908
          %v2402 = vunpack.c.h.b16 %v908
          %v2403 = vunpack.c.l.b16 %v909
          %v2404 = vunpack.c.h.b16 %v909
          %v2405 = vunpack.c.l.b16 %v910
          %v2406 = vunpack.c.h.b16 %v910
          %v2407 = vunpack.c.l.b16 %v911
          %v2408 = vunpack.c.h.b16 %v911
          %v2409 = vunpack.c.l.b16 %v912
          %v2410 = vunpack.c.h.b16 %v912
          %v2411 = vunpack.c.l.b16 %v913
          %v2412 = vunpack.c.h.b16 %v913
          %v2413 = vunpack.c.l.b16 %v914
          %v2414 = vunpack.c.h.b16 %v914
          %v2415 = vunpack.c.l.b16 %v915
          %v2416 = vunpack.c.h.b16 %v915
          %v2417 = vunpack.c.l.b16 %v916
          %v2418 = vunpack.c.h.b16 %v916
          %v2419 = vunpack.c.l.b16 %v917
          %v2420 = vunpack.c.h.b16 %v917
          %v2421 = vunpack.c.l.b16 %v918
          %v2422 = vunpack.c.h.b16 %v918
          %v2423 = vunpack.c.l.b16 %v919
          %v2424 = vunpack.c.h.b16 %v919
          %v2425 = vunpack.c.l.b16 %v920
          %v2426 = vunpack.c.h.b16 %v920
          %v2427 = vunpack.c.l.b16 %v921
          %v2428 = vunpack.c.h.b16 %v921
          %v2429 = vunpack.c.l.b16 %v922
          %v2430 = vunpack.c.h.b16 %v922
          %v2431 = vunpack.c.l.b16 %v923
          %v2432 = vunpack.c.h.b16 %v923
          %v2433 = vunpack.c.l.b16 %v924
          %v2434 = vunpack.c.h.b16 %v924
          %v2435 = vunpack.c.l.b16 %v925
          %v2436 = vunpack.c.h.b16 %v925
          %v2437 = vunpack.c.l.b16 %v926
          %v2438 = vunpack.c.h.b16 %v926
          %v2439 = vunpack.c.l.b16 %v927
          %v2440 = vunpack.c.h.b16 %v927
          %v2441 = vunpack.c.l.b16 %v928
          %v2442 = vunpack.c.h.b16 %v928
          %v2443 = vunpack.c.l.b16 %v929
          %v2444 = vunpack.c.h.b16 %v929
          %v2445 = vunpack.c.l.b16 %v930
          %v2446 = vunpack.c.h.b16 %v930
          %v2447 = vunpack.c.l.b16 %v931
          %v2448 = vunpack.c.h.b16 %v931
          %v2449 = vunpack.c.l.b16 %v932
          %v2450 = vunpack.c.h.b16 %v932
          %v2451 = vunpack.c.l.b16 %v933
          %v2452 = vunpack.c.h.b16 %v933
          %v2453 = vunpack.c.l.b16 %v934
          %v2454 = vunpack.c.h.b16 %v934
          %v2455 = vunpack.c.l.b16 %v935
          %v2456 = vunpack.c.h.b16 %v935
          %v2457 = vunpack.c.l.b16 %v936
          %v2458 = vunpack.c.h.b16 %v936
          %v2459 = vunpack.c.l.b16 %v937
          %v2460 = vunpack.c.h.b16 %v937
          %v2461 = vunpack.c.l.b16 %v938
          %v2462 = vunpack.c.h.b16 %v938
          %v2463 = vunpack.c.l.b16 %v939
          %v2464 = vunpack.c.h.b16 %v939
          %v2465 = vunpack.c.l.b16 %v940
          %v2466 = vunpack.c.h.b16 %v940
          %v2467 = vunpack.c.l.b16 %v941
          %v2468 = vunpack.c.h.b16 %v941
          %v2469 = vunpack.c.l.b16 %v942
          %v2470 = vunpack.c.h.b16 %v942
          %v2471 = vunpack.c.l.b16 %v943
          %v2472 = vunpack.c.h.b16 %v943
          %v2473 = vunpack.c.l.b16 %v944
          %v2474 = vunpack.c.h.b16 %v944
          %v2475 = vunpack.c.l.b16 %v945
          %v2476 = vunpack.c.h.b16 %v945
          %v2477 = vunpack.c.l.b16 %v946
          %v2478 = vunpack.c.h.b16 %v946
          %v2479 = vunpack.c.l.b16 %v947
          %v2480 = vunpack.c.h.b16 %v947
          %v2481 = vunpack.c.l.b16 %v948
          %v2482 = vunpack.c.h.b16 %v948
          %v2483 = vunpack.c.l.b16 %v949
          %v2484 = vunpack.c.h.b16 %v949
          %v2485 = vunpack.c.l.b16 %v950
          %v2486 = vunpack.c.h.b16 %v950
          %v2487 = vunpack.c.l.b16 %v951
          %v2488 = vunpack.c.h.b16 %v951
          %v2489 = vunpack.c.l.b16 %v952
          %v2490 = vunpack.c.h.b16 %v952
          %v2491 = vunpack.c.l.b16 %v953
          %v2492 = vunpack.c.h.b16 %v953
          %v2493 = vunpack.c.l.b16 %v954
          %v2494 = vunpack.c.h.b16 %v954
          %v2495 = vunpack.c.l.b16 %v955
          %v2496 = vunpack.c.h.b16 %v955
          %v2497 = vunpack.c.l.b16 %v956
          %v2498 = vunpack.c.h.b16 %v956
          %v2499 = vunpack.c.l.b16 %v957
          %v2500 = vunpack.c.h.b16 %v957
          %v2501 = vunpack.c.l.b16 %v958
          %v2502 = vunpack.c.h.b16 %v958
          %v2503 = vunpack.c.l.b16 %v959
          %v2504 = vunpack.c.h.b16 %v959
          %v2505 = vunpack.c.l.b16 %v960
          %v2506 = vunpack.c.h.b16 %v960
          %v2507 = vunpack.c.l.b16 %v961
          %v2508 = vunpack.c.h.b16 %v961
          %v2509 = vunpack.c.l.b16 %v962
          %v2510 = vunpack.c.h.b16 %v962
          %v2511 = vunpack.c.l.b16 %v963
          %v2512 = vunpack.c.h.b16 %v963
          %v2513 = vunpack.c.l.b16 %v964
          %v2514 = vunpack.c.h.b16 %v964
          %v2515 = vunpack.c.l.b16 %v965
          %v2516 = vunpack.c.h.b16 %v965
          %v2517 = vunpack.c.l.b16 %v966
          %v2518 = vunpack.c.h.b16 %v966
          %v2519 = vunpack.c.l.b16 %v967
          %v2520 = vunpack.c.h.b16 %v967
          %v2521 = vunpack.c.l.b16 %v968
          %v2522 = vunpack.c.h.b16 %v968
          %v2523 = vunpack.c.l.b16 %v969
          %v2524 = vunpack.c.h.b16 %v969
          %v2525 = vunpack.c.l.b16 %v970
          %v2526 = vunpack.c.h.b16 %v970
          %v2527 = vunpack.c.l.b16 %v971
          %v2528 = vunpack.c.h.b16 %v971
          %v2529 = vunpack.c.l.b16 %v972
          %v2530 = vunpack.c.h.b16 %v972
          %v2531 = vunpack.c.l.b16 %v973
          %v2532 = vunpack.c.h.b16 %v973
          %v2533 = vunpack.c.l.b16 %v974
          %v2534 = vunpack.c.h.b16 %v974
          %v2535 = vunpack.c.l.b16 %v975
          %v2536 = vunpack.c.h.b16 %v975
          %v2537 = vunpack.c.l.b16 %v976
          %v2538 = vunpack.c.h.b16 %v976
          %v2539 = vunpack.c.l.b16 %v977
          %v2540 = vunpack.c.h.b16 %v977
          %v2541 = vunpack.c.l.b16 %v978
          %v2542 = vunpack.c.h.b16 %v978
          %v2543 = vunpack.c.l.b16 %v979
          %v2544 = vunpack.c.h.b16 %v979
          %v2545 = vunpack.c.l.b16 %v980
          %v2546 = vunpack.c.h.b16 %v980
          %v2547 = vunpack.c.l.b16 %v981
          %v2548 = vunpack.c.h.b16 %v981
          %v2549 = vunpack.c.l.b16 %v982
          %v2550 = vunpack.c.h.b16 %v982
          %v2551 = vunpack.c.l.b16 %v983
          %v2552 = vunpack.c.h.b16 %v983
          %v2553 = vunpack.c.l.b16 %v984
          %v2554 = vunpack.c.h.b16 %v984
          %v2555 = vunpack.c.l.b16 %v985
          %v2556 = vunpack.c.h.b16 %v985
          %v2557 = vunpack.c.l.b16 %v986
          %v2558 = vunpack.c.h.b16 %v986
          %v2559 = vunpack.c.l.b16 %v987
          %v2560 = vunpack.c.h.b16 %v987
          %v2561 = vunpack.c.l.b16 %v988
          %v2562 = vunpack.c.h.b16 %v988
          %v2563 = vunpack.c.l.b16 %v989
          %v2564 = vunpack.c.h.b16 %v989
          %v2565 = vunpack.c.l.b16 %v990
          %v2566 = vunpack.c.h.b16 %v990
          %v2567 = vunpack.c.l.b16 %v991
          %v2568 = vunpack.c.h.b16 %v991
          %v2569 = vunpack.c.l.b16 %v992
          %v2570 = vunpack.c.h.b16 %v992
          %v2571 = vunpack.c.l.b16 %v993
          %v2572 = vunpack.c.h.b16 %v993
          %v2573 = vunpack.c.l.b16 %v994
          %v2574 = vunpack.c.h.b16 %v994
          %v2575 = vunpack.c.l.b16 %v995
          %v2576 = vunpack.c.h.b16 %v995
          %v2577 = vunpack.c.l.b16 %v996
          %v2578 = vunpack.c.h.b16 %v996
          %v2579 = vunpack.c.l.b16 %v997
          %v2580 = vunpack.c.h.b16 %v997
          %v2581 = vunpack.c.l.b16 %v998
          %v2582 = vunpack.c.h.b16 %v998
          %v2583 = vunpack.c.l.b16 %v999
          %v2584 = vunpack.c.h.b16 %v999
          %v2585 = vunpack.c.l.b16 %v1000
          %v2586 = vunpack.c.h.b16 %v1000
          %v2587 = vunpack.c.l.b16 %v1001
          %v2588 = vunpack.c.h.b16 %v1001
          %v2589 = vunpack.c.l.b16 %v1002
          %v2590 = vunpack.c.h.b16 %v1002
          %v2591 = vunpack.c.l.b16 %v1003
          %v2592 = vunpack.c.h.b16 %v1003
          %v2593 = vunpack.c.l.b16 %v1004
          %v2594 = vunpack.c.h.b16 %v1004
          %v2595 = vunpack.c.l.b16 %v1005
          %v2596 = vunpack.c.h.b16 %v1005
          %v2597 = vunpack.c.l.b16 %v1006
          %v2598 = vunpack.c.h.b16 %v1006
          %v2599 = vunpack.c.l.b16 %v1007
          %v2600 = vunpack.c.h.b16 %v1007
          %v2601 = vunpack.c.l.b16 %v1008
          %v2602 = vunpack.c.h.b16 %v1008
          %v2603 = vunpack.c.l.b16 %v1009
          %v2604 = vunpack.c.h.b16 %v1009
          %v2605 = vunpack.c.l.b16 %v1010
          %v2606 = vunpack.c.h.b16 %v1010
          %v2607 = vunpack.c.l.b16 %v1011
          %v2608 = vunpack.c.h.b16 %v1011
          %v2609 = vunpack.c.l.b16 %v1012
          %v2610 = vunpack.c.h.b16 %v1012
          %v2611 = vunpack.c.l.b16 %v1013
          %v2612 = vunpack.c.h.b16 %v1013
          %v2613 = vunpack.c.l.b16 %v1014
          %v2614 = vunpack.c.h.b16 %v1014
          %v2615 = vunpack.c.l.b16 %v1015
          %v2616 = vunpack.c.h.b16 %v1015
          %v2617 = vunpack.c.l.b16 %v1016
          %v2618 = vunpack.c.h.b16 %v1016
          %v2619 = vunpack.c.l.b16 %v1017
          %v2620 = vunpack.c.h.b16 %v1017
          %v2621 = vunpack.c.l.b16 %v1018
          %v2622 = vunpack.c.h.b16 %v1018
          %v2623 = vunpack.c.l.b16 %v1019
          %v2624 = vunpack.c.h.b16 %v1019
          %v2625 = vunpack.c.l.b16 %v1020
          %v2626 = vunpack.c.h.b16 %v1020
          %v2627 = vunpack.c.l.b16 %v1021
          %v2628 = vunpack.c.h.b16 %v1021
          %v2629 = vunpack.c.l.b16 %v1022
          %v2630 = vunpack.c.h.b16 %v1022
          %v2631 = vunpack.c.l.b16 %v1023
          %v2632 = vunpack.c.h.b16 %v1023
          %v2633 = vunpack.c.l.b16 %v1024
          %v2634 = vunpack.c.h.b16 %v1024
          %v2635 = vunpack.c.l.b16 %v1025
          %v2636 = vunpack.c.h.b16 %v1025
          %v2637 = vunpack.c.l.b16 %v1026
          %v2638 = vunpack.c.h.b16 %v1026
          %v2639 = vunpack.c.l.b16 %v1027
          %v2640 = vunpack.c.h.b16 %v1027
          %v2641 = vunpack.c.l.b16 %v1028
          %v2642 = vunpack.c.h.b16 %v1028
          %v2643 = vunpack.c.l.b16 %v1029
          %v2644 = vunpack.c.h.b16 %v1029
          %v2645 = vunpack.c.l.b16 %v1030
          %v2646 = vunpack.c.h.b16 %v1030
          %v2647 = vunpack.c.l.b16 %v1031
          %v2648 = vunpack.c.h.b16 %v1031
          %v2649 = vunpack.c.l.b16 %v1032
          %v2650 = vunpack.c.h.b16 %v1032
          %v2651 = vunpack.c.l.b16 %v1033
          %v2652 = vunpack.c.h.b16 %v1033
          %v2653 = vunpack.c.l.b16 %v1034
          %v2654 = vunpack.c.h.b16 %v1034
          %v2655 = vunpack.c.l.b16 %v1035
          %v2656 = vunpack.c.h.b16 %v1035
          %v2657 = vunpack.c.l.b16 %v1036
          %v2658 = vunpack.c.h.b16 %v1036
          %v2659 = vunpack.c.l.b16 %v1037
          %v2660 = vunpack.c.h.b16 %v1037
          %v2661 = vunpack.c.l.b16 %v1038
          %v2662 = vunpack.c.h.b16 %v1038
          %v2663 = vunpack.c.l.b16 %v1039
          %v2664 = vunpack.c.h.b16 %v1039
          %v2665 = vunpack.c.l.b16 %v1040
          %v2666 = vunpack.c.h.b16 %v1040
          %v2667 = vunpack.c.l.b16 %v1041
          %v2668 = vunpack.c.h.b16 %v1041
          %v2669 = vunpack.c.l.b16 %v1042
          %v2670 = vunpack.c.h.b16 %v1042
          %v2671 = vunpack.c.l.b16 %v1043
          %v2672 = vunpack.c.h.b16 %v1043
          %v2673 = vunpack.c.l.b16 %v1044
          %v2674 = vunpack.c.h.b16 %v1044
          %v2675 = vunpack.c.l.b16 %v1045
          %v2676 = vunpack.c.h.b16 %v1045
          %v2677 = vunpack.c.l.b16 %v1046
          %v2678 = vunpack.c.h.b16 %v1046
          %v2679 = vunpack.c.l.b16 %v1047
          %v2680 = vunpack.c.h.b16 %v1047
          %v2681 = vunpack.c.l.b16 %v1048
          %v2682 = vunpack.c.h.b16 %v1048
          %v2683 = vunpack.c.l.b16 %v1049
          %v2684 = vunpack.c.h.b16 %v1049
          %v2685 = vunpack.c.l.b16 %v1050
          %v2686 = vunpack.c.h.b16 %v1050
          %v2687 = vunpack.c.l.b16 %v1051
          %v2688 = vunpack.c.h.b16 %v1051
          %v2689 = vunpack.c.l.b16 %v1052
          %v2690 = vunpack.c.h.b16 %v1052
          %v2691 = vunpack.c.l.b16 %v1053
          %v2692 = vunpack.c.h.b16 %v1053
          %v2693 = vunpack.c.l.b16 %v1054
          %v2694 = vunpack.c.h.b16 %v1054
          %v2695 = vunpack.c.l.b16 %v1055
          %v2696 = vunpack.c.h.b16 %v1055
          %v2697 = vunpack.c.l.b16 %v1056
          %v2698 = vunpack.c.h.b16 %v1056
          %v2699 = vunpack.c.l.b16 %v1057
          %v2700 = vunpack.c.h.b16 %v1057
          %v2701 = vunpack.c.l.b16 %v1058
          %v2702 = vunpack.c.h.b16 %v1058
          %v2703 = vunpack.c.l.b16 %v1059
          %v2704 = vunpack.c.h.b16 %v1059
          %v2705 = vunpack.c.l.b16 %v1060
          %v2706 = vunpack.c.h.b16 %v1060
          %v2707 = vunpack.c.l.b16 %v1061
          %v2708 = vunpack.c.h.b16 %v1061
          %v2709 = vunpack.c.l.b16 %v1062
          %v2710 = vunpack.c.h.b16 %v1062
          %v2711 = vunpack.c.l.b16 %v1063
          %v2712 = vunpack.c.h.b16 %v1063
          %v2713 = vunpack.c.l.b16 %v1064
          %v2714 = vunpack.c.h.b16 %v1064
          %v2715 = vunpack.c.l.b16 %v1065
          %v2716 = vunpack.c.h.b16 %v1065
          %v2717 = vunpack.c.l.b16 %v1066
          %v2718 = vunpack.c.h.b16 %v1066
          %v2719 = vunpack.c.l.b16 %v1067
          %v2720 = vunpack.c.h.b16 %v1067
          %v2721 = vunpack.c.l.b16 %v1068
          %v2722 = vunpack.c.h.b16 %v1068
          %v2723 = vunpack.c.l.b16 %v1069
          %v2724 = vunpack.c.h.b16 %v1069
          %v2725 = vunpack.c.l.b16 %v1070
          %v2726 = vunpack.c.h.b16 %v1070
          %v2727 = vunpack.c.l.b16 %v1071
          %v2728 = vunpack.c.h.b16 %v1071
          %v2729 = vunpack.c.l.b16 %v1072
          %v2730 = vunpack.c.h.b16 %v1072
          %v2731 = vunpack.c.l.b16 %v1073
          %v2732 = vunpack.c.h.b16 %v1073
          %v2733 = vunpack.c.l.b16 %v1074
          %v2734 = vunpack.c.h.b16 %v1074
          %v2735 = vunpack.c.l.b16 %v1075
          %v2736 = vunpack.c.h.b16 %v1075
          %v2737 = vunpack.c.l.b16 %v1076
          %v2738 = vunpack.c.h.b16 %v1076
          %v2739 = vunpack.c.l.b16 %v1077
          %v2740 = vunpack.c.h.b16 %v1077
          %v2741 = vunpack.c.l.b16 %v1078
          %v2742 = vunpack.c.h.b16 %v1078
          %v2743 = vunpack.c.l.b16 %v1079
          %v2744 = vunpack.c.h.b16 %v1079
          %v2745 = vunpack.c.l.b16 %v1080
          %v2746 = vunpack.c.h.b16 %v1080
          %v2747 = vunpack.c.l.b16 %v1081
          %v2748 = vunpack.c.h.b16 %v1081
          %v2749 = vunpack.c.l.b16 %v1082
          %v2750 = vunpack.c.h.b16 %v1082
          %v2751 = vunpack.c.l.b16 %v1083
          %v2752 = vunpack.c.h.b16 %v1083
          %v2753 = vunpack.c.l.b16 %v1084
          %v2754 = vunpack.c.h.b16 %v1084
          %v2755 = vunpack.c.l.b16 %v1085
          %v2756 = vunpack.c.h.b16 %v1085
          %v2757 = vunpack.c.l.b16 %v1086
          %v2758 = vunpack.c.h.b16 %v1086
          %v2759 = vunpack.c.l.b16 %v1087
          %v2760 = vunpack.c.h.b16 %v1087
          %v2761 = vunpack.c.l.b16 %v1088
          %v2762 = vunpack.c.h.b16 %v1088
          %v2763 = vunpack.c.l.b16 %v1089
          %v2764 = vunpack.c.h.b16 %v1089
          %v2765 = vunpack.c.l.b16 %v1090
          %v2766 = vunpack.c.h.b16 %v1090
          %v2767 = vunpack.c.l.b16 %v1091
          %v2768 = vunpack.c.h.b16 %v1091
          %v2769 = vunpack.c.l.b16 %v1092
          %v2770 = vunpack.c.h.b16 %v1092
          %v2771 = vunpack.c.l.b16 %v1093
          %v2772 = vunpack.c.h.b16 %v1093
          %v2773 = vunpack.c.l.b16 %v1094
          %v2774 = vunpack.c.h.b16 %v1094
          %v2775 = vunpack.c.l.b16 %v1095
          %v2776 = vunpack.c.h.b16 %v1095
          %v2777 = vunpack.c.l.b16 %v1096
          %v2778 = vunpack.c.h.b16 %v1096
          %v2779 = vunpack.c.l.b16 %v1097
          %v2780 = vunpack.c.h.b16 %v1097
          %v2781 = vunpack.c.l.b16 %v1098
          %v2782 = vunpack.c.h.b16 %v1098
          %v2783 = vunpack.c.l.b16 %v1099
          %v2784 = vunpack.c.h.b16 %v1099
          %v2785 = vunpack.c.l.b16 %v1100
          %v2786 = vunpack.c.h.b16 %v1100
          %v2787 = vunpack.c.l.b16 %v1101
          %v2788 = vunpack.c.h.b16 %v1101
          %v2789 = vunpack.c.l.b16 %v1102
          %v2790 = vunpack.c.h.b16 %v1102
          %v2791 = vunpack.c.l.b16 %v1103
          %v2792 = vunpack.c.h.b16 %v1103
          %v2793 = vunpack.c.l.b16 %v1104
          %v2794 = vunpack.c.h.b16 %v1104
          %v2795 = vunpack.c.l.b16 %v1105
          %v2796 = vunpack.c.h.b16 %v1105
          %v2797 = vunpack.c.l.b16 %v1106
          %v2798 = vunpack.c.h.b16 %v1106
          %v2799 = vunpack.c.l.b16 %v1107
          %v2800 = vunpack.c.h.b16 %v1107
          %v2801 = vunpack.c.l.b16 %v1108
          %v2802 = vunpack.c.h.b16 %v1108
          %v2803 = vunpack.c.l.b16 %v1109
          %v2804 = vunpack.c.h.b16 %v1109
          %v2805 = vunpack.c.l.b16 %v1110
          %v2806 = vunpack.c.h.b16 %v1110
          %v2807 = vunpack.c.l.b16 %v1111
          %v2808 = vunpack.c.h.b16 %v1111
          %v2809 = vunpack.c.l.b16 %v1112
          %v2810 = vunpack.c.h.b16 %v1112
          %v2811 = vunpack.c.l.b16 %v1113
          %v2812 = vunpack.c.h.b16 %v1113
          %v2813 = vunpack.c.l.b16 %v1114
          %v2814 = vunpack.c.h.b16 %v1114
          %v2815 = vunpack.c.l.b16 %v1115
          %v2816 = vunpack.c.h.b16 %v1115
          %v2817 = vunpack.c.l.b16 %v1116
          %v2818 = vunpack.c.h.b16 %v1116
          %v2819 = vunpack.c.l.b16 %v1117
          %v2820 = vunpack.c.h.b16 %v1117
          %v2821 = vunpack.c.l.b16 %v1118
          %v2822 = vunpack.c.h.b16 %v1118
          %v2823 = vunpack.c.l.b16 %v1119
          %v2824 = vunpack.c.h.b16 %v1119
          %v2825 = vunpack.c.l.b16 %v1120
          %v2826 = vunpack.c.h.b16 %v1120
          %v2827 = vunpack.c.l.b16 %v1121
          %v2828 = vunpack.c.h.b16 %v1121
          %v2829 = vunpack.c.l.b16 %v1122
          %v2830 = vunpack.c.h.b16 %v1122
          %v2831 = vunpack.c.l.b16 %v1123
          %v2832 = vunpack.c.h.b16 %v1123
          %v2833 = vunpack.c.l.b16 %v1124
          %v2834 = vunpack.c.h.b16 %v1124
          %v2835 = vunpack.c.l.b16 %v1125
          %v2836 = vunpack.c.h.b16 %v1125
          %v2837 = vunpack.c.l.b16 %v1126
          %v2838 = vunpack.c.h.b16 %v1126
          %v2839 = vunpack.c.l.b16 %v1127
          %v2840 = vunpack.c.h.b16 %v1127
          %v2841 = vunpack.c.l.b16 %v1128
          %v2842 = vunpack.c.h.b16 %v1128
          %v2843 = vunpack.c.l.b16 %v1129
          %v2844 = vunpack.c.h.b16 %v1129
          %v2845 = vunpack.c.l.b16 %v1130
          %v2846 = vunpack.c.h.b16 %v1130
          %v2847 = vunpack.c.l.b16 %v1131
          %v2848 = vunpack.c.h.b16 %v1131
          %v2849 = vunpack.c.l.b16 %v1132
          %v2850 = vunpack.c.h.b16 %v1132
          %v2851 = vunpack.c.l.b16 %v1133
          %v2852 = vunpack.c.h.b16 %v1133
          %v2853 = vunpack.c.l.b16 %v1134
          %v2854 = vunpack.c.h.b16 %v1134
          %v2855 = vunpack.c.l.b16 %v1135
          %v2856 = vunpack.c.h.b16 %v1135
          %v2857 = vunpack.c.l.b16 %v1136
          %v2858 = vunpack.c.h.b16 %v1136
          %v2859 = vunpack.c.l.b16 %v1137
          %v2860 = vunpack.c.h.b16 %v1137
          %v2861 = vunpack.c.l.b16 %v1138
          %v2862 = vunpack.c.h.b16 %v1138
          %v2863 = vunpack.c.l.b16 %v1139
          %v2864 = vunpack.c.h.b16 %v1139
          %v2865 = vunpack.c.l.b16 %v1140
          %v2866 = vunpack.c.h.b16 %v1140
          %v2867 = vunpack.c.l.b16 %v1141
          %v2868 = vunpack.c.h.b16 %v1141
          %v2869 = vunpack.c.l.b16 %v1142
          %v2870 = vunpack.c.h.b16 %v1142
          %v2871 = vunpack.c.l.b16 %v1143
          %v2872 = vunpack.c.h.b16 %v1143
          %v2873 = vunpack.c.l.b16 %v1144
          %v2874 = vunpack.c.h.b16 %v1144
          %v2875 = vunpack.c.l.b16 %v1145
          %v2876 = vunpack.c.h.b16 %v1145
          %v2877 = vunpack.c.l.b16 %v1146
          %v2878 = vunpack.c.h.b16 %v1146
          %v2879 = vunpack.c.l.b16 %v1147
          %v2880 = vunpack.c.h.b16 %v1147
          %v2881 = vunpack.c.l.b16 %v1148
          %v2882 = vunpack.c.h.b16 %v1148
          %v2883 = vunpack.c.l.b16 %v1149
          %v2884 = vunpack.c.h.b16 %v1149
          %v2885 = vunpack.c.l.b16 %v1150
          %v2886 = vunpack.c.h.b16 %v1150
          %v2887 = vunpack.c.l.b16 %v1151
          %v2888 = vunpack.c.h.b16 %v1151
          %v2889 = vunpack.c.l.b16 %v1152
          %v2890 = vunpack.c.h.b16 %v1152
          %v2891 = vunpack.c.l.b16 %v1153
          %v2892 = vunpack.c.h.b16 %v1153
          %v2893 = vunpack.c.l.b16 %v1154
          %v2894 = vunpack.c.h.b16 %v1154
          %v2895 = vunpack.c.l.b16 %v1155
          %v2896 = vunpack.c.h.b16 %v1155
          %v2897 = vunpack.c.l.b16 %v1156
          %v2898 = vunpack.c.h.b16 %v1156
          %v2899 = vunpack.c.l.b16 %v1157
          %v2900 = vunpack.c.h.b16 %v1157
          %v2901 = vunpack.c.l.b16 %v1158
          %v2902 = vunpack.c.h.b16 %v1158
          %v2903 = vunpack.c.l.b16 %v1159
          %v2904 = vunpack.c.h.b16 %v1159
          %v2905 = vunpack.c.l.b16 %v1160
          %v2906 = vunpack.c.h.b16 %v1160
          %v2907 = vunpack.c.l.b16 %v1161
          %v2908 = vunpack.c.h.b16 %v1161
          %v2909 = vunpack.c.l.b16 %v1162
          %v2910 = vunpack.c.h.b16 %v1162
          %v2911 = vunpack.c.l.b16 %v1163
          %v2912 = vunpack.c.h.b16 %v1163
          %v2913 = vunpack.c.l.b16 %v1164
          %v2914 = vunpack.c.h.b16 %v1164
          %v2915 = vunpack.c.l.b16 %v1165
          %v2916 = vunpack.c.h.b16 %v1165
          %v2917 = vunpack.c.l.b16 %v1166
          %v2918 = vunpack.c.h.b16 %v1166
          %v2919 = vunpack.c.l.b16 %v1167
          %v2920 = vunpack.c.h.b16 %v1167
          %v2921 = vunpack.c.l.b16 %v1168
          %v2922 = vunpack.c.h.b16 %v1168
          %v2923 = vunpack.c.l.b16 %v1169
          %v2924 = vunpack.c.h.b16 %v1169
          %v2925 = vunpack.c.l.b16 %v1170
          %v2926 = vunpack.c.h.b16 %v1170
          %v2927 = vunpack.c.l.b16 %v1171
          %v2928 = vunpack.c.h.b16 %v1171
          %v2929 = vunpack.c.l.b16 %v1172
          %v2930 = vunpack.c.h.b16 %v1172
          %v2931 = vunpack.c.l.b16 %v1173
          %v2932 = vunpack.c.h.b16 %v1173
          %v2933 = vunpack.c.l.b16 %v1174
          %v2934 = vunpack.c.h.b16 %v1174
          %v2935 = vunpack.c.l.b16 %v1175
          %v2936 = vunpack.c.h.b16 %v1175
          %v2937 = vunpack.c.l.b16 %v1176
          %v2938 = vunpack.c.h.b16 %v1176
          %v2939 = vunpack.c.l.b16 %v1177
          %v2940 = vunpack.c.h.b16 %v1177
          %v2941 = vunpack.c.l.b16 %v1178
          %v2942 = vunpack.c.h.b16 %v1178
          %v2943 = vunpack.c.l.b16 %v1179
          %v2944 = vunpack.c.h.b16 %v1179
          %v2945 = vunpack.c.l.b16 %v1180
          %v2946 = vunpack.c.h.b16 %v1180
          %v2947 = vunpack.c.l.b16 %v1181
          %v2948 = vunpack.c.h.b16 %v1181
          %v2949 = vunpack.c.l.b16 %v1182
          %v2950 = vunpack.c.h.b16 %v1182
          %v2951 = vunpack.c.l.b16 %v1183
          %v2952 = vunpack.c.h.b16 %v1183
          %v2953 = vunpack.c.l.b16 %v1184
          %v2954 = vunpack.c.h.b16 %v1184
          %v2955 = vunpack.c.l.b16 %v1185
          %v2956 = vunpack.c.h.b16 %v1185
          %v2957 = vunpack.c.l.b16 %v1186
          %v2958 = vunpack.c.h.b16 %v1186
          %v2959 = vunpack.c.l.b16 %v1187
          %v2960 = vunpack.c.h.b16 %v1187
          %v2961 = vunpack.c.l.b16 %v1188
          %v2962 = vunpack.c.h.b16 %v1188
          %v2963 = vunpack.c.l.b16 %v1189
          %v2964 = vunpack.c.h.b16 %v1189
          %v2965 = vunpack.c.l.b16 %v1190
          %v2966 = vunpack.c.h.b16 %v1190
          %v2967 = vunpack.c.l.b16 %v1191
          %v2968 = vunpack.c.h.b16 %v1191
          %v2969 = vunpack.c.l.b16 %v1192
          %v2970 = vunpack.c.h.b16 %v1192
          %v2971 = vunpack.c.l.b16 %v1193
          %v2972 = vunpack.c.h.b16 %v1193
          %v2973 = vunpack.c.l.b16 %v1194
          %v2974 = vunpack.c.h.b16 %v1194
          %v2975 = vunpack.c.l.b16 %v1195
          %v2976 = vunpack.c.h.b16 %v1195
          %v2977 = vunpack.c.l.b16 %v1196
          %v2978 = vunpack.c.h.b16 %v1196
          %v2979 = vunpack.c.l.b16 %v1197
          %v2980 = vunpack.c.h.b16 %v1197
          %v2981 = vunpack.c.l.b16 %v1198
          %v2982 = vunpack.c.h.b16 %v1198
          %v2983 = vunpack.c.l.b16 %v1199
          %v2984 = vunpack.c.h.b16 %v1199
          %v2985 = vunpack.c.l.b16 %v1200
          %v2986 = vunpack.c.h.b16 %v1200
          %v2987 = vpack.c.b16 %v2159, %v2155
          %v2988 = vpack.c.b16 %v2160, %v2156
          %v2989 = vpack.c.b16 %v2161, %v2157
          %v2990 = vpack.c.b16 %v2162, %v2158
          %v2991 = vpack.c.b16 %v2167, %v2163
          %v2992 = vpack.c.b16 %v2168, %v2164
          %v2993 = vpack.c.b16 %v2169, %v2165
          %v2994 = vpack.c.b16 %v2170, %v2166
          %v2995 = vpack.c.b16 %v2175, %v2171
          %v2996 = vpack.c.b16 %v2176, %v2172
          %v2997 = vpack.c.b16 %v2177, %v2173
          %v2998 = vpack.c.b16 %v2178, %v2174
          %v2999 = vpack.c.b16 %v2183, %v2179
          %v3000 = vpack.c.b16 %v2184, %v2180
          %v3001 = vpack.c.b16 %v2185, %v2181
          %v3002 = vpack.c.b16 %v2186, %v2182
          %v3003 = vpack.c.b16 %v2191, %v2187
          %v3004 = vpack.c.b16 %v2192, %v2188
          %v3005 = vpack.c.b16 %v2193, %v2189
          %v3006 = vpack.c.b16 %v2194, %v2190
          %v3007 = vpack.c.b16 %v2199, %v2195
          %v3008 = vpack.c.b16 %v2200, %v2196
          %v3009 = vpack.c.b16 %v2201, %v2197
          %v3010 = vpack.c.b16 %v2202, %v2198
          %v3011 = vpack.c.b16 %v2207, %v2203
          %v3012 = vpack.c.b16 %v2208, %v2204
          %v3013 = vpack.c.b16 %v2209, %v2205
          %v3014 = vpack.c.b16 %v2210, %v2206
          %v3015 = vpack.c.b16 %v2215, %v2211
          %v3016 = vpack.c.b16 %v2216, %v2212
          %v3017 = vpack.c.b16 %v2217, %v2213
          %v3018 = vpack.c.b16 %v2218, %v2214
          %v3019 = vpack.c.b16 %v2223, %v2219
          %v3020 = vpack.c.b16 %v2224, %v2220
          %v3021 = vpack.c.b16 %v2225, %v2221
          %v3022 = vpack.c.b16 %v2226, %v2222
          %v3023 = vpack.c.b16 %v2231, %v2227
          %v3024 = vpack.c.b16 %v2232, %v2228
          %v3025 = vpack.c.b16 %v2233, %v2229
          %v3026 = vpack.c.b16 %v2234, %v2230
          %v3027 = vpack.c.b16 %v2239, %v2235
          %v3028 = vpack.c.b16 %v2240, %v2236
          %v3029 = vpack.c.b16 %v2241, %v2237
          %v3030 = vpack.c.b16 %v2242, %v2238
          %v3031 = vpack.c.b16 %v2247, %v2243
          %v3032 = vpack.c.b16 %v2248, %v2244
          %v3033 = vpack.c.b16 %v2249, %v2245
          %v3034 = vpack.c.b16 %v2250, %v2246
          %v3035 = vpack.c.b16 %v2255, %v2251
          %v3036 = vpack.c.b16 %v2256, %v2252
          %v3037 = vpack.c.b16 %v2257, %v2253
          %v3038 = vpack.c.b16 %v2258, %v2254
          %v3039 = vpack.c.b16 %v2263, %v2259
          %v3040 = vpack.c.b16 %v2264, %v2260
          %v3041 = vpack.c.b16 %v2265, %v2261
          %v3042 = vpack.c.b16 %v2266, %v2262
          %v3043 = vpack.c.b16 %v2271, %v2267
          %v3044 = vpack.c.b16 %v2272, %v2268
          %v3045 = vpack.c.b16 %v2273, %v2269
          %v3046 = vpack.c.b16 %v2274, %v2270
          %v3047 = vpack.c.b16 %v2279, %v2275
          %v3048 = vpack.c.b16 %v2280, %v2276
          %v3049 = vpack.c.b16 %v2281, %v2277
          %v3050 = vpack.c.b16 %v2282, %v2278
          %v3051 = vpack.c.b16 %v2287, %v2283
          %v3052 = vpack.c.b16 %v2288, %v2284
          %v3053 = vpack.c.b16 %v2289, %v2285
          %v3054 = vpack.c.b16 %v2290, %v2286
          %v3055 = vpack.c.b16 %v2295, %v2291
          %v3056 = vpack.c.b16 %v2296, %v2292
          %v3057 = vpack.c.b16 %v2297, %v2293
          %v3058 = vpack.c.b16 %v2298, %v2294
          %v3059 = vpack.c.b16 %v2303, %v2299
          %v3060 = vpack.c.b16 %v2304, %v2300
          %v3061 = vpack.c.b16 %v2305, %v2301
          %v3062 = vpack.c.b16 %v2306, %v2302
          %v3063 = vpack.c.b16 %v2311, %v2307
          %v3064 = vpack.c.b16 %v2312, %v2308
          %v3065 = vpack.c.b16 %v2313, %v2309
          %v3066 = vpack.c.b16 %v2314, %v2310
          %v3067 = vpack.c.b16 %v2319, %v2315
          %v3068 = vpack.c.b16 %v2320, %v2316
          %v3069 = vpack.c.b16 %v2321, %v2317
          %v3070 = vpack.c.b16 %v2322, %v2318
          %v3071 = vpack.c.b16 %v2327, %v2323
          %v3072 = vpack.c.b16 %v2328, %v2324
          %v3073 = vpack.c.b16 %v2329, %v2325
          %v3074 = vpack.c.b16 %v2330, %v2326
          %v3075 = vpack.c.b16 %v2335, %v2331
          %v3076 = vpack.c.b16 %v2336, %v2332
          %v3077 = vpack.c.b16 %v2337, %v2333
          %v3078 = vpack.c.b16 %v2338, %v2334
          %v3079 = vpack.c.b16 %v2343, %v2339
          %v3080 = vpack.c.b16 %v2344, %v2340
          %v3081 = vpack.c.b16 %v2345, %v2341
          %v3082 = vpack.c.b16 %v2346, %v2342
          %v3083 = vpack.c.b16 %v2351, %v2347
          %v3084 = vpack.c.b16 %v2352, %v2348
          %v3085 = vpack.c.b16 %v2353, %v2349
          %v3086 = vpack.c.b16 %v2354, %v2350
          %v3087 = vpack.c.b16 %v2359, %v2355
          %v3088 = vpack.c.b16 %v2360, %v2356
          %v3089 = vpack.c.b16 %v2361, %v2357
          %v3090 = vpack.c.b16 %v2362, %v2358
          %v3091 = vpack.c.b16 %v2367, %v2363
          %v3092 = vpack.c.b16 %v2368, %v2364
          %v3093 = vpack.c.b16 %v2369, %v2365
          %v3094 = vpack.c.b16 %v2370, %v2366
          %v3095 = vpack.c.b16 %v2375, %v2371
          %v3096 = vpack.c.b16 %v2376, %v2372
          %v3097 = vpack.c.b16 %v2377, %v2373
          %v3098 = vpack.c.b16 %v2378, %v2374
          %v3099 = vpack.c.b16 %v2383, %v2379
          %v3100 = vpack.c.b16 %v2384, %v2380
          %v3101 = vpack.c.b16 %v2385, %v2381
          %v3102 = vpack.c.b16 %v2386, %v2382
          %v3103 = vpack.c.b16 %v2391, %v2387
          %v3104 = vpack.c.b16 %v2392, %v2388
          %v3105 = vpack.c.b16 %v2393, %v2389
          %v3106 = vpack.c.b16 %v2394, %v2390
          %v3107 = vpack.c.b16 %v2399, %v2395
          %v3108 = vpack.c.b16 %v2400, %v2396
          %v3109 = vpack.c.b16 %v2401, %v2397
          %v3110 = vpack.c.b16 %v2402, %v2398
          %v3111 = vpack.c.b16 %v2407, %v2403
          %v3112 = vpack.c.b16 %v2408, %v2404
          %v3113 = vpack.c.b16 %v2409, %v2405
          %v3114 = vpack.c.b16 %v2410, %v2406
          %v3115 = vpack.c.b16 %v2415, %v2411
          %v3116 = vpack.c.b16 %v2416, %v2412
          %v3117 = vpack.c.b16 %v2417, %v2413
          %v3118 = vpack.c.b16 %v2418, %v2414
          %v3119 = vpack.c.b16 %v2423, %v2419
          %v3120 = vpack.c.b16 %v2424, %v2420
          %v3121 = vpack.c.b16 %v2425, %v2421
          %v3122 = vpack.c.b16 %v2426, %v2422
          %v3123 = vpack.c.b16 %v2431, %v2427
          %v3124 = vpack.c.b16 %v2432, %v2428
          %v3125 = vpack.c.b16 %v2433, %v2429
          %v3126 = vpack.c.b16 %v2434, %v2430
          %v3127 = vpack.c.b16 %v2439, %v2435
          %v3128 = vpack.c.b16 %v2440, %v2436
          %v3129 = vpack.c.b16 %v2441, %v2437
          %v3130 = vpack.c.b16 %v2442, %v2438
          %v3131 = vpack.c.b16 %v2447, %v2443
          %v3132 = vpack.c.b16 %v2448, %v2444
          %v3133 = vpack.c.b16 %v2449, %v2445
          %v3134 = vpack.c.b16 %v2450, %v2446
          %v3135 = vpack.c.b16 %v2455, %v2451
          %v3136 = vpack.c.b16 %v2456, %v2452
          %v3137 = vpack.c.b16 %v2457, %v2453
          %v3138 = vpack.c.b16 %v2458, %v2454
          %v3139 = vpack.c.b16 %v2463, %v2459
          %v3140 = vpack.c.b16 %v2464, %v2460
          %v3141 = vpack.c.b16 %v2465, %v2461
          %v3142 = vpack.c.b16 %v2466, %v2462
          %v3143 = vpack.c.b16 %v2471, %v2467
          %v3144 = vpack.c.b16 %v2472, %v2468
          %v3145 = vpack.c.b16 %v2473, %v2469
          %v3146 = vpack.c.b16 %v2474, %v2470
          %v3147 = vpack.c.b16 %v2479, %v2475
          %v3148 = vpack.c.b16 %v2480, %v2476
          %v3149 = vpack.c.b16 %v2481, %v2477
          %v3150 = vpack.c.b16 %v2482, %v2478
          %v3151 = vpack.c.b16 %v2487, %v2483
          %v3152 = vpack.c.b16 %v2488, %v2484
          %v3153 = vpack.c.b16 %v2489, %v2485
          %v3154 = vpack.c.b16 %v2490, %v2486
          %v3155 = vpack.c.b16 %v2495, %v2491
          %v3156 = vpack.c.b16 %v2496, %v2492
          %v3157 = vpack.c.b16 %v2497, %v2493
          %v3158 = vpack.c.b16 %v2498, %v2494
          %v3159 = vpack.c.b16 %v2503, %v2499
          %v3160 = vpack.c.b16 %v2504, %v2500
          %v3161 = vpack.c.b16 %v2505, %v2501
          %v3162 = vpack.c.b16 %v2506, %v2502
          %v3163 = vpack.c.b16 %v2511, %v2507
          %v3164 = vpack.c.b16 %v2512, %v2508
          %v3165 = vpack.c.b16 %v2513, %v2509
          %v3166 = vpack.c.b16 %v2514, %v2510
          %v3167 = vpack.c.b16 %v2519, %v2515
          %v3168 = vpack.c.b16 %v2520, %v2516
          %v3169 = vpack.c.b16 %v2521, %v2517
          %v3170 = vpack.c.b16 %v2522, %v2518
          %v3171 = vpack.c.b16 %v2527, %v2523
          %v3172 = vpack.c.b16 %v2528, %v2524
          %v3173 = vpack.c.b16 %v2529, %v2525
          %v3174 = vpack.c.b16 %v2530, %v2526
          %v3175 = vpack.c.b16 %v2535, %v2531
          %v3176 = vpack.c.b16 %v2536, %v2532
          %v3177 = vpack.c.b16 %v2537, %v2533
          %v3178 = vpack.c.b16 %v2538, %v2534
          %v3179 = vpack.c.b16 %v2543, %v2539
          %v3180 = vpack.c.b16 %v2544, %v2540
          %v3181 = vpack.c.b16 %v2545, %v2541
          %v3182 = vpack.c.b16 %v2546, %v2542
          %v3183 = vpack.c.b16 %v2551, %v2547
          %v3184 = vpack.c.b16 %v2552, %v2548
          %v3185 = vpack.c.b16 %v2553, %v2549
          %v3186 = vpack.c.b16 %v2554, %v2550
          %v3187 = vpack.c.b16 %v2559, %v2555
          %v3188 = vpack.c.b16 %v2560, %v2556
          %v3189 = vpack.c.b16 %v2561, %v2557
          %v3190 = vpack.c.b16 %v2562, %v2558
          %v3191 = vpack.c.b16 %v2567, %v2563
          %v3192 = vpack.c.b16 %v2568, %v2564
          %v3193 = vpack.c.b16 %v2569, %v2565
          %v3194 = vpack.c.b16 %v2570, %v2566
          %v3195 = vpack.c.b16 %v2575, %v2571
          %v3196 = vpack.c.b16 %v2576, %v2572
          %v3197 = vpack.c.b16 %v2577, %v2573
          %v3198 = vpack.c.b16 %v2578, %v2574
          %v3199 = vpack.c.b16 %v2583, %v2579
          %v3200 = vpack.c.b16 %v2584, %v2580
          %v3201 = vpack.c.b16 %v2585, %v2581
          %v3202 = vpack.c.b16 %v2586, %v2582
          %v3203 = vpack.c.b16 %v2591, %v2587
          %v3204 = vpack.c.b16 %v2592, %v2588
          %v3205 = vpack.c.b16 %v2593, %v2589
          %v3206 = vpack.c.b16 %v2594, %v2590
          %v3207 = vpack.c.b16 %v2599, %v2595
          %v3208 = vpack.c.b16 %v2600, %v2596
          %v3209 = vpack.c.b16 %v2601, %v2597
          %v3210 = vpack.c.b16 %v2602, %v2598
          %v3211 = vpack.c.b16 %v2607, %v2603
          %v3212 = vpack.c.b16 %v2608, %v2604
          %v3213 = vpack.c.b16 %v2609, %v2605
          %v3214 = vpack.c.b16 %v2610, %v2606
          %v3215 = vpack.c.b16 %v2615, %v2611
          %v3216 = vpack.c.b16 %v2616, %v2612
          %v3217 = vpack.c.b16 %v2617, %v2613
          %v3218 = vpack.c.b16 %v2618, %v2614
          %v3219 = vpack.c.b16 %v2623, %v2619
          %v3220 = vpack.c.b16 %v2624, %v2620
          %v3221 = vpack.c.b16 %v2625, %v2621
          %v3222 = vpack.c.b16 %v2626, %v2622
          %v3223 = vpack.c.b16 %v2631, %v2627
          %v3224 = vpack.c.b16 %v2632, %v2628
          %v3225 = vpack.c.b16 %v2633, %v2629
          %v3226 = vpack.c.b16 %v2634, %v2630
          %v3227 = vpack.c.b16 %v2639, %v2635
          %v3228 = vpack.c.b16 %v2640, %v2636
          %v3229 = vpack.c.b16 %v2641, %v2637
          %v3230 = vpack.c.b16 %v2642, %v2638
          %v3231 = vpack.c.b16 %v2647, %v2643
          %v3232 = vpack.c.b16 %v2648, %v2644
          %v3233 = vpack.c.b16 %v2649, %v2645
          %v3234 = vpack.c.b16 %v2650, %v2646
          %v3235 = vpack.c.b16 %v2655, %v2651
          %v3236 = vpack.c.b16 %v2656, %v2652
          %v3237 = vpack.c.b16 %v2657, %v2653
          %v3238 = vpack.c.b16 %v2658, %v2654
          %v3239 = vpack.c.b16 %v2663, %v2659
          %v3240 = vpack.c.b16 %v2664, %v2660
          %v3241 = vpack.c.b16 %v2665, %v2661
          %v3242 = vpack.c.b16 %v2666, %v2662
          %v3243 = vpack.c.b16 %v2671, %v2667
          %v3244 = vpack.c.b16 %v2672, %v2668
          %v3245 = vpack.c.b16 %v2673, %v2669
          %v3246 = vpack.c.b16 %v2674, %v2670
          %v3247 = vpack.c.b16 %v2679, %v2675
          %v3248 = vpack.c.b16 %v2680, %v2676
          %v3249 = vpack.c.b16 %v2681, %v2677
          %v3250 = vpack.c.b16 %v2682, %v2678
          %v3251 = vpack.c.b16 %v2687, %v2683
          %v3252 = vpack.c.b16 %v2688, %v2684
          %v3253 = vpack.c.b16 %v2689, %v2685
          %v3254 = vpack.c.b16 %v2690, %v2686
          %v3255 = vpack.c.b16 %v2695, %v2691
          %v3256 = vpack.c.b16 %v2696, %v2692
          %v3257 = vpack.c.b16 %v2697, %v2693
          %v3258 = vpack.c.b16 %v2698, %v2694
          %v3259 = vpack.c.b16 %v2703, %v2699
          %v3260 = vpack.c.b16 %v2704, %v2700
          %v3261 = vpack.c.b16 %v2705, %v2701
          %v3262 = vpack.c.b16 %v2706, %v2702
          %v3263 = vpack.c.b16 %v2711, %v2707
          %v3264 = vpack.c.b16 %v2712, %v2708
          %v3265 = vpack.c.b16 %v2713, %v2709
          %v3266 = vpack.c.b16 %v2714, %v2710
          %v3267 = vpack.c.b16 %v2719, %v2715
          %v3268 = vpack.c.b16 %v2720, %v2716
          %v3269 = vpack.c.b16 %v2721, %v2717
          %v3270 = vpack.c.b16 %v2722, %v2718
          %v3271 = vpack.c.b16 %v2727, %v2723
          %v3272 = vpack.c.b16 %v2728, %v2724
          %v3273 = vpack.c.b16 %v2729, %v2725
          %v3274 = vpack.c.b16 %v2730, %v2726
          %v3275 = vpack.c.b16 %v2735, %v2731
          %v3276 = vpack.c.b16 %v2736, %v2732
          %v3277 = vpack.c.b16 %v2737, %v2733
          %v3278 = vpack.c.b16 %v2738, %v2734
          %v3279 = vpack.c.b16 %v2743, %v2739
          %v3280 = vpack.c.b16 %v2744, %v2740
          %v3281 = vpack.c.b16 %v2745, %v2741
          %v3282 = vpack.c.b16 %v2746, %v2742
          %v3283 = vpack.c.b16 %v2751, %v2747
          %v3284 = vpack.c.b16 %v2752, %v2748
          %v3285 = vpack.c.b16 %v2753, %v2749
          %v3286 = vpack.c.b16 %v2754, %v2750
          %v3287 = vpack.c.b16 %v2759, %v2755
          %v3288 = vpack.c.b16 %v2760, %v2756
          %v3289 = vpack.c.b16 %v2761, %v2757
          %v3290 = vpack.c.b16 %v2762, %v2758
          %v3291 = vpack.c.b16 %v2767, %v2763
          %v3292 = vpack.c.b16 %v2768, %v2764
          %v3293 = vpack.c.b16 %v2769, %v2765
          %v3294 = vpack.c.b16 %v2770, %v2766
          %v3295 = vpack.c.b16 %v2775, %v2771
          %v3296 = vpack.c.b16 %v2776, %v2772
          %v3297 = vpack.c.b16 %v2777, %v2773
          %v3298 = vpack.c.b16 %v2778, %v2774
          %v3299 = vpack.c.b16 %v2783, %v2779
          %v3300 = vpack.c.b16 %v2784, %v2780
          %v3301 = vpack.c.b16 %v2785, %v2781
          %v3302 = vpack.c.b16 %v2786, %v2782
          %v3303 = vpack.c.b16 %v2791, %v2787
          %v3304 = vpack.c.b16 %v2792, %v2788
          %v3305 = vpack.c.b16 %v2793, %v2789
          %v3306 = vpack.c.b16 %v2794, %v2790
          %v3307 = vpack.c.b16 %v2799, %v2795
          %v3308 = vpack.c.b16 %v2800, %v2796
          %v3309 = vpack.c.b16 %v2801, %v2797
          %v3310 = vpack.c.b16 %v2802, %v2798
          %v3311 = vpack.c.b16 %v2807, %v2803
          %v3312 = vpack.c.b16 %v2808, %v2804
          %v3313 = vpack.c.b16 %v2809, %v2805
          %v3314 = vpack.c.b16 %v2810, %v2806
          %v3315 = vpack.c.b16 %v2815, %v2811
          %v3316 = vpack.c.b16 %v2816, %v2812
          %v3317 = vpack.c.b16 %v2817, %v2813
          %v3318 = vpack.c.b16 %v2818, %v2814
          %v3319 = vpack.c.b16 %v2823, %v2819
          %v3320 = vpack.c.b16 %v2824, %v2820
          %v3321 = vpack.c.b16 %v2825, %v2821
          %v3322 = vpack.c.b16 %v2826, %v2822
          %v3323 = vpack.c.b16 %v2831, %v2827
          %v3324 = vpack.c.b16 %v2832, %v2828
          %v3325 = vpack.c.b16 %v2833, %v2829
          %v3326 = vpack.c.b16 %v2834, %v2830
          %v3327 = vpack.c.b16 %v2839, %v2835
          %v3328 = vpack.c.b16 %v2840, %v2836
          %v3329 = vpack.c.b16 %v2841, %v2837
          %v3330 = vpack.c.b16 %v2842, %v2838
          %v3331 = vpack.c.b16 %v2847, %v2843
          %v3332 = vpack.c.b16 %v2848, %v2844
          %v3333 = vpack.c.b16 %v2849, %v2845
          %v3334 = vpack.c.b16 %v2850, %v2846
          %v3335 = vpack.c.b16 %v2855, %v2851
          %v3336 = vpack.c.b16 %v2856, %v2852
          %v3337 = vpack.c.b16 %v2857, %v2853
          %v3338 = vpack.c.b16 %v2858, %v2854
          %v3339 = vpack.c.b16 %v2863, %v2859
          %v3340 = vpack.c.b16 %v2864, %v2860
          %v3341 = vpack.c.b16 %v2865, %v2861
          %v3342 = vpack.c.b16 %v2866, %v2862
          %v3343 = vpack.c.b16 %v2871, %v2867
          %v3344 = vpack.c.b16 %v2872, %v2868
          %v3345 = vpack.c.b16 %v2873, %v2869
          %v3346 = vpack.c.b16 %v2874, %v2870
          %v3347 = vpack.c.b16 %v2879, %v2875
          %v3348 = vpack.c.b16 %v2880, %v2876
          %v3349 = vpack.c.b16 %v2881, %v2877
          %v3350 = vpack.c.b16 %v2882, %v2878
          %v3351 = vpack.c.b16 %v2887, %v2883
          %v3352 = vpack.c.b16 %v2888, %v2884
          %v3353 = vpack.c.b16 %v2889, %v2885
          %v3354 = vpack.c.b16 %v2890, %v2886
          %v3355 = vpack.c.b16 %v2895, %v2891
          %v3356 = vpack.c.b16 %v2896, %v2892
          %v3357 = vpack.c.b16 %v2897, %v2893
          %v3358 = vpack.c.b16 %v2898, %v2894
          %v3359 = vpack.c.b16 %v2903, %v2899
          %v3360 = vpack.c.b16 %v2904, %v2900
          %v3361 = vpack.c.b16 %v2905, %v2901
          %v3362 = vpack.c.b16 %v2906, %v2902
          %v3363 = vpack.c.b16 %v2911, %v2907
          %v3364 = vpack.c.b16 %v2912, %v2908
          %v3365 = vpack.c.b16 %v2913, %v2909
          %v3366 = vpack.c.b16 %v2914, %v2910
          %v3367 = vpack.c.b16 %v2919, %v2915
          %v3368 = vpack.c.b16 %v2920, %v2916
          %v3369 = vpack.c.b16 %v2921, %v2917
          %v3370 = vpack.c.b16 %v2922, %v2918
          %v3371 = vpack.c.b16 %v2927, %v2923
          %v3372 = vpack.c.b16 %v2928, %v2924
          %v3373 = vpack.c.b16 %v2929, %v2925
          %v3374 = vpack.c.b16 %v2930, %v2926
          %v3375 = vpack.c.b16 %v2935, %v2931
          %v3376 = vpack.c.b16 %v2936, %v2932
          %v3377 = vpack.c.b16 %v2937, %v2933
          %v3378 = vpack.c.b16 %v2938, %v2934
          %v3379 = vpack.c.b16 %v2943, %v2939
          %v3380 = vpack.c.b16 %v2944, %v2940
          %v3381 = vpack.c.b16 %v2945, %v2941
          %v3382 = vpack.c.b16 %v2946, %v2942
          %v3383 = vpack.c.b16 %v2951, %v2947
          %v3384 = vpack.c.b16 %v2952, %v2948
          %v3385 = vpack.c.b16 %v2953, %v2949
          %v3386 = vpack.c.b16 %v2954, %v2950
          %v3387 = vpack.c.b16 %v2959, %v2955
          %v3388 = vpack.c.b16 %v2960, %v2956
          %v3389 = vpack.c.b16 %v2961, %v2957
          %v3390 = vpack.c.b16 %v2962, %v2958
          %v3391 = vpack.c.b16 %v2967, %v2963
          %v3392 = vpack.c.b16 %v2968, %v2964
          %v3393 = vpack.c.b16 %v2969, %v2965
          %v3394 = vpack.c.b16 %v2970, %v2966
          %v3395 = vpack.c.b16 %v2975, %v2971
          %v3396 = vpack.c.b16 %v2976, %v2972
          %v3397 = vpack.c.b16 %v2977, %v2973
          %v3398 = vpack.c.b16 %v2978, %v2974
          %v3399 = vpack.c.b16 %v2983, %v2979
          %v3400 = vpack.c.b16 %v2984, %v2980
          %v3401 = vpack.c.b16 %v2985, %v2981
          %v3402 = vpack.c.b16 %v2986, %v2982
          %3819 = vmatpush.bf16.msra.mxu0 %v3015
          %3820 = vmatpush.bf16.msra.mxu0 %v3011
          %3821 = vmatpush.bf16.msra.mxu0 %v3007
          %3822 = vmatpush.bf16.msra.mxu0 %v3003
          %3823 = vmatpush.bf16.msra.mxu0 %v2999
          %3824 = vmatpush.bf16.msra.mxu0 %v2995
          %3825 = vmatpush.bf16.msra.mxu0 %v2991
          %3826 = vmatpush.bf16.msra.mxu0 %v2987
          %3827 = vmatmul.bf16.gmra.mxu0 %v1531
          %v3828 = vpop.f32.mrf.mxu0
          %v3829 = vadd.f32 %v1203, %v3828
          %v3830 = vpop.f32.mrf.mxu0
          %v3831 = vadd.f32 %v1203, %v3830
          %3832 = vmatmul.bf16.gmra.mxu0 %v1544
          %v3833 = vpop.f32.mrf.mxu0
          %v3834 = vadd.f32 %v1203, %v3833
          %v3835 = vpop.f32.mrf.mxu0
          %v3836 = vadd.f32 %v1203, %v3835
          %3837 = vmatmul.bf16.gmra.mxu0 %v1557
          %v3838 = vpop.f32.mrf.mxu0
          %v3839 = vadd.f32 %v1203, %v3838
          %v3840 = vpop.f32.mrf.mxu0
          %v3841 = vadd.f32 %v1203, %v3840
          %3842 = vmatmul.bf16.gmra.mxu0 %v1570
          %v3843 = vpop.f32.mrf.mxu0
          %v3844 = vadd.f32 %v1203, %v3843
          %v3845 = vpop.f32.mrf.mxu0
          %v3846 = vadd.f32 %v1203, %v3845
          %3847 = vmatmul.bf16.gmra.mxu0 %v1583
          %v3848 = vpop.f32.mrf.mxu0
          %v3849 = vadd.f32 %v1203, %v3848
          %v3850 = vpop.f32.mrf.mxu0
          %v3851 = vadd.f32 %v1203, %v3850
          %3852 = vmatmul.bf16.gmra.mxu0 %v1596
          %v3853 = vpop.f32.mrf.mxu0
          %v3854 = vadd.f32 %v1203, %v3853
          %v3855 = vpop.f32.mrf.mxu0
          %v3856 = vadd.f32 %v1203, %v3855
          %3857 = vmatmul.bf16.gmra.mxu0 %v1609
          %v3858 = vpop.f32.mrf.mxu0
          %v3859 = vadd.f32 %v1203, %v3858
          %v3860 = vpop.f32.mrf.mxu0
          %v3861 = vadd.f32 %v1203, %v3860
          %3862 = vmatmul.bf16.gmra.mxu0 %v1622
          %v3863 = vpop.f32.mrf.mxu0
          %v3864 = vadd.f32 %v1203, %v3863
          %v3865 = vpop.f32.mrf.mxu0
          %v3866 = vadd.f32 %v1203, %v3865
          %3867 = vdwg.mxu0
          %3868 = vmatpush.bf16.msra.mxu0 %v3047
          %3869 = vmatpush.bf16.msra.mxu0 %v3043
          %3870 = vmatpush.bf16.msra.mxu0 %v3039
          %3871 = vmatpush.bf16.msra.mxu0 %v3035
          %3872 = vmatpush.bf16.msra.mxu0 %v3031
          %3873 = vmatpush.bf16.msra.mxu0 %v3027
          %3874 = vmatpush.bf16.msra.mxu0 %v3023
          %3875 = vmatpush.bf16.msra.mxu0 %v3019
          %3876 = vmatmul.bf16.gmra.mxu0 %v1532
          %v3877 = vpop.f32.mrf.mxu0
          %v3878 = vadd.f32 %v3829, %v3877
          %v3879 = vpop.f32.mrf.mxu0
          %v3880 = vadd.f32 %v3831, %v3879
          %3881 = vmatmul.bf16.gmra.mxu0 %v1545
          %v3882 = vpop.f32.mrf.mxu0
          %v3883 = vadd.f32 %v3834, %v3882
          %v3884 = vpop.f32.mrf.mxu0
          %v3885 = vadd.f32 %v3836, %v3884
          %3886 = vmatmul.bf16.gmra.mxu0 %v1558
          %v3887 = vpop.f32.mrf.mxu0
          %v3888 = vadd.f32 %v3839, %v3887
          %v3889 = vpop.f32.mrf.mxu0
          %v3890 = vadd.f32 %v3841, %v3889
          %3891 = vmatmul.bf16.gmra.mxu0 %v1571
          %v3892 = vpop.f32.mrf.mxu0
          %v3893 = vadd.f32 %v3844, %v3892
          %v3894 = vpop.f32.mrf.mxu0
          %v3895 = vadd.f32 %v3846, %v3894
          %3896 = vmatmul.bf16.gmra.mxu0 %v1584
          %v3897 = vpop.f32.mrf.mxu0
          %v3898 = vadd.f32 %v3849, %v3897
          %v3899 = vpop.f32.mrf.mxu0
          %v3900 = vadd.f32 %v3851, %v3899
          %3901 = vmatmul.bf16.gmra.mxu0 %v1597
          %v3902 = vpop.f32.mrf.mxu0
          %v3903 = vadd.f32 %v3854, %v3902
          %v3904 = vpop.f32.mrf.mxu0
          %v3905 = vadd.f32 %v3856, %v3904
          %3906 = vmatmul.bf16.gmra.mxu0 %v1610
          %v3907 = vpop.f32.mrf.mxu0
          %v3908 = vadd.f32 %v3859, %v3907
          %v3909 = vpop.f32.mrf.mxu0
          %v3910 = vadd.f32 %v3861, %v3909
          %3911 = vmatmul.bf16.gmra.mxu0 %v1623
          %v3912 = vpop.f32.mrf.mxu0
          %v3913 = vadd.f32 %v3864, %v3912
          %v3914 = vpop.f32.mrf.mxu0
          %v3915 = vadd.f32 %v3866, %v3914
          %3916 = vdwg.mxu0
          %3917 = vmatpush.bf16.msra.mxu0 %v3079
          %3918 = vmatpush.bf16.msra.mxu0 %v3075
          %3919 = vmatpush.bf16.msra.mxu0 %v3071
          %3920 = vmatpush.bf16.msra.mxu0 %v3067
          %3921 = vmatpush.bf16.msra.mxu0 %v3063
          %3922 = vmatpush.bf16.msra.mxu0 %v3059
          %3923 = vmatpush.bf16.msra.mxu0 %v3055
          %3924 = vmatpush.bf16.msra.mxu0 %v3051
          %3925 = vmatmul.bf16.gmra.mxu0 %v1533
          %v3926 = vpop.f32.mrf.mxu0
          %v3927 = vadd.f32 %v3878, %v3926
          %v3928 = vpop.f32.mrf.mxu0
          %v3929 = vadd.f32 %v3880, %v3928
          %3930 = vmatmul.bf16.gmra.mxu0 %v1546
          %v3931 = vpop.f32.mrf.mxu0
          %v3932 = vadd.f32 %v3883, %v3931
          %v3933 = vpop.f32.mrf.mxu0
          %v3934 = vadd.f32 %v3885, %v3933
          %3935 = vmatmul.bf16.gmra.mxu0 %v1559
          %v3936 = vpop.f32.mrf.mxu0
          %v3937 = vadd.f32 %v3888, %v3936
          %v3938 = vpop.f32.mrf.mxu0
          %v3939 = vadd.f32 %v3890, %v3938
          %3940 = vmatmul.bf16.gmra.mxu0 %v1572
          %v3941 = vpop.f32.mrf.mxu0
          %v3942 = vadd.f32 %v3893, %v3941
          %v3943 = vpop.f32.mrf.mxu0
          %v3944 = vadd.f32 %v3895, %v3943
          %3945 = vmatmul.bf16.gmra.mxu0 %v1585
          %v3946 = vpop.f32.mrf.mxu0
          %v3947 = vadd.f32 %v3898, %v3946
          %v3948 = vpop.f32.mrf.mxu0
          %v3949 = vadd.f32 %v3900, %v3948
          %3950 = vmatmul.bf16.gmra.mxu0 %v1598
          %v3951 = vpop.f32.mrf.mxu0
          %v3952 = vadd.f32 %v3903, %v3951
          %v3953 = vpop.f32.mrf.mxu0
          %v3954 = vadd.f32 %v3905, %v3953
          %3955 = vmatmul.bf16.gmra.mxu0 %v1611
          %v3956 = vpop.f32.mrf.mxu0
          %v3957 = vadd.f32 %v3908, %v3956
          %v3958 = vpop.f32.mrf.mxu0
          %v3959 = vadd.f32 %v3910, %v3958
          %3960 = vmatmul.bf16.gmra.mxu0 %v1624
          %v3961 = vpop.f32.mrf.mxu0
          %v3962 = vadd.f32 %v3913, %v3961
          %v3963 = vpop.f32.mrf.mxu0
          %v3964 = vadd.f32 %v3915, %v3963
          %3965 = vdwg.mxu0
          %3966 = vmatpush.bf16.msra.mxu0 %v3111
          %3967 = vmatpush.bf16.msra.mxu0 %v3107
          %3968 = vmatpush.bf16.msra.mxu0 %v3103
          %3969 = vmatpush.bf16.msra.mxu0 %v3099
          %3970 = vmatpush.bf16.msra.mxu0 %v3095
          %3971 = vmatpush.bf16.msra.mxu0 %v3091
          %3972 = vmatpush.bf16.msra.mxu0 %v3087
          %3973 = vmatpush.bf16.msra.mxu0 %v3083
          %3974 = vmatmul.bf16.gmra.mxu0 %v1534
          %v3975 = vpop.f32.mrf.mxu0
          %v3976 = vadd.f32 %v3927, %v3975
          %v3977 = vpop.f32.mrf.mxu0
          %v3978 = vadd.f32 %v3929, %v3977
          %3979 = vmatmul.bf16.gmra.mxu0 %v1547
          %v3980 = vpop.f32.mrf.mxu0
          %v3981 = vadd.f32 %v3932, %v3980
          %v3982 = vpop.f32.mrf.mxu0
          %v3983 = vadd.f32 %v3934, %v3982
          %3984 = vmatmul.bf16.gmra.mxu0 %v1560
          %v3985 = vpop.f32.mrf.mxu0
          %v3986 = vadd.f32 %v3937, %v3985
          %v3987 = vpop.f32.mrf.mxu0
          %v3988 = vadd.f32 %v3939, %v3987
          %3989 = vmatmul.bf16.gmra.mxu0 %v1573
          %v3990 = vpop.f32.mrf.mxu0
          %v3991 = vadd.f32 %v3942, %v3990
          %v3992 = vpop.f32.mrf.mxu0
          %v3993 = vadd.f32 %v3944, %v3992
          %3994 = vmatmul.bf16.gmra.mxu0 %v1586
          %v3995 = vpop.f32.mrf.mxu0
          %v3996 = vadd.f32 %v3947, %v3995
          %v3997 = vpop.f32.mrf.mxu0
          %v3998 = vadd.f32 %v3949, %v3997
          %3999 = vmatmul.bf16.gmra.mxu0 %v1599
          %v4000 = vpop.f32.mrf.mxu0
          %v4001 = vadd.f32 %v3952, %v4000
          %v4002 = vpop.f32.mrf.mxu0
          %v4003 = vadd.f32 %v3954, %v4002
          %4004 = vmatmul.bf16.gmra.mxu0 %v1612
          %v4005 = vpop.f32.mrf.mxu0
          %v4006 = vadd.f32 %v3957, %v4005
          %v4007 = vpop.f32.mrf.mxu0
          %v4008 = vadd.f32 %v3959, %v4007
          %4009 = vmatmul.bf16.gmra.mxu0 %v1625
          %v4010 = vpop.f32.mrf.mxu0
          %v4011 = vadd.f32 %v3962, %v4010
          %v4012 = vpop.f32.mrf.mxu0
          %v4013 = vadd.f32 %v3964, %v4012
          %4014 = vdwg.mxu0
          %4015 = vmatpush.bf16.msra.mxu0 %v3143
          %4016 = vmatpush.bf16.msra.mxu0 %v3139
          %4017 = vmatpush.bf16.msra.mxu0 %v3135
          %4018 = vmatpush.bf16.msra.mxu0 %v3131
          %4019 = vmatpush.bf16.msra.mxu0 %v3127
          %4020 = vmatpush.bf16.msra.mxu0 %v3123
          %4021 = vmatpush.bf16.msra.mxu0 %v3119
          %4022 = vmatpush.bf16.msra.mxu0 %v3115
          %4023 = vmatmul.bf16.gmra.mxu0 %v1535
          %v4024 = vpop.f32.mrf.mxu0
          %v4025 = vadd.f32 %v3976, %v4024
          %v4026 = vpop.f32.mrf.mxu0
          %v4027 = vadd.f32 %v3978, %v4026
          %4028 = vmatmul.bf16.gmra.mxu0 %v1548
          %v4029 = vpop.f32.mrf.mxu0
          %v4030 = vadd.f32 %v3981, %v4029
          %v4031 = vpop.f32.mrf.mxu0
          %v4032 = vadd.f32 %v3983, %v4031
          %4033 = vmatmul.bf16.gmra.mxu0 %v1561
          %v4034 = vpop.f32.mrf.mxu0
          %v4035 = vadd.f32 %v3986, %v4034
          %v4036 = vpop.f32.mrf.mxu0
          %v4037 = vadd.f32 %v3988, %v4036
          %4038 = vmatmul.bf16.gmra.mxu0 %v1574
          %v4039 = vpop.f32.mrf.mxu0
          %v4040 = vadd.f32 %v3991, %v4039
          %v4041 = vpop.f32.mrf.mxu0
          %v4042 = vadd.f32 %v3993, %v4041
          %4043 = vmatmul.bf16.gmra.mxu0 %v1587
          %v4044 = vpop.f32.mrf.mxu0
          %v4045 = vadd.f32 %v3996, %v4044
          %v4046 = vpop.f32.mrf.mxu0
          %v4047 = vadd.f32 %v3998, %v4046
          %4048 = vmatmul.bf16.gmra.mxu0 %v1600
          %v4049 = vpop.f32.mrf.mxu0
          %v4050 = vadd.f32 %v4001, %v4049
          %v4051 = vpop.f32.mrf.mxu0
          %v4052 = vadd.f32 %v4003, %v4051
          %4053 = vmatmul.bf16.gmra.mxu0 %v1613
          %v4054 = vpop.f32.mrf.mxu0
          %v4055 = vadd.f32 %v4006, %v4054
          %v4056 = vpop.f32.mrf.mxu0
          %v4057 = vadd.f32 %v4008, %v4056
          %4058 = vmatmul.bf16.gmra.mxu0 %v1626
          %v4059 = vpop.f32.mrf.mxu0
          %v4060 = vadd.f32 %v4011, %v4059
          %v4061 = vpop.f32.mrf.mxu0
          %v4062 = vadd.f32 %v4013, %v4061
          %4063 = vdwg.mxu0
          %4064 = vmatpush.bf16.msra.mxu0 %v3175
          %4065 = vmatpush.bf16.msra.mxu0 %v3171
          %4066 = vmatpush.bf16.msra.mxu0 %v3167
          %4067 = vmatpush.bf16.msra.mxu0 %v3163
          %4068 = vmatpush.bf16.msra.mxu0 %v3159
          %4069 = vmatpush.bf16.msra.mxu0 %v3155
          %4070 = vmatpush.bf16.msra.mxu0 %v3151
          %4071 = vmatpush.bf16.msra.mxu0 %v3147
          %4072 = vmatmul.bf16.gmra.mxu0 %v1536
          %v4073 = vpop.f32.mrf.mxu0
          %v4074 = vadd.f32 %v4025, %v4073
          %v4075 = vpop.f32.mrf.mxu0
          %v4076 = vadd.f32 %v4027, %v4075
          %4077 = vmatmul.bf16.gmra.mxu0 %v1549
          %v4078 = vpop.f32.mrf.mxu0
          %v4079 = vadd.f32 %v4030, %v4078
          %v4080 = vpop.f32.mrf.mxu0
          %v4081 = vadd.f32 %v4032, %v4080
          %4082 = vmatmul.bf16.gmra.mxu0 %v1562
          %v4083 = vpop.f32.mrf.mxu0
          %v4084 = vadd.f32 %v4035, %v4083
          %v4085 = vpop.f32.mrf.mxu0
          %v4086 = vadd.f32 %v4037, %v4085
          %4087 = vmatmul.bf16.gmra.mxu0 %v1575
          %v4088 = vpop.f32.mrf.mxu0
          %v4089 = vadd.f32 %v4040, %v4088
          %v4090 = vpop.f32.mrf.mxu0
          %v4091 = vadd.f32 %v4042, %v4090
          %4092 = vmatmul.bf16.gmra.mxu0 %v1588
          %v4093 = vpop.f32.mrf.mxu0
          %v4094 = vadd.f32 %v4045, %v4093
          %v4095 = vpop.f32.mrf.mxu0
          %v4096 = vadd.f32 %v4047, %v4095
          %4097 = vmatmul.bf16.gmra.mxu0 %v1601
          %v4098 = vpop.f32.mrf.mxu0
          %v4099 = vadd.f32 %v4050, %v4098
          %v4100 = vpop.f32.mrf.mxu0
          %v4101 = vadd.f32 %v4052, %v4100
          %4102 = vmatmul.bf16.gmra.mxu0 %v1614
          %v4103 = vpop.f32.mrf.mxu0
          %v4104 = vadd.f32 %v4055, %v4103
          %v4105 = vpop.f32.mrf.mxu0
          %v4106 = vadd.f32 %v4057, %v4105
          %4107 = vmatmul.bf16.gmra.mxu0 %v1627
          %v4108 = vpop.f32.mrf.mxu0
          %v4109 = vadd.f32 %v4060, %v4108
          %v4110 = vpop.f32.mrf.mxu0
          %v4111 = vadd.f32 %v4062, %v4110
          %4112 = vdwg.mxu0
          %4113 = vmatpush.bf16.msra.mxu0 %v3207
          %4114 = vmatpush.bf16.msra.mxu0 %v3203
          %4115 = vmatpush.bf16.msra.mxu0 %v3199
          %4116 = vmatpush.bf16.msra.mxu0 %v3195
          %4117 = vmatpush.bf16.msra.mxu0 %v3191
          %4118 = vmatpush.bf16.msra.mxu0 %v3187
          %4119 = vmatpush.bf16.msra.mxu0 %v3183
          %4120 = vmatpush.bf16.msra.mxu0 %v3179
          %4121 = vmatmul.bf16.gmra.mxu0 %v1537
          %v4122 = vpop.f32.mrf.mxu0
          %v4123 = vadd.f32 %v4074, %v4122
          %v4124 = vpop.f32.mrf.mxu0
          %v4125 = vadd.f32 %v4076, %v4124
          %4126 = vmatmul.bf16.gmra.mxu0 %v1550
          %v4127 = vpop.f32.mrf.mxu0
          %v4128 = vadd.f32 %v4079, %v4127
          %v4129 = vpop.f32.mrf.mxu0
          %v4130 = vadd.f32 %v4081, %v4129
          %4131 = vmatmul.bf16.gmra.mxu0 %v1563
          %v4132 = vpop.f32.mrf.mxu0
          %v4133 = vadd.f32 %v4084, %v4132
          %v4134 = vpop.f32.mrf.mxu0
          %v4135 = vadd.f32 %v4086, %v4134
          %4136 = vmatmul.bf16.gmra.mxu0 %v1576
          %v4137 = vpop.f32.mrf.mxu0
          %v4138 = vadd.f32 %v4089, %v4137
          %v4139 = vpop.f32.mrf.mxu0
          %v4140 = vadd.f32 %v4091, %v4139
          %4141 = vmatmul.bf16.gmra.mxu0 %v1589
          %v4142 = vpop.f32.mrf.mxu0
          %v4143 = vadd.f32 %v4094, %v4142
          %v4144 = vpop.f32.mrf.mxu0
          %v4145 = vadd.f32 %v4096, %v4144
          %4146 = vmatmul.bf16.gmra.mxu0 %v1602
          %v4147 = vpop.f32.mrf.mxu0
          %v4148 = vadd.f32 %v4099, %v4147
          %v4149 = vpop.f32.mrf.mxu0
          %v4150 = vadd.f32 %v4101, %v4149
          %4151 = vmatmul.bf16.gmra.mxu0 %v1615
          %v4152 = vpop.f32.mrf.mxu0
          %v4153 = vadd.f32 %v4104, %v4152
          %v4154 = vpop.f32.mrf.mxu0
          %v4155 = vadd.f32 %v4106, %v4154
          %4156 = vmatmul.bf16.gmra.mxu0 %v1628
          %v4157 = vpop.f32.mrf.mxu0
          %v4158 = vadd.f32 %v4109, %v4157
          %v4159 = vpop.f32.mrf.mxu0
          %v4160 = vadd.f32 %v4111, %v4159
          %4161 = vdwg.mxu0
          %4162 = vmatpush.bf16.msra.mxu0 %v3239
          %4163 = vmatpush.bf16.msra.mxu0 %v3235
          %4164 = vmatpush.bf16.msra.mxu0 %v3231
          %4165 = vmatpush.bf16.msra.mxu0 %v3227
          %4166 = vmatpush.bf16.msra.mxu0 %v3223
          %4167 = vmatpush.bf16.msra.mxu0 %v3219
          %4168 = vmatpush.bf16.msra.mxu0 %v3215
          %4169 = vmatpush.bf16.msra.mxu0 %v3211
          %4170 = vmatmul.bf16.gmra.mxu0 %v1538
          %v4171 = vpop.f32.mrf.mxu0
          %v4172 = vadd.f32 %v4123, %v4171
          %v4173 = vpop.f32.mrf.mxu0
          %v4174 = vadd.f32 %v4125, %v4173
          %4175 = vmatmul.bf16.gmra.mxu0 %v1551
          %v4176 = vpop.f32.mrf.mxu0
          %v4177 = vadd.f32 %v4128, %v4176
          %v4178 = vpop.f32.mrf.mxu0
          %v4179 = vadd.f32 %v4130, %v4178
          %4180 = vmatmul.bf16.gmra.mxu0 %v1564
          %v4181 = vpop.f32.mrf.mxu0
          %v4182 = vadd.f32 %v4133, %v4181
          %v4183 = vpop.f32.mrf.mxu0
          %v4184 = vadd.f32 %v4135, %v4183
          %4185 = vmatmul.bf16.gmra.mxu0 %v1577
          %v4186 = vpop.f32.mrf.mxu0
          %v4187 = vadd.f32 %v4138, %v4186
          %v4188 = vpop.f32.mrf.mxu0
          %v4189 = vadd.f32 %v4140, %v4188
          %4190 = vmatmul.bf16.gmra.mxu0 %v1590
          %v4191 = vpop.f32.mrf.mxu0
          %v4192 = vadd.f32 %v4143, %v4191
          %v4193 = vpop.f32.mrf.mxu0
          %v4194 = vadd.f32 %v4145, %v4193
          %4195 = vmatmul.bf16.gmra.mxu0 %v1603
          %v4196 = vpop.f32.mrf.mxu0
          %v4197 = vadd.f32 %v4148, %v4196
          %v4198 = vpop.f32.mrf.mxu0
          %v4199 = vadd.f32 %v4150, %v4198
          %4200 = vmatmul.bf16.gmra.mxu0 %v1616
          %v4201 = vpop.f32.mrf.mxu0
          %v4202 = vadd.f32 %v4153, %v4201
          %v4203 = vpop.f32.mrf.mxu0
          %v4204 = vadd.f32 %v4155, %v4203
          %4205 = vmatmul.bf16.gmra.mxu0 %v1629
          %v4206 = vpop.f32.mrf.mxu0
          %v4207 = vadd.f32 %v4158, %v4206
          %v4208 = vpop.f32.mrf.mxu0
          %v4209 = vadd.f32 %v4160, %v4208
          %4210 = vdwg.mxu0
          %4211 = vmatpush.bf16.msra.mxu0 %v3271
          %4212 = vmatpush.bf16.msra.mxu0 %v3267
          %4213 = vmatpush.bf16.msra.mxu0 %v3263
          %4214 = vmatpush.bf16.msra.mxu0 %v3259
          %4215 = vmatpush.bf16.msra.mxu0 %v3255
          %4216 = vmatpush.bf16.msra.mxu0 %v3251
          %4217 = vmatpush.bf16.msra.mxu0 %v3247
          %4218 = vmatpush.bf16.msra.mxu0 %v3243
          %4219 = vmatmul.bf16.gmra.mxu0 %v1539
          %v4220 = vpop.f32.mrf.mxu0
          %v4221 = vadd.f32 %v4172, %v4220
          %v4222 = vpop.f32.mrf.mxu0
          %v4223 = vadd.f32 %v4174, %v4222
          %4224 = vmatmul.bf16.gmra.mxu0 %v1552
          %v4225 = vpop.f32.mrf.mxu0
          %v4226 = vadd.f32 %v4177, %v4225
          %v4227 = vpop.f32.mrf.mxu0
          %v4228 = vadd.f32 %v4179, %v4227
          %4229 = vmatmul.bf16.gmra.mxu0 %v1565
          %v4230 = vpop.f32.mrf.mxu0
          %v4231 = vadd.f32 %v4182, %v4230
          %v4232 = vpop.f32.mrf.mxu0
          %v4233 = vadd.f32 %v4184, %v4232
          %4234 = vmatmul.bf16.gmra.mxu0 %v1578
          %v4235 = vpop.f32.mrf.mxu0
          %v4236 = vadd.f32 %v4187, %v4235
          %v4237 = vpop.f32.mrf.mxu0
          %v4238 = vadd.f32 %v4189, %v4237
          %4239 = vmatmul.bf16.gmra.mxu0 %v1591
          %v4240 = vpop.f32.mrf.mxu0
          %v4241 = vadd.f32 %v4192, %v4240
          %v4242 = vpop.f32.mrf.mxu0
          %v4243 = vadd.f32 %v4194, %v4242
          %4244 = vmatmul.bf16.gmra.mxu0 %v1604
          %v4245 = vpop.f32.mrf.mxu0
          %v4246 = vadd.f32 %v4197, %v4245
          %v4247 = vpop.f32.mrf.mxu0
          %v4248 = vadd.f32 %v4199, %v4247
          %4249 = vmatmul.bf16.gmra.mxu0 %v1617
          %v4250 = vpop.f32.mrf.mxu0
          %v4251 = vadd.f32 %v4202, %v4250
          %v4252 = vpop.f32.mrf.mxu0
          %v4253 = vadd.f32 %v4204, %v4252
          %4254 = vmatmul.bf16.gmra.mxu0 %v1630
          %v4255 = vpop.f32.mrf.mxu0
          %v4256 = vadd.f32 %v4207, %v4255
          %v4257 = vpop.f32.mrf.mxu0
          %v4258 = vadd.f32 %v4209, %v4257
          %4259 = vdwg.mxu0
          %4260 = vmatpush.bf16.msra.mxu0 %v3303
          %4261 = vmatpush.bf16.msra.mxu0 %v3299
          %4262 = vmatpush.bf16.msra.mxu0 %v3295
          %4263 = vmatpush.bf16.msra.mxu0 %v3291
          %4264 = vmatpush.bf16.msra.mxu0 %v3287
          %4265 = vmatpush.bf16.msra.mxu0 %v3283
          %4266 = vmatpush.bf16.msra.mxu0 %v3279
          %4267 = vmatpush.bf16.msra.mxu0 %v3275
          %4268 = vmatmul.bf16.gmra.mxu0 %v1540
          %v4269 = vpop.f32.mrf.mxu0
          %v4270 = vadd.f32 %v4221, %v4269
          %v4271 = vpop.f32.mrf.mxu0
          %v4272 = vadd.f32 %v4223, %v4271
          %4273 = vmatmul.bf16.gmra.mxu0 %v1553
          %v4274 = vpop.f32.mrf.mxu0
          %v4275 = vadd.f32 %v4226, %v4274
          %v4276 = vpop.f32.mrf.mxu0
          %v4277 = vadd.f32 %v4228, %v4276
          %4278 = vmatmul.bf16.gmra.mxu0 %v1566
          %v4279 = vpop.f32.mrf.mxu0
          %v4280 = vadd.f32 %v4231, %v4279
          %v4281 = vpop.f32.mrf.mxu0
          %v4282 = vadd.f32 %v4233, %v4281
          %4283 = vmatmul.bf16.gmra.mxu0 %v1579
          %v4284 = vpop.f32.mrf.mxu0
          %v4285 = vadd.f32 %v4236, %v4284
          %v4286 = vpop.f32.mrf.mxu0
          %v4287 = vadd.f32 %v4238, %v4286
          %4288 = vmatmul.bf16.gmra.mxu0 %v1592
          %v4289 = vpop.f32.mrf.mxu0
          %v4290 = vadd.f32 %v4241, %v4289
          %v4291 = vpop.f32.mrf.mxu0
          %v4292 = vadd.f32 %v4243, %v4291
          %4293 = vmatmul.bf16.gmra.mxu0 %v1605
          %v4294 = vpop.f32.mrf.mxu0
          %v4295 = vadd.f32 %v4246, %v4294
          %v4296 = vpop.f32.mrf.mxu0
          %v4297 = vadd.f32 %v4248, %v4296
          %4298 = vmatmul.bf16.gmra.mxu0 %v1618
          %v4299 = vpop.f32.mrf.mxu0
          %v4300 = vadd.f32 %v4251, %v4299
          %v4301 = vpop.f32.mrf.mxu0
          %v4302 = vadd.f32 %v4253, %v4301
          %4303 = vmatmul.bf16.gmra.mxu0 %v1631
          %v4304 = vpop.f32.mrf.mxu0
          %v4305 = vadd.f32 %v4256, %v4304
          %v4306 = vpop.f32.mrf.mxu0
          %v4307 = vadd.f32 %v4258, %v4306
          %4308 = vdwg.mxu0
          %4309 = vmatpush.bf16.msra.mxu0 %v3335
          %4310 = vmatpush.bf16.msra.mxu0 %v3331
          %4311 = vmatpush.bf16.msra.mxu0 %v3327
          %4312 = vmatpush.bf16.msra.mxu0 %v3323
          %4313 = vmatpush.bf16.msra.mxu0 %v3319
          %4314 = vmatpush.bf16.msra.mxu0 %v3315
          %4315 = vmatpush.bf16.msra.mxu0 %v3311
          %4316 = vmatpush.bf16.msra.mxu0 %v3307
          %4317 = vmatmul.bf16.gmra.mxu0 %v1541
          %v4318 = vpop.f32.mrf.mxu0
          %v4319 = vadd.f32 %v4270, %v4318
          %v4320 = vpop.f32.mrf.mxu0
          %v4321 = vadd.f32 %v4272, %v4320
          %4322 = vmatmul.bf16.gmra.mxu0 %v1554
          %v4323 = vpop.f32.mrf.mxu0
          %v4324 = vadd.f32 %v4275, %v4323
          %v4325 = vpop.f32.mrf.mxu0
          %v4326 = vadd.f32 %v4277, %v4325
          %4327 = vmatmul.bf16.gmra.mxu0 %v1567
          %v4328 = vpop.f32.mrf.mxu0
          %v4329 = vadd.f32 %v4280, %v4328
          %v4330 = vpop.f32.mrf.mxu0
          %v4331 = vadd.f32 %v4282, %v4330
          %4332 = vmatmul.bf16.gmra.mxu0 %v1580
          %v4333 = vpop.f32.mrf.mxu0
          %v4334 = vadd.f32 %v4285, %v4333
          %v4335 = vpop.f32.mrf.mxu0
          %v4336 = vadd.f32 %v4287, %v4335
          %4337 = vmatmul.bf16.gmra.mxu0 %v1593
          %v4338 = vpop.f32.mrf.mxu0
          %v4339 = vadd.f32 %v4290, %v4338
          %v4340 = vpop.f32.mrf.mxu0
          %v4341 = vadd.f32 %v4292, %v4340
          %4342 = vmatmul.bf16.gmra.mxu0 %v1606
          %v4343 = vpop.f32.mrf.mxu0
          %v4344 = vadd.f32 %v4295, %v4343
          %v4345 = vpop.f32.mrf.mxu0
          %v4346 = vadd.f32 %v4297, %v4345
          %4347 = vmatmul.bf16.gmra.mxu0 %v1619
          %v4348 = vpop.f32.mrf.mxu0
          %v4349 = vadd.f32 %v4300, %v4348
          %v4350 = vpop.f32.mrf.mxu0
          %v4351 = vadd.f32 %v4302, %v4350
          %4352 = vmatmul.bf16.gmra.mxu0 %v1632
          %v4353 = vpop.f32.mrf.mxu0
          %v4354 = vadd.f32 %v4305, %v4353
          %v4355 = vpop.f32.mrf.mxu0
          %v4356 = vadd.f32 %v4307, %v4355
          %4357 = vdwg.mxu0
          %4358 = vmatpush.bf16.msra.mxu0 %v3367
          %4359 = vmatpush.bf16.msra.mxu0 %v3363
          %4360 = vmatpush.bf16.msra.mxu0 %v3359
          %4361 = vmatpush.bf16.msra.mxu0 %v3355
          %4362 = vmatpush.bf16.msra.mxu0 %v3351
          %4363 = vmatpush.bf16.msra.mxu0 %v3347
          %4364 = vmatpush.bf16.msra.mxu0 %v3343
          %4365 = vmatpush.bf16.msra.mxu0 %v3339
          %4366 = vmatmul.bf16.gmra.mxu0 %v1542
          %v4367 = vpop.f32.mrf.mxu0
          %v4368 = vadd.f32 %v4319, %v4367
          %v4369 = vpop.f32.mrf.mxu0
          %v4370 = vadd.f32 %v4321, %v4369
          %4371 = vmatmul.bf16.gmra.mxu0 %v1555
          %v4372 = vpop.f32.mrf.mxu0
          %v4373 = vadd.f32 %v4324, %v4372
          %v4374 = vpop.f32.mrf.mxu0
          %v4375 = vadd.f32 %v4326, %v4374
          %4376 = vmatmul.bf16.gmra.mxu0 %v1568
          %v4377 = vpop.f32.mrf.mxu0
          %v4378 = vadd.f32 %v4329, %v4377
          %v4379 = vpop.f32.mrf.mxu0
          %v4380 = vadd.f32 %v4331, %v4379
          %4381 = vmatmul.bf16.gmra.mxu0 %v1581
          %v4382 = vpop.f32.mrf.mxu0
          %v4383 = vadd.f32 %v4334, %v4382
          %v4384 = vpop.f32.mrf.mxu0
          %v4385 = vadd.f32 %v4336, %v4384
          %4386 = vmatmul.bf16.gmra.mxu0 %v1594
          %v4387 = vpop.f32.mrf.mxu0
          %v4388 = vadd.f32 %v4339, %v4387
          %v4389 = vpop.f32.mrf.mxu0
          %v4390 = vadd.f32 %v4341, %v4389
          %4391 = vmatmul.bf16.gmra.mxu0 %v1607
          %v4392 = vpop.f32.mrf.mxu0
          %v4393 = vadd.f32 %v4344, %v4392
          %v4394 = vpop.f32.mrf.mxu0
          %v4395 = vadd.f32 %v4346, %v4394
          %4396 = vmatmul.bf16.gmra.mxu0 %v1620
          %v4397 = vpop.f32.mrf.mxu0
          %v4398 = vadd.f32 %v4349, %v4397
          %v4399 = vpop.f32.mrf.mxu0
          %v4400 = vadd.f32 %v4351, %v4399
          %4401 = vmatmul.bf16.gmra.mxu0 %v1633
          %v4402 = vpop.f32.mrf.mxu0
          %v4403 = vadd.f32 %v4354, %v4402
          %v4404 = vpop.f32.mrf.mxu0
          %v4405 = vadd.f32 %v4356, %v4404
          %4406 = vdwg.mxu0
          %4407 = vmatpush.bf16.msra.mxu0 %v3399
          %4408 = vmatpush.bf16.msra.mxu0 %v3395
          %4409 = vmatpush.bf16.msra.mxu0 %v3391
          %4410 = vmatpush.bf16.msra.mxu0 %v3387
          %4411 = vmatpush.bf16.msra.mxu0 %v3383
          %4412 = vmatpush.bf16.msra.mxu0 %v3379
          %4413 = vmatpush.bf16.msra.mxu0 %v3375
          %4414 = vmatpush.bf16.msra.mxu0 %v3371
          %4415 = vmatmul.bf16.gmra.mxu0 %v1543
          %v4416 = vpop.f32.mrf.mxu0
          %v4417 = vadd.f32 %v4368, %v4416
          %v4418 = vpop.f32.mrf.mxu0
          %v4419 = vadd.f32 %v4370, %v4418
          %4420 = vmatmul.bf16.gmra.mxu0 %v1556
          %v4421 = vpop.f32.mrf.mxu0
          %v4422 = vadd.f32 %v4373, %v4421
          %v4423 = vpop.f32.mrf.mxu0
          %v4424 = vadd.f32 %v4375, %v4423
          %4425 = vmatmul.bf16.gmra.mxu0 %v1569
          %v4426 = vpop.f32.mrf.mxu0
          %v4427 = vadd.f32 %v4378, %v4426
          %v4428 = vpop.f32.mrf.mxu0
          %v4429 = vadd.f32 %v4380, %v4428
          %4430 = vmatmul.bf16.gmra.mxu0 %v1582
          %v4431 = vpop.f32.mrf.mxu0
          %v4432 = vadd.f32 %v4383, %v4431
          %v4433 = vpop.f32.mrf.mxu0
          %v4434 = vadd.f32 %v4385, %v4433
          %4435 = vmatmul.bf16.gmra.mxu0 %v1595
          %v4436 = vpop.f32.mrf.mxu0
          %v4437 = vadd.f32 %v4388, %v4436
          %v4438 = vpop.f32.mrf.mxu0
          %v4439 = vadd.f32 %v4390, %v4438
          %4440 = vmatmul.bf16.gmra.mxu0 %v1608
          %v4441 = vpop.f32.mrf.mxu0
          %v4442 = vadd.f32 %v4393, %v4441
          %v4443 = vpop.f32.mrf.mxu0
          %v4444 = vadd.f32 %v4395, %v4443
          %4445 = vmatmul.bf16.gmra.mxu0 %v1621
          %v4446 = vpop.f32.mrf.mxu0
          %v4447 = vadd.f32 %v4398, %v4446
          %v4448 = vpop.f32.mrf.mxu0
          %v4449 = vadd.f32 %v4400, %v4448
          %4450 = vmatmul.bf16.gmra.mxu0 %v1634
          %v4451 = vpop.f32.mrf.mxu0
          %v4452 = vadd.f32 %v4403, %v4451
          %v4453 = vpop.f32.mrf.mxu0
          %v4454 = vadd.f32 %v4405, %v4453
          %4455 = vdwg.mxu0
          %4456 = vmatpush.bf16.msra.mxu0 %v3016
          %4457 = vmatpush.bf16.msra.mxu0 %v3012
          %4458 = vmatpush.bf16.msra.mxu0 %v3008
          %4459 = vmatpush.bf16.msra.mxu0 %v3004
          %4460 = vmatpush.bf16.msra.mxu0 %v3000
          %4461 = vmatpush.bf16.msra.mxu0 %v2996
          %4462 = vmatpush.bf16.msra.mxu0 %v2992
          %4463 = vmatpush.bf16.msra.mxu0 %v2988
          %4464 = vmatmul.bf16.gmra.mxu0 %v1531
          %v4465 = vpop.f32.mrf.mxu0
          %v4466 = vadd.f32 %v1204, %v4465
          %v4467 = vpop.f32.mrf.mxu0
          %v4468 = vadd.f32 %v1204, %v4467
          %4469 = vmatmul.bf16.gmra.mxu0 %v1544
          %v4470 = vpop.f32.mrf.mxu0
          %v4471 = vadd.f32 %v1204, %v4470
          %v4472 = vpop.f32.mrf.mxu0
          %v4473 = vadd.f32 %v1204, %v4472
          %4474 = vmatmul.bf16.gmra.mxu0 %v1557
          %v4475 = vpop.f32.mrf.mxu0
          %v4476 = vadd.f32 %v1204, %v4475
          %v4477 = vpop.f32.mrf.mxu0
          %v4478 = vadd.f32 %v1204, %v4477
          %4479 = vmatmul.bf16.gmra.mxu0 %v1570
          %v4480 = vpop.f32.mrf.mxu0
          %v4481 = vadd.f32 %v1204, %v4480
          %v4482 = vpop.f32.mrf.mxu0
          %v4483 = vadd.f32 %v1204, %v4482
          %4484 = vmatmul.bf16.gmra.mxu0 %v1583
          %v4485 = vpop.f32.mrf.mxu0
          %v4486 = vadd.f32 %v1204, %v4485
          %v4487 = vpop.f32.mrf.mxu0
          %v4488 = vadd.f32 %v1204, %v4487
          %4489 = vmatmul.bf16.gmra.mxu0 %v1596
          %v4490 = vpop.f32.mrf.mxu0
          %v4491 = vadd.f32 %v1204, %v4490
          %v4492 = vpop.f32.mrf.mxu0
          %v4493 = vadd.f32 %v1204, %v4492
          %4494 = vmatmul.bf16.gmra.mxu0 %v1609
          %v4495 = vpop.f32.mrf.mxu0
          %v4496 = vadd.f32 %v1204, %v4495
          %v4497 = vpop.f32.mrf.mxu0
          %v4498 = vadd.f32 %v1204, %v4497
          %4499 = vmatmul.bf16.gmra.mxu0 %v1622
          %v4500 = vpop.f32.mrf.mxu0
          %v4501 = vadd.f32 %v1204, %v4500
          %v4502 = vpop.f32.mrf.mxu0
          %v4503 = vadd.f32 %v1204, %v4502
          %4504 = vdwg.mxu0
          %4505 = vmatpush.bf16.msra.mxu0 %v3048
          %4506 = vmatpush.bf16.msra.mxu0 %v3044
          %4507 = vmatpush.bf16.msra.mxu0 %v3040
          %4508 = vmatpush.bf16.msra.mxu0 %v3036
          %4509 = vmatpush.bf16.msra.mxu0 %v3032
          %4510 = vmatpush.bf16.msra.mxu0 %v3028
          %4511 = vmatpush.bf16.msra.mxu0 %v3024
          %4512 = vmatpush.bf16.msra.mxu0 %v3020
          %4513 = vmatmul.bf16.gmra.mxu0 %v1532
          %v4514 = vpop.f32.mrf.mxu0
          %v4515 = vadd.f32 %v4466, %v4514
          %v4516 = vpop.f32.mrf.mxu0
          %v4517 = vadd.f32 %v4468, %v4516
          %4518 = vmatmul.bf16.gmra.mxu0 %v1545
          %v4519 = vpop.f32.mrf.mxu0
          %v4520 = vadd.f32 %v4471, %v4519
          %v4521 = vpop.f32.mrf.mxu0
          %v4522 = vadd.f32 %v4473, %v4521
          %4523 = vmatmul.bf16.gmra.mxu0 %v1558
          %v4524 = vpop.f32.mrf.mxu0
          %v4525 = vadd.f32 %v4476, %v4524
          %v4526 = vpop.f32.mrf.mxu0
          %v4527 = vadd.f32 %v4478, %v4526
          %4528 = vmatmul.bf16.gmra.mxu0 %v1571
          %v4529 = vpop.f32.mrf.mxu0
          %v4530 = vadd.f32 %v4481, %v4529
          %v4531 = vpop.f32.mrf.mxu0
          %v4532 = vadd.f32 %v4483, %v4531
          %4533 = vmatmul.bf16.gmra.mxu0 %v1584
          %v4534 = vpop.f32.mrf.mxu0
          %v4535 = vadd.f32 %v4486, %v4534
          %v4536 = vpop.f32.mrf.mxu0
          %v4537 = vadd.f32 %v4488, %v4536
          %4538 = vmatmul.bf16.gmra.mxu0 %v1597
          %v4539 = vpop.f32.mrf.mxu0
          %v4540 = vadd.f32 %v4491, %v4539
          %v4541 = vpop.f32.mrf.mxu0
          %v4542 = vadd.f32 %v4493, %v4541
          %4543 = vmatmul.bf16.gmra.mxu0 %v1610
          %v4544 = vpop.f32.mrf.mxu0
          %v4545 = vadd.f32 %v4496, %v4544
          %v4546 = vpop.f32.mrf.mxu0
          %v4547 = vadd.f32 %v4498, %v4546
          %4548 = vmatmul.bf16.gmra.mxu0 %v1623
          %v4549 = vpop.f32.mrf.mxu0
          %v4550 = vadd.f32 %v4501, %v4549
          %v4551 = vpop.f32.mrf.mxu0
          %v4552 = vadd.f32 %v4503, %v4551
          %4553 = vdwg.mxu0
          %4554 = vmatpush.bf16.msra.mxu0 %v3080
          %4555 = vmatpush.bf16.msra.mxu0 %v3076
          %4556 = vmatpush.bf16.msra.mxu0 %v3072
          %4557 = vmatpush.bf16.msra.mxu0 %v3068
          %4558 = vmatpush.bf16.msra.mxu0 %v3064
          %4559 = vmatpush.bf16.msra.mxu0 %v3060
          %4560 = vmatpush.bf16.msra.mxu0 %v3056
          %4561 = vmatpush.bf16.msra.mxu0 %v3052
          %4562 = vmatmul.bf16.gmra.mxu0 %v1533
          %v4563 = vpop.f32.mrf.mxu0
          %v4564 = vadd.f32 %v4515, %v4563
          %v4565 = vpop.f32.mrf.mxu0
          %v4566 = vadd.f32 %v4517, %v4565
          %4567 = vmatmul.bf16.gmra.mxu0 %v1546
          %v4568 = vpop.f32.mrf.mxu0
          %v4569 = vadd.f32 %v4520, %v4568
          %v4570 = vpop.f32.mrf.mxu0
          %v4571 = vadd.f32 %v4522, %v4570
          %4572 = vmatmul.bf16.gmra.mxu0 %v1559
          %v4573 = vpop.f32.mrf.mxu0
          %v4574 = vadd.f32 %v4525, %v4573
          %v4575 = vpop.f32.mrf.mxu0
          %v4576 = vadd.f32 %v4527, %v4575
          %4577 = vmatmul.bf16.gmra.mxu0 %v1572
          %v4578 = vpop.f32.mrf.mxu0
          %v4579 = vadd.f32 %v4530, %v4578
          %v4580 = vpop.f32.mrf.mxu0
          %v4581 = vadd.f32 %v4532, %v4580
          %4582 = vmatmul.bf16.gmra.mxu0 %v1585
          %v4583 = vpop.f32.mrf.mxu0
          %v4584 = vadd.f32 %v4535, %v4583
          %v4585 = vpop.f32.mrf.mxu0
          %v4586 = vadd.f32 %v4537, %v4585
          %4587 = vmatmul.bf16.gmra.mxu0 %v1598
          %v4588 = vpop.f32.mrf.mxu0
          %v4589 = vadd.f32 %v4540, %v4588
          %v4590 = vpop.f32.mrf.mxu0
          %v4591 = vadd.f32 %v4542, %v4590
          %4592 = vmatmul.bf16.gmra.mxu0 %v1611
          %v4593 = vpop.f32.mrf.mxu0
          %v4594 = vadd.f32 %v4545, %v4593
          %v4595 = vpop.f32.mrf.mxu0
          %v4596 = vadd.f32 %v4547, %v4595
          %4597 = vmatmul.bf16.gmra.mxu0 %v1624
          %v4598 = vpop.f32.mrf.mxu0
          %v4599 = vadd.f32 %v4550, %v4598
          %v4600 = vpop.f32.mrf.mxu0
          %v4601 = vadd.f32 %v4552, %v4600
          %4602 = vdwg.mxu0
          %4603 = vmatpush.bf16.msra.mxu0 %v3112
          %4604 = vmatpush.bf16.msra.mxu0 %v3108
          %4605 = vmatpush.bf16.msra.mxu0 %v3104
          %4606 = vmatpush.bf16.msra.mxu0 %v3100
          %4607 = vmatpush.bf16.msra.mxu0 %v3096
          %4608 = vmatpush.bf16.msra.mxu0 %v3092
          %4609 = vmatpush.bf16.msra.mxu0 %v3088
          %4610 = vmatpush.bf16.msra.mxu0 %v3084
          %4611 = vmatmul.bf16.gmra.mxu0 %v1534
          %v4612 = vpop.f32.mrf.mxu0
          %v4613 = vadd.f32 %v4564, %v4612
          %v4614 = vpop.f32.mrf.mxu0
          %v4615 = vadd.f32 %v4566, %v4614
          %4616 = vmatmul.bf16.gmra.mxu0 %v1547
          %v4617 = vpop.f32.mrf.mxu0
          %v4618 = vadd.f32 %v4569, %v4617
          %v4619 = vpop.f32.mrf.mxu0
          %v4620 = vadd.f32 %v4571, %v4619
          %4621 = vmatmul.bf16.gmra.mxu0 %v1560
          %v4622 = vpop.f32.mrf.mxu0
          %v4623 = vadd.f32 %v4574, %v4622
          %v4624 = vpop.f32.mrf.mxu0
          %v4625 = vadd.f32 %v4576, %v4624
          %4626 = vmatmul.bf16.gmra.mxu0 %v1573
          %v4627 = vpop.f32.mrf.mxu0
          %v4628 = vadd.f32 %v4579, %v4627
          %v4629 = vpop.f32.mrf.mxu0
          %v4630 = vadd.f32 %v4581, %v4629
          %4631 = vmatmul.bf16.gmra.mxu0 %v1586
          %v4632 = vpop.f32.mrf.mxu0
          %v4633 = vadd.f32 %v4584, %v4632
          %v4634 = vpop.f32.mrf.mxu0
          %v4635 = vadd.f32 %v4586, %v4634
          %4636 = vmatmul.bf16.gmra.mxu0 %v1599
          %v4637 = vpop.f32.mrf.mxu0
          %v4638 = vadd.f32 %v4589, %v4637
          %v4639 = vpop.f32.mrf.mxu0
          %v4640 = vadd.f32 %v4591, %v4639
          %4641 = vmatmul.bf16.gmra.mxu0 %v1612
          %v4642 = vpop.f32.mrf.mxu0
          %v4643 = vadd.f32 %v4594, %v4642
          %v4644 = vpop.f32.mrf.mxu0
          %v4645 = vadd.f32 %v4596, %v4644
          %4646 = vmatmul.bf16.gmra.mxu0 %v1625
          %v4647 = vpop.f32.mrf.mxu0
          %v4648 = vadd.f32 %v4599, %v4647
          %v4649 = vpop.f32.mrf.mxu0
          %v4650 = vadd.f32 %v4601, %v4649
          %4651 = vdwg.mxu0
          %4652 = vmatpush.bf16.msra.mxu0 %v3144
          %4653 = vmatpush.bf16.msra.mxu0 %v3140
          %4654 = vmatpush.bf16.msra.mxu0 %v3136
          %4655 = vmatpush.bf16.msra.mxu0 %v3132
          %4656 = vmatpush.bf16.msra.mxu0 %v3128
          %4657 = vmatpush.bf16.msra.mxu0 %v3124
          %4658 = vmatpush.bf16.msra.mxu0 %v3120
          %4659 = vmatpush.bf16.msra.mxu0 %v3116
          %4660 = vmatmul.bf16.gmra.mxu0 %v1535
          %v4661 = vpop.f32.mrf.mxu0
          %v4662 = vadd.f32 %v4613, %v4661
          %v4663 = vpop.f32.mrf.mxu0
          %v4664 = vadd.f32 %v4615, %v4663
          %4665 = vmatmul.bf16.gmra.mxu0 %v1548
          %v4666 = vpop.f32.mrf.mxu0
          %v4667 = vadd.f32 %v4618, %v4666
          %v4668 = vpop.f32.mrf.mxu0
          %v4669 = vadd.f32 %v4620, %v4668
          %4670 = vmatmul.bf16.gmra.mxu0 %v1561
          %v4671 = vpop.f32.mrf.mxu0
          %v4672 = vadd.f32 %v4623, %v4671
          %v4673 = vpop.f32.mrf.mxu0
          %v4674 = vadd.f32 %v4625, %v4673
          %4675 = vmatmul.bf16.gmra.mxu0 %v1574
          %v4676 = vpop.f32.mrf.mxu0
          %v4677 = vadd.f32 %v4628, %v4676
          %v4678 = vpop.f32.mrf.mxu0
          %v4679 = vadd.f32 %v4630, %v4678
          %4680 = vmatmul.bf16.gmra.mxu0 %v1587
          %v4681 = vpop.f32.mrf.mxu0
          %v4682 = vadd.f32 %v4633, %v4681
          %v4683 = vpop.f32.mrf.mxu0
          %v4684 = vadd.f32 %v4635, %v4683
          %4685 = vmatmul.bf16.gmra.mxu0 %v1600
          %v4686 = vpop.f32.mrf.mxu0
          %v4687 = vadd.f32 %v4638, %v4686
          %v4688 = vpop.f32.mrf.mxu0
          %v4689 = vadd.f32 %v4640, %v4688
          %4690 = vmatmul.bf16.gmra.mxu0 %v1613
          %v4691 = vpop.f32.mrf.mxu0
          %v4692 = vadd.f32 %v4643, %v4691
          %v4693 = vpop.f32.mrf.mxu0
          %v4694 = vadd.f32 %v4645, %v4693
          %4695 = vmatmul.bf16.gmra.mxu0 %v1626
          %v4696 = vpop.f32.mrf.mxu0
          %v4697 = vadd.f32 %v4648, %v4696
          %v4698 = vpop.f32.mrf.mxu0
          %v4699 = vadd.f32 %v4650, %v4698
          %4700 = vdwg.mxu0
          %4701 = vmatpush.bf16.msra.mxu0 %v3176
          %4702 = vmatpush.bf16.msra.mxu0 %v3172
          %4703 = vmatpush.bf16.msra.mxu0 %v3168
          %4704 = vmatpush.bf16.msra.mxu0 %v3164
          %4705 = vmatpush.bf16.msra.mxu0 %v3160
          %4706 = vmatpush.bf16.msra.mxu0 %v3156
          %4707 = vmatpush.bf16.msra.mxu0 %v3152
          %4708 = vmatpush.bf16.msra.mxu0 %v3148
          %4709 = vmatmul.bf16.gmra.mxu0 %v1536
          %v4710 = vpop.f32.mrf.mxu0
          %v4711 = vadd.f32 %v4662, %v4710
          %v4712 = vpop.f32.mrf.mxu0
          %v4713 = vadd.f32 %v4664, %v4712
          %4714 = vmatmul.bf16.gmra.mxu0 %v1549
          %v4715 = vpop.f32.mrf.mxu0
          %v4716 = vadd.f32 %v4667, %v4715
          %v4717 = vpop.f32.mrf.mxu0
          %v4718 = vadd.f32 %v4669, %v4717
          %4719 = vmatmul.bf16.gmra.mxu0 %v1562
          %v4720 = vpop.f32.mrf.mxu0
          %v4721 = vadd.f32 %v4672, %v4720
          %v4722 = vpop.f32.mrf.mxu0
          %v4723 = vadd.f32 %v4674, %v4722
          %4724 = vmatmul.bf16.gmra.mxu0 %v1575
          %v4725 = vpop.f32.mrf.mxu0
          %v4726 = vadd.f32 %v4677, %v4725
          %v4727 = vpop.f32.mrf.mxu0
          %v4728 = vadd.f32 %v4679, %v4727
          %4729 = vmatmul.bf16.gmra.mxu0 %v1588
          %v4730 = vpop.f32.mrf.mxu0
          %v4731 = vadd.f32 %v4682, %v4730
          %v4732 = vpop.f32.mrf.mxu0
          %v4733 = vadd.f32 %v4684, %v4732
          %4734 = vmatmul.bf16.gmra.mxu0 %v1601
          %v4735 = vpop.f32.mrf.mxu0
          %v4736 = vadd.f32 %v4687, %v4735
          %v4737 = vpop.f32.mrf.mxu0
          %v4738 = vadd.f32 %v4689, %v4737
          %4739 = vmatmul.bf16.gmra.mxu0 %v1614
          %v4740 = vpop.f32.mrf.mxu0
          %v4741 = vadd.f32 %v4692, %v4740
          %v4742 = vpop.f32.mrf.mxu0
          %v4743 = vadd.f32 %v4694, %v4742
          %4744 = vmatmul.bf16.gmra.mxu0 %v1627
          %v4745 = vpop.f32.mrf.mxu0
          %v4746 = vadd.f32 %v4697, %v4745
          %v4747 = vpop.f32.mrf.mxu0
          %v4748 = vadd.f32 %v4699, %v4747
          %4749 = vdwg.mxu0
          %4750 = vmatpush.bf16.msra.mxu0 %v3208
          %4751 = vmatpush.bf16.msra.mxu0 %v3204
          %4752 = vmatpush.bf16.msra.mxu0 %v3200
          %4753 = vmatpush.bf16.msra.mxu0 %v3196
          %4754 = vmatpush.bf16.msra.mxu0 %v3192
          %4755 = vmatpush.bf16.msra.mxu0 %v3188
          %4756 = vmatpush.bf16.msra.mxu0 %v3184
          %4757 = vmatpush.bf16.msra.mxu0 %v3180
          %4758 = vmatmul.bf16.gmra.mxu0 %v1537
          %v4759 = vpop.f32.mrf.mxu0
          %v4760 = vadd.f32 %v4711, %v4759
          %v4761 = vpop.f32.mrf.mxu0
          %v4762 = vadd.f32 %v4713, %v4761
          %4763 = vmatmul.bf16.gmra.mxu0 %v1550
          %v4764 = vpop.f32.mrf.mxu0
          %v4765 = vadd.f32 %v4716, %v4764
          %v4766 = vpop.f32.mrf.mxu0
          %v4767 = vadd.f32 %v4718, %v4766
          %4768 = vmatmul.bf16.gmra.mxu0 %v1563
          %v4769 = vpop.f32.mrf.mxu0
          %v4770 = vadd.f32 %v4721, %v4769
          %v4771 = vpop.f32.mrf.mxu0
          %v4772 = vadd.f32 %v4723, %v4771
          %4773 = vmatmul.bf16.gmra.mxu0 %v1576
          %v4774 = vpop.f32.mrf.mxu0
          %v4775 = vadd.f32 %v4726, %v4774
          %v4776 = vpop.f32.mrf.mxu0
          %v4777 = vadd.f32 %v4728, %v4776
          %4778 = vmatmul.bf16.gmra.mxu0 %v1589
          %v4779 = vpop.f32.mrf.mxu0
          %v4780 = vadd.f32 %v4731, %v4779
          %v4781 = vpop.f32.mrf.mxu0
          %v4782 = vadd.f32 %v4733, %v4781
          %4783 = vmatmul.bf16.gmra.mxu0 %v1602
          %v4784 = vpop.f32.mrf.mxu0
          %v4785 = vadd.f32 %v4736, %v4784
          %v4786 = vpop.f32.mrf.mxu0
          %v4787 = vadd.f32 %v4738, %v4786
          %4788 = vmatmul.bf16.gmra.mxu0 %v1615
          %v4789 = vpop.f32.mrf.mxu0
          %v4790 = vadd.f32 %v4741, %v4789
          %v4791 = vpop.f32.mrf.mxu0
          %v4792 = vadd.f32 %v4743, %v4791
          %4793 = vmatmul.bf16.gmra.mxu0 %v1628
          %v4794 = vpop.f32.mrf.mxu0
          %v4795 = vadd.f32 %v4746, %v4794
          %v4796 = vpop.f32.mrf.mxu0
          %v4797 = vadd.f32 %v4748, %v4796
          %4798 = vdwg.mxu0
          %4799 = vmatpush.bf16.msra.mxu0 %v3240
          %4800 = vmatpush.bf16.msra.mxu0 %v3236
          %4801 = vmatpush.bf16.msra.mxu0 %v3232
          %4802 = vmatpush.bf16.msra.mxu0 %v3228
          %4803 = vmatpush.bf16.msra.mxu0 %v3224
          %4804 = vmatpush.bf16.msra.mxu0 %v3220
          %4805 = vmatpush.bf16.msra.mxu0 %v3216
          %4806 = vmatpush.bf16.msra.mxu0 %v3212
          %4807 = vmatmul.bf16.gmra.mxu0 %v1538
          %v4808 = vpop.f32.mrf.mxu0
          %v4809 = vadd.f32 %v4760, %v4808
          %v4810 = vpop.f32.mrf.mxu0
          %v4811 = vadd.f32 %v4762, %v4810
          %4812 = vmatmul.bf16.gmra.mxu0 %v1551
          %v4813 = vpop.f32.mrf.mxu0
          %v4814 = vadd.f32 %v4765, %v4813
          %v4815 = vpop.f32.mrf.mxu0
          %v4816 = vadd.f32 %v4767, %v4815
          %4817 = vmatmul.bf16.gmra.mxu0 %v1564
          %v4818 = vpop.f32.mrf.mxu0
          %v4819 = vadd.f32 %v4770, %v4818
          %v4820 = vpop.f32.mrf.mxu0
          %v4821 = vadd.f32 %v4772, %v4820
          %4822 = vmatmul.bf16.gmra.mxu0 %v1577
          %v4823 = vpop.f32.mrf.mxu0
          %v4824 = vadd.f32 %v4775, %v4823
          %v4825 = vpop.f32.mrf.mxu0
          %v4826 = vadd.f32 %v4777, %v4825
          %4827 = vmatmul.bf16.gmra.mxu0 %v1590
          %v4828 = vpop.f32.mrf.mxu0
          %v4829 = vadd.f32 %v4780, %v4828
          %v4830 = vpop.f32.mrf.mxu0
          %v4831 = vadd.f32 %v4782, %v4830
          %4832 = vmatmul.bf16.gmra.mxu0 %v1603
          %v4833 = vpop.f32.mrf.mxu0
          %v4834 = vadd.f32 %v4785, %v4833
          %v4835 = vpop.f32.mrf.mxu0
          %v4836 = vadd.f32 %v4787, %v4835
          %4837 = vmatmul.bf16.gmra.mxu0 %v1616
          %v4838 = vpop.f32.mrf.mxu0
          %v4839 = vadd.f32 %v4790, %v4838
          %v4840 = vpop.f32.mrf.mxu0
          %v4841 = vadd.f32 %v4792, %v4840
          %4842 = vmatmul.bf16.gmra.mxu0 %v1629
          %v4843 = vpop.f32.mrf.mxu0
          %v4844 = vadd.f32 %v4795, %v4843
          %v4845 = vpop.f32.mrf.mxu0
          %v4846 = vadd.f32 %v4797, %v4845
          %4847 = vdwg.mxu0
          %4848 = vmatpush.bf16.msra.mxu0 %v3272
          %4849 = vmatpush.bf16.msra.mxu0 %v3268
          %4850 = vmatpush.bf16.msra.mxu0 %v3264
          %4851 = vmatpush.bf16.msra.mxu0 %v3260
          %4852 = vmatpush.bf16.msra.mxu0 %v3256
          %4853 = vmatpush.bf16.msra.mxu0 %v3252
          %4854 = vmatpush.bf16.msra.mxu0 %v3248
          %4855 = vmatpush.bf16.msra.mxu0 %v3244
          %4856 = vmatmul.bf16.gmra.mxu0 %v1539
          %v4857 = vpop.f32.mrf.mxu0
          %v4858 = vadd.f32 %v4809, %v4857
          %v4859 = vpop.f32.mrf.mxu0
          %v4860 = vadd.f32 %v4811, %v4859
          %4861 = vmatmul.bf16.gmra.mxu0 %v1552
          %v4862 = vpop.f32.mrf.mxu0
          %v4863 = vadd.f32 %v4814, %v4862
          %v4864 = vpop.f32.mrf.mxu0
          %v4865 = vadd.f32 %v4816, %v4864
          %4866 = vmatmul.bf16.gmra.mxu0 %v1565
          %v4867 = vpop.f32.mrf.mxu0
          %v4868 = vadd.f32 %v4819, %v4867
          %v4869 = vpop.f32.mrf.mxu0
          %v4870 = vadd.f32 %v4821, %v4869
          %4871 = vmatmul.bf16.gmra.mxu0 %v1578
          %v4872 = vpop.f32.mrf.mxu0
          %v4873 = vadd.f32 %v4824, %v4872
          %v4874 = vpop.f32.mrf.mxu0
          %v4875 = vadd.f32 %v4826, %v4874
          %4876 = vmatmul.bf16.gmra.mxu0 %v1591
          %v4877 = vpop.f32.mrf.mxu0
          %v4878 = vadd.f32 %v4829, %v4877
          %v4879 = vpop.f32.mrf.mxu0
          %v4880 = vadd.f32 %v4831, %v4879
          %4881 = vmatmul.bf16.gmra.mxu0 %v1604
          %v4882 = vpop.f32.mrf.mxu0
          %v4883 = vadd.f32 %v4834, %v4882
          %v4884 = vpop.f32.mrf.mxu0
          %v4885 = vadd.f32 %v4836, %v4884
          %4886 = vmatmul.bf16.gmra.mxu0 %v1617
          %v4887 = vpop.f32.mrf.mxu0
          %v4888 = vadd.f32 %v4839, %v4887
          %v4889 = vpop.f32.mrf.mxu0
          %v4890 = vadd.f32 %v4841, %v4889
          %4891 = vmatmul.bf16.gmra.mxu0 %v1630
          %v4892 = vpop.f32.mrf.mxu0
          %v4893 = vadd.f32 %v4844, %v4892
          %v4894 = vpop.f32.mrf.mxu0
          %v4895 = vadd.f32 %v4846, %v4894
          %4896 = vdwg.mxu0
          %4897 = vmatpush.bf16.msra.mxu0 %v3304
          %4898 = vmatpush.bf16.msra.mxu0 %v3300
          %4899 = vmatpush.bf16.msra.mxu0 %v3296
          %4900 = vmatpush.bf16.msra.mxu0 %v3292
          %4901 = vmatpush.bf16.msra.mxu0 %v3288
          %4902 = vmatpush.bf16.msra.mxu0 %v3284
          %4903 = vmatpush.bf16.msra.mxu0 %v3280
          %4904 = vmatpush.bf16.msra.mxu0 %v3276
          %4905 = vmatmul.bf16.gmra.mxu0 %v1540
          %v4906 = vpop.f32.mrf.mxu0
          %v4907 = vadd.f32 %v4858, %v4906
          %v4908 = vpop.f32.mrf.mxu0
          %v4909 = vadd.f32 %v4860, %v4908
          %4910 = vmatmul.bf16.gmra.mxu0 %v1553
          %v4911 = vpop.f32.mrf.mxu0
          %v4912 = vadd.f32 %v4863, %v4911
          %v4913 = vpop.f32.mrf.mxu0
          %v4914 = vadd.f32 %v4865, %v4913
          %4915 = vmatmul.bf16.gmra.mxu0 %v1566
          %v4916 = vpop.f32.mrf.mxu0
          %v4917 = vadd.f32 %v4868, %v4916
          %v4918 = vpop.f32.mrf.mxu0
          %v4919 = vadd.f32 %v4870, %v4918
          %4920 = vmatmul.bf16.gmra.mxu0 %v1579
          %v4921 = vpop.f32.mrf.mxu0
          %v4922 = vadd.f32 %v4873, %v4921
          %v4923 = vpop.f32.mrf.mxu0
          %v4924 = vadd.f32 %v4875, %v4923
          %4925 = vmatmul.bf16.gmra.mxu0 %v1592
          %v4926 = vpop.f32.mrf.mxu0
          %v4927 = vadd.f32 %v4878, %v4926
          %v4928 = vpop.f32.mrf.mxu0
          %v4929 = vadd.f32 %v4880, %v4928
          %4930 = vmatmul.bf16.gmra.mxu0 %v1605
          %v4931 = vpop.f32.mrf.mxu0
          %v4932 = vadd.f32 %v4883, %v4931
          %v4933 = vpop.f32.mrf.mxu0
          %v4934 = vadd.f32 %v4885, %v4933
          %4935 = vmatmul.bf16.gmra.mxu0 %v1618
          %v4936 = vpop.f32.mrf.mxu0
          %v4937 = vadd.f32 %v4888, %v4936
          %v4938 = vpop.f32.mrf.mxu0
          %v4939 = vadd.f32 %v4890, %v4938
          %4940 = vmatmul.bf16.gmra.mxu0 %v1631
          %v4941 = vpop.f32.mrf.mxu0
          %v4942 = vadd.f32 %v4893, %v4941
          %v4943 = vpop.f32.mrf.mxu0
          %v4944 = vadd.f32 %v4895, %v4943
          %4945 = vdwg.mxu0
          %4946 = vmatpush.bf16.msra.mxu0 %v3336
          %4947 = vmatpush.bf16.msra.mxu0 %v3332
          %4948 = vmatpush.bf16.msra.mxu0 %v3328
          %4949 = vmatpush.bf16.msra.mxu0 %v3324
          %4950 = vmatpush.bf16.msra.mxu0 %v3320
          %4951 = vmatpush.bf16.msra.mxu0 %v3316
          %4952 = vmatpush.bf16.msra.mxu0 %v3312
          %4953 = vmatpush.bf16.msra.mxu0 %v3308
          %4954 = vmatmul.bf16.gmra.mxu0 %v1541
          %v4955 = vpop.f32.mrf.mxu0
          %v4956 = vadd.f32 %v4907, %v4955
          %v4957 = vpop.f32.mrf.mxu0
          %v4958 = vadd.f32 %v4909, %v4957
          %4959 = vmatmul.bf16.gmra.mxu0 %v1554
          %v4960 = vpop.f32.mrf.mxu0
          %v4961 = vadd.f32 %v4912, %v4960
          %v4962 = vpop.f32.mrf.mxu0
          %v4963 = vadd.f32 %v4914, %v4962
          %4964 = vmatmul.bf16.gmra.mxu0 %v1567
          %v4965 = vpop.f32.mrf.mxu0
          %v4966 = vadd.f32 %v4917, %v4965
          %v4967 = vpop.f32.mrf.mxu0
          %v4968 = vadd.f32 %v4919, %v4967
          %4969 = vmatmul.bf16.gmra.mxu0 %v1580
          %v4970 = vpop.f32.mrf.mxu0
          %v4971 = vadd.f32 %v4922, %v4970
          %v4972 = vpop.f32.mrf.mxu0
          %v4973 = vadd.f32 %v4924, %v4972
          %4974 = vmatmul.bf16.gmra.mxu0 %v1593
          %v4975 = vpop.f32.mrf.mxu0
          %v4976 = vadd.f32 %v4927, %v4975
          %v4977 = vpop.f32.mrf.mxu0
          %v4978 = vadd.f32 %v4929, %v4977
          %4979 = vmatmul.bf16.gmra.mxu0 %v1606
          %v4980 = vpop.f32.mrf.mxu0
          %v4981 = vadd.f32 %v4932, %v4980
          %v4982 = vpop.f32.mrf.mxu0
          %v4983 = vadd.f32 %v4934, %v4982
          %4984 = vmatmul.bf16.gmra.mxu0 %v1619
          %v4985 = vpop.f32.mrf.mxu0
          %v4986 = vadd.f32 %v4937, %v4985
          %v4987 = vpop.f32.mrf.mxu0
          %v4988 = vadd.f32 %v4939, %v4987
          %4989 = vmatmul.bf16.gmra.mxu0 %v1632
          %v4990 = vpop.f32.mrf.mxu0
          %v4991 = vadd.f32 %v4942, %v4990
          %v4992 = vpop.f32.mrf.mxu0
          %v4993 = vadd.f32 %v4944, %v4992
          %4994 = vdwg.mxu0
          %4995 = vmatpush.bf16.msra.mxu0 %v3368
          %4996 = vmatpush.bf16.msra.mxu0 %v3364
          %4997 = vmatpush.bf16.msra.mxu0 %v3360
          %4998 = vmatpush.bf16.msra.mxu0 %v3356
          %4999 = vmatpush.bf16.msra.mxu0 %v3352
          %5000 = vmatpush.bf16.msra.mxu0 %v3348
          %5001 = vmatpush.bf16.msra.mxu0 %v3344
          %5002 = vmatpush.bf16.msra.mxu0 %v3340
          %5003 = vmatmul.bf16.gmra.mxu0 %v1542
          %v5004 = vpop.f32.mrf.mxu0
          %v5005 = vadd.f32 %v4956, %v5004
          %v5006 = vpop.f32.mrf.mxu0
          %v5007 = vadd.f32 %v4958, %v5006
          %5008 = vmatmul.bf16.gmra.mxu0 %v1555
          %v5009 = vpop.f32.mrf.mxu0
          %v5010 = vadd.f32 %v4961, %v5009
          %v5011 = vpop.f32.mrf.mxu0
          %v5012 = vadd.f32 %v4963, %v5011
          %5013 = vmatmul.bf16.gmra.mxu0 %v1568
          %v5014 = vpop.f32.mrf.mxu0
          %v5015 = vadd.f32 %v4966, %v5014
          %v5016 = vpop.f32.mrf.mxu0
          %v5017 = vadd.f32 %v4968, %v5016
          %5018 = vmatmul.bf16.gmra.mxu0 %v1581
          %v5019 = vpop.f32.mrf.mxu0
          %v5020 = vadd.f32 %v4971, %v5019
          %v5021 = vpop.f32.mrf.mxu0
          %v5022 = vadd.f32 %v4973, %v5021
          %5023 = vmatmul.bf16.gmra.mxu0 %v1594
          %v5024 = vpop.f32.mrf.mxu0
          %v5025 = vadd.f32 %v4976, %v5024
          %v5026 = vpop.f32.mrf.mxu0
          %v5027 = vadd.f32 %v4978, %v5026
          %5028 = vmatmul.bf16.gmra.mxu0 %v1607
          %v5029 = vpop.f32.mrf.mxu0
          %v5030 = vadd.f32 %v4981, %v5029
          %v5031 = vpop.f32.mrf.mxu0
          %v5032 = vadd.f32 %v4983, %v5031
          %5033 = vmatmul.bf16.gmra.mxu0 %v1620
          %v5034 = vpop.f32.mrf.mxu0
          %v5035 = vadd.f32 %v4986, %v5034
          %v5036 = vpop.f32.mrf.mxu0
          %v5037 = vadd.f32 %v4988, %v5036
          %5038 = vmatmul.bf16.gmra.mxu0 %v1633
          %v5039 = vpop.f32.mrf.mxu0
          %v5040 = vadd.f32 %v4991, %v5039
          %v5041 = vpop.f32.mrf.mxu0
          %v5042 = vadd.f32 %v4993, %v5041
          %5043 = vdwg.mxu0
          %5044 = vmatpush.bf16.msra.mxu0 %v3400
          %5045 = vmatpush.bf16.msra.mxu0 %v3396
          %5046 = vmatpush.bf16.msra.mxu0 %v3392
          %5047 = vmatpush.bf16.msra.mxu0 %v3388
          %5048 = vmatpush.bf16.msra.mxu0 %v3384
          %5049 = vmatpush.bf16.msra.mxu0 %v3380
          %5050 = vmatpush.bf16.msra.mxu0 %v3376
          %5051 = vmatpush.bf16.msra.mxu0 %v3372
          %5052 = vmatmul.bf16.gmra.mxu0 %v1543
          %v5053 = vpop.f32.mrf.mxu0
          %v5054 = vadd.f32 %v5005, %v5053
          %v5055 = vpop.f32.mrf.mxu0
          %v5056 = vadd.f32 %v5007, %v5055
          %5057 = vmatmul.bf16.gmra.mxu0 %v1556
          %v5058 = vpop.f32.mrf.mxu0
          %v5059 = vadd.f32 %v5010, %v5058
          %v5060 = vpop.f32.mrf.mxu0
          %v5061 = vadd.f32 %v5012, %v5060
          %5062 = vmatmul.bf16.gmra.mxu0 %v1569
          %v5063 = vpop.f32.mrf.mxu0
          %v5064 = vadd.f32 %v5015, %v5063
          %v5065 = vpop.f32.mrf.mxu0
          %v5066 = vadd.f32 %v5017, %v5065
          %5067 = vmatmul.bf16.gmra.mxu0 %v1582
          %v5068 = vpop.f32.mrf.mxu0
          %v5069 = vadd.f32 %v5020, %v5068
          %v5070 = vpop.f32.mrf.mxu0
          %v5071 = vadd.f32 %v5022, %v5070
          %5072 = vmatmul.bf16.gmra.mxu0 %v1595
          %v5073 = vpop.f32.mrf.mxu0
          %v5074 = vadd.f32 %v5025, %v5073
          %v5075 = vpop.f32.mrf.mxu0
          %v5076 = vadd.f32 %v5027, %v5075
          %5077 = vmatmul.bf16.gmra.mxu0 %v1608
          %v5078 = vpop.f32.mrf.mxu0
          %v5079 = vadd.f32 %v5030, %v5078
          %v5080 = vpop.f32.mrf.mxu0
          %v5081 = vadd.f32 %v5032, %v5080
          %5082 = vmatmul.bf16.gmra.mxu0 %v1621
          %v5083 = vpop.f32.mrf.mxu0
          %v5084 = vadd.f32 %v5035, %v5083
          %v5085 = vpop.f32.mrf.mxu0
          %v5086 = vadd.f32 %v5037, %v5085
          %5087 = vmatmul.bf16.gmra.mxu0 %v1634
          %v5088 = vpop.f32.mrf.mxu0
          %v5089 = vadd.f32 %v5040, %v5088
          %v5090 = vpop.f32.mrf.mxu0
          %v5091 = vadd.f32 %v5042, %v5090
          %5092 = vdwg.mxu0
          %5093 = vmatpush.bf16.msra.mxu0 %v3017
          %5094 = vmatpush.bf16.msra.mxu0 %v3013
          %5095 = vmatpush.bf16.msra.mxu0 %v3009
          %5096 = vmatpush.bf16.msra.mxu0 %v3005
          %5097 = vmatpush.bf16.msra.mxu0 %v3001
          %5098 = vmatpush.bf16.msra.mxu0 %v2997
          %5099 = vmatpush.bf16.msra.mxu0 %v2993
          %5100 = vmatpush.bf16.msra.mxu0 %v2989
          %5101 = vmatmul.bf16.gmra.mxu0 %v1531
          %v5102 = vpop.f32.mrf.mxu0
          %v5103 = vadd.f32 %v1205, %v5102
          %v5104 = vpop.f32.mrf.mxu0
          %v5105 = vadd.f32 %v1205, %v5104
          %5106 = vmatmul.bf16.gmra.mxu0 %v1544
          %v5107 = vpop.f32.mrf.mxu0
          %v5108 = vadd.f32 %v1205, %v5107
          %v5109 = vpop.f32.mrf.mxu0
          %v5110 = vadd.f32 %v1205, %v5109
          %5111 = vmatmul.bf16.gmra.mxu0 %v1557
          %v5112 = vpop.f32.mrf.mxu0
          %v5113 = vadd.f32 %v1205, %v5112
          %v5114 = vpop.f32.mrf.mxu0
          %v5115 = vadd.f32 %v1205, %v5114
          %5116 = vmatmul.bf16.gmra.mxu0 %v1570
          %v5117 = vpop.f32.mrf.mxu0
          %v5118 = vadd.f32 %v1205, %v5117
          %v5119 = vpop.f32.mrf.mxu0
          %v5120 = vadd.f32 %v1205, %v5119
          %5121 = vmatmul.bf16.gmra.mxu0 %v1583
          %v5122 = vpop.f32.mrf.mxu0
          %v5123 = vadd.f32 %v1205, %v5122
          %v5124 = vpop.f32.mrf.mxu0
          %v5125 = vadd.f32 %v1205, %v5124
          %5126 = vmatmul.bf16.gmra.mxu0 %v1596
          %v5127 = vpop.f32.mrf.mxu0
          %v5128 = vadd.f32 %v1205, %v5127
          %v5129 = vpop.f32.mrf.mxu0
          %v5130 = vadd.f32 %v1205, %v5129
          %5131 = vmatmul.bf16.gmra.mxu0 %v1609
          %v5132 = vpop.f32.mrf.mxu0
          %v5133 = vadd.f32 %v1205, %v5132
          %v5134 = vpop.f32.mrf.mxu0
          %v5135 = vadd.f32 %v1205, %v5134
          %5136 = vmatmul.bf16.gmra.mxu0 %v1622
          %v5137 = vpop.f32.mrf.mxu0
          %v5138 = vadd.f32 %v1205, %v5137
          %v5139 = vpop.f32.mrf.mxu0
          %v5140 = vadd.f32 %v1205, %v5139
          %5141 = vdwg.mxu0
          %5142 = vmatpush.bf16.msra.mxu0 %v3049
          %5143 = vmatpush.bf16.msra.mxu0 %v3045
          %5144 = vmatpush.bf16.msra.mxu0 %v3041
          %5145 = vmatpush.bf16.msra.mxu0 %v3037
          %5146 = vmatpush.bf16.msra.mxu0 %v3033
          %5147 = vmatpush.bf16.msra.mxu0 %v3029
          %5148 = vmatpush.bf16.msra.mxu0 %v3025
          %5149 = vmatpush.bf16.msra.mxu0 %v3021
          %5150 = vmatmul.bf16.gmra.mxu0 %v1532
          %v5151 = vpop.f32.mrf.mxu0
          %v5152 = vadd.f32 %v5103, %v5151
          %v5153 = vpop.f32.mrf.mxu0
          %v5154 = vadd.f32 %v5105, %v5153
          %5155 = vmatmul.bf16.gmra.mxu0 %v1545
          %v5156 = vpop.f32.mrf.mxu0
          %v5157 = vadd.f32 %v5108, %v5156
          %v5158 = vpop.f32.mrf.mxu0
          %v5159 = vadd.f32 %v5110, %v5158
          %5160 = vmatmul.bf16.gmra.mxu0 %v1558
          %v5161 = vpop.f32.mrf.mxu0
          %v5162 = vadd.f32 %v5113, %v5161
          %v5163 = vpop.f32.mrf.mxu0
          %v5164 = vadd.f32 %v5115, %v5163
          %5165 = vmatmul.bf16.gmra.mxu0 %v1571
          %v5166 = vpop.f32.mrf.mxu0
          %v5167 = vadd.f32 %v5118, %v5166
          %v5168 = vpop.f32.mrf.mxu0
          %v5169 = vadd.f32 %v5120, %v5168
          %5170 = vmatmul.bf16.gmra.mxu0 %v1584
          %v5171 = vpop.f32.mrf.mxu0
          %v5172 = vadd.f32 %v5123, %v5171
          %v5173 = vpop.f32.mrf.mxu0
          %v5174 = vadd.f32 %v5125, %v5173
          %5175 = vmatmul.bf16.gmra.mxu0 %v1597
          %v5176 = vpop.f32.mrf.mxu0
          %v5177 = vadd.f32 %v5128, %v5176
          %v5178 = vpop.f32.mrf.mxu0
          %v5179 = vadd.f32 %v5130, %v5178
          %5180 = vmatmul.bf16.gmra.mxu0 %v1610
          %v5181 = vpop.f32.mrf.mxu0
          %v5182 = vadd.f32 %v5133, %v5181
          %v5183 = vpop.f32.mrf.mxu0
          %v5184 = vadd.f32 %v5135, %v5183
          %5185 = vmatmul.bf16.gmra.mxu0 %v1623
          %v5186 = vpop.f32.mrf.mxu0
          %v5187 = vadd.f32 %v5138, %v5186
          %v5188 = vpop.f32.mrf.mxu0
          %v5189 = vadd.f32 %v5140, %v5188
          %5190 = vdwg.mxu0
          %5191 = vmatpush.bf16.msra.mxu0 %v3081
          %5192 = vmatpush.bf16.msra.mxu0 %v3077
          %5193 = vmatpush.bf16.msra.mxu0 %v3073
          %5194 = vmatpush.bf16.msra.mxu0 %v3069
          %5195 = vmatpush.bf16.msra.mxu0 %v3065
          %5196 = vmatpush.bf16.msra.mxu0 %v3061
          %5197 = vmatpush.bf16.msra.mxu0 %v3057
          %5198 = vmatpush.bf16.msra.mxu0 %v3053
          %5199 = vmatmul.bf16.gmra.mxu0 %v1533
          %v5200 = vpop.f32.mrf.mxu0
          %v5201 = vadd.f32 %v5152, %v5200
          %v5202 = vpop.f32.mrf.mxu0
          %v5203 = vadd.f32 %v5154, %v5202
          %5204 = vmatmul.bf16.gmra.mxu0 %v1546
          %v5205 = vpop.f32.mrf.mxu0
          %v5206 = vadd.f32 %v5157, %v5205
          %v5207 = vpop.f32.mrf.mxu0
          %v5208 = vadd.f32 %v5159, %v5207
          %5209 = vmatmul.bf16.gmra.mxu0 %v1559
          %v5210 = vpop.f32.mrf.mxu0
          %v5211 = vadd.f32 %v5162, %v5210
          %v5212 = vpop.f32.mrf.mxu0
          %v5213 = vadd.f32 %v5164, %v5212
          %5214 = vmatmul.bf16.gmra.mxu0 %v1572
          %v5215 = vpop.f32.mrf.mxu0
          %v5216 = vadd.f32 %v5167, %v5215
          %v5217 = vpop.f32.mrf.mxu0
          %v5218 = vadd.f32 %v5169, %v5217
          %5219 = vmatmul.bf16.gmra.mxu0 %v1585
          %v5220 = vpop.f32.mrf.mxu0
          %v5221 = vadd.f32 %v5172, %v5220
          %v5222 = vpop.f32.mrf.mxu0
          %v5223 = vadd.f32 %v5174, %v5222
          %5224 = vmatmul.bf16.gmra.mxu0 %v1598
          %v5225 = vpop.f32.mrf.mxu0
          %v5226 = vadd.f32 %v5177, %v5225
          %v5227 = vpop.f32.mrf.mxu0
          %v5228 = vadd.f32 %v5179, %v5227
          %5229 = vmatmul.bf16.gmra.mxu0 %v1611
          %v5230 = vpop.f32.mrf.mxu0
          %v5231 = vadd.f32 %v5182, %v5230
          %v5232 = vpop.f32.mrf.mxu0
          %v5233 = vadd.f32 %v5184, %v5232
          %5234 = vmatmul.bf16.gmra.mxu0 %v1624
          %v5235 = vpop.f32.mrf.mxu0
          %v5236 = vadd.f32 %v5187, %v5235
          %v5237 = vpop.f32.mrf.mxu0
          %v5238 = vadd.f32 %v5189, %v5237
          %5239 = vdwg.mxu0
          %5240 = vmatpush.bf16.msra.mxu0 %v3113
          %5241 = vmatpush.bf16.msra.mxu0 %v3109
          %5242 = vmatpush.bf16.msra.mxu0 %v3105
          %5243 = vmatpush.bf16.msra.mxu0 %v3101
          %5244 = vmatpush.bf16.msra.mxu0 %v3097
          %5245 = vmatpush.bf16.msra.mxu0 %v3093
          %5246 = vmatpush.bf16.msra.mxu0 %v3089
          %5247 = vmatpush.bf16.msra.mxu0 %v3085
          %5248 = vmatmul.bf16.gmra.mxu0 %v1534
          %v5249 = vpop.f32.mrf.mxu0
          %v5250 = vadd.f32 %v5201, %v5249
          %v5251 = vpop.f32.mrf.mxu0
          %v5252 = vadd.f32 %v5203, %v5251
          %5253 = vmatmul.bf16.gmra.mxu0 %v1547
          %v5254 = vpop.f32.mrf.mxu0
          %v5255 = vadd.f32 %v5206, %v5254
          %v5256 = vpop.f32.mrf.mxu0
          %v5257 = vadd.f32 %v5208, %v5256
          %5258 = vmatmul.bf16.gmra.mxu0 %v1560
          %v5259 = vpop.f32.mrf.mxu0
          %v5260 = vadd.f32 %v5211, %v5259
          %v5261 = vpop.f32.mrf.mxu0
          %v5262 = vadd.f32 %v5213, %v5261
          %5263 = vmatmul.bf16.gmra.mxu0 %v1573
          %v5264 = vpop.f32.mrf.mxu0
          %v5265 = vadd.f32 %v5216, %v5264
          %v5266 = vpop.f32.mrf.mxu0
          %v5267 = vadd.f32 %v5218, %v5266
          %5268 = vmatmul.bf16.gmra.mxu0 %v1586
          %v5269 = vpop.f32.mrf.mxu0
          %v5270 = vadd.f32 %v5221, %v5269
          %v5271 = vpop.f32.mrf.mxu0
          %v5272 = vadd.f32 %v5223, %v5271
          %5273 = vmatmul.bf16.gmra.mxu0 %v1599
          %v5274 = vpop.f32.mrf.mxu0
          %v5275 = vadd.f32 %v5226, %v5274
          %v5276 = vpop.f32.mrf.mxu0
          %v5277 = vadd.f32 %v5228, %v5276
          %5278 = vmatmul.bf16.gmra.mxu0 %v1612
          %v5279 = vpop.f32.mrf.mxu0
          %v5280 = vadd.f32 %v5231, %v5279
          %v5281 = vpop.f32.mrf.mxu0
          %v5282 = vadd.f32 %v5233, %v5281
          %5283 = vmatmul.bf16.gmra.mxu0 %v1625
          %v5284 = vpop.f32.mrf.mxu0
          %v5285 = vadd.f32 %v5236, %v5284
          %v5286 = vpop.f32.mrf.mxu0
          %v5287 = vadd.f32 %v5238, %v5286
          %5288 = vdwg.mxu0
          %5289 = vmatpush.bf16.msra.mxu0 %v3145
          %5290 = vmatpush.bf16.msra.mxu0 %v3141
          %5291 = vmatpush.bf16.msra.mxu0 %v3137
          %5292 = vmatpush.bf16.msra.mxu0 %v3133
          %5293 = vmatpush.bf16.msra.mxu0 %v3129
          %5294 = vmatpush.bf16.msra.mxu0 %v3125
          %5295 = vmatpush.bf16.msra.mxu0 %v3121
          %5296 = vmatpush.bf16.msra.mxu0 %v3117
          %5297 = vmatmul.bf16.gmra.mxu0 %v1535
          %v5298 = vpop.f32.mrf.mxu0
          %v5299 = vadd.f32 %v5250, %v5298
          %v5300 = vpop.f32.mrf.mxu0
          %v5301 = vadd.f32 %v5252, %v5300
          %5302 = vmatmul.bf16.gmra.mxu0 %v1548
          %v5303 = vpop.f32.mrf.mxu0
          %v5304 = vadd.f32 %v5255, %v5303
          %v5305 = vpop.f32.mrf.mxu0
          %v5306 = vadd.f32 %v5257, %v5305
          %5307 = vmatmul.bf16.gmra.mxu0 %v1561
          %v5308 = vpop.f32.mrf.mxu0
          %v5309 = vadd.f32 %v5260, %v5308
          %v5310 = vpop.f32.mrf.mxu0
          %v5311 = vadd.f32 %v5262, %v5310
          %5312 = vmatmul.bf16.gmra.mxu0 %v1574
          %v5313 = vpop.f32.mrf.mxu0
          %v5314 = vadd.f32 %v5265, %v5313
          %v5315 = vpop.f32.mrf.mxu0
          %v5316 = vadd.f32 %v5267, %v5315
          %5317 = vmatmul.bf16.gmra.mxu0 %v1587
          %v5318 = vpop.f32.mrf.mxu0
          %v5319 = vadd.f32 %v5270, %v5318
          %v5320 = vpop.f32.mrf.mxu0
          %v5321 = vadd.f32 %v5272, %v5320
          %5322 = vmatmul.bf16.gmra.mxu0 %v1600
          %v5323 = vpop.f32.mrf.mxu0
          %v5324 = vadd.f32 %v5275, %v5323
          %v5325 = vpop.f32.mrf.mxu0
          %v5326 = vadd.f32 %v5277, %v5325
          %5327 = vmatmul.bf16.gmra.mxu0 %v1613
          %v5328 = vpop.f32.mrf.mxu0
          %v5329 = vadd.f32 %v5280, %v5328
          %v5330 = vpop.f32.mrf.mxu0
          %v5331 = vadd.f32 %v5282, %v5330
          %5332 = vmatmul.bf16.gmra.mxu0 %v1626
          %v5333 = vpop.f32.mrf.mxu0
          %v5334 = vadd.f32 %v5285, %v5333
          %v5335 = vpop.f32.mrf.mxu0
          %v5336 = vadd.f32 %v5287, %v5335
          %5337 = vdwg.mxu0
          %5338 = vmatpush.bf16.msra.mxu0 %v3177
          %5339 = vmatpush.bf16.msra.mxu0 %v3173
          %5340 = vmatpush.bf16.msra.mxu0 %v3169
          %5341 = vmatpush.bf16.msra.mxu0 %v3165
          %5342 = vmatpush.bf16.msra.mxu0 %v3161
          %5343 = vmatpush.bf16.msra.mxu0 %v3157
          %5344 = vmatpush.bf16.msra.mxu0 %v3153
          %5345 = vmatpush.bf16.msra.mxu0 %v3149
          %5346 = vmatmul.bf16.gmra.mxu0 %v1536
          %v5347 = vpop.f32.mrf.mxu0
          %v5348 = vadd.f32 %v5299, %v5347
          %v5349 = vpop.f32.mrf.mxu0
          %v5350 = vadd.f32 %v5301, %v5349
          %5351 = vmatmul.bf16.gmra.mxu0 %v1549
          %v5352 = vpop.f32.mrf.mxu0
          %v5353 = vadd.f32 %v5304, %v5352
          %v5354 = vpop.f32.mrf.mxu0
          %v5355 = vadd.f32 %v5306, %v5354
          %5356 = vmatmul.bf16.gmra.mxu0 %v1562
          %v5357 = vpop.f32.mrf.mxu0
          %v5358 = vadd.f32 %v5309, %v5357
          %v5359 = vpop.f32.mrf.mxu0
          %v5360 = vadd.f32 %v5311, %v5359
          %5361 = vmatmul.bf16.gmra.mxu0 %v1575
          %v5362 = vpop.f32.mrf.mxu0
          %v5363 = vadd.f32 %v5314, %v5362
          %v5364 = vpop.f32.mrf.mxu0
          %v5365 = vadd.f32 %v5316, %v5364
          %5366 = vmatmul.bf16.gmra.mxu0 %v1588
          %v5367 = vpop.f32.mrf.mxu0
          %v5368 = vadd.f32 %v5319, %v5367
          %v5369 = vpop.f32.mrf.mxu0
          %v5370 = vadd.f32 %v5321, %v5369
          %5371 = vmatmul.bf16.gmra.mxu0 %v1601
          %v5372 = vpop.f32.mrf.mxu0
          %v5373 = vadd.f32 %v5324, %v5372
          %v5374 = vpop.f32.mrf.mxu0
          %v5375 = vadd.f32 %v5326, %v5374
          %5376 = vmatmul.bf16.gmra.mxu0 %v1614
          %v5377 = vpop.f32.mrf.mxu0
          %v5378 = vadd.f32 %v5329, %v5377
          %v5379 = vpop.f32.mrf.mxu0
          %v5380 = vadd.f32 %v5331, %v5379
          %5381 = vmatmul.bf16.gmra.mxu0 %v1627
          %v5382 = vpop.f32.mrf.mxu0
          %v5383 = vadd.f32 %v5334, %v5382
          %v5384 = vpop.f32.mrf.mxu0
          %v5385 = vadd.f32 %v5336, %v5384
          %5386 = vdwg.mxu0
          %5387 = vmatpush.bf16.msra.mxu0 %v3209
          %5388 = vmatpush.bf16.msra.mxu0 %v3205
          %5389 = vmatpush.bf16.msra.mxu0 %v3201
          %5390 = vmatpush.bf16.msra.mxu0 %v3197
          %5391 = vmatpush.bf16.msra.mxu0 %v3193
          %5392 = vmatpush.bf16.msra.mxu0 %v3189
          %5393 = vmatpush.bf16.msra.mxu0 %v3185
          %5394 = vmatpush.bf16.msra.mxu0 %v3181
          %5395 = vmatmul.bf16.gmra.mxu0 %v1537
          %v5396 = vpop.f32.mrf.mxu0
          %v5397 = vadd.f32 %v5348, %v5396
          %v5398 = vpop.f32.mrf.mxu0
          %v5399 = vadd.f32 %v5350, %v5398
          %5400 = vmatmul.bf16.gmra.mxu0 %v1550
          %v5401 = vpop.f32.mrf.mxu0
          %v5402 = vadd.f32 %v5353, %v5401
          %v5403 = vpop.f32.mrf.mxu0
          %v5404 = vadd.f32 %v5355, %v5403
          %5405 = vmatmul.bf16.gmra.mxu0 %v1563
          %v5406 = vpop.f32.mrf.mxu0
          %v5407 = vadd.f32 %v5358, %v5406
          %v5408 = vpop.f32.mrf.mxu0
          %v5409 = vadd.f32 %v5360, %v5408
          %5410 = vmatmul.bf16.gmra.mxu0 %v1576
          %v5411 = vpop.f32.mrf.mxu0
          %v5412 = vadd.f32 %v5363, %v5411
          %v5413 = vpop.f32.mrf.mxu0
          %v5414 = vadd.f32 %v5365, %v5413
          %5415 = vmatmul.bf16.gmra.mxu0 %v1589
          %v5416 = vpop.f32.mrf.mxu0
          %v5417 = vadd.f32 %v5368, %v5416
          %v5418 = vpop.f32.mrf.mxu0
          %v5419 = vadd.f32 %v5370, %v5418
          %5420 = vmatmul.bf16.gmra.mxu0 %v1602
          %v5421 = vpop.f32.mrf.mxu0
          %v5422 = vadd.f32 %v5373, %v5421
          %v5423 = vpop.f32.mrf.mxu0
          %v5424 = vadd.f32 %v5375, %v5423
          %5425 = vmatmul.bf16.gmra.mxu0 %v1615
          %v5426 = vpop.f32.mrf.mxu0
          %v5427 = vadd.f32 %v5378, %v5426
          %v5428 = vpop.f32.mrf.mxu0
          %v5429 = vadd.f32 %v5380, %v5428
          %5430 = vmatmul.bf16.gmra.mxu0 %v1628
          %v5431 = vpop.f32.mrf.mxu0
          %v5432 = vadd.f32 %v5383, %v5431
          %v5433 = vpop.f32.mrf.mxu0
          %v5434 = vadd.f32 %v5385, %v5433
          %5435 = vdwg.mxu0
          %5436 = vmatpush.bf16.msra.mxu0 %v3241
          %5437 = vmatpush.bf16.msra.mxu0 %v3237
          %5438 = vmatpush.bf16.msra.mxu0 %v3233
          %5439 = vmatpush.bf16.msra.mxu0 %v3229
          %5440 = vmatpush.bf16.msra.mxu0 %v3225
          %5441 = vmatpush.bf16.msra.mxu0 %v3221
          %5442 = vmatpush.bf16.msra.mxu0 %v3217
          %5443 = vmatpush.bf16.msra.mxu0 %v3213
          %5444 = vmatmul.bf16.gmra.mxu0 %v1538
          %v5445 = vpop.f32.mrf.mxu0
          %v5446 = vadd.f32 %v5397, %v5445
          %v5447 = vpop.f32.mrf.mxu0
          %v5448 = vadd.f32 %v5399, %v5447
          %5449 = vmatmul.bf16.gmra.mxu0 %v1551
          %v5450 = vpop.f32.mrf.mxu0
          %v5451 = vadd.f32 %v5402, %v5450
          %v5452 = vpop.f32.mrf.mxu0
          %v5453 = vadd.f32 %v5404, %v5452
          %5454 = vmatmul.bf16.gmra.mxu0 %v1564
          %v5455 = vpop.f32.mrf.mxu0
          %v5456 = vadd.f32 %v5407, %v5455
          %v5457 = vpop.f32.mrf.mxu0
          %v5458 = vadd.f32 %v5409, %v5457
          %5459 = vmatmul.bf16.gmra.mxu0 %v1577
          %v5460 = vpop.f32.mrf.mxu0
          %v5461 = vadd.f32 %v5412, %v5460
          %v5462 = vpop.f32.mrf.mxu0
          %v5463 = vadd.f32 %v5414, %v5462
          %5464 = vmatmul.bf16.gmra.mxu0 %v1590
          %v5465 = vpop.f32.mrf.mxu0
          %v5466 = vadd.f32 %v5417, %v5465
          %v5467 = vpop.f32.mrf.mxu0
          %v5468 = vadd.f32 %v5419, %v5467
          %5469 = vmatmul.bf16.gmra.mxu0 %v1603
          %v5470 = vpop.f32.mrf.mxu0
          %v5471 = vadd.f32 %v5422, %v5470
          %v5472 = vpop.f32.mrf.mxu0
          %v5473 = vadd.f32 %v5424, %v5472
          %5474 = vmatmul.bf16.gmra.mxu0 %v1616
          %v5475 = vpop.f32.mrf.mxu0
          %v5476 = vadd.f32 %v5427, %v5475
          %v5477 = vpop.f32.mrf.mxu0
          %v5478 = vadd.f32 %v5429, %v5477
          %5479 = vmatmul.bf16.gmra.mxu0 %v1629
          %v5480 = vpop.f32.mrf.mxu0
          %v5481 = vadd.f32 %v5432, %v5480
          %v5482 = vpop.f32.mrf.mxu0
          %v5483 = vadd.f32 %v5434, %v5482
          %5484 = vdwg.mxu0
          %5485 = vmatpush.bf16.msra.mxu0 %v3273
          %5486 = vmatpush.bf16.msra.mxu0 %v3269
          %5487 = vmatpush.bf16.msra.mxu0 %v3265
          %5488 = vmatpush.bf16.msra.mxu0 %v3261
          %5489 = vmatpush.bf16.msra.mxu0 %v3257
          %5490 = vmatpush.bf16.msra.mxu0 %v3253
          %5491 = vmatpush.bf16.msra.mxu0 %v3249
          %5492 = vmatpush.bf16.msra.mxu0 %v3245
          %5493 = vmatmul.bf16.gmra.mxu0 %v1539
          %v5494 = vpop.f32.mrf.mxu0
          %v5495 = vadd.f32 %v5446, %v5494
          %v5496 = vpop.f32.mrf.mxu0
          %v5497 = vadd.f32 %v5448, %v5496
          %5498 = vmatmul.bf16.gmra.mxu0 %v1552
          %v5499 = vpop.f32.mrf.mxu0
          %v5500 = vadd.f32 %v5451, %v5499
          %v5501 = vpop.f32.mrf.mxu0
          %v5502 = vadd.f32 %v5453, %v5501
          %5503 = vmatmul.bf16.gmra.mxu0 %v1565
          %v5504 = vpop.f32.mrf.mxu0
          %v5505 = vadd.f32 %v5456, %v5504
          %v5506 = vpop.f32.mrf.mxu0
          %v5507 = vadd.f32 %v5458, %v5506
          %5508 = vmatmul.bf16.gmra.mxu0 %v1578
          %v5509 = vpop.f32.mrf.mxu0
          %v5510 = vadd.f32 %v5461, %v5509
          %v5511 = vpop.f32.mrf.mxu0
          %v5512 = vadd.f32 %v5463, %v5511
          %5513 = vmatmul.bf16.gmra.mxu0 %v1591
          %v5514 = vpop.f32.mrf.mxu0
          %v5515 = vadd.f32 %v5466, %v5514
          %v5516 = vpop.f32.mrf.mxu0
          %v5517 = vadd.f32 %v5468, %v5516
          %5518 = vmatmul.bf16.gmra.mxu0 %v1604
          %v5519 = vpop.f32.mrf.mxu0
          %v5520 = vadd.f32 %v5471, %v5519
          %v5521 = vpop.f32.mrf.mxu0
          %v5522 = vadd.f32 %v5473, %v5521
          %5523 = vmatmul.bf16.gmra.mxu0 %v1617
          %v5524 = vpop.f32.mrf.mxu0
          %v5525 = vadd.f32 %v5476, %v5524
          %v5526 = vpop.f32.mrf.mxu0
          %v5527 = vadd.f32 %v5478, %v5526
          %5528 = vmatmul.bf16.gmra.mxu0 %v1630
          %v5529 = vpop.f32.mrf.mxu0
          %v5530 = vadd.f32 %v5481, %v5529
          %v5531 = vpop.f32.mrf.mxu0
          %v5532 = vadd.f32 %v5483, %v5531
          %5533 = vdwg.mxu0
          %5534 = vmatpush.bf16.msra.mxu0 %v3305
          %5535 = vmatpush.bf16.msra.mxu0 %v3301
          %5536 = vmatpush.bf16.msra.mxu0 %v3297
          %5537 = vmatpush.bf16.msra.mxu0 %v3293
          %5538 = vmatpush.bf16.msra.mxu0 %v3289
          %5539 = vmatpush.bf16.msra.mxu0 %v3285
          %5540 = vmatpush.bf16.msra.mxu0 %v3281
          %5541 = vmatpush.bf16.msra.mxu0 %v3277
          %5542 = vmatmul.bf16.gmra.mxu0 %v1540
          %v5543 = vpop.f32.mrf.mxu0
          %v5544 = vadd.f32 %v5495, %v5543
          %v5545 = vpop.f32.mrf.mxu0
          %v5546 = vadd.f32 %v5497, %v5545
          %5547 = vmatmul.bf16.gmra.mxu0 %v1553
          %v5548 = vpop.f32.mrf.mxu0
          %v5549 = vadd.f32 %v5500, %v5548
          %v5550 = vpop.f32.mrf.mxu0
          %v5551 = vadd.f32 %v5502, %v5550
          %5552 = vmatmul.bf16.gmra.mxu0 %v1566
          %v5553 = vpop.f32.mrf.mxu0
          %v5554 = vadd.f32 %v5505, %v5553
          %v5555 = vpop.f32.mrf.mxu0
          %v5556 = vadd.f32 %v5507, %v5555
          %5557 = vmatmul.bf16.gmra.mxu0 %v1579
          %v5558 = vpop.f32.mrf.mxu0
          %v5559 = vadd.f32 %v5510, %v5558
          %v5560 = vpop.f32.mrf.mxu0
          %v5561 = vadd.f32 %v5512, %v5560
          %5562 = vmatmul.bf16.gmra.mxu0 %v1592
          %v5563 = vpop.f32.mrf.mxu0
          %v5564 = vadd.f32 %v5515, %v5563
          %v5565 = vpop.f32.mrf.mxu0
          %v5566 = vadd.f32 %v5517, %v5565
          %5567 = vmatmul.bf16.gmra.mxu0 %v1605
          %v5568 = vpop.f32.mrf.mxu0
          %v5569 = vadd.f32 %v5520, %v5568
          %v5570 = vpop.f32.mrf.mxu0
          %v5571 = vadd.f32 %v5522, %v5570
          %5572 = vmatmul.bf16.gmra.mxu0 %v1618
          %v5573 = vpop.f32.mrf.mxu0
          %v5574 = vadd.f32 %v5525, %v5573
          %v5575 = vpop.f32.mrf.mxu0
          %v5576 = vadd.f32 %v5527, %v5575
          %5577 = vmatmul.bf16.gmra.mxu0 %v1631
          %v5578 = vpop.f32.mrf.mxu0
          %v5579 = vadd.f32 %v5530, %v5578
          %v5580 = vpop.f32.mrf.mxu0
          %v5581 = vadd.f32 %v5532, %v5580
          %5582 = vdwg.mxu0
          %5583 = vmatpush.bf16.msra.mxu0 %v3337
          %5584 = vmatpush.bf16.msra.mxu0 %v3333
          %5585 = vmatpush.bf16.msra.mxu0 %v3329
          %5586 = vmatpush.bf16.msra.mxu0 %v3325
          %5587 = vmatpush.bf16.msra.mxu0 %v3321
          %5588 = vmatpush.bf16.msra.mxu0 %v3317
          %5589 = vmatpush.bf16.msra.mxu0 %v3313
          %5590 = vmatpush.bf16.msra.mxu0 %v3309
          %5591 = vmatmul.bf16.gmra.mxu0 %v1541
          %v5592 = vpop.f32.mrf.mxu0
          %v5593 = vadd.f32 %v5544, %v5592
          %v5594 = vpop.f32.mrf.mxu0
          %v5595 = vadd.f32 %v5546, %v5594
          %5596 = vmatmul.bf16.gmra.mxu0 %v1554
          %v5597 = vpop.f32.mrf.mxu0
          %v5598 = vadd.f32 %v5549, %v5597
          %v5599 = vpop.f32.mrf.mxu0
          %v5600 = vadd.f32 %v5551, %v5599
          %5601 = vmatmul.bf16.gmra.mxu0 %v1567
          %v5602 = vpop.f32.mrf.mxu0
          %v5603 = vadd.f32 %v5554, %v5602
          %v5604 = vpop.f32.mrf.mxu0
          %v5605 = vadd.f32 %v5556, %v5604
          %5606 = vmatmul.bf16.gmra.mxu0 %v1580
          %v5607 = vpop.f32.mrf.mxu0
          %v5608 = vadd.f32 %v5559, %v5607
          %v5609 = vpop.f32.mrf.mxu0
          %v5610 = vadd.f32 %v5561, %v5609
          %5611 = vmatmul.bf16.gmra.mxu0 %v1593
          %v5612 = vpop.f32.mrf.mxu0
          %v5613 = vadd.f32 %v5564, %v5612
          %v5614 = vpop.f32.mrf.mxu0
          %v5615 = vadd.f32 %v5566, %v5614
          %5616 = vmatmul.bf16.gmra.mxu0 %v1606
          %v5617 = vpop.f32.mrf.mxu0
          %v5618 = vadd.f32 %v5569, %v5617
          %v5619 = vpop.f32.mrf.mxu0
          %v5620 = vadd.f32 %v5571, %v5619
          %5621 = vmatmul.bf16.gmra.mxu0 %v1619
          %v5622 = vpop.f32.mrf.mxu0
          %v5623 = vadd.f32 %v5574, %v5622
          %v5624 = vpop.f32.mrf.mxu0
          %v5625 = vadd.f32 %v5576, %v5624
          %5626 = vmatmul.bf16.gmra.mxu0 %v1632
          %v5627 = vpop.f32.mrf.mxu0
          %v5628 = vadd.f32 %v5579, %v5627
          %v5629 = vpop.f32.mrf.mxu0
          %v5630 = vadd.f32 %v5581, %v5629
          %5631 = vdwg.mxu0
          %5632 = vmatpush.bf16.msra.mxu0 %v3369
          %5633 = vmatpush.bf16.msra.mxu0 %v3365
          %5634 = vmatpush.bf16.msra.mxu0 %v3361
          %5635 = vmatpush.bf16.msra.mxu0 %v3357
          %5636 = vmatpush.bf16.msra.mxu0 %v3353
          %5637 = vmatpush.bf16.msra.mxu0 %v3349
          %5638 = vmatpush.bf16.msra.mxu0 %v3345
          %5639 = vmatpush.bf16.msra.mxu0 %v3341
          %5640 = vmatmul.bf16.gmra.mxu0 %v1542
          %v5641 = vpop.f32.mrf.mxu0
          %v5642 = vadd.f32 %v5593, %v5641
          %v5643 = vpop.f32.mrf.mxu0
          %v5644 = vadd.f32 %v5595, %v5643
          %5645 = vmatmul.bf16.gmra.mxu0 %v1555
          %v5646 = vpop.f32.mrf.mxu0
          %v5647 = vadd.f32 %v5598, %v5646
          %v5648 = vpop.f32.mrf.mxu0
          %v5649 = vadd.f32 %v5600, %v5648
          %5650 = vmatmul.bf16.gmra.mxu0 %v1568
          %v5651 = vpop.f32.mrf.mxu0
          %v5652 = vadd.f32 %v5603, %v5651
          %v5653 = vpop.f32.mrf.mxu0
          %v5654 = vadd.f32 %v5605, %v5653
          %5655 = vmatmul.bf16.gmra.mxu0 %v1581
          %v5656 = vpop.f32.mrf.mxu0
          %v5657 = vadd.f32 %v5608, %v5656
          %v5658 = vpop.f32.mrf.mxu0
          %v5659 = vadd.f32 %v5610, %v5658
          %5660 = vmatmul.bf16.gmra.mxu0 %v1594
          %v5661 = vpop.f32.mrf.mxu0
          %v5662 = vadd.f32 %v5613, %v5661
          %v5663 = vpop.f32.mrf.mxu0
          %v5664 = vadd.f32 %v5615, %v5663
          %5665 = vmatmul.bf16.gmra.mxu0 %v1607
          %v5666 = vpop.f32.mrf.mxu0
          %v5667 = vadd.f32 %v5618, %v5666
          %v5668 = vpop.f32.mrf.mxu0
          %v5669 = vadd.f32 %v5620, %v5668
          %5670 = vmatmul.bf16.gmra.mxu0 %v1620
          %v5671 = vpop.f32.mrf.mxu0
          %v5672 = vadd.f32 %v5623, %v5671
          %v5673 = vpop.f32.mrf.mxu0
          %v5674 = vadd.f32 %v5625, %v5673
          %5675 = vmatmul.bf16.gmra.mxu0 %v1633
          %v5676 = vpop.f32.mrf.mxu0
          %v5677 = vadd.f32 %v5628, %v5676
          %v5678 = vpop.f32.mrf.mxu0
          %v5679 = vadd.f32 %v5630, %v5678
          %5680 = vdwg.mxu0
          %5681 = vmatpush.bf16.msra.mxu0 %v3401
          %5682 = vmatpush.bf16.msra.mxu0 %v3397
          %5683 = vmatpush.bf16.msra.mxu0 %v3393
          %5684 = vmatpush.bf16.msra.mxu0 %v3389
          %5685 = vmatpush.bf16.msra.mxu0 %v3385
          %5686 = vmatpush.bf16.msra.mxu0 %v3381
          %5687 = vmatpush.bf16.msra.mxu0 %v3377
          %5688 = vmatpush.bf16.msra.mxu0 %v3373
          %5689 = vmatmul.bf16.gmra.mxu0 %v1543
          %v5690 = vpop.f32.mrf.mxu0
          %v5691 = vadd.f32 %v5642, %v5690
          %v5692 = vpop.f32.mrf.mxu0
          %v5693 = vadd.f32 %v5644, %v5692
          %5694 = vmatmul.bf16.gmra.mxu0 %v1556
          %v5695 = vpop.f32.mrf.mxu0
          %v5696 = vadd.f32 %v5647, %v5695
          %v5697 = vpop.f32.mrf.mxu0
          %v5698 = vadd.f32 %v5649, %v5697
          %5699 = vmatmul.bf16.gmra.mxu0 %v1569
          %v5700 = vpop.f32.mrf.mxu0
          %v5701 = vadd.f32 %v5652, %v5700
          %v5702 = vpop.f32.mrf.mxu0
          %v5703 = vadd.f32 %v5654, %v5702
          %5704 = vmatmul.bf16.gmra.mxu0 %v1582
          %v5705 = vpop.f32.mrf.mxu0
          %v5706 = vadd.f32 %v5657, %v5705
          %v5707 = vpop.f32.mrf.mxu0
          %v5708 = vadd.f32 %v5659, %v5707
          %5709 = vmatmul.bf16.gmra.mxu0 %v1595
          %v5710 = vpop.f32.mrf.mxu0
          %v5711 = vadd.f32 %v5662, %v5710
          %v5712 = vpop.f32.mrf.mxu0
          %v5713 = vadd.f32 %v5664, %v5712
          %5714 = vmatmul.bf16.gmra.mxu0 %v1608
          %v5715 = vpop.f32.mrf.mxu0
          %v5716 = vadd.f32 %v5667, %v5715
          %v5717 = vpop.f32.mrf.mxu0
          %v5718 = vadd.f32 %v5669, %v5717
          %5719 = vmatmul.bf16.gmra.mxu0 %v1621
          %v5720 = vpop.f32.mrf.mxu0
          %v5721 = vadd.f32 %v5672, %v5720
          %v5722 = vpop.f32.mrf.mxu0
          %v5723 = vadd.f32 %v5674, %v5722
          %5724 = vmatmul.bf16.gmra.mxu0 %v1634
          %v5725 = vpop.f32.mrf.mxu0
          %v5726 = vadd.f32 %v5677, %v5725
          %v5727 = vpop.f32.mrf.mxu0
          %v5728 = vadd.f32 %v5679, %v5727
          %5729 = vdwg.mxu0
          %5730 = vmatpush.bf16.msra.mxu0 %v3018
          %5731 = vmatpush.bf16.msra.mxu0 %v3014
          %5732 = vmatpush.bf16.msra.mxu0 %v3010
          %5733 = vmatpush.bf16.msra.mxu0 %v3006
          %5734 = vmatpush.bf16.msra.mxu0 %v3002
          %5735 = vmatpush.bf16.msra.mxu0 %v2998
          %5736 = vmatpush.bf16.msra.mxu0 %v2994
          %5737 = vmatpush.bf16.msra.mxu0 %v2990
          %5738 = vmatmul.bf16.gmra.mxu0 %v1531
          %v5739 = vpop.f32.mrf.mxu0
          %v5740 = vadd.f32 %v1206, %v5739
          %v5741 = vpop.f32.mrf.mxu0
          %v5742 = vadd.f32 %v1206, %v5741
          %5743 = vmatmul.bf16.gmra.mxu0 %v1544
          %v5744 = vpop.f32.mrf.mxu0
          %v5745 = vadd.f32 %v1206, %v5744
          %v5746 = vpop.f32.mrf.mxu0
          %v5747 = vadd.f32 %v1206, %v5746
          %5748 = vmatmul.bf16.gmra.mxu0 %v1557
          %v5749 = vpop.f32.mrf.mxu0
          %v5750 = vadd.f32 %v1206, %v5749
          %v5751 = vpop.f32.mrf.mxu0
          %v5752 = vadd.f32 %v1206, %v5751
          %5753 = vmatmul.bf16.gmra.mxu0 %v1570
          %v5754 = vpop.f32.mrf.mxu0
          %v5755 = vadd.f32 %v1206, %v5754
          %v5756 = vpop.f32.mrf.mxu0
          %v5757 = vadd.f32 %v1206, %v5756
          %5758 = vmatmul.bf16.gmra.mxu0 %v1583
          %v5759 = vpop.f32.mrf.mxu0
          %v5760 = vadd.f32 %v1206, %v5759
          %v5761 = vpop.f32.mrf.mxu0
          %v5762 = vadd.f32 %v1206, %v5761
          %5763 = vmatmul.bf16.gmra.mxu0 %v1596
          %v5764 = vpop.f32.mrf.mxu0
          %v5765 = vadd.f32 %v1206, %v5764
          %v5766 = vpop.f32.mrf.mxu0
          %v5767 = vadd.f32 %v1206, %v5766
          %5768 = vmatmul.bf16.gmra.mxu0 %v1609
          %v5769 = vpop.f32.mrf.mxu0
          %v5770 = vadd.f32 %v1206, %v5769
          %v5771 = vpop.f32.mrf.mxu0
          %v5772 = vadd.f32 %v1206, %v5771
          %5773 = vmatmul.bf16.gmra.mxu0 %v1622
          %v5774 = vpop.f32.mrf.mxu0
          %v5775 = vadd.f32 %v1206, %v5774
          %v5776 = vpop.f32.mrf.mxu0
          %v5777 = vadd.f32 %v1206, %v5776
          %5778 = vdwg.mxu0
          %5779 = vmatpush.bf16.msra.mxu0 %v3050
          %5780 = vmatpush.bf16.msra.mxu0 %v3046
          %5781 = vmatpush.bf16.msra.mxu0 %v3042
          %5782 = vmatpush.bf16.msra.mxu0 %v3038
          %5783 = vmatpush.bf16.msra.mxu0 %v3034
          %5784 = vmatpush.bf16.msra.mxu0 %v3030
          %5785 = vmatpush.bf16.msra.mxu0 %v3026
          %5786 = vmatpush.bf16.msra.mxu0 %v3022
          %5787 = vmatmul.bf16.gmra.mxu0 %v1532
          %v5788 = vpop.f32.mrf.mxu0
          %v5789 = vadd.f32 %v5740, %v5788
          %v5790 = vpop.f32.mrf.mxu0
          %v5791 = vadd.f32 %v5742, %v5790
          %5792 = vmatmul.bf16.gmra.mxu0 %v1545
          %v5793 = vpop.f32.mrf.mxu0
          %v5794 = vadd.f32 %v5745, %v5793
          %v5795 = vpop.f32.mrf.mxu0
          %v5796 = vadd.f32 %v5747, %v5795
          %5797 = vmatmul.bf16.gmra.mxu0 %v1558
          %v5798 = vpop.f32.mrf.mxu0
          %v5799 = vadd.f32 %v5750, %v5798
          %v5800 = vpop.f32.mrf.mxu0
          %v5801 = vadd.f32 %v5752, %v5800
          %5802 = vmatmul.bf16.gmra.mxu0 %v1571
          %v5803 = vpop.f32.mrf.mxu0
          %v5804 = vadd.f32 %v5755, %v5803
          %v5805 = vpop.f32.mrf.mxu0
          %v5806 = vadd.f32 %v5757, %v5805
          %5807 = vmatmul.bf16.gmra.mxu0 %v1584
          %v5808 = vpop.f32.mrf.mxu0
          %v5809 = vadd.f32 %v5760, %v5808
          %v5810 = vpop.f32.mrf.mxu0
          %v5811 = vadd.f32 %v5762, %v5810
          %5812 = vmatmul.bf16.gmra.mxu0 %v1597
          %v5813 = vpop.f32.mrf.mxu0
          %v5814 = vadd.f32 %v5765, %v5813
          %v5815 = vpop.f32.mrf.mxu0
          %v5816 = vadd.f32 %v5767, %v5815
          %5817 = vmatmul.bf16.gmra.mxu0 %v1610
          %v5818 = vpop.f32.mrf.mxu0
          %v5819 = vadd.f32 %v5770, %v5818
          %v5820 = vpop.f32.mrf.mxu0
          %v5821 = vadd.f32 %v5772, %v5820
          %5822 = vmatmul.bf16.gmra.mxu0 %v1623
          %v5823 = vpop.f32.mrf.mxu0
          %v5824 = vadd.f32 %v5775, %v5823
          %v5825 = vpop.f32.mrf.mxu0
          %v5826 = vadd.f32 %v5777, %v5825
          %5827 = vdwg.mxu0
          %5828 = vmatpush.bf16.msra.mxu0 %v3082
          %5829 = vmatpush.bf16.msra.mxu0 %v3078
          %5830 = vmatpush.bf16.msra.mxu0 %v3074
          %5831 = vmatpush.bf16.msra.mxu0 %v3070
          %5832 = vmatpush.bf16.msra.mxu0 %v3066
          %5833 = vmatpush.bf16.msra.mxu0 %v3062
          %5834 = vmatpush.bf16.msra.mxu0 %v3058
          %5835 = vmatpush.bf16.msra.mxu0 %v3054
          %5836 = vmatmul.bf16.gmra.mxu0 %v1533
          %v5837 = vpop.f32.mrf.mxu0
          %v5838 = vadd.f32 %v5789, %v5837
          %v5839 = vpop.f32.mrf.mxu0
          %v5840 = vadd.f32 %v5791, %v5839
          %5841 = vmatmul.bf16.gmra.mxu0 %v1546
          %v5842 = vpop.f32.mrf.mxu0
          %v5843 = vadd.f32 %v5794, %v5842
          %v5844 = vpop.f32.mrf.mxu0
          %v5845 = vadd.f32 %v5796, %v5844
          %5846 = vmatmul.bf16.gmra.mxu0 %v1559
          %v5847 = vpop.f32.mrf.mxu0
          %v5848 = vadd.f32 %v5799, %v5847
          %v5849 = vpop.f32.mrf.mxu0
          %v5850 = vadd.f32 %v5801, %v5849
          %5851 = vmatmul.bf16.gmra.mxu0 %v1572
          %v5852 = vpop.f32.mrf.mxu0
          %v5853 = vadd.f32 %v5804, %v5852
          %v5854 = vpop.f32.mrf.mxu0
          %v5855 = vadd.f32 %v5806, %v5854
          %5856 = vmatmul.bf16.gmra.mxu0 %v1585
          %v5857 = vpop.f32.mrf.mxu0
          %v5858 = vadd.f32 %v5809, %v5857
          %v5859 = vpop.f32.mrf.mxu0
          %v5860 = vadd.f32 %v5811, %v5859
          %5861 = vmatmul.bf16.gmra.mxu0 %v1598
          %v5862 = vpop.f32.mrf.mxu0
          %v5863 = vadd.f32 %v5814, %v5862
          %v5864 = vpop.f32.mrf.mxu0
          %v5865 = vadd.f32 %v5816, %v5864
          %5866 = vmatmul.bf16.gmra.mxu0 %v1611
          %v5867 = vpop.f32.mrf.mxu0
          %v5868 = vadd.f32 %v5819, %v5867
          %v5869 = vpop.f32.mrf.mxu0
          %v5870 = vadd.f32 %v5821, %v5869
          %5871 = vmatmul.bf16.gmra.mxu0 %v1624
          %v5872 = vpop.f32.mrf.mxu0
          %v5873 = vadd.f32 %v5824, %v5872
          %v5874 = vpop.f32.mrf.mxu0
          %v5875 = vadd.f32 %v5826, %v5874
          %5876 = vdwg.mxu0
          %5877 = vmatpush.bf16.msra.mxu0 %v3114
          %5878 = vmatpush.bf16.msra.mxu0 %v3110
          %5879 = vmatpush.bf16.msra.mxu0 %v3106
          %5880 = vmatpush.bf16.msra.mxu0 %v3102
          %5881 = vmatpush.bf16.msra.mxu0 %v3098
          %5882 = vmatpush.bf16.msra.mxu0 %v3094
          %5883 = vmatpush.bf16.msra.mxu0 %v3090
          %5884 = vmatpush.bf16.msra.mxu0 %v3086
          %5885 = vmatmul.bf16.gmra.mxu0 %v1534
          %v5886 = vpop.f32.mrf.mxu0
          %v5887 = vadd.f32 %v5838, %v5886
          %v5888 = vpop.f32.mrf.mxu0
          %v5889 = vadd.f32 %v5840, %v5888
          %5890 = vmatmul.bf16.gmra.mxu0 %v1547
          %v5891 = vpop.f32.mrf.mxu0
          %v5892 = vadd.f32 %v5843, %v5891
          %v5893 = vpop.f32.mrf.mxu0
          %v5894 = vadd.f32 %v5845, %v5893
          %5895 = vmatmul.bf16.gmra.mxu0 %v1560
          %v5896 = vpop.f32.mrf.mxu0
          %v5897 = vadd.f32 %v5848, %v5896
          %v5898 = vpop.f32.mrf.mxu0
          %v5899 = vadd.f32 %v5850, %v5898
          %5900 = vmatmul.bf16.gmra.mxu0 %v1573
          %v5901 = vpop.f32.mrf.mxu0
          %v5902 = vadd.f32 %v5853, %v5901
          %v5903 = vpop.f32.mrf.mxu0
          %v5904 = vadd.f32 %v5855, %v5903
          %5905 = vmatmul.bf16.gmra.mxu0 %v1586
          %v5906 = vpop.f32.mrf.mxu0
          %v5907 = vadd.f32 %v5858, %v5906
          %v5908 = vpop.f32.mrf.mxu0
          %v5909 = vadd.f32 %v5860, %v5908
          %5910 = vmatmul.bf16.gmra.mxu0 %v1599
          %v5911 = vpop.f32.mrf.mxu0
          %v5912 = vadd.f32 %v5863, %v5911
          %v5913 = vpop.f32.mrf.mxu0
          %v5914 = vadd.f32 %v5865, %v5913
          %5915 = vmatmul.bf16.gmra.mxu0 %v1612
          %v5916 = vpop.f32.mrf.mxu0
          %v5917 = vadd.f32 %v5868, %v5916
          %v5918 = vpop.f32.mrf.mxu0
          %v5919 = vadd.f32 %v5870, %v5918
          %5920 = vmatmul.bf16.gmra.mxu0 %v1625
          %v5921 = vpop.f32.mrf.mxu0
          %v5922 = vadd.f32 %v5873, %v5921
          %v5923 = vpop.f32.mrf.mxu0
          %v5924 = vadd.f32 %v5875, %v5923
          %5925 = vdwg.mxu0
          %5926 = vmatpush.bf16.msra.mxu0 %v3146
          %5927 = vmatpush.bf16.msra.mxu0 %v3142
          %5928 = vmatpush.bf16.msra.mxu0 %v3138
          %5929 = vmatpush.bf16.msra.mxu0 %v3134
          %5930 = vmatpush.bf16.msra.mxu0 %v3130
          %5931 = vmatpush.bf16.msra.mxu0 %v3126
          %5932 = vmatpush.bf16.msra.mxu0 %v3122
          %5933 = vmatpush.bf16.msra.mxu0 %v3118
          %5934 = vmatmul.bf16.gmra.mxu0 %v1535
          %v5935 = vpop.f32.mrf.mxu0
          %v5936 = vadd.f32 %v5887, %v5935
          %v5937 = vpop.f32.mrf.mxu0
          %v5938 = vadd.f32 %v5889, %v5937
          %5939 = vmatmul.bf16.gmra.mxu0 %v1548
          %v5940 = vpop.f32.mrf.mxu0
          %v5941 = vadd.f32 %v5892, %v5940
          %v5942 = vpop.f32.mrf.mxu0
          %v5943 = vadd.f32 %v5894, %v5942
          %5944 = vmatmul.bf16.gmra.mxu0 %v1561
          %v5945 = vpop.f32.mrf.mxu0
          %v5946 = vadd.f32 %v5897, %v5945
          %v5947 = vpop.f32.mrf.mxu0
          %v5948 = vadd.f32 %v5899, %v5947
          %5949 = vmatmul.bf16.gmra.mxu0 %v1574
          %v5950 = vpop.f32.mrf.mxu0
          %v5951 = vadd.f32 %v5902, %v5950
          %v5952 = vpop.f32.mrf.mxu0
          %v5953 = vadd.f32 %v5904, %v5952
          %5954 = vmatmul.bf16.gmra.mxu0 %v1587
          %v5955 = vpop.f32.mrf.mxu0
          %v5956 = vadd.f32 %v5907, %v5955
          %v5957 = vpop.f32.mrf.mxu0
          %v5958 = vadd.f32 %v5909, %v5957
          %5959 = vmatmul.bf16.gmra.mxu0 %v1600
          %v5960 = vpop.f32.mrf.mxu0
          %v5961 = vadd.f32 %v5912, %v5960
          %v5962 = vpop.f32.mrf.mxu0
          %v5963 = vadd.f32 %v5914, %v5962
          %5964 = vmatmul.bf16.gmra.mxu0 %v1613
          %v5965 = vpop.f32.mrf.mxu0
          %v5966 = vadd.f32 %v5917, %v5965
          %v5967 = vpop.f32.mrf.mxu0
          %v5968 = vadd.f32 %v5919, %v5967
          %5969 = vmatmul.bf16.gmra.mxu0 %v1626
          %v5970 = vpop.f32.mrf.mxu0
          %v5971 = vadd.f32 %v5922, %v5970
          %v5972 = vpop.f32.mrf.mxu0
          %v5973 = vadd.f32 %v5924, %v5972
          %5974 = vdwg.mxu0
          %5975 = vmatpush.bf16.msra.mxu0 %v3178
          %5976 = vmatpush.bf16.msra.mxu0 %v3174
          %5977 = vmatpush.bf16.msra.mxu0 %v3170
          %5978 = vmatpush.bf16.msra.mxu0 %v3166
          %5979 = vmatpush.bf16.msra.mxu0 %v3162
          %5980 = vmatpush.bf16.msra.mxu0 %v3158
          %5981 = vmatpush.bf16.msra.mxu0 %v3154
          %5982 = vmatpush.bf16.msra.mxu0 %v3150
          %5983 = vmatmul.bf16.gmra.mxu0 %v1536
          %v5984 = vpop.f32.mrf.mxu0
          %v5985 = vadd.f32 %v5936, %v5984
          %v5986 = vpop.f32.mrf.mxu0
          %v5987 = vadd.f32 %v5938, %v5986
          %5988 = vmatmul.bf16.gmra.mxu0 %v1549
          %v5989 = vpop.f32.mrf.mxu0
          %v5990 = vadd.f32 %v5941, %v5989
          %v5991 = vpop.f32.mrf.mxu0
          %v5992 = vadd.f32 %v5943, %v5991
          %5993 = vmatmul.bf16.gmra.mxu0 %v1562
          %v5994 = vpop.f32.mrf.mxu0
          %v5995 = vadd.f32 %v5946, %v5994
          %v5996 = vpop.f32.mrf.mxu0
          %v5997 = vadd.f32 %v5948, %v5996
          %5998 = vmatmul.bf16.gmra.mxu0 %v1575
          %v5999 = vpop.f32.mrf.mxu0
          %v6000 = vadd.f32 %v5951, %v5999
          %v6001 = vpop.f32.mrf.mxu0
          %v6002 = vadd.f32 %v5953, %v6001
          %6003 = vmatmul.bf16.gmra.mxu0 %v1588
          %v6004 = vpop.f32.mrf.mxu0
          %v6005 = vadd.f32 %v5956, %v6004
          %v6006 = vpop.f32.mrf.mxu0
          %v6007 = vadd.f32 %v5958, %v6006
          %6008 = vmatmul.bf16.gmra.mxu0 %v1601
          %v6009 = vpop.f32.mrf.mxu0
          %v6010 = vadd.f32 %v5961, %v6009
          %v6011 = vpop.f32.mrf.mxu0
          %v6012 = vadd.f32 %v5963, %v6011
          %6013 = vmatmul.bf16.gmra.mxu0 %v1614
          %v6014 = vpop.f32.mrf.mxu0
          %v6015 = vadd.f32 %v5966, %v6014
          %v6016 = vpop.f32.mrf.mxu0
          %v6017 = vadd.f32 %v5968, %v6016
          %6018 = vmatmul.bf16.gmra.mxu0 %v1627
          %v6019 = vpop.f32.mrf.mxu0
          %v6020 = vadd.f32 %v5971, %v6019
          %v6021 = vpop.f32.mrf.mxu0
          %v6022 = vadd.f32 %v5973, %v6021
          %6023 = vdwg.mxu0
          %6024 = vmatpush.bf16.msra.mxu0 %v3210
          %6025 = vmatpush.bf16.msra.mxu0 %v3206
          %6026 = vmatpush.bf16.msra.mxu0 %v3202
          %6027 = vmatpush.bf16.msra.mxu0 %v3198
          %6028 = vmatpush.bf16.msra.mxu0 %v3194
          %6029 = vmatpush.bf16.msra.mxu0 %v3190
          %6030 = vmatpush.bf16.msra.mxu0 %v3186
          %6031 = vmatpush.bf16.msra.mxu0 %v3182
          %6032 = vmatmul.bf16.gmra.mxu0 %v1537
          %v6033 = vpop.f32.mrf.mxu0
          %v6034 = vadd.f32 %v5985, %v6033
          %v6035 = vpop.f32.mrf.mxu0
          %v6036 = vadd.f32 %v5987, %v6035
          %6037 = vmatmul.bf16.gmra.mxu0 %v1550
          %v6038 = vpop.f32.mrf.mxu0
          %v6039 = vadd.f32 %v5990, %v6038
          %v6040 = vpop.f32.mrf.mxu0
          %v6041 = vadd.f32 %v5992, %v6040
          %6042 = vmatmul.bf16.gmra.mxu0 %v1563
          %v6043 = vpop.f32.mrf.mxu0
          %v6044 = vadd.f32 %v5995, %v6043
          %v6045 = vpop.f32.mrf.mxu0
          %v6046 = vadd.f32 %v5997, %v6045
          %6047 = vmatmul.bf16.gmra.mxu0 %v1576
          %v6048 = vpop.f32.mrf.mxu0
          %v6049 = vadd.f32 %v6000, %v6048
          %v6050 = vpop.f32.mrf.mxu0
          %v6051 = vadd.f32 %v6002, %v6050
          %6052 = vmatmul.bf16.gmra.mxu0 %v1589
          %v6053 = vpop.f32.mrf.mxu0
          %v6054 = vadd.f32 %v6005, %v6053
          %v6055 = vpop.f32.mrf.mxu0
          %v6056 = vadd.f32 %v6007, %v6055
          %6057 = vmatmul.bf16.gmra.mxu0 %v1602
          %v6058 = vpop.f32.mrf.mxu0
          %v6059 = vadd.f32 %v6010, %v6058
          %v6060 = vpop.f32.mrf.mxu0
          %v6061 = vadd.f32 %v6012, %v6060
          %6062 = vmatmul.bf16.gmra.mxu0 %v1615
          %v6063 = vpop.f32.mrf.mxu0
          %v6064 = vadd.f32 %v6015, %v6063
          %v6065 = vpop.f32.mrf.mxu0
          %v6066 = vadd.f32 %v6017, %v6065
          %6067 = vmatmul.bf16.gmra.mxu0 %v1628
          %v6068 = vpop.f32.mrf.mxu0
          %v6069 = vadd.f32 %v6020, %v6068
          %v6070 = vpop.f32.mrf.mxu0
          %v6071 = vadd.f32 %v6022, %v6070
          %6072 = vdwg.mxu0
          %6073 = vmatpush.bf16.msra.mxu0 %v3242
          %6074 = vmatpush.bf16.msra.mxu0 %v3238
          %6075 = vmatpush.bf16.msra.mxu0 %v3234
          %6076 = vmatpush.bf16.msra.mxu0 %v3230
          %6077 = vmatpush.bf16.msra.mxu0 %v3226
          %6078 = vmatpush.bf16.msra.mxu0 %v3222
          %6079 = vmatpush.bf16.msra.mxu0 %v3218
          %6080 = vmatpush.bf16.msra.mxu0 %v3214
          %6081 = vmatmul.bf16.gmra.mxu0 %v1538
          %v6082 = vpop.f32.mrf.mxu0
          %v6083 = vadd.f32 %v6034, %v6082
          %v6084 = vpop.f32.mrf.mxu0
          %v6085 = vadd.f32 %v6036, %v6084
          %6086 = vmatmul.bf16.gmra.mxu0 %v1551
          %v6087 = vpop.f32.mrf.mxu0
          %v6088 = vadd.f32 %v6039, %v6087
          %v6089 = vpop.f32.mrf.mxu0
          %v6090 = vadd.f32 %v6041, %v6089
          %6091 = vmatmul.bf16.gmra.mxu0 %v1564
          %v6092 = vpop.f32.mrf.mxu0
          %v6093 = vadd.f32 %v6044, %v6092
          %v6094 = vpop.f32.mrf.mxu0
          %v6095 = vadd.f32 %v6046, %v6094
          %6096 = vmatmul.bf16.gmra.mxu0 %v1577
          %v6097 = vpop.f32.mrf.mxu0
          %v6098 = vadd.f32 %v6049, %v6097
          %v6099 = vpop.f32.mrf.mxu0
          %v6100 = vadd.f32 %v6051, %v6099
          %6101 = vmatmul.bf16.gmra.mxu0 %v1590
          %v6102 = vpop.f32.mrf.mxu0
          %v6103 = vadd.f32 %v6054, %v6102
          %v6104 = vpop.f32.mrf.mxu0
          %v6105 = vadd.f32 %v6056, %v6104
          %6106 = vmatmul.bf16.gmra.mxu0 %v1603
          %v6107 = vpop.f32.mrf.mxu0
          %v6108 = vadd.f32 %v6059, %v6107
          %v6109 = vpop.f32.mrf.mxu0
          %v6110 = vadd.f32 %v6061, %v6109
          %6111 = vmatmul.bf16.gmra.mxu0 %v1616
          %v6112 = vpop.f32.mrf.mxu0
          %v6113 = vadd.f32 %v6064, %v6112
          %v6114 = vpop.f32.mrf.mxu0
          %v6115 = vadd.f32 %v6066, %v6114
          %6116 = vmatmul.bf16.gmra.mxu0 %v1629
          %v6117 = vpop.f32.mrf.mxu0
          %v6118 = vadd.f32 %v6069, %v6117
          %v6119 = vpop.f32.mrf.mxu0
          %v6120 = vadd.f32 %v6071, %v6119
          %6121 = vdwg.mxu0
          %6122 = vmatpush.bf16.msra.mxu0 %v3274
          %6123 = vmatpush.bf16.msra.mxu0 %v3270
          %6124 = vmatpush.bf16.msra.mxu0 %v3266
          %6125 = vmatpush.bf16.msra.mxu0 %v3262
          %6126 = vmatpush.bf16.msra.mxu0 %v3258
          %6127 = vmatpush.bf16.msra.mxu0 %v3254
          %6128 = vmatpush.bf16.msra.mxu0 %v3250
          %6129 = vmatpush.bf16.msra.mxu0 %v3246
          %6130 = vmatmul.bf16.gmra.mxu0 %v1539
          %v6131 = vpop.f32.mrf.mxu0
          %v6132 = vadd.f32 %v6083, %v6131
          %v6133 = vpop.f32.mrf.mxu0
          %v6134 = vadd.f32 %v6085, %v6133
          %6135 = vmatmul.bf16.gmra.mxu0 %v1552
          %v6136 = vpop.f32.mrf.mxu0
          %v6137 = vadd.f32 %v6088, %v6136
          %v6138 = vpop.f32.mrf.mxu0
          %v6139 = vadd.f32 %v6090, %v6138
          %6140 = vmatmul.bf16.gmra.mxu0 %v1565
          %v6141 = vpop.f32.mrf.mxu0
          %v6142 = vadd.f32 %v6093, %v6141
          %v6143 = vpop.f32.mrf.mxu0
          %v6144 = vadd.f32 %v6095, %v6143
          %6145 = vmatmul.bf16.gmra.mxu0 %v1578
          %v6146 = vpop.f32.mrf.mxu0
          %v6147 = vadd.f32 %v6098, %v6146
          %v6148 = vpop.f32.mrf.mxu0
          %v6149 = vadd.f32 %v6100, %v6148
          %6150 = vmatmul.bf16.gmra.mxu0 %v1591
          %v6151 = vpop.f32.mrf.mxu0
          %v6152 = vadd.f32 %v6103, %v6151
          %v6153 = vpop.f32.mrf.mxu0
          %v6154 = vadd.f32 %v6105, %v6153
          %6155 = vmatmul.bf16.gmra.mxu0 %v1604
          %v6156 = vpop.f32.mrf.mxu0
          %v6157 = vadd.f32 %v6108, %v6156
          %v6158 = vpop.f32.mrf.mxu0
          %v6159 = vadd.f32 %v6110, %v6158
          %6160 = vmatmul.bf16.gmra.mxu0 %v1617
          %v6161 = vpop.f32.mrf.mxu0
          %v6162 = vadd.f32 %v6113, %v6161
          %v6163 = vpop.f32.mrf.mxu0
          %v6164 = vadd.f32 %v6115, %v6163
          %6165 = vmatmul.bf16.gmra.mxu0 %v1630
          %v6166 = vpop.f32.mrf.mxu0
          %v6167 = vadd.f32 %v6118, %v6166
          %v6168 = vpop.f32.mrf.mxu0
          %v6169 = vadd.f32 %v6120, %v6168
          %6170 = vdwg.mxu0
          %6171 = vmatpush.bf16.msra.mxu0 %v3306
          %6172 = vmatpush.bf16.msra.mxu0 %v3302
          %6173 = vmatpush.bf16.msra.mxu0 %v3298
          %6174 = vmatpush.bf16.msra.mxu0 %v3294
          %6175 = vmatpush.bf16.msra.mxu0 %v3290
          %6176 = vmatpush.bf16.msra.mxu0 %v3286
          %6177 = vmatpush.bf16.msra.mxu0 %v3282
          %6178 = vmatpush.bf16.msra.mxu0 %v3278
          %6179 = vmatmul.bf16.gmra.mxu0 %v1540
          %v6180 = vpop.f32.mrf.mxu0
          %v6181 = vadd.f32 %v6132, %v6180
          %v6182 = vpop.f32.mrf.mxu0
          %v6183 = vadd.f32 %v6134, %v6182
          %6184 = vmatmul.bf16.gmra.mxu0 %v1553
          %v6185 = vpop.f32.mrf.mxu0
          %v6186 = vadd.f32 %v6137, %v6185
          %v6187 = vpop.f32.mrf.mxu0
          %v6188 = vadd.f32 %v6139, %v6187
          %6189 = vmatmul.bf16.gmra.mxu0 %v1566
          %v6190 = vpop.f32.mrf.mxu0
          %v6191 = vadd.f32 %v6142, %v6190
          %v6192 = vpop.f32.mrf.mxu0
          %v6193 = vadd.f32 %v6144, %v6192
          %6194 = vmatmul.bf16.gmra.mxu0 %v1579
          %v6195 = vpop.f32.mrf.mxu0
          %v6196 = vadd.f32 %v6147, %v6195
          %v6197 = vpop.f32.mrf.mxu0
          %v6198 = vadd.f32 %v6149, %v6197
          %6199 = vmatmul.bf16.gmra.mxu0 %v1592
          %v6200 = vpop.f32.mrf.mxu0
          %v6201 = vadd.f32 %v6152, %v6200
          %v6202 = vpop.f32.mrf.mxu0
          %v6203 = vadd.f32 %v6154, %v6202
          %6204 = vmatmul.bf16.gmra.mxu0 %v1605
          %v6205 = vpop.f32.mrf.mxu0
          %v6206 = vadd.f32 %v6157, %v6205
          %v6207 = vpop.f32.mrf.mxu0
          %v6208 = vadd.f32 %v6159, %v6207
          %6209 = vmatmul.bf16.gmra.mxu0 %v1618
          %v6210 = vpop.f32.mrf.mxu0
          %v6211 = vadd.f32 %v6162, %v6210
          %v6212 = vpop.f32.mrf.mxu0
          %v6213 = vadd.f32 %v6164, %v6212
          %6214 = vmatmul.bf16.gmra.mxu0 %v1631
          %v6215 = vpop.f32.mrf.mxu0
          %v6216 = vadd.f32 %v6167, %v6215
          %v6217 = vpop.f32.mrf.mxu0
          %v6218 = vadd.f32 %v6169, %v6217
          %6219 = vdwg.mxu0
          %6220 = vmatpush.bf16.msra.mxu0 %v3338
          %6221 = vmatpush.bf16.msra.mxu0 %v3334
          %6222 = vmatpush.bf16.msra.mxu0 %v3330
          %6223 = vmatpush.bf16.msra.mxu0 %v3326
          %6224 = vmatpush.bf16.msra.mxu0 %v3322
          %6225 = vmatpush.bf16.msra.mxu0 %v3318
          %6226 = vmatpush.bf16.msra.mxu0 %v3314
          %6227 = vmatpush.bf16.msra.mxu0 %v3310
          %6228 = vmatmul.bf16.gmra.mxu0 %v1541
          %v6229 = vpop.f32.mrf.mxu0
          %v6230 = vadd.f32 %v6181, %v6229
          %v6231 = vpop.f32.mrf.mxu0
          %v6232 = vadd.f32 %v6183, %v6231
          %6233 = vmatmul.bf16.gmra.mxu0 %v1554
          %v6234 = vpop.f32.mrf.mxu0
          %v6235 = vadd.f32 %v6186, %v6234
          %v6236 = vpop.f32.mrf.mxu0
          %v6237 = vadd.f32 %v6188, %v6236
          %6238 = vmatmul.bf16.gmra.mxu0 %v1567
          %v6239 = vpop.f32.mrf.mxu0
          %v6240 = vadd.f32 %v6191, %v6239
          %v6241 = vpop.f32.mrf.mxu0
          %v6242 = vadd.f32 %v6193, %v6241
          %6243 = vmatmul.bf16.gmra.mxu0 %v1580
          %v6244 = vpop.f32.mrf.mxu0
          %v6245 = vadd.f32 %v6196, %v6244
          %v6246 = vpop.f32.mrf.mxu0
          %v6247 = vadd.f32 %v6198, %v6246
          %6248 = vmatmul.bf16.gmra.mxu0 %v1593
          %v6249 = vpop.f32.mrf.mxu0
          %v6250 = vadd.f32 %v6201, %v6249
          %v6251 = vpop.f32.mrf.mxu0
          %v6252 = vadd.f32 %v6203, %v6251
          %6253 = vmatmul.bf16.gmra.mxu0 %v1606
          %v6254 = vpop.f32.mrf.mxu0
          %v6255 = vadd.f32 %v6206, %v6254
          %v6256 = vpop.f32.mrf.mxu0
          %v6257 = vadd.f32 %v6208, %v6256
          %6258 = vmatmul.bf16.gmra.mxu0 %v1619
          %v6259 = vpop.f32.mrf.mxu0
          %v6260 = vadd.f32 %v6211, %v6259
          %v6261 = vpop.f32.mrf.mxu0
          %v6262 = vadd.f32 %v6213, %v6261
          %6263 = vmatmul.bf16.gmra.mxu0 %v1632
          %v6264 = vpop.f32.mrf.mxu0
          %v6265 = vadd.f32 %v6216, %v6264
          %v6266 = vpop.f32.mrf.mxu0
          %v6267 = vadd.f32 %v6218, %v6266
          %6268 = vdwg.mxu0
          %6269 = vmatpush.bf16.msra.mxu0 %v3370
          %6270 = vmatpush.bf16.msra.mxu0 %v3366
          %6271 = vmatpush.bf16.msra.mxu0 %v3362
          %6272 = vmatpush.bf16.msra.mxu0 %v3358
          %6273 = vmatpush.bf16.msra.mxu0 %v3354
          %6274 = vmatpush.bf16.msra.mxu0 %v3350
          %6275 = vmatpush.bf16.msra.mxu0 %v3346
          %6276 = vmatpush.bf16.msra.mxu0 %v3342
          %6277 = vmatmul.bf16.gmra.mxu0 %v1542
          %v6278 = vpop.f32.mrf.mxu0
          %v6279 = vadd.f32 %v6230, %v6278
          %v6280 = vpop.f32.mrf.mxu0
          %v6281 = vadd.f32 %v6232, %v6280
          %6282 = vmatmul.bf16.gmra.mxu0 %v1555
          %v6283 = vpop.f32.mrf.mxu0
          %v6284 = vadd.f32 %v6235, %v6283
          %v6285 = vpop.f32.mrf.mxu0
          %v6286 = vadd.f32 %v6237, %v6285
          %6287 = vmatmul.bf16.gmra.mxu0 %v1568
          %v6288 = vpop.f32.mrf.mxu0
          %v6289 = vadd.f32 %v6240, %v6288
          %v6290 = vpop.f32.mrf.mxu0
          %v6291 = vadd.f32 %v6242, %v6290
          %6292 = vmatmul.bf16.gmra.mxu0 %v1581
          %v6293 = vpop.f32.mrf.mxu0
          %v6294 = vadd.f32 %v6245, %v6293
          %v6295 = vpop.f32.mrf.mxu0
          %v6296 = vadd.f32 %v6247, %v6295
          %6297 = vmatmul.bf16.gmra.mxu0 %v1594
          %v6298 = vpop.f32.mrf.mxu0
          %v6299 = vadd.f32 %v6250, %v6298
          %v6300 = vpop.f32.mrf.mxu0
          %v6301 = vadd.f32 %v6252, %v6300
          %6302 = vmatmul.bf16.gmra.mxu0 %v1607
          %v6303 = vpop.f32.mrf.mxu0
          %v6304 = vadd.f32 %v6255, %v6303
          %v6305 = vpop.f32.mrf.mxu0
          %v6306 = vadd.f32 %v6257, %v6305
          %6307 = vmatmul.bf16.gmra.mxu0 %v1620
          %v6308 = vpop.f32.mrf.mxu0
          %v6309 = vadd.f32 %v6260, %v6308
          %v6310 = vpop.f32.mrf.mxu0
          %v6311 = vadd.f32 %v6262, %v6310
          %6312 = vmatmul.bf16.gmra.mxu0 %v1633
          %v6313 = vpop.f32.mrf.mxu0
          %v6314 = vadd.f32 %v6265, %v6313
          %v6315 = vpop.f32.mrf.mxu0
          %v6316 = vadd.f32 %v6267, %v6315
          %6317 = vdwg.mxu0
          %6318 = vmatpush.bf16.msra.mxu0 %v3402
          %6319 = vmatpush.bf16.msra.mxu0 %v3398
          %6320 = vmatpush.bf16.msra.mxu0 %v3394
          %6321 = vmatpush.bf16.msra.mxu0 %v3390
          %6322 = vmatpush.bf16.msra.mxu0 %v3386
          %6323 = vmatpush.bf16.msra.mxu0 %v3382
          %6324 = vmatpush.bf16.msra.mxu0 %v3378
          %6325 = vmatpush.bf16.msra.mxu0 %v3374
          %6326 = vmatmul.bf16.gmra.mxu0 %v1543
          %v6327 = vpop.f32.mrf.mxu0
          %v6328 = vadd.f32 %v6279, %v6327
          %v6329 = vpop.f32.mrf.mxu0
          %v6330 = vadd.f32 %v6281, %v6329
          %6331 = vmatmul.bf16.gmra.mxu0 %v1556
          %v6332 = vpop.f32.mrf.mxu0
          %v6333 = vadd.f32 %v6284, %v6332
          %v6334 = vpop.f32.mrf.mxu0
          %v6335 = vadd.f32 %v6286, %v6334
          %6336 = vmatmul.bf16.gmra.mxu0 %v1569
          %v6337 = vpop.f32.mrf.mxu0
          %v6338 = vadd.f32 %v6289, %v6337
          %v6339 = vpop.f32.mrf.mxu0
          %v6340 = vadd.f32 %v6291, %v6339
          %6341 = vmatmul.bf16.gmra.mxu0 %v1582
          %v6342 = vpop.f32.mrf.mxu0
          %v6343 = vadd.f32 %v6294, %v6342
          %v6344 = vpop.f32.mrf.mxu0
          %v6345 = vadd.f32 %v6296, %v6344
          %6346 = vmatmul.bf16.gmra.mxu0 %v1595
          %v6347 = vpop.f32.mrf.mxu0
          %v6348 = vadd.f32 %v6299, %v6347
          %v6349 = vpop.f32.mrf.mxu0
          %v6350 = vadd.f32 %v6301, %v6349
          %6351 = vmatmul.bf16.gmra.mxu0 %v1608
          %v6352 = vpop.f32.mrf.mxu0
          %v6353 = vadd.f32 %v6304, %v6352
          %v6354 = vpop.f32.mrf.mxu0
          %v6355 = vadd.f32 %v6306, %v6354
          %6356 = vmatmul.bf16.gmra.mxu0 %v1621
          %v6357 = vpop.f32.mrf.mxu0
          %v6358 = vadd.f32 %v6309, %v6357
          %v6359 = vpop.f32.mrf.mxu0
          %v6360 = vadd.f32 %v6311, %v6359
          %6361 = vmatmul.bf16.gmra.mxu0 %v1634
          %v6362 = vpop.f32.mrf.mxu0
          %v6363 = vadd.f32 %v6314, %v6362
          %v6364 = vpop.f32.mrf.mxu0
          %v6365 = vadd.f32 %v6316, %v6364
          %6366 = vdwg.mxu0
          %s6367 = smul.u32 %s40, 64
          %s6368 = smul.addr %s6367, 8
          %s6369 = scalar_lea.vmem [#allocation2], %s6368
          %6370 = vst [vmem:[%s6369] sm:$0xff] %v4417
          %6371 = vst [vmem:[%s6369 + $0x8] sm:$0xff] %v5054
          %6372 = vst [vmem:[%s6369 + $0x10] sm:$0xff] %v5691
          %6373 = vst [vmem:[%s6369 + $0x18] sm:$0xff] %v6328
          %6374 = vst [vmem:[%s6369 + $0x20] sm:$0xff] %v4419
          %6375 = vst [vmem:[%s6369 + $0x28] sm:$0xff] %v5056
          %6376 = vst [vmem:[%s6369 + $0x30] sm:$0xff] %v5693
          %6377 = vst [vmem:[%s6369 + $0x38] sm:$0xff] %v6330
          %6378 = vst [vmem:[%s6369 + $0x40] sm:$0xff] %v4422
          %6379 = vst [vmem:[%s6369 + $0x48] sm:$0xff] %v5059
          %6380 = vst [vmem:[%s6369 + $0x50] sm:$0xff] %v5696
          %6381 = vst [vmem:[%s6369 + $0x58] sm:$0xff] %v6333
          %6382 = vst [vmem:[%s6369 + $0x60] sm:$0xff] %v4424
          %6383 = vst [vmem:[%s6369 + $0x68] sm:$0xff] %v5061
          %6384 = vst [vmem:[%s6369 + $0x70] sm:$0xff] %v5698
          %6385 = vst [vmem:[%s6369 + $0x78] sm:$0xff] %v6335
          %6386 = vst [vmem:[%s6369 + $0x80] sm:$0xff] %v4427
          %6387 = vst [vmem:[%s6369 + $0x88] sm:$0xff] %v5064
          %6388 = vst [vmem:[%s6369 + $0x90] sm:$0xff] %v5701
          %6389 = vst [vmem:[%s6369 + $0x98] sm:$0xff] %v6338
          %6390 = vst [vmem:[%s6369 + $0xa0] sm:$0xff] %v4429
          %6391 = vst [vmem:[%s6369 + $0xa8] sm:$0xff] %v5066
          %6392 = vst [vmem:[%s6369 + $0xb0] sm:$0xff] %v5703
          %6393 = vst [vmem:[%s6369 + $0xb8] sm:$0xff] %v6340
          %6394 = vst [vmem:[%s6369 + $0xc0] sm:$0xff] %v4432
          %6395 = vst [vmem:[%s6369 + $0xc8] sm:$0xff] %v5069
          %6396 = vst [vmem:[%s6369 + $0xd0] sm:$0xff] %v5706
          %6397 = vst [vmem:[%s6369 + $0xd8] sm:$0xff] %v6343
          %6398 = vst [vmem:[%s6369 + $0xe0] sm:$0xff] %v4434
          %6399 = vst [vmem:[%s6369 + $0xe8] sm:$0xff] %v5071
          %6400 = vst [vmem:[%s6369 + $0xf0] sm:$0xff] %v5708
          %6401 = vst [vmem:[%s6369 + $0xf8] sm:$0xff] %v6345
          %6402 = vst [vmem:[%s6369 + $0x100] sm:$0xff] %v4437
          %6403 = vst [vmem:[%s6369 + $0x108] sm:$0xff] %v5074
          %6404 = vst [vmem:[%s6369 + $0x110] sm:$0xff] %v5711
          %6405 = vst [vmem:[%s6369 + $0x118] sm:$0xff] %v6348
          %6406 = vst [vmem:[%s6369 + $0x120] sm:$0xff] %v4439
          %6407 = vst [vmem:[%s6369 + $0x128] sm:$0xff] %v5076
          %6408 = vst [vmem:[%s6369 + $0x130] sm:$0xff] %v5713
          %6409 = vst [vmem:[%s6369 + $0x138] sm:$0xff] %v6350
          %6410 = vst [vmem:[%s6369 + $0x140] sm:$0xff] %v4442
          %6411 = vst [vmem:[%s6369 + $0x148] sm:$0xff] %v5079
          %6412 = vst [vmem:[%s6369 + $0x150] sm:$0xff] %v5716
          %6413 = vst [vmem:[%s6369 + $0x158] sm:$0xff] %v6353
          %6414 = vst [vmem:[%s6369 + $0x160] sm:$0xff] %v4444
          %6415 = vst [vmem:[%s6369 + $0x168] sm:$0xff] %v5081
          %6416 = vst [vmem:[%s6369 + $0x170] sm:$0xff] %v5718
          %6417 = vst [vmem:[%s6369 + $0x178] sm:$0xff] %v6355
          %6418 = vst [vmem:[%s6369 + $0x180] sm:$0xff] %v4447
          %6419 = vst [vmem:[%s6369 + $0x188] sm:$0xff] %v5084
          %6420 = vst [vmem:[%s6369 + $0x190] sm:$0xff] %v5721
          %6421 = vst [vmem:[%s6369 + $0x198] sm:$0xff] %v6358
          %6422 = vst [vmem:[%s6369 + $0x1a0] sm:$0xff] %v4449
          %6423 = vst [vmem:[%s6369 + $0x1a8] sm:$0xff] %v5086
          %6424 = vst [vmem:[%s6369 + $0x1b0] sm:$0xff] %v5723
          %6425 = vst [vmem:[%s6369 + $0x1b8] sm:$0xff] %v6360
          %6426 = vst [vmem:[%s6369 + $0x1c0] sm:$0xff] %v4452
          %6427 = vst [vmem:[%s6369 + $0x1c8] sm:$0xff] %v5089
          %6428 = vst [vmem:[%s6369 + $0x1d0] sm:$0xff] %v5726
          %6429 = vst [vmem:[%s6369 + $0x1d8] sm:$0xff] %v6363
          %6430 = vst [vmem:[%s6369 + $0x1e0] sm:$0xff] %v4454
          %6431 = vst [vmem:[%s6369 + $0x1e8] sm:$0xff] %v5091
          %6432 = vst [vmem:[%s6369 + $0x1f0] sm:$0xff] %v5728
          %6433 = vst [vmem:[%s6369 + $0x1f8] sm:$0xff] %v6365
          %v6434 = vmul.f32 %v4417, %v640
          %v6435 = vmul.f32 %v5054, %v640
          %v6436 = vmul.f32 %v5691, %v640
          %v6437 = vmul.f32 %v6328, %v640
          %v6438 = vmul.f32 %v4419, %v641
          %v6439 = vmul.f32 %v5056, %v641
          %v6440 = vmul.f32 %v5693, %v641
          %v6441 = vmul.f32 %v6330, %v641
          %v6442 = vmul.f32 %v4422, %v642
          %v6443 = vmul.f32 %v5059, %v642
          %v6444 = vmul.f32 %v5696, %v642
          %v6445 = vmul.f32 %v6333, %v642
          %v6446 = vmul.f32 %v4424, %v643
          %v6447 = vmul.f32 %v5061, %v643
          %v6448 = vmul.f32 %v5698, %v643
          %v6449 = vmul.f32 %v6335, %v643
          %v6450 = vmul.f32 %v4427, %v644
          %v6451 = vmul.f32 %v5064, %v644
          %v6452 = vmul.f32 %v5701, %v644
          %v6453 = vmul.f32 %v6338, %v644
          %v6454 = vmul.f32 %v4429, %v645
          %v6455 = vmul.f32 %v5066, %v645
          %v6456 = vmul.f32 %v5703, %v645
          %v6457 = vmul.f32 %v6340, %v645
          %v6458 = vmul.f32 %v4432, %v646
          %v6459 = vmul.f32 %v5069, %v646
          %v6460 = vmul.f32 %v5706, %v646
          %v6461 = vmul.f32 %v6343, %v646
          %v6462 = vmul.f32 %v4434, %v647
          %v6463 = vmul.f32 %v5071, %v647
          %v6464 = vmul.f32 %v5708, %v647
          %v6465 = vmul.f32 %v6345, %v647
          %v6466 = vmul.f32 %v4437, %v648
          %v6467 = vmul.f32 %v5074, %v648
          %v6468 = vmul.f32 %v5711, %v648
          %v6469 = vmul.f32 %v6348, %v648
          %v6470 = vmul.f32 %v4439, %v649
          %v6471 = vmul.f32 %v5076, %v649
          %v6472 = vmul.f32 %v5713, %v649
          %v6473 = vmul.f32 %v6350, %v649
          %v6474 = vmul.f32 %v4442, %v650
          %v6475 = vmul.f32 %v5079, %v650
          %v6476 = vmul.f32 %v5716, %v650
          %v6477 = vmul.f32 %v6353, %v650
          %v6478 = vmul.f32 %v4444, %v651
          %v6479 = vmul.f32 %v5081, %v651
          %v6480 = vmul.f32 %v5718, %v651
          %v6481 = vmul.f32 %v6355, %v651
          %v6482 = vmul.f32 %v4447, %v652
          %v6483 = vmul.f32 %v5084, %v652
          %v6484 = vmul.f32 %v5721, %v652
          %v6485 = vmul.f32 %v6358, %v652
          %v6486 = vmul.f32 %v4449, %v653
          %v6487 = vmul.f32 %v5086, %v653
          %v6488 = vmul.f32 %v5723, %v653
          %v6489 = vmul.f32 %v6360, %v653
          %v6490 = vmul.f32 %v4452, %v654
          %v6491 = vmul.f32 %v5089, %v654
          %v6492 = vmul.f32 %v5726, %v654
          %v6493 = vmul.f32 %v6363, %v654
          %v6494 = vmul.f32 %v4454, %v655
          %v6495 = vmul.f32 %v5091, %v655
          %v6496 = vmul.f32 %v5728, %v655
          %v6497 = vmul.f32 %v6365, %v655
          %v6498 = vld [vmem:[#allocation4] sm:$0xf]
          %v6499 = vadd.f32 %v6434, %v6438
          %v6500 = vadd.f32 %v6499, %v6442
          %v6501 = vadd.f32 %v6500, %v6446
          %v6502 = vadd.f32 %v6501, %v6450
          %v6503 = vadd.f32 %v6502, %v6454
          %v6504 = vadd.f32 %v6503, %v6458
          %v6505 = vadd.f32 %v6504, %v6462
          %v6506 = vadd.f32 %v6505, %v6466
          %v6507 = vadd.f32 %v6506, %v6470
          %v6508 = vadd.f32 %v6507, %v6474
          %v6509 = vadd.f32 %v6508, %v6478
          %v6510 = vadd.f32 %v6509, %v6482
          %v6511 = vadd.f32 %v6510, %v6486
          %v6512 = vadd.f32 %v6511, %v6490
          %v6513 = vadd.f32 %v6512, %v6494
          %v6514 = vrot.slane %v6513, 4
          %v6515 = vadd.f32 %v6513, %v6514
          %v6516 = vrot.slane %v6515, 2
          %v6517 = vadd.f32 %v6515, %v6516
          %v6518 = vrot.slane %v6517, 1
          %v6519 = vadd.f32 %v6517, %v6518
          %v6520 = vadd.f32 %v6435, %v6439
          %v6521 = vadd.f32 %v6520, %v6443
          %v6522 = vadd.f32 %v6521, %v6447
          %v6523 = vadd.f32 %v6522, %v6451
          %v6524 = vadd.f32 %v6523, %v6455
          %v6525 = vadd.f32 %v6524, %v6459
          %v6526 = vadd.f32 %v6525, %v6463
          %v6527 = vadd.f32 %v6526, %v6467
          %v6528 = vadd.f32 %v6527, %v6471
          %v6529 = vadd.f32 %v6528, %v6475
          %v6530 = vadd.f32 %v6529, %v6479
          %v6531 = vadd.f32 %v6530, %v6483
          %v6532 = vadd.f32 %v6531, %v6487
          %v6533 = vadd.f32 %v6532, %v6491
          %v6534 = vadd.f32 %v6533, %v6495
          %v6535 = vrot.slane %v6534, 4
          %v6536 = vadd.f32 %v6534, %v6535
          %v6537 = vrot.slane %v6536, 2
          %v6538 = vadd.f32 %v6536, %v6537
          %v6539 = vrot.slane %v6538, 1
          %v6540 = vadd.f32 %v6538, %v6539
          %v6541 = vadd.f32 %v6436, %v6440
          %v6542 = vadd.f32 %v6541, %v6444
          %v6543 = vadd.f32 %v6542, %v6448
          %v6544 = vadd.f32 %v6543, %v6452
          %v6545 = vadd.f32 %v6544, %v6456
          %v6546 = vadd.f32 %v6545, %v6460
          %v6547 = vadd.f32 %v6546, %v6464
          %v6548 = vadd.f32 %v6547, %v6468
          %v6549 = vadd.f32 %v6548, %v6472
          %v6550 = vadd.f32 %v6549, %v6476
          %v6551 = vadd.f32 %v6550, %v6480
          %v6552 = vadd.f32 %v6551, %v6484
          %v6553 = vadd.f32 %v6552, %v6488
          %v6554 = vadd.f32 %v6553, %v6492
          %v6555 = vadd.f32 %v6554, %v6496
          %v6556 = vrot.slane %v6555, 4
          %v6557 = vadd.f32 %v6555, %v6556
          %v6558 = vrot.slane %v6557, 2
          %v6559 = vadd.f32 %v6557, %v6558
          %v6560 = vrot.slane %v6559, 1
          %v6561 = vadd.f32 %v6559, %v6560
          %v6562 = vadd.f32 %v6437, %v6441
          %v6563 = vadd.f32 %v6562, %v6445
          %v6564 = vadd.f32 %v6563, %v6449
          %v6565 = vadd.f32 %v6564, %v6453
          %v6566 = vadd.f32 %v6565, %v6457
          %v6567 = vadd.f32 %v6566, %v6461
          %v6568 = vadd.f32 %v6567, %v6465
          %v6569 = vadd.f32 %v6568, %v6469
          %v6570 = vadd.f32 %v6569, %v6473
          %v6571 = vadd.f32 %v6570, %v6477
          %v6572 = vadd.f32 %v6571, %v6481
          %v6573 = vadd.f32 %v6572, %v6485
          %v6574 = vadd.f32 %v6573, %v6489
          %v6575 = vadd.f32 %v6574, %v6493
          %v6576 = vadd.f32 %v6575, %v6497
          %v6577 = vrot.slane %v6576, 4
          %v6578 = vadd.f32 %v6576, %v6577
          %v6579 = vrot.slane %v6578, 2
          %v6580 = vadd.f32 %v6578, %v6579
          %v6581 = vrot.slane %v6580, 1
          %v6582 = vadd.f32 %v6580, %v6581
          %v6587 = vrot.slane %v6540, 7
          %v6588 = vrot.slane %v6561, 6
          %v6589 = vrot.slane %v6582, 5
          %vm6590 = vcmask 1040384
          %v6591 = vsel %vm6590, %v6519, %v6587
          %vm6592 = vcmask 1042434
          %v6593 = vsel %vm6592, %v6588, %v6589
          %vm6594 = vcmask 1041408
          %v6595 = vsel %vm6594, %v6591, %v6593
          %v6597 = vadd.f32 %v6498, %v6595
          %v6598 = vlaneseq
          %vm6599 = vcmp.ge.s32.totalorder %v6598, 0
          %vm6600 = vcmp.lt.s32.totalorder %v6598, 512
          %vm6601 = vmand %vm6599, %vm6600
          %6602 = vst.msk [vmem:[#allocation4] sm:$0xf] %vm6601, %v6597
          %v6603 = vld [vmem:[#allocation5] sm:$0xf]
          %v6604 = vmul.f32 %v6434, %v4417
          %v6605 = vmul.f32 %v6435, %v5054
          %v6606 = vmul.f32 %v6436, %v5691
          %v6607 = vmul.f32 %v6437, %v6328
          %v6608 = vmul.f32 %v6438, %v4419
          %v6609 = vmul.f32 %v6439, %v5056
          %v6610 = vmul.f32 %v6440, %v5693
          %v6611 = vmul.f32 %v6441, %v6330
          %v6612 = vmul.f32 %v6442, %v4422
          %v6613 = vmul.f32 %v6443, %v5059
          %v6614 = vmul.f32 %v6444, %v5696
          %v6615 = vmul.f32 %v6445, %v6333
          %v6616 = vmul.f32 %v6446, %v4424
          %v6617 = vmul.f32 %v6447, %v5061
          %v6618 = vmul.f32 %v6448, %v5698
          %v6619 = vmul.f32 %v6449, %v6335
          %v6620 = vmul.f32 %v6450, %v4427
          %v6621 = vmul.f32 %v6451, %v5064
          %v6622 = vmul.f32 %v6452, %v5701
          %v6623 = vmul.f32 %v6453, %v6338
          %v6624 = vmul.f32 %v6454, %v4429
          %v6625 = vmul.f32 %v6455, %v5066
          %v6626 = vmul.f32 %v6456, %v5703
          %v6627 = vmul.f32 %v6457, %v6340
          %v6628 = vmul.f32 %v6458, %v4432
          %v6629 = vmul.f32 %v6459, %v5069
          %v6630 = vmul.f32 %v6460, %v5706
          %v6631 = vmul.f32 %v6461, %v6343
          %v6632 = vmul.f32 %v6462, %v4434
          %v6633 = vmul.f32 %v6463, %v5071
          %v6634 = vmul.f32 %v6464, %v5708
          %v6635 = vmul.f32 %v6465, %v6345
          %v6636 = vmul.f32 %v6466, %v4437
          %v6637 = vmul.f32 %v6467, %v5074
          %v6638 = vmul.f32 %v6468, %v5711
          %v6639 = vmul.f32 %v6469, %v6348
          %v6640 = vmul.f32 %v6470, %v4439
          %v6641 = vmul.f32 %v6471, %v5076
          %v6642 = vmul.f32 %v6472, %v5713
          %v6643 = vmul.f32 %v6473, %v6350
          %v6644 = vmul.f32 %v6474, %v4442
          %v6645 = vmul.f32 %v6475, %v5079
          %v6646 = vmul.f32 %v6476, %v5716
          %v6647 = vmul.f32 %v6477, %v6353
          %v6648 = vmul.f32 %v6478, %v4444
          %v6649 = vmul.f32 %v6479, %v5081
          %v6650 = vmul.f32 %v6480, %v5718
          %v6651 = vmul.f32 %v6481, %v6355
          %v6652 = vmul.f32 %v6482, %v4447
          %v6653 = vmul.f32 %v6483, %v5084
          %v6654 = vmul.f32 %v6484, %v5721
          %v6655 = vmul.f32 %v6485, %v6358
          %v6656 = vmul.f32 %v6486, %v4449
          %v6657 = vmul.f32 %v6487, %v5086
          %v6658 = vmul.f32 %v6488, %v5723
          %v6659 = vmul.f32 %v6489, %v6360
          %v6660 = vmul.f32 %v6490, %v4452
          %v6661 = vmul.f32 %v6491, %v5089
          %v6662 = vmul.f32 %v6492, %v5726
          %v6663 = vmul.f32 %v6493, %v6363
          %v6664 = vmul.f32 %v6494, %v4454
          %v6665 = vmul.f32 %v6495, %v5091
          %v6666 = vmul.f32 %v6496, %v5728
          %v6667 = vmul.f32 %v6497, %v6365
          %v6668 = vadd.f32 %v6604, %v6608
          %v6669 = vadd.f32 %v6668, %v6612
          %v6670 = vadd.f32 %v6669, %v6616
          %v6671 = vadd.f32 %v6670, %v6620
          %v6672 = vadd.f32 %v6671, %v6624
          %v6673 = vadd.f32 %v6672, %v6628
          %v6674 = vadd.f32 %v6673, %v6632
          %v6675 = vadd.f32 %v6674, %v6636
          %v6676 = vadd.f32 %v6675, %v6640
          %v6677 = vadd.f32 %v6676, %v6644
          %v6678 = vadd.f32 %v6677, %v6648
          %v6679 = vadd.f32 %v6678, %v6652
          %v6680 = vadd.f32 %v6679, %v6656
          %v6681 = vadd.f32 %v6680, %v6660
          %v6682 = vadd.f32 %v6681, %v6664
          %v6683 = vrot.slane %v6682, 4
          %v6684 = vadd.f32 %v6682, %v6683
          %v6685 = vrot.slane %v6684, 2
          %v6686 = vadd.f32 %v6684, %v6685
          %v6687 = vrot.slane %v6686, 1
          %v6688 = vadd.f32 %v6686, %v6687
          %v6689 = vadd.f32 %v6605, %v6609
          %v6690 = vadd.f32 %v6689, %v6613
          %v6691 = vadd.f32 %v6690, %v6617
          %v6692 = vadd.f32 %v6691, %v6621
          %v6693 = vadd.f32 %v6692, %v6625
          %v6694 = vadd.f32 %v6693, %v6629
          %v6695 = vadd.f32 %v6694, %v6633
          %v6696 = vadd.f32 %v6695, %v6637
          %v6697 = vadd.f32 %v6696, %v6641
          %v6698 = vadd.f32 %v6697, %v6645
          %v6699 = vadd.f32 %v6698, %v6649
          %v6700 = vadd.f32 %v6699, %v6653
          %v6701 = vadd.f32 %v6700, %v6657
          %v6702 = vadd.f32 %v6701, %v6661
          %v6703 = vadd.f32 %v6702, %v6665
          %v6704 = vrot.slane %v6703, 4
          %v6705 = vadd.f32 %v6703, %v6704
          %v6706 = vrot.slane %v6705, 2
          %v6707 = vadd.f32 %v6705, %v6706
          %v6708 = vrot.slane %v6707, 1
          %v6709 = vadd.f32 %v6707, %v6708
          %v6710 = vadd.f32 %v6606, %v6610
          %v6711 = vadd.f32 %v6710, %v6614
          %v6712 = vadd.f32 %v6711, %v6618
          %v6713 = vadd.f32 %v6712, %v6622
          %v6714 = vadd.f32 %v6713, %v6626
          %v6715 = vadd.f32 %v6714, %v6630
          %v6716 = vadd.f32 %v6715, %v6634
          %v6717 = vadd.f32 %v6716, %v6638
          %v6718 = vadd.f32 %v6717, %v6642
          %v6719 = vadd.f32 %v6718, %v6646
          %v6720 = vadd.f32 %v6719, %v6650
          %v6721 = vadd.f32 %v6720, %v6654
          %v6722 = vadd.f32 %v6721, %v6658
          %v6723 = vadd.f32 %v6722, %v6662
          %v6724 = vadd.f32 %v6723, %v6666
          %v6725 = vrot.slane %v6724, 4
          %v6726 = vadd.f32 %v6724, %v6725
          %v6727 = vrot.slane %v6726, 2
          %v6728 = vadd.f32 %v6726, %v6727
          %v6729 = vrot.slane %v6728, 1
          %v6730 = vadd.f32 %v6728, %v6729
          %v6731 = vadd.f32 %v6607, %v6611
          %v6732 = vadd.f32 %v6731, %v6615
          %v6733 = vadd.f32 %v6732, %v6619
          %v6734 = vadd.f32 %v6733, %v6623
          %v6735 = vadd.f32 %v6734, %v6627
          %v6736 = vadd.f32 %v6735, %v6631
          %v6737 = vadd.f32 %v6736, %v6635
          %v6738 = vadd.f32 %v6737, %v6639
          %v6739 = vadd.f32 %v6738, %v6643
          %v6740 = vadd.f32 %v6739, %v6647
          %v6741 = vadd.f32 %v6740, %v6651
          %v6742 = vadd.f32 %v6741, %v6655
          %v6743 = vadd.f32 %v6742, %v6659
          %v6744 = vadd.f32 %v6743, %v6663
          %v6745 = vadd.f32 %v6744, %v6667
          %v6746 = vrot.slane %v6745, 4
          %v6747 = vadd.f32 %v6745, %v6746
          %v6748 = vrot.slane %v6747, 2
          %v6749 = vadd.f32 %v6747, %v6748
          %v6750 = vrot.slane %v6749, 1
          %v6751 = vadd.f32 %v6749, %v6750
          %v6756 = vrot.slane %v6709, 7
          %v6757 = vrot.slane %v6730, 6
          %v6758 = vrot.slane %v6751, 5
          %v6759 = vsel %vm6590, %v6688, %v6756
          %v6760 = vsel %vm6592, %v6757, %v6758
          %v6761 = vsel %vm6594, %v6759, %v6760
          %v6763 = vadd.f32 %v6603, %v6761
          %6764 = vst.msk [vmem:[#allocation5] sm:$0xf] %vm6601, %v6763
        $region112: #{tpu_custom_call.1} parent=63 // pred_fallthru
          _
        %p6765 = scmp.eq.s32.totalorder %s39, 1
        // Predicated region
        $region113: #{tpu_custom_call.1} parent=63 // pred_check
          %p6766 = pneg %p6765
        $region114: #{tpu_custom_call.1} parent=63 // pred_check_branch
          %6768 = sbr.rel (%p6766) target = $region116
        $region115: #{tpu_custom_call.1} parent=63 // pred_region
          %v6769 = vld [vmem:[#allocation4] sm:$0xf]
          %v6770 = vmul.f32 %v6769, 0.005
          %v6771 = vld [vmem:[#allocation5] sm:$0xf]
          %v6772 = vmul.f32 %v6771, 0.005
          %v6773 = vmul.f32 %v6770, %v6770
          %v6774 = vsub.f32 %v6772, %v6773
          %v6775 = vld [vmem:[#allocation15] sm:$0xf]
          %v6776 = vadd.f32 %v6774, 1e-05
          %v6777 = vrsqrt.pop %v6776
          %v6778 = vmul.f32 %v6777, %v6776
          %v6779 = vmul.f32 %v6778, %v6777
          %v6780 = vmul.f32 0.5, %v6779
          %v6781 = vsub.f32 1.5, %v6780
          %v6782 = vmul.f32 %v6777, %v6781
          %vm6783 = vweird.f32 %v6776
          %vm6784 = vweird.f32 %v6777
          %vm6785 = vmor %vm6783, %vm6784
          %v6786 = vsel %vm6785, %v6777, %v6782
          %v6787 = vmul.f32 %v6775, %v6786
          %v6788 = vld [vmem:[#allocation17] sm:$0xf]
          %v6789 = vmul.f32 %v6787, %v6770
          %v6790 = vsub.f32 %v6788, %v6789
          %s6791 = smul.u32 %s40, 64
          %s6792 = smul.addr %s6791, 8
          %s6793 = scalar_lea.vmem [#allocation2], %s6792
          %v6794 = vld [vmem:[%s6793] sm:$0xff]
          %v6795 = vld [vmem:[%s6793 + $0x8] sm:$0xff]
          %v6796 = vld [vmem:[%s6793 + $0x10] sm:$0xff]
          %v6797 = vld [vmem:[%s6793 + $0x18] sm:$0xff]
          %v6798 = vld [vmem:[%s6793 + $0x20] sm:$0xff]
          %v6799 = vld [vmem:[%s6793 + $0x28] sm:$0xff]
          %v6800 = vld [vmem:[%s6793 + $0x30] sm:$0xff]
          %v6801 = vld [vmem:[%s6793 + $0x38] sm:$0xff]
          %v6802 = vld [vmem:[%s6793 + $0x40] sm:$0xff]
          %v6803 = vld [vmem:[%s6793 + $0x48] sm:$0xff]
          %v6804 = vld [vmem:[%s6793 + $0x50] sm:$0xff]
          %v6805 = vld [vmem:[%s6793 + $0x58] sm:$0xff]
          %v6806 = vld [vmem:[%s6793 + $0x60] sm:$0xff]
          %v6807 = vld [vmem:[%s6793 + $0x68] sm:$0xff]
          %v6808 = vld [vmem:[%s6793 + $0x70] sm:$0xff]
          %v6809 = vld [vmem:[%s6793 + $0x78] sm:$0xff]
          %v6810 = vld [vmem:[%s6793 + $0x80] sm:$0xff]
          %v6811 = vld [vmem:[%s6793 + $0x88] sm:$0xff]
          %v6812 = vld [vmem:[%s6793 + $0x90] sm:$0xff]
          %v6813 = vld [vmem:[%s6793 + $0x98] sm:$0xff]
          %v6814 = vld [vmem:[%s6793 + $0xa0] sm:$0xff]
          %v6815 = vld [vmem:[%s6793 + $0xa8] sm:$0xff]
          %v6816 = vld [vmem:[%s6793 + $0xb0] sm:$0xff]
          %v6817 = vld [vmem:[%s6793 + $0xb8] sm:$0xff]
          %v6818 = vld [vmem:[%s6793 + $0xc0] sm:$0xff]
          %v6819 = vld [vmem:[%s6793 + $0xc8] sm:$0xff]
          %v6820 = vld [vmem:[%s6793 + $0xd0] sm:$0xff]
          %v6821 = vld [vmem:[%s6793 + $0xd8] sm:$0xff]
          %v6822 = vld [vmem:[%s6793 + $0xe0] sm:$0xff]
          %v6823 = vld [vmem:[%s6793 + $0xe8] sm:$0xff]
          %v6824 = vld [vmem:[%s6793 + $0xf0] sm:$0xff]
          %v6825 = vld [vmem:[%s6793 + $0xf8] sm:$0xff]
          %v6826 = vld [vmem:[%s6793 + $0x100] sm:$0xff]
          %v6827 = vld [vmem:[%s6793 + $0x108] sm:$0xff]
          %v6828 = vld [vmem:[%s6793 + $0x110] sm:$0xff]
          %v6829 = vld [vmem:[%s6793 + $0x118] sm:$0xff]
          %v6830 = vld [vmem:[%s6793 + $0x120] sm:$0xff]
          %v6831 = vld [vmem:[%s6793 + $0x128] sm:$0xff]
          %v6832 = vld [vmem:[%s6793 + $0x130] sm:$0xff]
          %v6833 = vld [vmem:[%s6793 + $0x138] sm:$0xff]
          %v6834 = vld [vmem:[%s6793 + $0x140] sm:$0xff]
          %v6835 = vld [vmem:[%s6793 + $0x148] sm:$0xff]
          %v6836 = vld [vmem:[%s6793 + $0x150] sm:$0xff]
          %v6837 = vld [vmem:[%s6793 + $0x158] sm:$0xff]
          %v6838 = vld [vmem:[%s6793 + $0x160] sm:$0xff]
          %v6839 = vld [vmem:[%s6793 + $0x168] sm:$0xff]
          %v6840 = vld [vmem:[%s6793 + $0x170] sm:$0xff]
          %v6841 = vld [vmem:[%s6793 + $0x178] sm:$0xff]
          %v6842 = vld [vmem:[%s6793 + $0x180] sm:$0xff]
          %v6843 = vld [vmem:[%s6793 + $0x188] sm:$0xff]
          %v6844 = vld [vmem:[%s6793 + $0x190] sm:$0xff]
          %v6845 = vld [vmem:[%s6793 + $0x198] sm:$0xff]
          %v6846 = vld [vmem:[%s6793 + $0x1a0] sm:$0xff]
          %v6847 = vld [vmem:[%s6793 + $0x1a8] sm:$0xff]
          %v6848 = vld [vmem:[%s6793 + $0x1b0] sm:$0xff]
          %v6849 = vld [vmem:[%s6793 + $0x1b8] sm:$0xff]
          %v6850 = vld [vmem:[%s6793 + $0x1c0] sm:$0xff]
          %v6851 = vld [vmem:[%s6793 + $0x1c8] sm:$0xff]
          %v6852 = vld [vmem:[%s6793 + $0x1d0] sm:$0xff]
          %v6853 = vld [vmem:[%s6793 + $0x1d8] sm:$0xff]
          %v6854 = vld [vmem:[%s6793 + $0x1e0] sm:$0xff]
          %v6855 = vld [vmem:[%s6793 + $0x1e8] sm:$0xff]
          %v6856 = vld [vmem:[%s6793 + $0x1f0] sm:$0xff]
          %v6857 = vld [vmem:[%s6793 + $0x1f8] sm:$0xff]
          %v6859 = vperm.slane %v6787, 0
          %v6860 = vperm.slane %v6787, 1
          %v6861 = vperm.slane %v6787, 2
          %v6862 = vperm.slane %v6787, 3
          %v6867 = vmul.f32 %v6794, %v6859
          %v6868 = vmul.f32 %v6795, %v6860
          %v6869 = vmul.f32 %v6796, %v6861
          %v6870 = vmul.f32 %v6797, %v6862
          %v6871 = vmul.f32 %v6798, %v6859
          %v6872 = vmul.f32 %v6799, %v6860
          %v6873 = vmul.f32 %v6800, %v6861
          %v6874 = vmul.f32 %v6801, %v6862
          %v6875 = vmul.f32 %v6802, %v6859
          %v6876 = vmul.f32 %v6803, %v6860
          %v6877 = vmul.f32 %v6804, %v6861
          %v6878 = vmul.f32 %v6805, %v6862
          %v6879 = vmul.f32 %v6806, %v6859
          %v6880 = vmul.f32 %v6807, %v6860
          %v6881 = vmul.f32 %v6808, %v6861
          %v6882 = vmul.f32 %v6809, %v6862
          %v6883 = vmul.f32 %v6810, %v6859
          %v6884 = vmul.f32 %v6811, %v6860
          %v6885 = vmul.f32 %v6812, %v6861
          %v6886 = vmul.f32 %v6813, %v6862
          %v6887 = vmul.f32 %v6814, %v6859
          %v6888 = vmul.f32 %v6815, %v6860
          %v6889 = vmul.f32 %v6816, %v6861
          %v6890 = vmul.f32 %v6817, %v6862
          %v6891 = vmul.f32 %v6818, %v6859
          %v6892 = vmul.f32 %v6819, %v6860
          %v6893 = vmul.f32 %v6820, %v6861
          %v6894 = vmul.f32 %v6821, %v6862
          %v6895 = vmul.f32 %v6822, %v6859
          %v6896 = vmul.f32 %v6823, %v6860
          %v6897 = vmul.f32 %v6824, %v6861
          %v6898 = vmul.f32 %v6825, %v6862
          %v6899 = vmul.f32 %v6826, %v6859
          %v6900 = vmul.f32 %v6827, %v6860
          %v6901 = vmul.f32 %v6828, %v6861
          %v6902 = vmul.f32 %v6829, %v6862
          %v6903 = vmul.f32 %v6830, %v6859
          %v6904 = vmul.f32 %v6831, %v6860
          %v6905 = vmul.f32 %v6832, %v6861
          %v6906 = vmul.f32 %v6833, %v6862
          %v6907 = vmul.f32 %v6834, %v6859
          %v6908 = vmul.f32 %v6835, %v6860
          %v6909 = vmul.f32 %v6836, %v6861
          %v6910 = vmul.f32 %v6837, %v6862
          %v6911 = vmul.f32 %v6838, %v6859
          %v6912 = vmul.f32 %v6839, %v6860
          %v6913 = vmul.f32 %v6840, %v6861
          %v6914 = vmul.f32 %v6841, %v6862
          %v6915 = vmul.f32 %v6842, %v6859
          %v6916 = vmul.f32 %v6843, %v6860
          %v6917 = vmul.f32 %v6844, %v6861
          %v6918 = vmul.f32 %v6845, %v6862
          %v6919 = vmul.f32 %v6846, %v6859
          %v6920 = vmul.f32 %v6847, %v6860
          %v6921 = vmul.f32 %v6848, %v6861
          %v6922 = vmul.f32 %v6849, %v6862
          %v6923 = vmul.f32 %v6850, %v6859
          %v6924 = vmul.f32 %v6851, %v6860
          %v6925 = vmul.f32 %v6852, %v6861
          %v6926 = vmul.f32 %v6853, %v6862
          %v6927 = vmul.f32 %v6854, %v6859
          %v6928 = vmul.f32 %v6855, %v6860
          %v6929 = vmul.f32 %v6856, %v6861
          %v6930 = vmul.f32 %v6857, %v6862
          %v6932 = vperm.slane %v6790, 0
          %v6933 = vperm.slane %v6790, 1
          %v6934 = vperm.slane %v6790, 2
          %v6935 = vperm.slane %v6790, 3
          %v6940 = vadd.f32 %v6867, %v6932
          %v6941 = vadd.f32 %v6868, %v6933
          %v6942 = vadd.f32 %v6869, %v6934
          %v6943 = vadd.f32 %v6870, %v6935
          %v6944 = vadd.f32 %v6871, %v6932
          %v6945 = vadd.f32 %v6872, %v6933
          %v6946 = vadd.f32 %v6873, %v6934
          %v6947 = vadd.f32 %v6874, %v6935
          %v6948 = vadd.f32 %v6875, %v6932
          %v6949 = vadd.f32 %v6876, %v6933
          %v6950 = vadd.f32 %v6877, %v6934
          %v6951 = vadd.f32 %v6878, %v6935
          %v6952 = vadd.f32 %v6879, %v6932
          %v6953 = vadd.f32 %v6880, %v6933
          %v6954 = vadd.f32 %v6881, %v6934
          %v6955 = vadd.f32 %v6882, %v6935
          %v6956 = vadd.f32 %v6883, %v6932
          %v6957 = vadd.f32 %v6884, %v6933
          %v6958 = vadd.f32 %v6885, %v6934
          %v6959 = vadd.f32 %v6886, %v6935
          %v6960 = vadd.f32 %v6887, %v6932
          %v6961 = vadd.f32 %v6888, %v6933
          %v6962 = vadd.f32 %v6889, %v6934
          %v6963 = vadd.f32 %v6890, %v6935
          %v6964 = vadd.f32 %v6891, %v6932
          %v6965 = vadd.f32 %v6892, %v6933
          %v6966 = vadd.f32 %v6893, %v6934
          %v6967 = vadd.f32 %v6894, %v6935
          %v6968 = vadd.f32 %v6895, %v6932
          %v6969 = vadd.f32 %v6896, %v6933
          %v6970 = vadd.f32 %v6897, %v6934
          %v6971 = vadd.f32 %v6898, %v6935
          %v6972 = vadd.f32 %v6899, %v6932
          %v6973 = vadd.f32 %v6900, %v6933
          %v6974 = vadd.f32 %v6901, %v6934
          %v6975 = vadd.f32 %v6902, %v6935
          %v6976 = vadd.f32 %v6903, %v6932
          %v6977 = vadd.f32 %v6904, %v6933
          %v6978 = vadd.f32 %v6905, %v6934
          %v6979 = vadd.f32 %v6906, %v6935
          %v6980 = vadd.f32 %v6907, %v6932
          %v6981 = vadd.f32 %v6908, %v6933
          %v6982 = vadd.f32 %v6909, %v6934
          %v6983 = vadd.f32 %v6910, %v6935
          %v6984 = vadd.f32 %v6911, %v6932
          %v6985 = vadd.f32 %v6912, %v6933
          %v6986 = vadd.f32 %v6913, %v6934
          %v6987 = vadd.f32 %v6914, %v6935
          %v6988 = vadd.f32 %v6915, %v6932
          %v6989 = vadd.f32 %v6916, %v6933
          %v6990 = vadd.f32 %v6917, %v6934
          %v6991 = vadd.f32 %v6918, %v6935
          %v6992 = vadd.f32 %v6919, %v6932
          %v6993 = vadd.f32 %v6920, %v6933
          %v6994 = vadd.f32 %v6921, %v6934
          %v6995 = vadd.f32 %v6922, %v6935
          %v6996 = vadd.f32 %v6923, %v6932
          %v6997 = vadd.f32 %v6924, %v6933
          %v6998 = vadd.f32 %v6925, %v6934
          %v6999 = vadd.f32 %v6926, %v6935
          %v7000 = vadd.f32 %v6927, %v6932
          %v7001 = vadd.f32 %v6928, %v6933
          %v7002 = vadd.f32 %v6929, %v6934
          %v7003 = vadd.f32 %v6930, %v6935
          %v7004 = vmax.f32 %v6940, 0.0
          %v7005 = vmax.f32 %v6941, 0.0
          %v7006 = vmax.f32 %v6942, 0.0
          %v7007 = vmax.f32 %v6943, 0.0
          %v7008 = vmax.f32 %v6944, 0.0
          %v7009 = vmax.f32 %v6945, 0.0
          %v7010 = vmax.f32 %v6946, 0.0
          %v7011 = vmax.f32 %v6947, 0.0
          %v7012 = vmax.f32 %v6948, 0.0
          %v7013 = vmax.f32 %v6949, 0.0
          %v7014 = vmax.f32 %v6950, 0.0
          %v7015 = vmax.f32 %v6951, 0.0
          %v7016 = vmax.f32 %v6952, 0.0
          %v7017 = vmax.f32 %v6953, 0.0
          %v7018 = vmax.f32 %v6954, 0.0
          %v7019 = vmax.f32 %v6955, 0.0
          %v7020 = vmax.f32 %v6956, 0.0
          %v7021 = vmax.f32 %v6957, 0.0
          %v7022 = vmax.f32 %v6958, 0.0
          %v7023 = vmax.f32 %v6959, 0.0
          %v7024 = vmax.f32 %v6960, 0.0
          %v7025 = vmax.f32 %v6961, 0.0
          %v7026 = vmax.f32 %v6962, 0.0
          %v7027 = vmax.f32 %v6963, 0.0
          %v7028 = vmax.f32 %v6964, 0.0
          %v7029 = vmax.f32 %v6965, 0.0
          %v7030 = vmax.f32 %v6966, 0.0
          %v7031 = vmax.f32 %v6967, 0.0
          %v7032 = vmax.f32 %v6968, 0.0
          %v7033 = vmax.f32 %v6969, 0.0
          %v7034 = vmax.f32 %v6970, 0.0
          %v7035 = vmax.f32 %v6971, 0.0
          %v7036 = vmax.f32 %v6972, 0.0
          %v7037 = vmax.f32 %v6973, 0.0
          %v7038 = vmax.f32 %v6974, 0.0
          %v7039 = vmax.f32 %v6975, 0.0
          %v7040 = vmax.f32 %v6976, 0.0
          %v7041 = vmax.f32 %v6977, 0.0
          %v7042 = vmax.f32 %v6978, 0.0
          %v7043 = vmax.f32 %v6979, 0.0
          %v7044 = vmax.f32 %v6980, 0.0
          %v7045 = vmax.f32 %v6981, 0.0
          %v7046 = vmax.f32 %v6982, 0.0
          %v7047 = vmax.f32 %v6983, 0.0
          %v7048 = vmax.f32 %v6984, 0.0
          %v7049 = vmax.f32 %v6985, 0.0
          %v7050 = vmax.f32 %v6986, 0.0
          %v7051 = vmax.f32 %v6987, 0.0
          %v7052 = vmax.f32 %v6988, 0.0
          %v7053 = vmax.f32 %v6989, 0.0
          %v7054 = vmax.f32 %v6990, 0.0
          %v7055 = vmax.f32 %v6991, 0.0
          %v7056 = vmax.f32 %v6992, 0.0
          %v7057 = vmax.f32 %v6993, 0.0
          %v7058 = vmax.f32 %v6994, 0.0
          %v7059 = vmax.f32 %v6995, 0.0
          %v7060 = vmax.f32 %v6996, 0.0
          %v7061 = vmax.f32 %v6997, 0.0
          %v7062 = vmax.f32 %v6998, 0.0
          %v7063 = vmax.f32 %v6999, 0.0
          %v7064 = vmax.f32 %v7000, 0.0
          %v7065 = vmax.f32 %v7001, 0.0
          %v7066 = vmax.f32 %v7002, 0.0
          %v7067 = vmax.f32 %v7003, 0.0
          %v7068 = vpack.c.bf16 %v7008, %v7004
          %v7069 = vpack.c.bf16 %v7009, %v7005
          %v7070 = vpack.c.bf16 %v7010, %v7006
          %v7071 = vpack.c.bf16 %v7011, %v7007
          %v7072 = vpack.c.bf16 %v7016, %v7012
          %v7073 = vpack.c.bf16 %v7017, %v7013
          %v7074 = vpack.c.bf16 %v7018, %v7014
          %v7075 = vpack.c.bf16 %v7019, %v7015
          %v7076 = vpack.c.bf16 %v7024, %v7020
          %v7077 = vpack.c.bf16 %v7025, %v7021
          %v7078 = vpack.c.bf16 %v7026, %v7022
          %v7079 = vpack.c.bf16 %v7027, %v7023
          %v7080 = vpack.c.bf16 %v7032, %v7028
          %v7081 = vpack.c.bf16 %v7033, %v7029
          %v7082 = vpack.c.bf16 %v7034, %v7030
          %v7083 = vpack.c.bf16 %v7035, %v7031
          %v7084 = vpack.c.bf16 %v7040, %v7036
          %v7085 = vpack.c.bf16 %v7041, %v7037
          %v7086 = vpack.c.bf16 %v7042, %v7038
          %v7087 = vpack.c.bf16 %v7043, %v7039
          %v7088 = vpack.c.bf16 %v7048, %v7044
          %v7089 = vpack.c.bf16 %v7049, %v7045
          %v7090 = vpack.c.bf16 %v7050, %v7046
          %v7091 = vpack.c.bf16 %v7051, %v7047
          %v7092 = vpack.c.bf16 %v7056, %v7052
          %v7093 = vpack.c.bf16 %v7057, %v7053
          %v7094 = vpack.c.bf16 %v7058, %v7054
          %v7095 = vpack.c.bf16 %v7059, %v7055
          %v7096 = vpack.c.bf16 %v7064, %v7060
          %v7097 = vpack.c.bf16 %v7065, %v7061
          %v7098 = vpack.c.bf16 %v7066, %v7062
          %v7099 = vpack.c.bf16 %v7067, %v7063
          %v7100 = vld [vmem:[#allocation18] sm:$0xf]
          %v7101 = vld [vmem:[#allocation18 + $0x4] sm:$0xf]
          %v7102 = vld [vmem:[#allocation18 + $0x8] sm:$0xf]
          %v7103 = vld [vmem:[#allocation18 + $0xc] sm:$0xf]
          %v7104 = vld [vmem:[#allocation18 + $0x10] sm:$0xf]
          %v7105 = vld [vmem:[#allocation18 + $0x14] sm:$0xf]
          %v7106 = vld [vmem:[#allocation18 + $0x18] sm:$0xf]
          %v7107 = vld [vmem:[#allocation18 + $0x1c] sm:$0xf]
          %v7108 = vld [vmem:[#allocation18 + $0x20] sm:$0xf]
          %v7109 = vld [vmem:[#allocation18 + $0x24] sm:$0xf]
          %v7110 = vld [vmem:[#allocation18 + $0x28] sm:$0xf]
          %v7111 = vld [vmem:[#allocation18 + $0x2c] sm:$0xf]
          %v7112 = vld [vmem:[#allocation18 + $0x30] sm:$0xf]
          %v7113 = vld [vmem:[#allocation18 + $0x34] sm:$0xf]
          %v7114 = vld [vmem:[#allocation18 + $0x38] sm:$0xf]
          %v7115 = vld [vmem:[#allocation18 + $0x3c] sm:$0xf]
          %v7116 = vld [vmem:[#allocation18 + $0x40] sm:$0xf]
          %v7117 = vld [vmem:[#allocation18 + $0x44] sm:$0xf]
          %v7118 = vld [vmem:[#allocation18 + $0x48] sm:$0xf]
          %v7119 = vld [vmem:[#allocation18 + $0x4c] sm:$0xf]
          %v7120 = vld [vmem:[#allocation18 + $0x50] sm:$0xf]
          %v7121 = vld [vmem:[#allocation18 + $0x54] sm:$0xf]
          %v7122 = vld [vmem:[#allocation18 + $0x58] sm:$0xf]
          %v7123 = vld [vmem:[#allocation18 + $0x5c] sm:$0xf]
          %v7124 = vld [vmem:[#allocation18 + $0x60] sm:$0xf]
          %v7125 = vld [vmem:[#allocation18 + $0x64] sm:$0xf]
          %v7126 = vld [vmem:[#allocation18 + $0x68] sm:$0xf]
          %v7127 = vld [vmem:[#allocation18 + $0x6c] sm:$0xf]
          %v7128 = vld [vmem:[#allocation18 + $0x70] sm:$0xf]
          %v7129 = vld [vmem:[#allocation18 + $0x74] sm:$0xf]
          %v7130 = vld [vmem:[#allocation18 + $0x78] sm:$0xf]
          %v7131 = vld [vmem:[#allocation18 + $0x7c] sm:$0xf]
          %v7132 = vld [vmem:[#allocation18 + $0x80] sm:$0xf]
          %v7133 = vld [vmem:[#allocation18 + $0x84] sm:$0xf]
          %v7134 = vld [vmem:[#allocation18 + $0x88] sm:$0xf]
          %v7135 = vld [vmem:[#allocation18 + $0x8c] sm:$0xf]
          %v7136 = vld [vmem:[#allocation18 + $0x90] sm:$0xf]
          %v7137 = vld [vmem:[#allocation18 + $0x94] sm:$0xf]
          %v7138 = vld [vmem:[#allocation18 + $0x98] sm:$0xf]
          %v7139 = vld [vmem:[#allocation18 + $0x9c] sm:$0xf]
          %v7140 = vld [vmem:[#allocation18 + $0xa0] sm:$0xf]
          %v7141 = vld [vmem:[#allocation18 + $0xa4] sm:$0xf]
          %v7142 = vld [vmem:[#allocation18 + $0xa8] sm:$0xf]
          %v7143 = vld [vmem:[#allocation18 + $0xac] sm:$0xf]
          %v7144 = vld [vmem:[#allocation18 + $0xb0] sm:$0xf]
          %v7145 = vld [vmem:[#allocation18 + $0xb4] sm:$0xf]
          %v7146 = vld [vmem:[#allocation18 + $0xb8] sm:$0xf]
          %v7147 = vld [vmem:[#allocation18 + $0xbc] sm:$0xf]
          %v7148 = vld [vmem:[#allocation18 + $0xc0] sm:$0xf]
          %v7149 = vld [vmem:[#allocation18 + $0xc4] sm:$0xf]
          %v7150 = vld [vmem:[#allocation18 + $0xc8] sm:$0xf]
          %v7151 = vld [vmem:[#allocation18 + $0xcc] sm:$0xf]
          %v7152 = vld [vmem:[#allocation18 + $0xd0] sm:$0xf]
          %v7153 = vld [vmem:[#allocation18 + $0xd4] sm:$0xf]
          %v7154 = vld [vmem:[#allocation18 + $0xd8] sm:$0xf]
          %v7155 = vld [vmem:[#allocation18 + $0xdc] sm:$0xf]
          %v7156 = vld [vmem:[#allocation18 + $0xe0] sm:$0xf]
          %v7157 = vld [vmem:[#allocation18 + $0xe4] sm:$0xf]
          %v7158 = vld [vmem:[#allocation18 + $0xe8] sm:$0xf]
          %v7159 = vld [vmem:[#allocation18 + $0xec] sm:$0xf]
          %v7160 = vld [vmem:[#allocation18 + $0xf0] sm:$0xf]
          %v7161 = vld [vmem:[#allocation18 + $0xf4] sm:$0xf]
          %v7162 = vld [vmem:[#allocation18 + $0xf8] sm:$0xf]
          %v7163 = vld [vmem:[#allocation18 + $0xfc] sm:$0xf]
          %v7164 = vld [vmem:[#allocation20] sm:$0x1]
          %v7166 = vperm.slane %v7164, 0
          %v7232 = vunpack.c.l.b16 %v7100
          %v7233 = vunpack.c.l.b16 %v7101
          %v7234 = vunpack.c.l.b16 %v7102
          %v7235 = vunpack.c.l.b16 %v7103
          %v7236 = vunpack.c.l.b16 %v7104
          %v7237 = vunpack.c.l.b16 %v7105
          %v7238 = vunpack.c.l.b16 %v7106
          %v7239 = vunpack.c.l.b16 %v7107
          %v7240 = vunpack.c.l.b16 %v7108
          %v7241 = vunpack.c.l.b16 %v7109
          %v7242 = vunpack.c.l.b16 %v7110
          %v7243 = vunpack.c.l.b16 %v7111
          %v7244 = vunpack.c.l.b16 %v7112
          %v7245 = vunpack.c.l.b16 %v7113
          %v7246 = vunpack.c.l.b16 %v7114
          %v7247 = vunpack.c.l.b16 %v7115
          %v7248 = vunpack.c.l.b16 %v7116
          %v7249 = vunpack.c.l.b16 %v7117
          %v7250 = vunpack.c.l.b16 %v7118
          %v7251 = vunpack.c.l.b16 %v7119
          %v7252 = vunpack.c.l.b16 %v7120
          %v7253 = vunpack.c.l.b16 %v7121
          %v7254 = vunpack.c.l.b16 %v7122
          %v7255 = vunpack.c.l.b16 %v7123
          %v7256 = vunpack.c.l.b16 %v7124
          %v7257 = vunpack.c.l.b16 %v7125
          %v7258 = vunpack.c.l.b16 %v7126
          %v7259 = vunpack.c.l.b16 %v7127
          %v7260 = vunpack.c.l.b16 %v7128
          %v7261 = vunpack.c.l.b16 %v7129
          %v7262 = vunpack.c.l.b16 %v7130
          %v7263 = vunpack.c.l.b16 %v7131
          %v7264 = vunpack.c.l.b16 %v7132
          %v7265 = vunpack.c.l.b16 %v7133
          %v7266 = vunpack.c.l.b16 %v7134
          %v7267 = vunpack.c.l.b16 %v7135
          %v7268 = vunpack.c.l.b16 %v7136
          %v7269 = vunpack.c.l.b16 %v7137
          %v7270 = vunpack.c.l.b16 %v7138
          %v7271 = vunpack.c.l.b16 %v7139
          %v7272 = vunpack.c.l.b16 %v7140
          %v7273 = vunpack.c.l.b16 %v7141
          %v7274 = vunpack.c.l.b16 %v7142
          %v7275 = vunpack.c.l.b16 %v7143
          %v7276 = vunpack.c.l.b16 %v7144
          %v7277 = vunpack.c.l.b16 %v7145
          %v7278 = vunpack.c.l.b16 %v7146
          %v7279 = vunpack.c.l.b16 %v7147
          %v7280 = vunpack.c.l.b16 %v7148
          %v7281 = vunpack.c.l.b16 %v7149
          %v7282 = vunpack.c.l.b16 %v7150
          %v7283 = vunpack.c.l.b16 %v7151
          %v7284 = vunpack.c.l.b16 %v7152
          %v7285 = vunpack.c.l.b16 %v7153
          %v7286 = vunpack.c.l.b16 %v7154
          %v7287 = vunpack.c.l.b16 %v7155
          %v7288 = vunpack.c.l.b16 %v7156
          %v7289 = vunpack.c.l.b16 %v7157
          %v7290 = vunpack.c.l.b16 %v7158
          %v7291 = vunpack.c.l.b16 %v7159
          %v7292 = vunpack.c.l.b16 %v7160
          %v7293 = vunpack.c.l.b16 %v7161
          %v7294 = vunpack.c.l.b16 %v7162
          %v7295 = vunpack.c.l.b16 %v7163
          %v7296 = vpack.c.b16 %v7233, %v7232
          %v7297 = vpack.c.b16 %v7235, %v7234
          %v7298 = vpack.c.b16 %v7237, %v7236
          %v7299 = vpack.c.b16 %v7239, %v7238
          %v7300 = vpack.c.b16 %v7241, %v7240
          %v7301 = vpack.c.b16 %v7243, %v7242
          %v7302 = vpack.c.b16 %v7245, %v7244
          %v7303 = vpack.c.b16 %v7247, %v7246
          %v7304 = vpack.c.b16 %v7249, %v7248
          %v7305 = vpack.c.b16 %v7251, %v7250
          %v7306 = vpack.c.b16 %v7253, %v7252
          %v7307 = vpack.c.b16 %v7255, %v7254
          %v7308 = vpack.c.b16 %v7257, %v7256
          %v7309 = vpack.c.b16 %v7259, %v7258
          %v7310 = vpack.c.b16 %v7261, %v7260
          %v7311 = vpack.c.b16 %v7263, %v7262
          %v7312 = vpack.c.b16 %v7265, %v7264
          %v7313 = vpack.c.b16 %v7267, %v7266
          %v7314 = vpack.c.b16 %v7269, %v7268
          %v7315 = vpack.c.b16 %v7271, %v7270
          %v7316 = vpack.c.b16 %v7273, %v7272
          %v7317 = vpack.c.b16 %v7275, %v7274
          %v7318 = vpack.c.b16 %v7277, %v7276
          %v7319 = vpack.c.b16 %v7279, %v7278
          %v7320 = vpack.c.b16 %v7281, %v7280
          %v7321 = vpack.c.b16 %v7283, %v7282
          %v7322 = vpack.c.b16 %v7285, %v7284
          %v7323 = vpack.c.b16 %v7287, %v7286
          %v7324 = vpack.c.b16 %v7289, %v7288
          %v7325 = vpack.c.b16 %v7291, %v7290
          %v7326 = vpack.c.b16 %v7293, %v7292
          %v7327 = vpack.c.b16 %v7295, %v7294
          %7360 = vmatpush.bf16.msra.mxu0 %v7303
          %7361 = vmatpush.bf16.msra.mxu0 %v7302
          %7362 = vmatpush.bf16.msra.mxu0 %v7301
          %7363 = vmatpush.bf16.msra.mxu0 %v7300
          %7364 = vmatpush.bf16.msra.mxu0 %v7299
          %7365 = vmatpush.bf16.msra.mxu0 %v7298
          %7366 = vmatpush.bf16.msra.mxu0 %v7297
          %7367 = vmatpush.bf16.msra.mxu0 %v7296
          %7368 = vmatmul.bf16.gmra.mxu0 %v7068
          %v7369 = vpop.f32.mrf.mxu0
          %v7370 = vadd.f32 %v7166, %v7369
          %v7371 = vpop.f32.mrf.mxu0
          %v7372 = vadd.f32 %v7166, %v7371
          %7373 = vmatmul.bf16.gmra.mxu0 %v7072
          %v7374 = vpop.f32.mrf.mxu0
          %v7375 = vadd.f32 %v7166, %v7374
          %v7376 = vpop.f32.mrf.mxu0
          %v7377 = vadd.f32 %v7166, %v7376
          %7378 = vmatmul.bf16.gmra.mxu0 %v7076
          %v7379 = vpop.f32.mrf.mxu0
          %v7380 = vadd.f32 %v7166, %v7379
          %v7381 = vpop.f32.mrf.mxu0
          %v7382 = vadd.f32 %v7166, %v7381
          %7383 = vmatmul.bf16.gmra.mxu0 %v7080
          %v7384 = vpop.f32.mrf.mxu0
          %v7385 = vadd.f32 %v7166, %v7384
          %v7386 = vpop.f32.mrf.mxu0
          %v7387 = vadd.f32 %v7166, %v7386
          %7388 = vmatmul.bf16.gmra.mxu0 %v7084
          %v7389 = vpop.f32.mrf.mxu0
          %v7390 = vadd.f32 %v7166, %v7389
          %v7391 = vpop.f32.mrf.mxu0
          %v7392 = vadd.f32 %v7166, %v7391
          %7393 = vmatmul.bf16.gmra.mxu0 %v7088
          %v7394 = vpop.f32.mrf.mxu0
          %v7395 = vadd.f32 %v7166, %v7394
          %v7396 = vpop.f32.mrf.mxu0
          %v7397 = vadd.f32 %v7166, %v7396
          %7398 = vmatmul.bf16.gmra.mxu0 %v7092
          %v7399 = vpop.f32.mrf.mxu0
          %v7400 = vadd.f32 %v7166, %v7399
          %v7401 = vpop.f32.mrf.mxu0
          %v7402 = vadd.f32 %v7166, %v7401
          %7403 = vmatmul.bf16.gmra.mxu0 %v7096
          %v7404 = vpop.f32.mrf.mxu0
          %v7405 = vadd.f32 %v7166, %v7404
          %v7406 = vpop.f32.mrf.mxu0
          %v7407 = vadd.f32 %v7166, %v7406
          %7408 = vdwg.mxu0
          %7409 = vmatpush.bf16.msra.mxu0 %v7311
          %7410 = vmatpush.bf16.msra.mxu0 %v7310
          %7411 = vmatpush.bf16.msra.mxu0 %v7309
          %7412 = vmatpush.bf16.msra.mxu0 %v7308
          %7413 = vmatpush.bf16.msra.mxu0 %v7307
          %7414 = vmatpush.bf16.msra.mxu0 %v7306
          %7415 = vmatpush.bf16.msra.mxu0 %v7305
          %7416 = vmatpush.bf16.msra.mxu0 %v7304
          %7417 = vmatmul.bf16.gmra.mxu0 %v7069
          %v7418 = vpop.f32.mrf.mxu0
          %v7419 = vadd.f32 %v7370, %v7418
          %v7420 = vpop.f32.mrf.mxu0
          %v7421 = vadd.f32 %v7372, %v7420
          %7422 = vmatmul.bf16.gmra.mxu0 %v7073
          %v7423 = vpop.f32.mrf.mxu0
          %v7424 = vadd.f32 %v7375, %v7423
          %v7425 = vpop.f32.mrf.mxu0
          %v7426 = vadd.f32 %v7377, %v7425
          %7427 = vmatmul.bf16.gmra.mxu0 %v7077
          %v7428 = vpop.f32.mrf.mxu0
          %v7429 = vadd.f32 %v7380, %v7428
          %v7430 = vpop.f32.mrf.mxu0
          %v7431 = vadd.f32 %v7382, %v7430
          %7432 = vmatmul.bf16.gmra.mxu0 %v7081
          %v7433 = vpop.f32.mrf.mxu0
          %v7434 = vadd.f32 %v7385, %v7433
          %v7435 = vpop.f32.mrf.mxu0
          %v7436 = vadd.f32 %v7387, %v7435
          %7437 = vmatmul.bf16.gmra.mxu0 %v7085
          %v7438 = vpop.f32.mrf.mxu0
          %v7439 = vadd.f32 %v7390, %v7438
          %v7440 = vpop.f32.mrf.mxu0
          %v7441 = vadd.f32 %v7392, %v7440
          %7442 = vmatmul.bf16.gmra.mxu0 %v7089
          %v7443 = vpop.f32.mrf.mxu0
          %v7444 = vadd.f32 %v7395, %v7443
          %v7445 = vpop.f32.mrf.mxu0
          %v7446 = vadd.f32 %v7397, %v7445
          %7447 = vmatmul.bf16.gmra.mxu0 %v7093
          %v7448 = vpop.f32.mrf.mxu0
          %v7449 = vadd.f32 %v7400, %v7448
          %v7450 = vpop.f32.mrf.mxu0
          %v7451 = vadd.f32 %v7402, %v7450
          %7452 = vmatmul.bf16.gmra.mxu0 %v7097
          %v7453 = vpop.f32.mrf.mxu0
          %v7454 = vadd.f32 %v7405, %v7453
          %v7455 = vpop.f32.mrf.mxu0
          %v7456 = vadd.f32 %v7407, %v7455
          %7457 = vdwg.mxu0
          %7458 = vmatpush.bf16.msra.mxu0 %v7319
          %7459 = vmatpush.bf16.msra.mxu0 %v7318
          %7460 = vmatpush.bf16.msra.mxu0 %v7317
          %7461 = vmatpush.bf16.msra.mxu0 %v7316
          %7462 = vmatpush.bf16.msra.mxu0 %v7315
          %7463 = vmatpush.bf16.msra.mxu0 %v7314
          %7464 = vmatpush.bf16.msra.mxu0 %v7313
          %7465 = vmatpush.bf16.msra.mxu0 %v7312
          %7466 = vmatmul.bf16.gmra.mxu0 %v7070
          %v7467 = vpop.f32.mrf.mxu0
          %v7468 = vadd.f32 %v7419, %v7467
          %v7469 = vpop.f32.mrf.mxu0
          %v7470 = vadd.f32 %v7421, %v7469
          %7471 = vmatmul.bf16.gmra.mxu0 %v7074
          %v7472 = vpop.f32.mrf.mxu0
          %v7473 = vadd.f32 %v7424, %v7472
          %v7474 = vpop.f32.mrf.mxu0
          %v7475 = vadd.f32 %v7426, %v7474
          %7476 = vmatmul.bf16.gmra.mxu0 %v7078
          %v7477 = vpop.f32.mrf.mxu0
          %v7478 = vadd.f32 %v7429, %v7477
          %v7479 = vpop.f32.mrf.mxu0
          %v7480 = vadd.f32 %v7431, %v7479
          %7481 = vmatmul.bf16.gmra.mxu0 %v7082
          %v7482 = vpop.f32.mrf.mxu0
          %v7483 = vadd.f32 %v7434, %v7482
          %v7484 = vpop.f32.mrf.mxu0
          %v7485 = vadd.f32 %v7436, %v7484
          %7486 = vmatmul.bf16.gmra.mxu0 %v7086
          %v7487 = vpop.f32.mrf.mxu0
          %v7488 = vadd.f32 %v7439, %v7487
          %v7489 = vpop.f32.mrf.mxu0
          %v7490 = vadd.f32 %v7441, %v7489
          %7491 = vmatmul.bf16.gmra.mxu0 %v7090
          %v7492 = vpop.f32.mrf.mxu0
          %v7493 = vadd.f32 %v7444, %v7492
          %v7494 = vpop.f32.mrf.mxu0
          %v7495 = vadd.f32 %v7446, %v7494
          %7496 = vmatmul.bf16.gmra.mxu0 %v7094
          %v7497 = vpop.f32.mrf.mxu0
          %v7498 = vadd.f32 %v7449, %v7497
          %v7499 = vpop.f32.mrf.mxu0
          %v7500 = vadd.f32 %v7451, %v7499
          %7501 = vmatmul.bf16.gmra.mxu0 %v7098
          %v7502 = vpop.f32.mrf.mxu0
          %v7503 = vadd.f32 %v7454, %v7502
          %v7504 = vpop.f32.mrf.mxu0
          %v7505 = vadd.f32 %v7456, %v7504
          %7506 = vdwg.mxu0
          %7507 = vmatpush.bf16.msra.mxu0 %v7327
          %7508 = vmatpush.bf16.msra.mxu0 %v7326
          %7509 = vmatpush.bf16.msra.mxu0 %v7325
          %7510 = vmatpush.bf16.msra.mxu0 %v7324
          %7511 = vmatpush.bf16.msra.mxu0 %v7323
          %7512 = vmatpush.bf16.msra.mxu0 %v7322
          %7513 = vmatpush.bf16.msra.mxu0 %v7321
          %7514 = vmatpush.bf16.msra.mxu0 %v7320
          %7515 = vmatmul.bf16.gmra.mxu0 %v7071
          %v7516 = vpop.f32.mrf.mxu0
          %v7517 = vadd.f32 %v7468, %v7516
          %v7518 = vpop.f32.mrf.mxu0
          %v7519 = vadd.f32 %v7470, %v7518
          %7520 = vmatmul.bf16.gmra.mxu0 %v7075
          %v7521 = vpop.f32.mrf.mxu0
          %v7522 = vadd.f32 %v7473, %v7521
          %v7523 = vpop.f32.mrf.mxu0
          %v7524 = vadd.f32 %v7475, %v7523
          %7525 = vmatmul.bf16.gmra.mxu0 %v7079
          %v7526 = vpop.f32.mrf.mxu0
          %v7527 = vadd.f32 %v7478, %v7526
          %v7528 = vpop.f32.mrf.mxu0
          %v7529 = vadd.f32 %v7480, %v7528
          %7530 = vmatmul.bf16.gmra.mxu0 %v7083
          %v7531 = vpop.f32.mrf.mxu0
          %v7532 = vadd.f32 %v7483, %v7531
          %v7533 = vpop.f32.mrf.mxu0
          %v7534 = vadd.f32 %v7485, %v7533
          %7535 = vmatmul.bf16.gmra.mxu0 %v7087
          %v7536 = vpop.f32.mrf.mxu0
          %v7537 = vadd.f32 %v7488, %v7536
          %v7538 = vpop.f32.mrf.mxu0
          %v7539 = vadd.f32 %v7490, %v7538
          %7540 = vmatmul.bf16.gmra.mxu0 %v7091
          %v7541 = vpop.f32.mrf.mxu0
          %v7542 = vadd.f32 %v7493, %v7541
          %v7543 = vpop.f32.mrf.mxu0
          %v7544 = vadd.f32 %v7495, %v7543
          %7545 = vmatmul.bf16.gmra.mxu0 %v7095
          %v7546 = vpop.f32.mrf.mxu0
          %v7547 = vadd.f32 %v7498, %v7546
          %v7548 = vpop.f32.mrf.mxu0
          %v7549 = vadd.f32 %v7500, %v7548
          %7550 = vmatmul.bf16.gmra.mxu0 %v7099
          %v7551 = vpop.f32.mrf.mxu0
          %v7552 = vadd.f32 %v7503, %v7551
          %v7553 = vpop.f32.mrf.mxu0
          %v7554 = vadd.f32 %v7505, %v7553
          %7555 = vdwg.mxu0
          %s7556 = scalar_lea.vmem [#allocation3], %s590
          %7557 = vst [vmem:[%s7556] sm:$0xff] %v7517
          %7558 = vst [vmem:[%s7556 + $0x8] sm:$0xff] %v7519
          %7559 = vst [vmem:[%s7556 + $0x10] sm:$0xff] %v7522
          %7560 = vst [vmem:[%s7556 + $0x18] sm:$0xff] %v7524
          %7561 = vst [vmem:[%s7556 + $0x20] sm:$0xff] %v7527
          %7562 = vst [vmem:[%s7556 + $0x28] sm:$0xff] %v7529
          %7563 = vst [vmem:[%s7556 + $0x30] sm:$0xff] %v7532
          %7564 = vst [vmem:[%s7556 + $0x38] sm:$0xff] %v7534
          %7565 = vst [vmem:[%s7556 + $0x40] sm:$0xff] %v7537
          %7566 = vst [vmem:[%s7556 + $0x48] sm:$0xff] %v7539
          %7567 = vst [vmem:[%s7556 + $0x50] sm:$0xff] %v7542
          %7568 = vst [vmem:[%s7556 + $0x58] sm:$0xff] %v7544
          %7569 = vst [vmem:[%s7556 + $0x60] sm:$0xff] %v7547
          %7570 = vst [vmem:[%s7556 + $0x68] sm:$0xff] %v7549
          %7571 = vst [vmem:[%s7556 + $0x70] sm:$0xff] %v7552
          %7572 = vst [vmem:[%s7556 + $0x78] sm:$0xff] %v7554
          %v7573 = vmul.f32 %v7517, %v640
          %v7574 = vmul.f32 %v7519, %v641
          %v7575 = vmul.f32 %v7522, %v642
          %v7576 = vmul.f32 %v7524, %v643
          %v7577 = vmul.f32 %v7527, %v644
          %v7578 = vmul.f32 %v7529, %v645
          %v7579 = vmul.f32 %v7532, %v646
          %v7580 = vmul.f32 %v7534, %v647
          %v7581 = vmul.f32 %v7537, %v648
          %v7582 = vmul.f32 %v7539, %v649
          %v7583 = vmul.f32 %v7542, %v650
          %v7584 = vmul.f32 %v7544, %v651
          %v7585 = vmul.f32 %v7547, %v652
          %v7586 = vmul.f32 %v7549, %v653
          %v7587 = vmul.f32 %v7552, %v654
          %v7588 = vmul.f32 %v7554, %v655
          %v7589 = vld [vmem:[#allocation6] sm:$0x1]
          %v7590 = vadd.f32 %v7573, %v7574
          %v7591 = vadd.f32 %v7590, %v7575
          %v7592 = vadd.f32 %v7591, %v7576
          %v7593 = vadd.f32 %v7592, %v7577
          %v7594 = vadd.f32 %v7593, %v7578
          %v7595 = vadd.f32 %v7594, %v7579
          %v7596 = vadd.f32 %v7595, %v7580
          %v7597 = vadd.f32 %v7596, %v7581
          %v7598 = vadd.f32 %v7597, %v7582
          %v7599 = vadd.f32 %v7598, %v7583
          %v7600 = vadd.f32 %v7599, %v7584
          %v7601 = vadd.f32 %v7600, %v7585
          %v7602 = vadd.f32 %v7601, %v7586
          %v7603 = vadd.f32 %v7602, %v7587
          %v7604 = vadd.f32 %v7603, %v7588
          %v7605 = vrot.slane %v7604, 4
          %v7606 = vadd.f32 %v7604, %v7605
          %v7607 = vrot.slane %v7606, 2
          %v7608 = vadd.f32 %v7606, %v7607
          %v7609 = vrot.slane %v7608, 1
          %v7610 = vadd.f32 %v7608, %v7609
          %v7611 = vadd.f32 %v7589, %v7610
          %7612 = vst [vmem:[#allocation6] sm:$0x1] %v7611
          %v7613 = vld [vmem:[#allocation7] sm:$0x1]
          %v7614 = vmul.f32 %v7573, %v7517
          %v7615 = vmul.f32 %v7574, %v7519
          %v7616 = vmul.f32 %v7575, %v7522
          %v7617 = vmul.f32 %v7576, %v7524
          %v7618 = vmul.f32 %v7577, %v7527
          %v7619 = vmul.f32 %v7578, %v7529
          %v7620 = vmul.f32 %v7579, %v7532
          %v7621 = vmul.f32 %v7580, %v7534
          %v7622 = vmul.f32 %v7581, %v7537
          %v7623 = vmul.f32 %v7582, %v7539
          %v7624 = vmul.f32 %v7583, %v7542
          %v7625 = vmul.f32 %v7584, %v7544
          %v7626 = vmul.f32 %v7585, %v7547
          %v7627 = vmul.f32 %v7586, %v7549
          %v7628 = vmul.f32 %v7587, %v7552
          %v7629 = vmul.f32 %v7588, %v7554
          %v7630 = vadd.f32 %v7614, %v7615
          %v7631 = vadd.f32 %v7630, %v7616
          %v7632 = vadd.f32 %v7631, %v7617
          %v7633 = vadd.f32 %v7632, %v7618
          %v7634 = vadd.f32 %v7633, %v7619
          %v7635 = vadd.f32 %v7634, %v7620
          %v7636 = vadd.f32 %v7635, %v7621
          %v7637 = vadd.f32 %v7636, %v7622
          %v7638 = vadd.f32 %v7637, %v7623
          %v7639 = vadd.f32 %v7638, %v7624
          %v7640 = vadd.f32 %v7639, %v7625
          %v7641 = vadd.f32 %v7640, %v7626
          %v7642 = vadd.f32 %v7641, %v7627
          %v7643 = vadd.f32 %v7642, %v7628
          %v7644 = vadd.f32 %v7643, %v7629
          %v7645 = vrot.slane %v7644, 4
          %v7646 = vadd.f32 %v7644, %v7645
          %v7647 = vrot.slane %v7646, 2
          %v7648 = vadd.f32 %v7646, %v7647
          %v7649 = vrot.slane %v7648, 1
          %v7650 = vadd.f32 %v7648, %v7649
          %v7651 = vadd.f32 %v7613, %v7650
          %7652 = vst [vmem:[#allocation7] sm:$0x1] %v7651
        $region116: #{tpu_custom_call.1} parent=63 // pred_fallthru
          _
        %p7653 = scmp.eq.s32.totalorder %s39, 2
        // Predicated region
        $region117: #{tpu_custom_call.1} parent=63 // pred_check
          %p7654 = pneg %p7653
        $region118: #{tpu_custom_call.1} parent=63 // pred_check_branch
          %7656 = sbr.rel (%p7654) target = $region120
        $region119: #{tpu_custom_call.1} parent=63 // pred_region
          %v7657 = vld [vmem:[#allocation6] sm:$0x1]
          %v7658 = vmul.f32 %v7657, 0.005
          %v7659 = vld [vmem:[#allocation7] sm:$0x1]
          %v7660 = vmul.f32 %v7659, 0.005
          %v7661 = vmul.f32 %v7658, %v7658
          %v7662 = vsub.f32 %v7660, %v7661
          %v7663 = vld [vmem:[#allocation21] sm:$0x1]
          %v7664 = vadd.f32 %v7662, 1e-05
          %v7665 = vrsqrt.pop %v7664
          %v7666 = vmul.f32 %v7665, %v7664
          %v7667 = vmul.f32 %v7666, %v7665
          %v7668 = vmul.f32 0.5, %v7667
          %v7669 = vsub.f32 1.5, %v7668
          %v7670 = vmul.f32 %v7665, %v7669
          %vm7671 = vweird.f32 %v7664
          %vm7672 = vweird.f32 %v7665
          %vm7673 = vmor %vm7671, %vm7672
          %v7674 = vsel %vm7673, %v7665, %v7670
          %v7675 = vmul.f32 %v7663, %v7674
          %v7676 = vld [vmem:[#allocation23] sm:$0x1]
          %v7677 = vmul.f32 %v7675, %v7658
          %v7678 = vsub.f32 %v7676, %v7677
          %s7679 = scalar_lea.vmem [#allocation3], %s590
          %v7680 = vld [vmem:[%s7679] sm:$0xff]
          %v7681 = vld [vmem:[%s7679 + $0x8] sm:$0xff]
          %v7682 = vld [vmem:[%s7679 + $0x10] sm:$0xff]
          %v7683 = vld [vmem:[%s7679 + $0x18] sm:$0xff]
          %v7684 = vld [vmem:[%s7679 + $0x20] sm:$0xff]
          %v7685 = vld [vmem:[%s7679 + $0x28] sm:$0xff]
          %v7686 = vld [vmem:[%s7679 + $0x30] sm:$0xff]
          %v7687 = vld [vmem:[%s7679 + $0x38] sm:$0xff]
          %v7688 = vld [vmem:[%s7679 + $0x40] sm:$0xff]
          %v7689 = vld [vmem:[%s7679 + $0x48] sm:$0xff]
          %v7690 = vld [vmem:[%s7679 + $0x50] sm:$0xff]
          %v7691 = vld [vmem:[%s7679 + $0x58] sm:$0xff]
          %v7692 = vld [vmem:[%s7679 + $0x60] sm:$0xff]
          %v7693 = vld [vmem:[%s7679 + $0x68] sm:$0xff]
          %v7694 = vld [vmem:[%s7679 + $0x70] sm:$0xff]
          %v7695 = vld [vmem:[%s7679 + $0x78] sm:$0xff]
          %v7697 = vperm.slane %v7675, 0
          %v7699 = vmul.f32 %v7680, %v7697
          %v7700 = vmul.f32 %v7681, %v7697
          %v7701 = vmul.f32 %v7682, %v7697
          %v7702 = vmul.f32 %v7683, %v7697
          %v7703 = vmul.f32 %v7684, %v7697
          %v7704 = vmul.f32 %v7685, %v7697
          %v7705 = vmul.f32 %v7686, %v7697
          %v7706 = vmul.f32 %v7687, %v7697
          %v7707 = vmul.f32 %v7688, %v7697
          %v7708 = vmul.f32 %v7689, %v7697
          %v7709 = vmul.f32 %v7690, %v7697
          %v7710 = vmul.f32 %v7691, %v7697
          %v7711 = vmul.f32 %v7692, %v7697
          %v7712 = vmul.f32 %v7693, %v7697
          %v7713 = vmul.f32 %v7694, %v7697
          %v7714 = vmul.f32 %v7695, %v7697
          %v7716 = vperm.slane %v7678, 0
          %v7718 = vadd.f32 %v7699, %v7716
          %v7719 = vadd.f32 %v7700, %v7716
          %v7720 = vadd.f32 %v7701, %v7716
          %v7721 = vadd.f32 %v7702, %v7716
          %v7722 = vadd.f32 %v7703, %v7716
          %v7723 = vadd.f32 %v7704, %v7716
          %v7724 = vadd.f32 %v7705, %v7716
          %v7725 = vadd.f32 %v7706, %v7716
          %v7726 = vadd.f32 %v7707, %v7716
          %v7727 = vadd.f32 %v7708, %v7716
          %v7728 = vadd.f32 %v7709, %v7716
          %v7729 = vadd.f32 %v7710, %v7716
          %v7730 = vadd.f32 %v7711, %v7716
          %v7731 = vadd.f32 %v7712, %v7716
          %v7732 = vadd.f32 %v7713, %v7716
          %v7733 = vadd.f32 %v7714, %v7716
          %v7734 = vmax.f32 %v7718, 0.0
          %v7735 = vmax.f32 %v7719, 0.0
          %v7736 = vmax.f32 %v7720, 0.0
          %v7737 = vmax.f32 %v7721, 0.0
          %v7738 = vmax.f32 %v7722, 0.0
          %v7739 = vmax.f32 %v7723, 0.0
          %v7740 = vmax.f32 %v7724, 0.0
          %v7741 = vmax.f32 %v7725, 0.0
          %v7742 = vmax.f32 %v7726, 0.0
          %v7743 = vmax.f32 %v7727, 0.0
          %v7744 = vmax.f32 %v7728, 0.0
          %v7745 = vmax.f32 %v7729, 0.0
          %v7746 = vmax.f32 %v7730, 0.0
          %v7747 = vmax.f32 %v7731, 0.0
          %v7748 = vmax.f32 %v7732, 0.0
          %v7749 = vmax.f32 %v7733, 0.0
          %v7750 = vld [vmem:[#allocation24] sm:$0x1]
          %v7752 = vperm.slane %v7750, 0
          %v7754 = vmul.f32 %v7734, %v7752
          %v7755 = vmul.f32 %v7735, %v7752
          %v7756 = vmul.f32 %v7736, %v7752
          %v7757 = vmul.f32 %v7737, %v7752
          %v7758 = vmul.f32 %v7738, %v7752
          %v7759 = vmul.f32 %v7739, %v7752
          %v7760 = vmul.f32 %v7740, %v7752
          %v7761 = vmul.f32 %v7741, %v7752
          %v7762 = vmul.f32 %v7742, %v7752
          %v7763 = vmul.f32 %v7743, %v7752
          %v7764 = vmul.f32 %v7744, %v7752
          %v7765 = vmul.f32 %v7745, %v7752
          %v7766 = vmul.f32 %v7746, %v7752
          %v7767 = vmul.f32 %v7747, %v7752
          %v7768 = vmul.f32 %v7748, %v7752
          %v7769 = vmul.f32 %v7749, %v7752
          %7770 = vadd.xlane.f32.xlu0 %v7754
          %v7771 = vpop.xlane.xlu0 %7770
          %7772 = vadd.xlane.f32.xlu0 %v7755
          %v7773 = vpop.xlane.xlu0 %7772
          %7774 = vadd.xlane.f32.xlu0 %v7756
          %v7775 = vpop.xlane.xlu0 %7774
          %7776 = vadd.xlane.f32.xlu0 %v7757
          %v7777 = vpop.xlane.xlu0 %7776
          %7778 = vadd.xlane.f32.xlu0 %v7758
          %v7779 = vpop.xlane.xlu0 %7778
          %7780 = vadd.xlane.f32.xlu0 %v7759
          %v7781 = vpop.xlane.xlu0 %7780
          %7782 = vadd.xlane.f32.xlu0 %v7760
          %v7783 = vpop.xlane.xlu0 %7782
          %7784 = vadd.xlane.f32.xlu0 %v7761
          %v7785 = vpop.xlane.xlu0 %7784
          %7786 = vadd.xlane.f32.xlu0 %v7762
          %v7787 = vpop.xlane.xlu0 %7786
          %7788 = vadd.xlane.f32.xlu0 %v7763
          %v7789 = vpop.xlane.xlu0 %7788
          %7790 = vadd.xlane.f32.xlu0 %v7764
          %v7791 = vpop.xlane.xlu0 %7790
          %7792 = vadd.xlane.f32.xlu0 %v7765
          %v7793 = vpop.xlane.xlu0 %7792
          %7794 = vadd.xlane.f32.xlu0 %v7766
          %v7795 = vpop.xlane.xlu0 %7794
          %7796 = vadd.xlane.f32.xlu0 %v7767
          %v7797 = vpop.xlane.xlu0 %7796
          %7798 = vadd.xlane.f32.xlu0 %v7768
          %v7799 = vpop.xlane.xlu0 %7798
          %7800 = vadd.xlane.f32.xlu0 %v7769
          %v7801 = vpop.xlane.xlu0 %7800
          %v7802 = vld [vmem:[#allocation8] sm:$0x1]
          %v7804 = vperm.slane %v7802, 0
          %v7806 = vadd.f32 %v7771, %v7804
          %v7807 = vadd.f32 %v7773, %v7804
          %v7808 = vadd.f32 %v7775, %v7804
          %v7809 = vadd.f32 %v7777, %v7804
          %v7810 = vadd.f32 %v7779, %v7804
          %v7811 = vadd.f32 %v7781, %v7804
          %v7812 = vadd.f32 %v7783, %v7804
          %v7813 = vadd.f32 %v7785, %v7804
          %v7814 = vadd.f32 %v7787, %v7804
          %v7815 = vadd.f32 %v7789, %v7804
          %v7816 = vadd.f32 %v7791, %v7804
          %v7817 = vadd.f32 %v7793, %v7804
          %v7818 = vadd.f32 %v7795, %v7804
          %v7819 = vadd.f32 %v7797, %v7804
          %v7820 = vadd.f32 %v7799, %v7804
          %v7821 = vadd.f32 %v7801, %v7804
          %7823 = vset.pattern.permute.xlu0 0
          %7824 = vperm.xlu0 %7823, %v7806
          %v7825 = vpop.permute.xlu0 %7824
          %7828 = vset.pattern.permute.xlu0 0
          %7829 = vperm.xlu0 %7828, %v7807
          %v7830 = vpop.permute.xlu0 %7829
          %7833 = vset.pattern.permute.xlu0 0
          %7834 = vperm.xlu0 %7833, %v7808
          %v7835 = vpop.permute.xlu0 %7834
          %7838 = vset.pattern.permute.xlu0 0
          %7839 = vperm.xlu0 %7838, %v7809
          %v7840 = vpop.permute.xlu0 %7839
          %7843 = vset.pattern.permute.xlu0 0
          %7844 = vperm.xlu0 %7843, %v7810
          %v7845 = vpop.permute.xlu0 %7844
          %7848 = vset.pattern.permute.xlu0 0
          %7849 = vperm.xlu0 %7848, %v7811
          %v7850 = vpop.permute.xlu0 %7849
          %7853 = vset.pattern.permute.xlu0 0
          %7854 = vperm.xlu0 %7853, %v7812
          %v7855 = vpop.permute.xlu0 %7854
          %7858 = vset.pattern.permute.xlu0 0
          %7859 = vperm.xlu0 %7858, %v7813
          %v7860 = vpop.permute.xlu0 %7859
          %7863 = vset.pattern.permute.xlu0 0
          %7864 = vperm.xlu0 %7863, %v7814
          %v7865 = vpop.permute.xlu0 %7864
          %7868 = vset.pattern.permute.xlu0 0
          %7869 = vperm.xlu0 %7868, %v7815
          %v7870 = vpop.permute.xlu0 %7869
          %7873 = vset.pattern.permute.xlu0 0
          %7874 = vperm.xlu0 %7873, %v7816
          %v7875 = vpop.permute.xlu0 %7874
          %7878 = vset.pattern.permute.xlu0 0
          %7879 = vperm.xlu0 %7878, %v7817
          %v7880 = vpop.permute.xlu0 %7879
          %7883 = vset.pattern.permute.xlu0 0
          %7884 = vperm.xlu0 %7883, %v7818
          %v7885 = vpop.permute.xlu0 %7884
          %7888 = vset.pattern.permute.xlu0 0
          %7889 = vperm.xlu0 %7888, %v7819
          %v7890 = vpop.permute.xlu0 %7889
          %7893 = vset.pattern.permute.xlu0 0
          %7894 = vperm.xlu0 %7893, %v7820
          %v7895 = vpop.permute.xlu0 %7894
          %7898 = vset.pattern.permute.xlu0 0
          %7899 = vperm.xlu0 %7898, %v7821
          %v7900 = vpop.permute.xlu0 %7899
          %7902 = vst [vmem:[%s566] sm:$0xff] %v7825
          %7903 = vst [vmem:[%s566 + $0x8] sm:$0xff] %v7830
          %7904 = vst [vmem:[%s566 + $0x10] sm:$0xff] %v7835
          %7905 = vst [vmem:[%s566 + $0x18] sm:$0xff] %v7840
          %7906 = vst [vmem:[%s566 + $0x20] sm:$0xff] %v7845
          %7907 = vst [vmem:[%s566 + $0x28] sm:$0xff] %v7850
          %7908 = vst [vmem:[%s566 + $0x30] sm:$0xff] %v7855
          %7909 = vst [vmem:[%s566 + $0x38] sm:$0xff] %v7860
          %7910 = vst [vmem:[%s566 + $0x40] sm:$0xff] %v7865
          %7911 = vst [vmem:[%s566 + $0x48] sm:$0xff] %v7870
          %7912 = vst [vmem:[%s566 + $0x50] sm:$0xff] %v7875
          %7913 = vst [vmem:[%s566 + $0x58] sm:$0xff] %v7880
          %7914 = vst [vmem:[%s566 + $0x60] sm:$0xff] %v7885
          %7915 = vst [vmem:[%s566 + $0x68] sm:$0xff] %v7890
          %7916 = vst [vmem:[%s566 + $0x70] sm:$0xff] %v7895
          %7917 = vst [vmem:[%s566 + $0x78] sm:$0xff] %v7900
        $region120: #{tpu_custom_call.1} parent=63 // pred_fallthru
          _
        %s7918 = sand.u32 %s299, 1
        %s7919 = scalar_lea.sflag [#allocation11], %s7918
        %s7920 = sand.u32 %s299, 1
        %s7921 = smul.addr %s7920, 128
        %s7922 = scalar_lea.vmem [#allocation26], %s7921
        // Predicated region
        $region121: #{tpu_custom_call.1} parent=63 // pred_check
          %p7923 = pneg %p309
        $region122: #{tpu_custom_call.1} parent=63 // pred_check_branch
          %7925 = sbr.rel (%p7923) target = $region124
        $region123: #{tpu_custom_call.1} parent=63 // pred_region
          %p7926 = scmp.eq.s32.totalorder %s39, 2
          %s7927 = scalar_select %p7926, %s40, 0
          %s7928 = smul.u32 16, %s7927
          %7930 = vsyncadd %s7919, 0
          %s7931 = smul.addr %s7928, 8
          %s7932 = scalar_lea.hbm %s11, %s7931
          %s7933 = sshll.u32 %s7922, 4
          %s7934 = int_to_ptr.vmem [resolvable:$true] %s7933
          %s7935 = sshll.u32 %s7932, 4
          %s7936 = int_to_ptr.hbm [resolvable:$true] %s7935
          %7941 = dma.vmem_to_hbm [thread:$0]  %s7934, 2048, %s7936, %s7919, 128, 128, 8
        $region124: #{tpu_custom_call.1} parent=63 // pred_fallthru
          _
      $region64: #{tpu_custom_call.1} parent=5 // pred_fallthru
        _
      %p7942 = scmp.le.s32.totalorder 2, %s30
      // Predicated region
      $region125: #{tpu_custom_call.1} parent=5 // pred_check
        %p7943 = pneg %p7942
      $region126: #{tpu_custom_call.1} parent=5 // pred_check_branch
        %7945 = sbr.rel (%p7943) target = $region128
      $region127: #{tpu_custom_call.1} parent=5 // pred_region
        %s7946 = ssub.s32 %s30, 2
        // Predicated region
        $region129: #{tpu_custom_call.1} parent=127 // pred_check
          %p7947 = pneg %p315
        $region130: #{tpu_custom_call.1} parent=127 // pred_check_branch
          %7949 = sbr.rel (%p7947) target = $region132
        $region131: #{tpu_custom_call.1} parent=127 // pred_region
          %s7950 = sand.u32 %s300, 1
          %s7951 = scalar_lea.sflag [#allocation11], %s7950
          %s7952 = sand.u32 %s300, 1
          %s7953 = smul.addr %s7952, 128
          %s7954 = scalar_lea.vmem [#allocation26], %s7953
          %7956 = dma.done %s7951, 2048
        $region132: #{tpu_custom_call.1} parent=127 // pred_fallthru
          _
      $region128: #{tpu_custom_call.1} parent=5 // pred_fallthru
        _
    $region6: #{tpu_custom_call.1} parent=1 // loop_footer
      %s34 = sadd.s32 1, %s30
    $region7: #{tpu_custom_call.1} parent=1 // loop_footer_branch
      %29 = sbr.rel target = $region3
    $region8: #{tpu_custom_call.1} parent=1 // loop_exit
      _
    %7957 = vsyncpa [#allocation10], 1
    %s7958 = scalar_lea.sflag [#allocation10], 1
    %7959 = vsyncpa %s7958, 1
    %7960 = vsyncpa [#allocation13], 1
    %7961 = vsyncpa [#allocation16], 1
    %7962 = vsyncpa [#allocation19], 1
    %7963 = vsyncpa [#allocation22], 1
    %7964 = vsyncpa [#allocation25], 1
    %7965 = vsyncpa [#allocation11], 1
    %s7966 = scalar_lea.sflag [#allocation11], 1
    %7967 = vsyncpa %s7966, 1

</llo_original>
